<compile_context>
chip_gen: v7x
topology: tpu7x:2x2x1
jax: 0.10.0
libtpu: 0.0.40
codegen_flags: <defaults>
</compile_context>

<pallas_src>
import math

import jax
import jax.numpy as jnp
from jax.experimental import pallas as pl
from jax.experimental.pallas import tpu as pltpu

# ----------------------------- configuration (cfg.tf_config analogue) ----------------------
Z_DIM      = 512              # d_model (tied to the hard-coded 512's in the module)
N_HEAD     = 4                # head dim = 512 / 4 = 128 -> lane aligned
LATENT_LEN = 64               # inst_latent_len
MAX_N_LANE = 4
N_BATCH    = 2
FLAT_IN    = 512 * 25 * 5     # 64000, from nn.Linear(512*25*5, 1024)
FLAT_HID   = 1024
HEAD_DIM   = Z_DIM // N_HEAD
OUT_W      = 128              # packed output width: [box(64) | comp(1) | pad]

# The xor-based fused-head attention mask relies on these being powers of two.
assert (N_HEAD & (N_HEAD - 1)) == 0 and (N_BATCH & (N_BATCH - 1)) == 0


def _gelu(x):
    # TODO(synk): torch F.gelu defaults to the exact erf form; tanh approximation used here
    # because erf has no guaranteed Mosaic lowering.
    return jax.nn.gelu(x, approximate=True)


def _chip_defaults():
    """Per-generation tiling for kernel 1 (the HBM-roofline w1 stream)."""
    kind = jax.devices()[0].device_kind.lower()
    if "v7" in kind or "7x" in kind:
        # v7x: 2 TensorCores (split w1 columns across them), 64 MiB physical VMEM.
        return dict(col_split=2, tk=16000, vmem=48 << 20)
    if "v5" in kind or "v6" in kind:
        # single TensorCore, 128 MiB VMEM: no column split, big contiguous K tiles.
        return dict(col_split=1, tk=16000, vmem=64 << 20)
    return dict(col_split=1, tk=6400, vmem=48 << 20)    # v2/v3/v4 / unknown: conservative


# =============================== kernel 1: flatten, first layer ============================
def _flatten_fc1_kernel(x_ref, w1_ref, scale_ref, b1_ref, h_ref):
    k = pl.program_id(1)

    @pl.when(k == 0)
    def _init():
        h_ref[...] = jnp.zeros_like(h_ref)

    # Weight-only int8: dequantize to bf16 in-register (exact for |q| <= 127), accumulate f32.
    # The per-output-channel scale is applied once in the epilogue below, so the running sum
    # stays a plain integer-weighted accumulation.
    # TODO(synk): use the native int8 (v5e/v6e) / fp8 (v7x) MXU path to skip the dequant cast.
    h_ref[...] += jnp.dot(x_ref[...].astype(jnp.bfloat16),
                          w1_ref[0].astype(jnp.bfloat16),
                          preferred_element_type=jnp.float32)

    @pl.when(k == pl.num_programs(1) - 1)
    def _finish():
        # scale (dequant) + bias + ReLU folded into one epilogue.
        h_ref[...] = jnp.maximum(h_ref[...] * scale_ref[...] + b1_ref[...], 0.0)


def flatten_fc1(x2d, w1_q, w1_scale, b1, *, tk, vmem_limit):
    """ReLU((x @ W1_int8) * scale + b1); W1 pre-packed as (col_split, K, N/col_split)."""
    nb, kdim = x2d.shape
    col_split, _, tn = w1_q.shape
    h1 = col_split * tn
    assert kdim % tk == 0 and tk % 128 == 0 and tn % 128 == 0
    return pl.pallas_call(
        _flatten_fc1_kernel,
        out_shape=jax.ShapeDtypeStruct((nb, h1), jnp.float32),
        grid=(col_split, kdim // tk),
        in_specs=[
            pl.BlockSpec((nb, tk), lambda j, k: (0, k)),
            pl.BlockSpec((1, tk, tn), lambda j, k: (j, k, 0)),   # contiguous int8 slab / step
            pl.BlockSpec((1, tn), lambda j, k: (0, j)),          # per-channel dequant scale
            pl.BlockSpec((1, tn), lambda j, k: (0, j)),          # bias
        ],
        out_specs=pl.BlockSpec((nb, tn), lambda j, k: (0, j)),
        compiler_params=pltpu.CompilerParams(
            dimension_semantics=("parallel", "arbitrary"),
            vmem_limit_bytes=vmem_limit,
        ),
    )(x2d, w1_q, w1_scale, b1)


# =============================== kernel 2: autoregressive decode ===========================
def _ar_kernel(h_ref, emb_ref, fw2_ref, fb2_ref,
               e_wqkv_ref, e_bqkv_ref, e_wo_ref, e_bo_ref,
               e_w1_ref, e_b1_ref, e_w2_ref, e_b2_ref, e_ln_ref,
               d_sv_ref, d_sbv_ref, d_so_ref, d_sbo_ref,
               d_cq_ref, d_cbq_ref, d_ckv_ref, d_cbkv_ref, d_co_ref, d_cbo_ref,
               d_w1_ref, d_b1_ref, d_w2_ref, d_b2_ref, d_ln_ref,
               lane_w_ref, lane_b_ref,
               bb_w1_ref, bb_b1_ref, bb_w2_ref, bb_b2_ref,
               cp_w1_ref, cp_b1_ref, cp_w2_ref, cp_b2_ref,
               out_ref):

    def lin_wv(x, w, b):
        # bf16 operands into the MXU, f32 accumulation; elementwise math stays f32.
        return jnp.dot(x.astype(jnp.bfloat16), w, preferred_element_type=jnp.float32) + b

    def lin(x, w_ref, b_ref):
        return lin_wv(x, w_ref[...], b_ref[...])

    def layer_norm(x, ln_ref, row):
        g = ln_ref[pl.ds(row, 1), :]
        b = ln_ref[pl.ds(row + 1, 1), :]
        mu = jnp.mean(x, axis=-1, keepdims=True)
        var = jnp.mean(jnp.square(x - mu), axis=-1, keepdims=True)
        return (x - mu) * jax.lax.rsqrt(var + 1e-5) * g + b

    def attend(q, k, v):
        """fast_transformers FullAttention (softmax_temp = 1/sqrt(E)), all heads fused.

        Rows are batch-interleaved (row r = token r//N_BATCH of batch r%N_BATCH).  Reshaping
        (rows, 512) -> (4*rows, 128) puts restacked row i at (orig row i>>2, head i&3), so a
        (query i, key j) pair is valid (same head AND same batch) iff ((i ^ j) & 7) == 0.
        QK^T and A.V each become a single MXU issue instead of one per head.
        """
        nq, nk = q.shape[0] * N_HEAD, k.shape[0] * N_HEAD
        qh = q.reshape(nq, HEAD_DIM)
        kh = k.reshape(nk, HEAD_DIM)
        vh = v.reshape(nk, HEAD_DIM)
        s = jax.lax.dot_general(qh, kh, (((1,), (1,)), ((), ())),
                                preferred_element_type=jnp.float32)
        s = s * (1.0 / math.sqrt(HEAD_DIM))
        ri = jax.lax.broadcasted_iota(jnp.int32, (nq, nk), 0)
        rj = jax.lax.broadcasted_iota(jnp.int32, (nq, nk), 1)
        ok = jnp.bitwise_and(jnp.bitwise_xor(ri, rj), N_HEAD * N_BATCH - 1) == 0
        s = jnp.where(ok, s, -1e30)
        p = jnp.exp(s - jnp.max(s, axis=-1, keepdims=True))
        a = p * pl.reciprocal(jnp.sum(p, axis=-1, keepdims=True), approx=True)
        o = jnp.dot(a, vh, preferred_element_type=jnp.float32)
        return o.reshape(q.shape[0], Z_DIM)

    def encoder(x):
        """fast_transformers TransformerEncoder, 1 layer + final LayerNorm (packed QKV)."""
        qkv = lin(x, e_wqkv_ref, e_bqkv_ref)                       # (rows, 3*Z_DIM)
        att = attend(qkv[:, :Z_DIM], qkv[:, Z_DIM:2 * Z_DIM], qkv[:, 2 * Z_DIM:])
        x = x + lin(att, e_wo_ref, e_bo_ref)
        x = layer_norm(x, e_ln_ref, 0)
        y = _gelu(lin(x, e_w1_ref, e_b1_ref))
        y = lin(y, e_w2_ref, e_b2_ref)
        x = layer_norm(x + y, e_ln_ref, 2)
        return layer_norm(x, e_ln_ref, 4)

    def decoder(x, mem):
        """fast_transformers TransformerDecoder, 1 layer + final LayerNorm."""
        # Self-attention over a length-1 target: softmax of a single score is exactly 1,
        # so the attention output equals out_proj(value_proj(x)) (q/k projections cancel).
        x = x + lin(lin(x, d_sv_ref, d_sbv_ref), d_so_ref, d_sbo_ref)
        x = layer_norm(x, d_ln_ref, 0)
        q = lin(x, d_cq_ref, d_cbq_ref)                            # (NB, Z_DIM)
        kv = lin(mem, d_ckv_ref, d_cbkv_ref)                       # (rows, 2*Z_DIM)
        att = attend(q, kv[:, :Z_DIM], kv[:, Z_DIM:])
        x = x + lin(att, d_co_ref, d_cbo_ref)
        x = layer_norm(x, d_ln_ref, 2)
        y = _gelu(lin(x, d_w1_ref, d_b1_ref))
        y = lin(y, d_w2_ref, d_b2_ref)
        x = layer_norm(x + y, d_ln_ref, 4)
        return layer_norm(x, d_ln_ref, 6)

    # flatten second layer (fused here so kernel 1 only streams w1): latent_z = ReLU-out @ W2 + b2
    latent_z = lin(h_ref[...], fw2_ref, fb2_ref)                   # (NB, Z_DIM)

    # Growing token sequence carried as a register value (<= 16x512 f32 = 8 vregs),
    # batch-interleaved; no VMEM scratch round-trips on the serial dependency chain.
    X = emb_ref[...]                                               # token 0 of both batches
    obj_rows = []
    for idx in range(MAX_N_LANE):                                  # statically unrolled
        Xe = encoder(X)
        hd = decoder(latent_z, Xe)                                 # (NB, Z_DIM)
        # self.encoders[idx]: Linear-ReLU-Linear-ReLU (both batches at once)
        hd = jnp.maximum(lin_wv(hd, lane_w_ref[2 * idx],
                                lane_b_ref[pl.ds(2 * idx, 1), :]), 0.0)
        hd = jnp.maximum(lin_wv(hd, lane_w_ref[2 * idx + 1],
                                lane_b_ref[pl.ds(2 * idx + 1, 1), :]), 0.0)
        obj_rows.append(hd)
        X = jnp.concatenate([X, hd], axis=0)                       # append token idx+1

    obj = jnp.concatenate(obj_rows, axis=0)                        # obj_feats[1:], (8, 512)
    hb = jnp.maximum(lin(obj, bb_w1_ref, bb_b1_ref), 0.0)          # mlp_bbox
    box = lin(hb, bb_w2_ref, bb_b2_ref)                            # (8, LATENT_LEN)
    hc = jnp.maximum(lin(obj, cp_w1_ref, cp_b1_ref), 0.0)          # mlp_comp
    comp = lin(hc, cp_w2_ref, cp_b2_ref)                           # (8, 1)

    # Lane-dense packed output block: [box | comp | zero pad] in one (8, 128) writeback.
    out_ref[:, :LATENT_LEN] = box
    out_ref[:, LATENT_LEN:LATENT_LEN + 1] = comp
    out_ref[:, LATENT_LEN + 1:] = jnp.zeros(
        (N_BATCH * MAX_N_LANE, OUT_W - LATENT_LEN - 1), jnp.float32)


def ar_decode(h, emb, p):
    args = (
        h, emb,
        p["flat_w2"], p["flat_b2"],
        p["enc_wqkv"], p["enc_bqkv"], p["enc_wo"], p["enc_bo"],
        p["enc_w1"], p["enc_b1"], p["enc_w2"], p["enc_b2"], p["enc_ln"],
        p["dec_sv"], p["dec_sbv"], p["dec_so"], p["dec_sbo"],
        p["dec_cq"], p["dec_cbq"], p["dec_ckv"], p["dec_cbkv"], p["dec_co"], p["dec_cbo"],
        p["dec_w1"], p["dec_b1"], p["dec_w2"], p["dec_b2"], p["dec_ln"],
        p["lane_w"], p["lane_b"],
        p["bb_w1"], p["bb_b1"], p["bb_w2"], p["bb_b2"],
        p["cp_w1"], p["cp_b1"], p["cp_w2"], p["cp_b2"],
    )
    vmem = pl.BlockSpec(memory_space=pltpu.MemorySpace.VMEM)
    return pl.pallas_call(
        _ar_kernel,
        out_shape=jax.ShapeDtypeStruct((N_BATCH * MAX_N_LANE, OUT_W), jnp.float32),
        in_specs=[vmem] * len(args),
        out_specs=vmem,
        compiler_params=pltpu.CompilerParams(vmem_limit_bytes=32 << 20),
    )(*args)


# =============================== parameters & forward ======================================
def _quantize_w1(w_f32, col_split):
    """Per-output-channel symmetric int8 quantization + repack to (col_split, K, N/col_split)."""
    amax = jnp.max(jnp.abs(w_f32), axis=0)                          # (FLAT_HID,)
    scale = jnp.maximum(amax, 1e-8) / 127.0
    q = jnp.clip(jnp.round(w_f32 / scale), -127.0, 127.0).astype(jnp.int8)
    q = q.reshape(FLAT_IN, col_split, FLAT_HID // col_split).transpose(1, 0, 2)
    return q, scale.reshape(1, FLAT_HID).astype(jnp.float32)


def init_params(key):
    cfg = _chip_defaults()
    ks = iter(jax.random.split(key, 64))

    def w(shape, scale=0.02, dtype=jnp.bfloat16):
        return (scale * jax.random.normal(next(ks), shape, dtype=jnp.float32)).astype(dtype)

    def b(n):
        return jnp.zeros((1, n), jnp.float32)

    def ln_pack(n_ln):
        gb = jnp.stack([jnp.ones((Z_DIM,), jnp.float32),            # gamma
                        jnp.zeros((Z_DIM,), jnp.float32)])          # beta
        return jnp.tile(gb, (n_ln, 1))                              # rows: g,b,g,b,...

    w1_f32 = w((FLAT_IN, FLAT_HID), dtype=jnp.float32)
    w1_q, w1_s = _quantize_w1(w1_f32, cfg["col_split"])

    return {
        "emb":      jax.random.normal(next(ks), (100, Z_DIM), dtype=jnp.float32),
        # flatten MLP (first layer weight-only int8, pre-packed per chip layout)
        "flat_w1q": w1_q, "flat_w1s": w1_s,
        "flat_b1":  b(FLAT_HID),
        "flat_w2":  w((FLAT_HID, Z_DIM)),
        "flat_b2":  b(Z_DIM),
        # transformer encoder (packed QKV)
        "enc_wqkv": w((Z_DIM, 3 * Z_DIM)), "enc_bqkv": b(3 * Z_DIM),
        "enc_wo":   w((Z_DIM, Z_DIM)),     "enc_bo":   b(Z_DIM),
        "enc_w1":   w((Z_DIM, Z_DIM)),     "enc_b1":   b(Z_DIM),
        "enc_w2":   w((Z_DIM, Z_DIM)),     "enc_b2":   b(Z_DIM),
        "enc_ln":   ln_pack(3),
        # transformer decoder (self-attn v/o, cross-attn q + packed kv, FFN)
        "dec_sv":   w((Z_DIM, Z_DIM)),     "dec_sbv":  b(Z_DIM),
        "dec_so":   w((Z_DIM, Z_DIM)),     "dec_sbo":  b(Z_DIM),
        "dec_cq":   w((Z_DIM, Z_DIM)),     "dec_cbq":  b(Z_DIM),
        "dec_ckv":  w((Z_DIM, 2 * Z_DIM)), "dec_cbkv": b(2 * Z_DIM),
        "dec_co":   w((Z_DIM, Z_DIM)),     "dec_cbo":  b(Z_DIM),
        "dec_w1":   w((Z_DIM, Z_DIM)),     "dec_b1":   b(Z_DIM),
        "dec_w2":   w((Z_DIM, Z_DIM)),     "dec_b2":   b(Z_DIM),
        "dec_ln":   ln_pack(4),
        # per-lane encoders (Linear-ReLU-Linear-ReLU), stacked
        "lane_w":   w((2 * MAX_N_LANE, Z_DIM, Z_DIM)),
        "lane_b":   jnp.zeros((2 * MAX_N_LANE, Z_DIM), jnp.float32),
        # heads
        "bb_w1":    w((Z_DIM, Z_DIM)),      "bb_b1":    b(Z_DIM),
        "bb_w2":    w((Z_DIM, LATENT_LEN)), "bb_b2":    b(LATENT_LEN),
        "cp_w1":    w((Z_DIM, 128)),        "cp_b1":    b(128),
        "cp_w2":    w((128, 1)),            "cp_b2":    b(1),
    }


def autoregressive_transformer_forward(latent_codes, params):
    cfg = _chip_defaults()
    n_batch = latent_codes.shape[0]
    assert n_batch == N_BATCH
    x2d = latent_codes.reshape(n_batch, -1)                        # torch .view(n_batch, -1)
    h = flatten_fc1(x2d, params["flat_w1q"], params["flat_w1s"], params["flat_b1"],
                    tk=cfg["tk"], vmem_limit=cfg["vmem"])          # ReLU(x@W1+b1), (N, 1024)
    emb = params["emb"][:n_batch]                                  # empty_token_embedding(batch_id)
    packed = ar_decode(h, emb, params)                             # (8, 128) = [box | comp | pad]
    box2d = packed[:, :LATENT_LEN]
    comp2d = packed[:, LATENT_LEN:LATENT_LEN + 1]
    # De-interleave: row i = lane i//N_BATCH of batch i%N_BATCH.
    box = box2d.reshape(MAX_N_LANE, n_batch, LATENT_LEN).transpose(1, 0, 2)
    comp = comp2d.reshape(MAX_N_LANE, n_batch, 1).transpose(1, 0, 2)
    # Mirror the PyTorch return type: per-batch lists of (1, max_n_lane, ...) tensors.
    out_box = [box[i:i + 1] for i in range(n_batch)]
    out_comp = [comp[i:i + 1] for i in range(n_batch)]
    return out_box, out_comp


if __name__ == "__main__":
    key = jax.random.PRNGKey(0)
    pkey, xkey = jax.random.split(key)
    params = init_params(pkey)
    latent_codes = jax.random.normal(xkey, (N_BATCH, 512, 25, 5), dtype=jnp.float32)

    box_list, comp_list = autoregressive_transformer_forward(latent_codes, params)
    jax.block_until_ready((box_list, comp_list))

    assert box_list[0].shape == (1, MAX_N_LANE, LATENT_LEN)
    assert comp_list[0].shape == (1, MAX_N_LANE, 1)
    assert all(bool(jnp.all(jnp.isfinite(t))) for t in box_list + comp_list)
    print("KERNEL_OK")
</pallas_src>

<mosaic_0001>
module attributes {stable_mosaic.version = 11 : i64} {
  func.func @_flatten_fc1_kernel(%arg0: i32, %arg1: i32, %arg2: memref<2x6400xf32, #tpu.memory_space<vmem>>, %arg3: memref<1x6400x1024xi8, #tpu.memory_space<vmem>>, %arg4: memref<1x1024xf32, #tpu.memory_space<vmem>>, %arg5: memref<1x1024xf32, #tpu.memory_space<vmem>>, %arg6: memref<2x1024xf32, #tpu.memory_space<vmem>>) attributes {dimension_semantics = [#tpu.dimension_semantics<parallel>, #tpu.dimension_semantics<arbitrary>], iteration_bounds = array<i64: 1, 10>, scalar_prefetch = 0 : i64, scratch_operands = 0 : i64, tpu.core_type = #tpu.core_type<tc>, window_params = [{transform_indices = @transform_0, window_bounds = array<i64: 2, 6400>}, {transform_indices = @transform_1, window_bounds = array<i64: 1, 6400, 1024>}, {transform_indices = @transform_2, window_bounds = array<i64: 1, 1024>}, {transform_indices = @transform_3, window_bounds = array<i64: 1, 1024>}, {transform_indices = @transform_4, window_bounds = array<i64: 2, 1024>}]} {
    %c0_i32 = arith.constant 0 : i32
    %0 = arith.cmpi eq, %arg1, %c0_i32 : i32
    %1 = arith.extui %0 : i1 to i32
    %c0_i32_0 = arith.constant 0 : i32
    %2 = arith.cmpi ne, %1, %c0_i32_0 : i32
    scf.if %2 {
      %cst_10 = arith.constant 0.000000e+00 : f32
      %15 = vector.broadcast %cst_10 : f32 to vector<2x1024xf32>
      %c0_11 = arith.constant 0 : index
      %c0_12 = arith.constant 0 : index
      %16 = vector.load %arg6[%c0_11, %c0_12] : memref<2x1024xf32, #tpu.memory_space<vmem>>, vector<2x1024xf32>
      tpu.vector_store %arg6[%c0_11, %c0_12], %15 {strides = array<i32>} : memref<2x1024xf32, #tpu.memory_space<vmem>>, vector<2x1024xf32>,
    } else {
    }
    %c0 = arith.constant 0 : index
    %c0_1 = arith.constant 0 : index
    %3 = vector.load %arg6[%c0, %c0_1] : memref<2x1024xf32, #tpu.memory_space<vmem>>, vector<2x1024xf32>
    %c0_2 = arith.constant 0 : index
    %c0_3 = arith.constant 0 : index
    %4 = vector.load %arg2[%c0_2, %c0_3] : memref<2x6400xf32, #tpu.memory_space<vmem>>, vector<2x6400xf32>
    %5 = arith.truncf %4 : vector<2x6400xf32> to vector<2x6400xbf16>
    %c0_4 = arith.constant 0 : index
    %c0_5 = arith.constant 0 : index
    %c0_6 = arith.constant 0 : index
    %6 = vector.load %arg3[%c0_4, %c0_5, %c0_6] : memref<1x6400x1024xi8, #tpu.memory_space<vmem>>, vector<1x6400x1024xi8>
    %7 = vector.shape_cast %6 : vector<1x6400x1024xi8> to vector<6400x1024xi8>
    %8 = arith.sitofp %7 : vector<6400x1024xi8> to vector<6400x1024xbf16>
    %cst = arith.constant dense<0.000000e+00> : vector<2x1024xf32>
    %9 = tpu.matmul %5, %8, %cst {dimension_numbers = #tpu.dot_dimension_numbers<[1], [0], [0], [1], [0, 0, 1, 1], [], []>} : vector<2x6400xbf16>, vector<6400x1024xbf16>, vector<2x1024xf32> -> vector<2x1024xf32>
    %10 = arith.addf %3, %9 : vector<2x1024xf32>
    %c0_7 = arith.constant 0 : index
    %c0_8 = arith.constant 0 : index
    %11 = vector.load %arg6[%c0_7, %c0_8] : memref<2x1024xf32, #tpu.memory_space<vmem>>, vector<2x1024xf32>
    tpu.vector_store %arg6[%c0_7, %c0_8], %10 {strides = array<i32>} : memref<2x1024xf32, #tpu.memory_space<vmem>>, vector<2x1024xf32>,
    %c9_i32 = arith.constant 9 : i32
    %12 = arith.cmpi eq, %arg1, %c9_i32 : i32
    %13 = arith.extui %12 : i1 to i32
    %c0_i32_9 = arith.constant 0 : i32
    %14 = arith.cmpi ne, %13, %c0_i32_9 : i32
    scf.if %14 {
      %c0_10 = arith.constant 0 : index
      %c0_11 = arith.constant 0 : index
      %15 = vector.load %arg6[%c0_10, %c0_11] : memref<2x1024xf32, #tpu.memory_space<vmem>>, vector<2x1024xf32>
      %c0_12 = arith.constant 0 : index
      %c0_13 = arith.constant 0 : index
      %16 = vector.load %arg4[%c0_12, %c0_13] : memref<1x1024xf32, #tpu.memory_space<vmem>>, vector<1x1024xf32>
      %17 = vector.broadcast %16 : vector<1x1024xf32> to vector<2x1024xf32>
      %18 = arith.mulf %15, %17 : vector<2x1024xf32>
      %c0_14 = arith.constant 0 : index
      %c0_15 = arith.constant 0 : index
      %19 = vector.load %arg5[%c0_14, %c0_15] : memref<1x1024xf32, #tpu.memory_space<vmem>>, vector<1x1024xf32>
      %20 = vector.broadcast %19 : vector<1x1024xf32> to vector<2x1024xf32>
      %21 = arith.addf %18, %20 : vector<2x1024xf32>
      %cst_16 = arith.constant 0.000000e+00 : f32
      %22 = vector.broadcast %cst_16 : f32 to vector<2x1024xf32>
      %23 = arith.maximumf %21, %22 : vector<2x1024xf32>
      %c0_17 = arith.constant 0 : index
      %c0_18 = arith.constant 0 : index
      %24 = vector.load %arg6[%c0_17, %c0_18] : memref<2x1024xf32, #tpu.memory_space<vmem>>, vector<2x1024xf32>
      tpu.vector_store %arg6[%c0_17, %c0_18], %23 {strides = array<i32>} : memref<2x1024xf32, #tpu.memory_space<vmem>>, vector<2x1024xf32>,
    } else {
    }
    return
  }
  func.func @transform_0(%arg0: i32, %arg1: i32) -> (i32, i32) {
    %c0_i32 = arith.constant 0 : i32
    %c0_i32_0 = arith.constant 0 : i32
    return %c0_i32, %arg1 : i32, i32
  }
  func.func @transform_1(%arg0: i32, %arg1: i32) -> (i32, i32, i32) {
    %c0_i32 = arith.constant 0 : i32
    %c0_i32_0 = arith.constant 0 : i32
    return %arg0, %arg1, %c0_i32 : i32, i32, i32
  }
  func.func @transform_2(%arg0: i32, %arg1: i32) -> (i32, i32) {
    %c0_i32 = arith.constant 0 : i32
    %c0_i32_0 = arith.constant 0 : i32
    return %c0_i32, %arg0 : i32, i32
  }
  func.func @transform_3(%arg0: i32, %arg1: i32) -> (i32, i32) {
    %c0_i32 = arith.constant 0 : i32
    %c0_i32_0 = arith.constant 0 : i32
    return %c0_i32, %arg0 : i32, i32
  }
  func.func @transform_4(%arg0: i32, %arg1: i32) -> (i32, i32) {
    %c0_i32 = arith.constant 0 : i32
    %c0_i32_0 = arith.constant 0 : i32
    return %c0_i32, %arg0 : i32, i32
  }
}

</mosaic_0001>

<llo_original>
// kernel: tpu_custom_call.1
$region0: #{tpu_custom_call.1}
  #allocation0 [shape = 'u32[]', space=smem, size = 0x4, offset = 0x4, fixed_abs, tag = 'smem constant byte address 0x4 - core index']
  #allocation1 [shape = 'u32[144,128]{1,0:T(1,128)}', space=vmem, size = 0x12000, scoped, tag = 'internal scratch']
  %s0 = inlined_call_operand.hbm [shape: f32[2,64000], index: 0, kind: input, shape index: {}]
  %s1 = inlined_call_operand.hbm [shape: s8[1,64000,1024], index: 1, kind: input, shape index: {}]
  %s2 = inlined_call_operand.hbm [shape: f32[1,1024], index: 2, kind: input, shape index: {}]
  %s3 = inlined_call_operand.hbm [shape: f32[1,1024], index: 3, kind: input, shape index: {}]
  %s4 = inlined_call_operand.hbm [shape: f32[2,1024], index: 4, kind: output, shape index: {}]
  %s5 = sld [smem:[#allocation0]]
  $region73: #{tpu_custom_call.1} parent=0
    _
  %s7 = ssub.s32 1, %s5
  %s8 = scalar_select 0, %s7, %s5
  $region1: #{tpu_custom_call.1} parent=0
    #allocation2 [shape = 'u8[102400]{0}', space=vmem, size = 0x19000, scoped, tag = 'input window, operand 0']
    #allocation3 [shape = 's32[2]{0}', space=sflag, size = 0x8, scoped, tag = 'scoped memory for tpu_custom_call.1']
    #allocation4 [shape = 's32[2]{0}', space=sflag, size = 0x8, scoped, tag = 'scoped memory for tpu_custom_call.1']
    #allocation5 [shape = 'u8[13107200]{0}', space=vmem, size = 0xc80000, scoped, tag = 'input window, operand 1']
    #allocation6 [shape = 's32[2]{0}', space=sflag, size = 0x8, scoped, tag = 'scoped memory for tpu_custom_call.1']
    #allocation7 [shape = 'u8[4096]{0}', space=vmem, size = 0x1000, scoped, tag = 'input window, operand 2, single buffered']
    #allocation8 [shape = 'u8[4096]{0}', space=vmem, size = 0x1000, scoped, tag = 'input window, operand 3, single buffered']
    #allocation9 [shape = 's32[1]{0}', space=sflag, size = 0x4, scoped, tag = 'scoped memory for tpu_custom_call.1']
    #allocation10 [shape = 'u8[8192]{0}', space=vmem, size = 0x2000, scoped, tag = 'output window, operand 0, single buffered']
    %9 = vsyncpa [#allocation3], 0
    %s10 = scalar_lea.sflag [#allocation3], 1
    %11 = vsyncpa %s10, 0
    %12 = vsyncpa [#allocation6], 0
    %s13 = scalar_lea.sflag [#allocation6], 1
    %14 = vsyncpa %s13, 0
    %15 = vsyncpa [#allocation9], 0
    %16 = vsyncpa [#allocation4], 0
    loop: start=0, step=1, limit=12
    $region2: #{tpu_custom_call.1} parent=1 // loop_pre_header
      _
    $region3: #{tpu_custom_call.1} parent=1 // loop_header
      %s18 = sphi 0, %s22
      %p19 = scmp.ge.s32.totalorder %s18, 12
      %s25 = sphi 0, %s37
      %s26 = sphi 0, %s33
      %s27 = sphi 0, %s25
      %s28 = sphi 0, %s26
      %s29 = sphi 0, %s27
      %s30 = sphi 0, %s28
      %s40 = sphi 0, %s42
      %s43 = sphi 0, %s40
      %s44 = sphi 0, %s43
      %s60 = sphi 0, %s44
      %s68 = sphi 0, %s70
      %s71 = sphi 0, %s68
      %s72 = sphi 0, %s71
      %s88 = sphi 0, %s72
      %s94 = sphi 0, %s96
      %s97 = sphi 0, %s94
      %s98 = sphi 0, %s97
      %s114 = sphi 0, %s98
      %s120 = sphi 0, %s122
      %s123 = sphi 0, %s120
      %s124 = sphi 0, %s123
      %s140 = sphi 0, %s124
      %s146 = sphi 0, %s148
      %s149 = sphi 0, %s146
      %s150 = sphi 0, %s149
      %s166 = sphi 0, %s150
    $region4: #{tpu_custom_call.1} parent=1 // loop_header_branch
      %21 = sbr.rel (%p19) target = $region8
    $region5: #{tpu_custom_call.1} parent=1 // loop_body
      %s23 = ssub.s32 %s18, 1
      %s24 = ssub.s32 %s18, 2
      %s31 = sadd.s32 1, %s26
      %p32 = scmp.ge.s32.totalorder %s31, 10
      %s33 = scalar_select %p32, 0, %s31
      %s34 = sadd.s32 1, %s25
      %s35 = scalar_select %p32, %s34, %s25
      %p36 = scmp.ge.s32.totalorder %s35, 1
      %s37 = scalar_select %p36, 0, %s35
      %s38 = ssub.s32 %s26, %s33
      %p39 = scmp.eq.s32.totalorder %s38, 0
      %s41 = sadd.s32 %s40, 1
      %s42 = scalar_select %p39, %s40, %s41
      %p45 = pneg %p39
      %p46 = scmp.eq.s32.totalorder %s18, 9
      %p47 = por %p45, %p46
      %p48 = scmp.ne.s32.totalorder %s40, %s43
      %p49 = scmp.eq.s32.totalorder %s18, 0
      %p50 = por %p48, %p49
      %p51 = scmp.ne.s32.totalorder %s40, %s43
      %p52 = scmp.eq.s32.totalorder %s23, 9
      %p53 = por %p51, %p52
      %p54 = scmp.ne.s32.totalorder %s43, %s44
      %p55 = scmp.eq.s32.totalorder %s23, 0
      %p56 = por %p54, %p55
      %p57 = scmp.ne.s32.totalorder %s43, %s44
      %p58 = scmp.eq.s32.totalorder %s24, 9
      %p59 = por %p57, %p58
      %p61 = scmp.ne.s32.totalorder %s44, %s60
      %p62 = scmp.eq.s32.totalorder %s24, 0
      %p63 = por %p61, %p62
      %s64 = ssub.s32 %s25, %s37
      %s65 = ssub.s32 %s26, %s33
      %s66 = sor.u32 %s64, %s65
      %p67 = scmp.eq.s32.totalorder %s66, 0
      %s69 = sadd.s32 %s68, 1
      %s70 = scalar_select %p67, %s68, %s69
      %p73 = pneg %p67
      %p74 = scmp.eq.s32.totalorder %s18, 9
      %p75 = por %p73, %p74
      %p76 = scmp.ne.s32.totalorder %s68, %s71
      %p77 = scmp.eq.s32.totalorder %s18, 0
      %p78 = por %p76, %p77
      %p79 = scmp.ne.s32.totalorder %s68, %s71
      %p80 = scmp.eq.s32.totalorder %s23, 9
      %p81 = por %p79, %p80
      %p82 = scmp.ne.s32.totalorder %s71, %s72
      %p83 = scmp.eq.s32.totalorder %s23, 0
      %p84 = por %p82, %p83
      %p85 = scmp.ne.s32.totalorder %s71, %s72
      %p86 = scmp.eq.s32.totalorder %s24, 9
      %p87 = por %p85, %p86
      %p89 = scmp.ne.s32.totalorder %s72, %s88
      %p90 = scmp.eq.s32.totalorder %s24, 0
      %p91 = por %p89, %p90
      %s92 = ssub.s32 %s25, %s37
      %p93 = scmp.eq.s32.totalorder %s92, 0
      %s95 = sadd.s32 %s94, 1
      %s96 = scalar_select %p93, %s94, %s95
      %p99 = pneg %p93
      %p100 = scmp.eq.s32.totalorder %s18, 9
      %p101 = por %p99, %p100
      %p102 = scmp.ne.s32.totalorder %s94, %s97
      %p103 = scmp.eq.s32.totalorder %s18, 0
      %p104 = por %p102, %p103
      %p105 = scmp.ne.s32.totalorder %s94, %s97
      %p106 = scmp.eq.s32.totalorder %s23, 9
      %p107 = por %p105, %p106
      %p108 = scmp.ne.s32.totalorder %s97, %s98
      %p109 = scmp.eq.s32.totalorder %s23, 0
      %p110 = por %p108, %p109
      %p111 = scmp.ne.s32.totalorder %s97, %s98
      %p112 = scmp.eq.s32.totalorder %s24, 9
      %p113 = por %p111, %p112
      %p115 = scmp.ne.s32.totalorder %s98, %s114
      %p116 = scmp.eq.s32.totalorder %s24, 0
      %p117 = por %p115, %p116
      %s118 = ssub.s32 %s25, %s37
      %p119 = scmp.eq.s32.totalorder %s118, 0
      %s121 = sadd.s32 %s120, 1
      %s122 = scalar_select %p119, %s120, %s121
      %p125 = pneg %p119
      %p126 = scmp.eq.s32.totalorder %s18, 9
      %p127 = por %p125, %p126
      %p128 = scmp.ne.s32.totalorder %s120, %s123
      %p129 = scmp.eq.s32.totalorder %s18, 0
      %p130 = por %p128, %p129
      %p131 = scmp.ne.s32.totalorder %s120, %s123
      %p132 = scmp.eq.s32.totalorder %s23, 9
      %p133 = por %p131, %p132
      %p134 = scmp.ne.s32.totalorder %s123, %s124
      %p135 = scmp.eq.s32.totalorder %s23, 0
      %p136 = por %p134, %p135
      %p137 = scmp.ne.s32.totalorder %s123, %s124
      %p138 = scmp.eq.s32.totalorder %s24, 9
      %p139 = por %p137, %p138
      %p141 = scmp.ne.s32.totalorder %s124, %s140
      %p142 = scmp.eq.s32.totalorder %s24, 0
      %p143 = por %p141, %p142
      %s144 = ssub.s32 %s25, %s37
      %p145 = scmp.eq.s32.totalorder %s144, 0
      %s147 = sadd.s32 %s146, 1
      %s148 = scalar_select %p145, %s146, %s147
      %p151 = pneg %p145
      %p152 = scmp.eq.s32.totalorder %s18, 9
      %p153 = por %p151, %p152
      %p154 = scmp.ne.s32.totalorder %s146, %s149
      %p155 = scmp.eq.s32.totalorder %s18, 0
      %p156 = por %p154, %p155
      %p157 = scmp.ne.s32.totalorder %s146, %s149
      %p158 = scmp.eq.s32.totalorder %s23, 9
      %p159 = por %p157, %p158
      %p160 = scmp.ne.s32.totalorder %s149, %s150
      %p161 = scmp.eq.s32.totalorder %s23, 0
      %p162 = por %p160, %p161
      %p163 = scmp.ne.s32.totalorder %s149, %s150
      %p164 = scmp.eq.s32.totalorder %s24, 9
      %p165 = por %p163, %p164
      %p167 = scmp.ne.s32.totalorder %s150, %s166
      %p168 = scmp.eq.s32.totalorder %s24, 0
      %p169 = por %p167, %p168
      %p170 = scmp.le.s32.totalorder 1, %s18
      %p171 = scmp.lt.s32.totalorder %s18, 11
      %p172 = pnand %p170, %p171
      %p173 = pneg %p172
      // Predicated region
      $region9: #{tpu_custom_call.1} parent=5 // pred_check
        _
      $region10: #{tpu_custom_call.1} parent=5 // pred_check_branch
        %175 = sbr.rel (%p172) target = $region12
      $region11: #{tpu_custom_call.1} parent=5 // pred_region
        %s176 = ssub.s32 %s18, 1
        // Predicated region
        $region13: #{tpu_custom_call.1} parent=11 // pred_check
          %p177 = pneg %p110
        $region14: #{tpu_custom_call.1} parent=11 // pred_check_branch
          %179 = sbr.rel (%p177) target = $region16
        $region15: #{tpu_custom_call.1} parent=11 // pred_region
          %s180 = smul.u32 8, %s27
          %s182 = ssub.s32 128, 128
          %183 = vsyncadd [#allocation6], %s182
          %s184 = smul.addr %s180, 16
          %s185 = scalar_lea.hbm %s2, %s184
          %s187 = sshll.u32 [#allocation7], 4
          %s188 = int_to_ptr.vmem [resolvable:$true] %s187
          %190 = dma.hbm_to_vmem [thread:$0]  %s185, 128, %s188, [#allocation6]
        $region16: #{tpu_custom_call.1} parent=11 // pred_fallthru
          _
        // Predicated region
        $region17: #{tpu_custom_call.1} parent=11 // pred_check
          %p191 = pneg %p136
        $region18: #{tpu_custom_call.1} parent=11 // pred_check_branch
          %193 = sbr.rel (%p191) target = $region20
        $region19: #{tpu_custom_call.1} parent=11 // pred_region
          %s194 = smul.u32 8, %s27
          %s196 = ssub.s32 128, 128
          %197 = vsyncadd [#allocation9], %s196
          %s198 = smul.addr %s194, 16
          %s199 = scalar_lea.hbm %s3, %s198
          %s201 = sshll.u32 [#allocation8], 4
          %s202 = int_to_ptr.vmem [resolvable:$true] %s201
          %204 = dma.hbm_to_vmem [thread:$0]  %s199, 128, %s202, [#allocation9]
        $region20: #{tpu_custom_call.1} parent=11 // pred_fallthru
          _
      $region12: #{tpu_custom_call.1} parent=5 // pred_fallthru
        _
      %p205 = scmp.lt.s32.totalorder %s18, 10
      // Predicated region
      $region21: #{tpu_custom_call.1} parent=5 // pred_check
        %p206 = pneg %p205
      $region22: #{tpu_custom_call.1} parent=5 // pred_check_branch
        %208 = sbr.rel (%p206) target = $region24
      $region23: #{tpu_custom_call.1} parent=5 // pred_region
        // Predicated region
        $region25: #{tpu_custom_call.1} parent=23 // pred_check
          %p209 = pneg %p50
        $region26: #{tpu_custom_call.1} parent=23 // pred_check_branch
          %211 = sbr.rel (%p209) target = $region28
        $region27: #{tpu_custom_call.1} parent=23 // pred_region
          %s212 = sand.u32 %s40, 1
          %s213 = scalar_lea.sflag [#allocation3], %s212
          %s214 = sand.u32 %s40, 1
          %s215 = smul.addr %s214, 100
          %s216 = scalar_lea.vmem [#allocation2], %s215
          %s217 = smul.u32 50, %s26
          %s219 = ssub.s32 1600, 1600
          %220 = vsyncadd %s213, %s219
          %s221 = smul.addr %s217, 32
          %s222 = scalar_lea.hbm %s0, %s221
          %s224 = sshll.u32 %s216, 4
          %s225 = int_to_ptr.vmem [resolvable:$true] %s224
          %227 = dma.hbm_to_vmem [thread:$0]  %s222, 1600, %s225, %s213
        $region28: #{tpu_custom_call.1} parent=23 // pred_fallthru
          _
        // Predicated region
        $region29: #{tpu_custom_call.1} parent=23 // pred_check
          %p228 = pneg %p78
        $region30: #{tpu_custom_call.1} parent=23 // pred_check_branch
          %230 = sbr.rel (%p228) target = $region32
        $region31: #{tpu_custom_call.1} parent=23 // pred_region
          %s231 = sand.u32 %s18, 1
          %s232 = scalar_lea.sflag [#allocation6], %s231
          %s233 = sand.u32 %s68, 1
          %s234 = smul.addr %s233, 12800
          %s235 = scalar_lea.vmem [#allocation5], %s234
          %s236 = smul.u32 200, %s26
          %s238 = ssub.s32 204800, 204800
          %239 = vsyncadd %s232, %s238
          %s240 = smul.addr %s236, 8
          %s241 = smul.addr %s25, 16000
          %s242 = sadd.s32 %s240, %s241
          %s243 = smul.addr %s242, 128
          %s244 = scalar_lea.hbm %s1, %s243
          %s245 = sshll.u32 %s235, 4
          %s246 = int_to_ptr.vmem [resolvable:$true] %s245
          %251 = dma.hbm_to_vmem [thread:$0]  %s244, 204800, %s246, %s232, 1024, 1024, 64
        $region32: #{tpu_custom_call.1} parent=23 // pred_fallthru
          _
      $region24: #{tpu_custom_call.1} parent=5 // pred_fallthru
        _
      %p252 = scmp.le.s32.totalorder 1, %s18
      %p253 = scmp.lt.s32.totalorder %s18, 11
      %p254 = pnand %p252, %p253
      %p255 = pneg %p254
      // Predicated region
      $region33: #{tpu_custom_call.1} parent=5 // pred_check
        _
      $region34: #{tpu_custom_call.1} parent=5 // pred_check_branch
        %257 = sbr.rel (%p254) target = $region36
      $region35: #{tpu_custom_call.1} parent=5 // pred_region
        %s258 = ssub.s32 %s18, 1
        %s259 = sand.u32 %s43, 1
        %s260 = scalar_lea.sflag [#allocation3], %s259
        %s261 = sand.u32 %s43, 1
        %s262 = smul.addr %s261, 100
        %s263 = scalar_lea.vmem [#allocation2], %s262
        // Predicated region
        $region37: #{tpu_custom_call.1} parent=35 // pred_check
          %p264 = pneg %p56
        $region38: #{tpu_custom_call.1} parent=35 // pred_check_branch
          %266 = sbr.rel (%p264) target = $region40
        $region39: #{tpu_custom_call.1} parent=35 // pred_region
          %267 = dma.done %s260, 1600
        $region40: #{tpu_custom_call.1} parent=35 // pred_fallthru
          _
        %s268 = sand.u32 %s23, 1
        %s269 = scalar_lea.sflag [#allocation6], %s268
        %s270 = sand.u32 %s71, 1
        %s271 = smul.addr %s270, 12800
        %s272 = scalar_lea.vmem [#allocation5], %s271
        // Predicated region
        $region41: #{tpu_custom_call.1} parent=35 // pred_check
          %p273 = pneg %p84
        $region42: #{tpu_custom_call.1} parent=35 // pred_check_branch
          %275 = sbr.rel (%p273) target = $region44
        $region43: #{tpu_custom_call.1} parent=35 // pred_region
          %276 = dma.done %s269, 204800
        $region44: #{tpu_custom_call.1} parent=35 // pred_fallthru
          _
        // Predicated region
        $region45: #{tpu_custom_call.1} parent=35 // pred_check
          %p277 = pneg %p110
        $region46: #{tpu_custom_call.1} parent=35 // pred_check_branch
          %279 = sbr.rel (%p277) target = $region48
        $region47: #{tpu_custom_call.1} parent=35 // pred_region
          %280 = dma.done [#allocation6], 128
        $region48: #{tpu_custom_call.1} parent=35 // pred_fallthru
          _
        // Predicated region
        $region49: #{tpu_custom_call.1} parent=35 // pred_check
          %p281 = pneg %p136
        $region50: #{tpu_custom_call.1} parent=35 // pred_check_branch
          %283 = sbr.rel (%p281) target = $region52
        $region51: #{tpu_custom_call.1} parent=35 // pred_region
          %284 = dma.done [#allocation9], 128
        $region52: #{tpu_custom_call.1} parent=35 // pred_fallthru
          _
        %s285 = sand.u32 %s43, 1
        %s286 = scalar_lea.sflag [#allocation3], %s285
        %s287 = sand.u32 %s43, 1
        %s288 = smul.addr %s287, 100
        %s289 = scalar_lea.vmem [#allocation2], %s288
        %p290 = pneg %p56
        %p291 = pneg %p53
        %s292 = sand.u32 %s23, 1
        %s293 = scalar_lea.sflag [#allocation6], %s292
        %s294 = sand.u32 %s71, 1
        %s295 = smul.addr %s294, 12800
        %s296 = scalar_lea.vmem [#allocation5], %s295
        %p297 = pneg %p84
        %p298 = pneg %p81
        %p299 = pneg %p110
        %p300 = pneg %p107
        %p301 = pneg %p136
        %p302 = pneg %p133
        %p303 = pneg %p162
        %p304 = pneg %p159
        %s305 = smul.u32 50, %s28
        %s306 = smul.u32 200, %s28
        %s307 = smul.u32 8, %s27
        %s308 = smul.u32 8, %s27
        %s309 = smul.u32 8, %s27
        %p310 = scmp.eq.s32.totalorder %s28, 0
        // Predicated region
        $region53: #{tpu_custom_call.1} parent=35 // pred_check
          %p311 = pneg %p310
        $region54: #{tpu_custom_call.1} parent=35 // pred_check_branch
          %313 = sbr.rel (%p311) target = $region56
        $region55: #{tpu_custom_call.1} parent=35 // pred_region
          %314 = vst [vmem:[#allocation10] sm:$0xff] 0.0
          %315 = vst [vmem:[#allocation10 + $0x8] sm:$0xff] 0.0
        $region56: #{tpu_custom_call.1} parent=35 // pred_fallthru
          _
        %v316 = vld [vmem:[#allocation10] sm:$0xff]
        %v317 = vld [vmem:[#allocation10 + $0x8] sm:$0xff]
        %v318 = vld [vmem:[%s263] sm:$0xff]
        %v319 = vld [vmem:[%s263 + $0x8] sm:$0xff]
        %v320 = vld [vmem:[%s263 + $0x10] sm:$0xff]
        %v321 = vld [vmem:[%s263 + $0x18] sm:$0xff]
        %v322 = vld [vmem:[%s263 + $0x20] sm:$0xff]
        %v323 = vld [vmem:[%s263 + $0x28] sm:$0xff]
        %v324 = vld [vmem:[%s263 + $0x30] sm:$0xff]
        %v325 = vld [vmem:[%s263 + $0x38] sm:$0xff]
        %v326 = vld [vmem:[%s263 + $0x40] sm:$0xff]
        %v327 = vld [vmem:[%s263 + $0x48] sm:$0xff]
        %v328 = vld [vmem:[%s263 + $0x50] sm:$0xff]
        %v329 = vld [vmem:[%s263 + $0x58] sm:$0xff]
        %v330 = vld [vmem:[%s263 + $0x60] sm:$0xf]
        %v344 = vcombine.high %v318, %v318
        %v346 = vunpack.c.l.s4 1983009808
        %v347 = vunpack.c.0.s8 %v346
        %v348 = vlaneseq
        %v349 = vshrl.u32 %v348, 7
        %v350 = vsub.s32 %v347, %v349
        %v351 = vrot.slane %v318, %v350
        %v353 = vunpack.c.l.s4 1983009808
        %v354 = vunpack.c.0.s8 %v353
        %v355 = vlaneseq
        %v356 = vshrl.u32 %v355, 7
        %v357 = vsub.s32 %v354, %v356
        %v358 = vrot.slane %v344, %v357
        %v359 = vcombine.high %v351, %v351
        %v360 = vcombine.high %v358, %v358
        %v361 = vcombine.high %v319, %v319
        %v363 = vunpack.c.l.s4 1983009808
        %v364 = vunpack.c.0.s8 %v363
        %v365 = vlaneseq
        %v366 = vshrl.u32 %v365, 7
        %v367 = vsub.s32 %v364, %v366
        %v368 = vrot.slane %v319, %v367
        %v370 = vunpack.c.l.s4 1983009808
        %v371 = vunpack.c.0.s8 %v370
        %v372 = vlaneseq
        %v373 = vshrl.u32 %v372, 7
        %v374 = vsub.s32 %v371, %v373
        %v375 = vrot.slane %v361, %v374
        %v376 = vcombine.high %v368, %v368
        %v377 = vcombine.high %v375, %v375
        %v378 = vcombine.high %v320, %v320
        %v380 = vunpack.c.l.s4 1983009808
        %v381 = vunpack.c.0.s8 %v380
        %v382 = vlaneseq
        %v383 = vshrl.u32 %v382, 7
        %v384 = vsub.s32 %v381, %v383
        %v385 = vrot.slane %v320, %v384
        %v387 = vunpack.c.l.s4 1983009808
        %v388 = vunpack.c.0.s8 %v387
        %v389 = vlaneseq
        %v390 = vshrl.u32 %v389, 7
        %v391 = vsub.s32 %v388, %v390
        %v392 = vrot.slane %v378, %v391
        %v393 = vcombine.high %v385, %v385
        %v394 = vcombine.high %v392, %v392
        %v395 = vcombine.high %v321, %v321
        %v397 = vunpack.c.l.s4 1983009808
        %v398 = vunpack.c.0.s8 %v397
        %v399 = vlaneseq
        %v400 = vshrl.u32 %v399, 7
        %v401 = vsub.s32 %v398, %v400
        %v402 = vrot.slane %v321, %v401
        %v404 = vunpack.c.l.s4 1983009808
        %v405 = vunpack.c.0.s8 %v404
        %v406 = vlaneseq
        %v407 = vshrl.u32 %v406, 7
        %v408 = vsub.s32 %v405, %v407
        %v409 = vrot.slane %v395, %v408
        %v410 = vcombine.high %v402, %v402
        %v411 = vcombine.high %v409, %v409
        %v412 = vcombine.high %v322, %v322
        %v414 = vunpack.c.l.s4 1983009808
        %v415 = vunpack.c.0.s8 %v414
        %v416 = vlaneseq
        %v417 = vshrl.u32 %v416, 7
        %v418 = vsub.s32 %v415, %v417
        %v419 = vrot.slane %v322, %v418
        %v421 = vunpack.c.l.s4 1983009808
        %v422 = vunpack.c.0.s8 %v421
        %v423 = vlaneseq
        %v424 = vshrl.u32 %v423, 7
        %v425 = vsub.s32 %v422, %v424
        %v426 = vrot.slane %v412, %v425
        %v427 = vcombine.high %v419, %v419
        %v428 = vcombine.high %v426, %v426
        %v429 = vcombine.high %v323, %v323
        %v431 = vunpack.c.l.s4 1983009808
        %v432 = vunpack.c.0.s8 %v431
        %v433 = vlaneseq
        %v434 = vshrl.u32 %v433, 7
        %v435 = vsub.s32 %v432, %v434
        %v436 = vrot.slane %v323, %v435
        %v438 = vunpack.c.l.s4 1983009808
        %v439 = vunpack.c.0.s8 %v438
        %v440 = vlaneseq
        %v441 = vshrl.u32 %v440, 7
        %v442 = vsub.s32 %v439, %v441
        %v443 = vrot.slane %v429, %v442
        %v444 = vcombine.high %v436, %v436
        %v445 = vcombine.high %v443, %v443
        %v446 = vcombine.high %v324, %v324
        %v448 = vunpack.c.l.s4 1983009808
        %v449 = vunpack.c.0.s8 %v448
        %v450 = vlaneseq
        %v451 = vshrl.u32 %v450, 7
        %v452 = vsub.s32 %v449, %v451
        %v453 = vrot.slane %v324, %v452
        %v455 = vunpack.c.l.s4 1983009808
        %v456 = vunpack.c.0.s8 %v455
        %v457 = vlaneseq
        %v458 = vshrl.u32 %v457, 7
        %v459 = vsub.s32 %v456, %v458
        %v460 = vrot.slane %v446, %v459
        %v461 = vcombine.high %v453, %v453
        %v462 = vcombine.high %v460, %v460
        %v463 = vcombine.high %v325, %v325
        %v465 = vunpack.c.l.s4 1983009808
        %v466 = vunpack.c.0.s8 %v465
        %v467 = vlaneseq
        %v468 = vshrl.u32 %v467, 7
        %v469 = vsub.s32 %v466, %v468
        %v470 = vrot.slane %v325, %v469
        %v472 = vunpack.c.l.s4 1983009808
        %v473 = vunpack.c.0.s8 %v472
        %v474 = vlaneseq
        %v475 = vshrl.u32 %v474, 7
        %v476 = vsub.s32 %v473, %v475
        %v477 = vrot.slane %v463, %v476
        %v478 = vcombine.high %v470, %v470
        %v479 = vcombine.high %v477, %v477
        %v480 = vcombine.high %v326, %v326
        %v482 = vunpack.c.l.s4 1983009808
        %v483 = vunpack.c.0.s8 %v482
        %v484 = vlaneseq
        %v485 = vshrl.u32 %v484, 7
        %v486 = vsub.s32 %v483, %v485
        %v487 = vrot.slane %v326, %v486
        %v489 = vunpack.c.l.s4 1983009808
        %v490 = vunpack.c.0.s8 %v489
        %v491 = vlaneseq
        %v492 = vshrl.u32 %v491, 7
        %v493 = vsub.s32 %v490, %v492
        %v494 = vrot.slane %v480, %v493
        %v495 = vcombine.high %v487, %v487
        %v496 = vcombine.high %v494, %v494
        %v497 = vcombine.high %v327, %v327
        %v499 = vunpack.c.l.s4 1983009808
        %v500 = vunpack.c.0.s8 %v499
        %v501 = vlaneseq
        %v502 = vshrl.u32 %v501, 7
        %v503 = vsub.s32 %v500, %v502
        %v504 = vrot.slane %v327, %v503
        %v506 = vunpack.c.l.s4 1983009808
        %v507 = vunpack.c.0.s8 %v506
        %v508 = vlaneseq
        %v509 = vshrl.u32 %v508, 7
        %v510 = vsub.s32 %v507, %v509
        %v511 = vrot.slane %v497, %v510
        %v512 = vcombine.high %v504, %v504
        %v513 = vcombine.high %v511, %v511
        %v514 = vcombine.high %v328, %v328
        %v516 = vunpack.c.l.s4 1983009808
        %v517 = vunpack.c.0.s8 %v516
        %v518 = vlaneseq
        %v519 = vshrl.u32 %v518, 7
        %v520 = vsub.s32 %v517, %v519
        %v521 = vrot.slane %v328, %v520
        %v523 = vunpack.c.l.s4 1983009808
        %v524 = vunpack.c.0.s8 %v523
        %v525 = vlaneseq
        %v526 = vshrl.u32 %v525, 7
        %v527 = vsub.s32 %v524, %v526
        %v528 = vrot.slane %v514, %v527
        %v529 = vcombine.high %v521, %v521
        %v530 = vcombine.high %v528, %v528
        %v531 = vcombine.high %v329, %v329
        %v533 = vunpack.c.l.s4 1983009808
        %v534 = vunpack.c.0.s8 %v533
        %v535 = vlaneseq
        %v536 = vshrl.u32 %v535, 7
        %v537 = vsub.s32 %v534, %v536
        %v538 = vrot.slane %v329, %v537
        %v540 = vunpack.c.l.s4 1983009808
        %v541 = vunpack.c.0.s8 %v540
        %v542 = vlaneseq
        %v543 = vshrl.u32 %v542, 7
        %v544 = vsub.s32 %v541, %v543
        %v545 = vrot.slane %v531, %v544
        %v546 = vcombine.high %v538, %v538
        %v547 = vcombine.high %v545, %v545
        %v549 = vunpack.c.l.s4 1983009808
        %v550 = vunpack.c.0.s8 %v549
        %v551 = vlaneseq
        %v552 = vshrl.u32 %v551, 7
        %v553 = vsub.s32 %v550, %v552
        %v554 = vrot.slane %v330, %v553
        %v555 = vcombine.high %v554, %v554
        %v606 = vpack.c.bf16 %v351, %v351
        %v607 = vpack.c.bf16 %v359, %v359
        %v608 = vpack.c.bf16 %v358, %v358
        %v609 = vpack.c.bf16 %v360, %v360
        %v610 = vpack.c.bf16 %v368, %v368
        %v611 = vpack.c.bf16 %v376, %v376
        %v612 = vpack.c.bf16 %v375, %v375
        %v613 = vpack.c.bf16 %v377, %v377
        %v614 = vpack.c.bf16 %v385, %v385
        %v615 = vpack.c.bf16 %v393, %v393
        %v616 = vpack.c.bf16 %v392, %v392
        %v617 = vpack.c.bf16 %v394, %v394
        %v618 = vpack.c.bf16 %v402, %v402
        %v619 = vpack.c.bf16 %v410, %v410
        %v620 = vpack.c.bf16 %v409, %v409
        %v621 = vpack.c.bf16 %v411, %v411
        %v622 = vpack.c.bf16 %v419, %v419
        %v623 = vpack.c.bf16 %v427, %v427
        %v624 = vpack.c.bf16 %v426, %v426
        %v625 = vpack.c.bf16 %v428, %v428
        %v626 = vpack.c.bf16 %v436, %v436
        %v627 = vpack.c.bf16 %v444, %v444
        %v628 = vpack.c.bf16 %v443, %v443
        %v629 = vpack.c.bf16 %v445, %v445
        %v630 = vpack.c.bf16 %v453, %v453
        %v631 = vpack.c.bf16 %v461, %v461
        %v632 = vpack.c.bf16 %v460, %v460
        %v633 = vpack.c.bf16 %v462, %v462
        %v634 = vpack.c.bf16 %v470, %v470
        %v635 = vpack.c.bf16 %v478, %v478
        %v636 = vpack.c.bf16 %v477, %v477
        %v637 = vpack.c.bf16 %v479, %v479
        %v638 = vpack.c.bf16 %v487, %v487
        %v639 = vpack.c.bf16 %v495, %v495
        %v640 = vpack.c.bf16 %v494, %v494
        %v641 = vpack.c.bf16 %v496, %v496
        %v642 = vpack.c.bf16 %v504, %v504
        %v643 = vpack.c.bf16 %v512, %v512
        %v644 = vpack.c.bf16 %v511, %v511
        %v645 = vpack.c.bf16 %v513, %v513
        %v646 = vpack.c.bf16 %v521, %v521
        %v647 = vpack.c.bf16 %v529, %v529
        %v648 = vpack.c.bf16 %v528, %v528
        %v649 = vpack.c.bf16 %v530, %v530
        %v650 = vpack.c.bf16 %v538, %v538
        %v651 = vpack.c.bf16 %v546, %v546
        %v652 = vpack.c.bf16 %v545, %v545
        %v653 = vpack.c.bf16 %v547, %v547
        %v654 = vpack.c.bf16 %v554, %v554
        %v655 = vpack.c.bf16 %v555, %v555
        %v656 = vld [vmem:[%s272] sm:$0xff]
        %v657 = vld [vmem:[%s272 + $0x8] sm:$0xff]
        %v658 = vld [vmem:[%s272 + $0x10] sm:$0xff]
        %v659 = vld [vmem:[%s272 + $0x18] sm:$0xff]
        %v660 = vld [vmem:[%s272 + $0x20] sm:$0xff]
        %v661 = vld [vmem:[%s272 + $0x28] sm:$0xff]
        %v662 = vld [vmem:[%s272 + $0x30] sm:$0xff]
        %v663 = vld [vmem:[%s272 + $0x38] sm:$0xff]
        %v664 = vld [vmem:[%s272 + $0x40] sm:$0xff]
        %v665 = vld [vmem:[%s272 + $0x48] sm:$0xff]
        %v666 = vld [vmem:[%s272 + $0x50] sm:$0xff]
        %v667 = vld [vmem:[%s272 + $0x58] sm:$0xff]
        %v668 = vld [vmem:[%s272 + $0x60] sm:$0xff]
        %v669 = vld [vmem:[%s272 + $0x68] sm:$0xff]
        %v670 = vld [vmem:[%s272 + $0x70] sm:$0xff]
        %v671 = vld [vmem:[%s272 + $0x78] sm:$0xff]
        %v672 = vld [vmem:[%s272 + $0x80] sm:$0xff]
        %v673 = vld [vmem:[%s272 + $0x88] sm:$0xff]
        %v674 = vld [vmem:[%s272 + $0x90] sm:$0xff]
        %v675 = vld [vmem:[%s272 + $0x98] sm:$0xff]
        %v676 = vld [vmem:[%s272 + $0xa0] sm:$0xff]
        %v677 = vld [vmem:[%s272 + $0xa8] sm:$0xff]
        %v678 = vld [vmem:[%s272 + $0xb0] sm:$0xff]
        %v679 = vld [vmem:[%s272 + $0xb8] sm:$0xff]
        %v680 = vld [vmem:[%s272 + $0xc0] sm:$0xff]
        %v681 = vld [vmem:[%s272 + $0xc8] sm:$0xff]
        %v682 = vld [vmem:[%s272 + $0xd0] sm:$0xff]
        %v683 = vld [vmem:[%s272 + $0xd8] sm:$0xff]
        %v684 = vld [vmem:[%s272 + $0xe0] sm:$0xff]
        %v685 = vld [vmem:[%s272 + $0xe8] sm:$0xff]
        %v686 = vld [vmem:[%s272 + $0xf0] sm:$0xff]
        %v687 = vld [vmem:[%s272 + $0xf8] sm:$0xff]
        %v688 = vld [vmem:[%s272 + $0x100] sm:$0xff]
        %v689 = vld [vmem:[%s272 + $0x108] sm:$0xff]
        %v690 = vld [vmem:[%s272 + $0x110] sm:$0xff]
        %v691 = vld [vmem:[%s272 + $0x118] sm:$0xff]
        %v692 = vld [vmem:[%s272 + $0x120] sm:$0xff]
        %v693 = vld [vmem:[%s272 + $0x128] sm:$0xff]
        %v694 = vld [vmem:[%s272 + $0x130] sm:$0xff]
        %v695 = vld [vmem:[%s272 + $0x138] sm:$0xff]
        %v696 = vld [vmem:[%s272 + $0x140] sm:$0xff]
        %v697 = vld [vmem:[%s272 + $0x148] sm:$0xff]
        %v698 = vld [vmem:[%s272 + $0x150] sm:$0xff]
        %v699 = vld [vmem:[%s272 + $0x158] sm:$0xff]
        %v700 = vld [vmem:[%s272 + $0x160] sm:$0xff]
        %v701 = vld [vmem:[%s272 + $0x168] sm:$0xff]
        %v702 = vld [vmem:[%s272 + $0x170] sm:$0xff]
        %v703 = vld [vmem:[%s272 + $0x178] sm:$0xff]
        %v704 = vld [vmem:[%s272 + $0x180] sm:$0xff]
        %v705 = vld [vmem:[%s272 + $0x188] sm:$0xff]
        %v706 = vld [vmem:[%s272 + $0x190] sm:$0xff]
        %v707 = vld [vmem:[%s272 + $0x198] sm:$0xff]
        %v708 = vld [vmem:[%s272 + $0x1a0] sm:$0xff]
        %v709 = vld [vmem:[%s272 + $0x1a8] sm:$0xff]
        %v710 = vld [vmem:[%s272 + $0x1b0] sm:$0xff]
        %v711 = vld [vmem:[%s272 + $0x1b8] sm:$0xff]
        %v712 = vld [vmem:[%s272 + $0x1c0] sm:$0xff]
        %v713 = vld [vmem:[%s272 + $0x1c8] sm:$0xff]
        %v714 = vld [vmem:[%s272 + $0x1d0] sm:$0xff]
        %v715 = vld [vmem:[%s272 + $0x1d8] sm:$0xff]
        %v716 = vld [vmem:[%s272 + $0x1e0] sm:$0xff]
        %v717 = vld [vmem:[%s272 + $0x1e8] sm:$0xff]
        %v718 = vld [vmem:[%s272 + $0x1f0] sm:$0xff]
        %v719 = vld [vmem:[%s272 + $0x1f8] sm:$0xff]
        %v720 = vld [vmem:[%s272 + $0x200] sm:$0xff]
        %v721 = vld [vmem:[%s272 + $0x208] sm:$0xff]
        %v722 = vld [vmem:[%s272 + $0x210] sm:$0xff]
        %v723 = vld [vmem:[%s272 + $0x218] sm:$0xff]
        %v724 = vld [vmem:[%s272 + $0x220] sm:$0xff]
        %v725 = vld [vmem:[%s272 + $0x228] sm:$0xff]
        %v726 = vld [vmem:[%s272 + $0x230] sm:$0xff]
        %v727 = vld [vmem:[%s272 + $0x238] sm:$0xff]
        %v728 = vld [vmem:[%s272 + $0x240] sm:$0xff]
        %v729 = vld [vmem:[%s272 + $0x248] sm:$0xff]
        %v730 = vld [vmem:[%s272 + $0x250] sm:$0xff]
        %v731 = vld [vmem:[%s272 + $0x258] sm:$0xff]
        %v732 = vld [vmem:[%s272 + $0x260] sm:$0xff]
        %v733 = vld [vmem:[%s272 + $0x268] sm:$0xff]
        %v734 = vld [vmem:[%s272 + $0x270] sm:$0xff]
        %v735 = vld [vmem:[%s272 + $0x278] sm:$0xff]
        %v736 = vld [vmem:[%s272 + $0x280] sm:$0xff]
        %v737 = vld [vmem:[%s272 + $0x288] sm:$0xff]
        %v738 = vld [vmem:[%s272 + $0x290] sm:$0xff]
        %v739 = vld [vmem:[%s272 + $0x298] sm:$0xff]
        %v740 = vld [vmem:[%s272 + $0x2a0] sm:$0xff]
        %v741 = vld [vmem:[%s272 + $0x2a8] sm:$0xff]
        %v742 = vld [vmem:[%s272 + $0x2b0] sm:$0xff]
        %v743 = vld [vmem:[%s272 + $0x2b8] sm:$0xff]
        %v744 = vld [vmem:[%s272 + $0x2c0] sm:$0xff]
        %v745 = vld [vmem:[%s272 + $0x2c8] sm:$0xff]
        %v746 = vld [vmem:[%s272 + $0x2d0] sm:$0xff]
        %v747 = vld [vmem:[%s272 + $0x2d8] sm:$0xff]
        %v748 = vld [vmem:[%s272 + $0x2e0] sm:$0xff]
        %v749 = vld [vmem:[%s272 + $0x2e8] sm:$0xff]
        %v750 = vld [vmem:[%s272 + $0x2f0] sm:$0xff]
        %v751 = vld [vmem:[%s272 + $0x2f8] sm:$0xff]
        %v752 = vld [vmem:[%s272 + $0x300] sm:$0xff]
        %v753 = vld [vmem:[%s272 + $0x308] sm:$0xff]
        %v754 = vld [vmem:[%s272 + $0x310] sm:$0xff]
        %v755 = vld [vmem:[%s272 + $0x318] sm:$0xff]
        %v756 = vld [vmem:[%s272 + $0x320] sm:$0xff]
        %v757 = vld [vmem:[%s272 + $0x328] sm:$0xff]
        %v758 = vld [vmem:[%s272 + $0x330] sm:$0xff]
        %v759 = vld [vmem:[%s272 + $0x338] sm:$0xff]
        %v760 = vld [vmem:[%s272 + $0x340] sm:$0xff]
        %v761 = vld [vmem:[%s272 + $0x348] sm:$0xff]
        %v762 = vld [vmem:[%s272 + $0x350] sm:$0xff]
        %v763 = vld [vmem:[%s272 + $0x358] sm:$0xff]
        %v764 = vld [vmem:[%s272 + $0x360] sm:$0xff]
        %v765 = vld [vmem:[%s272 + $0x368] sm:$0xff]
        %v766 = vld [vmem:[%s272 + $0x370] sm:$0xff]
        %v767 = vld [vmem:[%s272 + $0x378] sm:$0xff]
        %v768 = vld [vmem:[%s272 + $0x380] sm:$0xff]
        %v769 = vld [vmem:[%s272 + $0x388] sm:$0xff]
        %v770 = vld [vmem:[%s272 + $0x390] sm:$0xff]
        %v771 = vld [vmem:[%s272 + $0x398] sm:$0xff]
        %v772 = vld [vmem:[%s272 + $0x3a0] sm:$0xff]
        %v773 = vld [vmem:[%s272 + $0x3a8] sm:$0xff]
        %v774 = vld [vmem:[%s272 + $0x3b0] sm:$0xff]
        %v775 = vld [vmem:[%s272 + $0x3b8] sm:$0xff]
        %v776 = vld [vmem:[%s272 + $0x3c0] sm:$0xff]
        %v777 = vld [vmem:[%s272 + $0x3c8] sm:$0xff]
        %v778 = vld [vmem:[%s272 + $0x3d0] sm:$0xff]
        %v779 = vld [vmem:[%s272 + $0x3d8] sm:$0xff]
        %v780 = vld [vmem:[%s272 + $0x3e0] sm:$0xff]
        %v781 = vld [vmem:[%s272 + $0x3e8] sm:$0xff]
        %v782 = vld [vmem:[%s272 + $0x3f0] sm:$0xff]
        %v783 = vld [vmem:[%s272 + $0x3f8] sm:$0xff]
        %v784 = vld [vmem:[%s272 + $0x400] sm:$0xff]
        %v785 = vld [vmem:[%s272 + $0x408] sm:$0xff]
        %v786 = vld [vmem:[%s272 + $0x410] sm:$0xff]
        %v787 = vld [vmem:[%s272 + $0x418] sm:$0xff]
        %v788 = vld [vmem:[%s272 + $0x420] sm:$0xff]
        %v789 = vld [vmem:[%s272 + $0x428] sm:$0xff]
        %v790 = vld [vmem:[%s272 + $0x430] sm:$0xff]
        %v791 = vld [vmem:[%s272 + $0x438] sm:$0xff]
        %v792 = vld [vmem:[%s272 + $0x440] sm:$0xff]
        %v793 = vld [vmem:[%s272 + $0x448] sm:$0xff]
        %v794 = vld [vmem:[%s272 + $0x450] sm:$0xff]
        %v795 = vld [vmem:[%s272 + $0x458] sm:$0xff]
        %v796 = vld [vmem:[%s272 + $0x460] sm:$0xff]
        %v797 = vld [vmem:[%s272 + $0x468] sm:$0xff]
        %v798 = vld [vmem:[%s272 + $0x470] sm:$0xff]
        %v799 = vld [vmem:[%s272 + $0x478] sm:$0xff]
        %v800 = vld [vmem:[%s272 + $0x480] sm:$0xff]
        %v801 = vld [vmem:[%s272 + $0x488] sm:$0xff]
        %v802 = vld [vmem:[%s272 + $0x490] sm:$0xff]
        %v803 = vld [vmem:[%s272 + $0x498] sm:$0xff]
        %v804 = vld [vmem:[%s272 + $0x4a0] sm:$0xff]
        %v805 = vld [vmem:[%s272 + $0x4a8] sm:$0xff]
        %v806 = vld [vmem:[%s272 + $0x4b0] sm:$0xff]
        %v807 = vld [vmem:[%s272 + $0x4b8] sm:$0xff]
        %v808 = vld [vmem:[%s272 + $0x4c0] sm:$0xff]
        %v809 = vld [vmem:[%s272 + $0x4c8] sm:$0xff]
        %v810 = vld [vmem:[%s272 + $0x4d0] sm:$0xff]
        %v811 = vld [vmem:[%s272 + $0x4d8] sm:$0xff]
        %v812 = vld [vmem:[%s272 + $0x4e0] sm:$0xff]
        %v813 = vld [vmem:[%s272 + $0x4e8] sm:$0xff]
        %v814 = vld [vmem:[%s272 + $0x4f0] sm:$0xff]
        %v815 = vld [vmem:[%s272 + $0x4f8] sm:$0xff]
        %v816 = vld [vmem:[%s272 + $0x500] sm:$0xff]
        %v817 = vld [vmem:[%s272 + $0x508] sm:$0xff]
        %v818 = vld [vmem:[%s272 + $0x510] sm:$0xff]
        %v819 = vld [vmem:[%s272 + $0x518] sm:$0xff]
        %v820 = vld [vmem:[%s272 + $0x520] sm:$0xff]
        %v821 = vld [vmem:[%s272 + $0x528] sm:$0xff]
        %v822 = vld [vmem:[%s272 + $0x530] sm:$0xff]
        %v823 = vld [vmem:[%s272 + $0x538] sm:$0xff]
        %v824 = vld [vmem:[%s272 + $0x540] sm:$0xff]
        %v825 = vld [vmem:[%s272 + $0x548] sm:$0xff]
        %v826 = vld [vmem:[%s272 + $0x550] sm:$0xff]
        %v827 = vld [vmem:[%s272 + $0x558] sm:$0xff]
        %v828 = vld [vmem:[%s272 + $0x560] sm:$0xff]
        %v829 = vld [vmem:[%s272 + $0x568] sm:$0xff]
        %v830 = vld [vmem:[%s272 + $0x570] sm:$0xff]
        %v831 = vld [vmem:[%s272 + $0x578] sm:$0xff]
        %v832 = vld [vmem:[%s272 + $0x580] sm:$0xff]
        %v833 = vld [vmem:[%s272 + $0x588] sm:$0xff]
        %v834 = vld [vmem:[%s272 + $0x590] sm:$0xff]
        %v835 = vld [vmem:[%s272 + $0x598] sm:$0xff]
        %v836 = vld [vmem:[%s272 + $0x5a0] sm:$0xff]
        %v837 = vld [vmem:[%s272 + $0x5a8] sm:$0xff]
        %v838 = vld [vmem:[%s272 + $0x5b0] sm:$0xff]
        %v839 = vld [vmem:[%s272 + $0x5b8] sm:$0xff]
        %v840 = vld [vmem:[%s272 + $0x5c0] sm:$0xff]
        %v841 = vld [vmem:[%s272 + $0x5c8] sm:$0xff]
        %v842 = vld [vmem:[%s272 + $0x5d0] sm:$0xff]
        %v843 = vld [vmem:[%s272 + $0x5d8] sm:$0xff]
        %v844 = vld [vmem:[%s272 + $0x5e0] sm:$0xff]
        %v845 = vld [vmem:[%s272 + $0x5e8] sm:$0xff]
        %v846 = vld [vmem:[%s272 + $0x5f0] sm:$0xff]
        %v847 = vld [vmem:[%s272 + $0x5f8] sm:$0xff]
        %v848 = vld [vmem:[%s272 + $0x600] sm:$0xff]
        %v849 = vld [vmem:[%s272 + $0x608] sm:$0xff]
        %v850 = vld [vmem:[%s272 + $0x610] sm:$0xff]
        %v851 = vld [vmem:[%s272 + $0x618] sm:$0xff]
        %v852 = vld [vmem:[%s272 + $0x620] sm:$0xff]
        %v853 = vld [vmem:[%s272 + $0x628] sm:$0xff]
        %v854 = vld [vmem:[%s272 + $0x630] sm:$0xff]
        %v855 = vld [vmem:[%s272 + $0x638] sm:$0xff]
        %v856 = vld [vmem:[%s272 + $0x640] sm:$0xff]
        %v857 = vld [vmem:[%s272 + $0x648] sm:$0xff]
        %v858 = vld [vmem:[%s272 + $0x650] sm:$0xff]
        %v859 = vld [vmem:[%s272 + $0x658] sm:$0xff]
        %v860 = vld [vmem:[%s272 + $0x660] sm:$0xff]
        %v861 = vld [vmem:[%s272 + $0x668] sm:$0xff]
        %v862 = vld [vmem:[%s272 + $0x670] sm:$0xff]
        %v863 = vld [vmem:[%s272 + $0x678] sm:$0xff]
        %v864 = vld [vmem:[%s272 + $0x680] sm:$0xff]
        %v865 = vld [vmem:[%s272 + $0x688] sm:$0xff]
        %v866 = vld [vmem:[%s272 + $0x690] sm:$0xff]
        %v867 = vld [vmem:[%s272 + $0x698] sm:$0xff]
        %v868 = vld [vmem:[%s272 + $0x6a0] sm:$0xff]
        %v869 = vld [vmem:[%s272 + $0x6a8] sm:$0xff]
        %v870 = vld [vmem:[%s272 + $0x6b0] sm:$0xff]
        %v871 = vld [vmem:[%s272 + $0x6b8] sm:$0xff]
        %v872 = vld [vmem:[%s272 + $0x6c0] sm:$0xff]
        %v873 = vld [vmem:[%s272 + $0x6c8] sm:$0xff]
        %v874 = vld [vmem:[%s272 + $0x6d0] sm:$0xff]
        %v875 = vld [vmem:[%s272 + $0x6d8] sm:$0xff]
        %v876 = vld [vmem:[%s272 + $0x6e0] sm:$0xff]
        %v877 = vld [vmem:[%s272 + $0x6e8] sm:$0xff]
        %v878 = vld [vmem:[%s272 + $0x6f0] sm:$0xff]
        %v879 = vld [vmem:[%s272 + $0x6f8] sm:$0xff]
        %v880 = vld [vmem:[%s272 + $0x700] sm:$0xff]
        %v881 = vld [vmem:[%s272 + $0x708] sm:$0xff]
        %v882 = vld [vmem:[%s272 + $0x710] sm:$0xff]
        %v883 = vld [vmem:[%s272 + $0x718] sm:$0xff]
        %v884 = vld [vmem:[%s272 + $0x720] sm:$0xff]
        %v885 = vld [vmem:[%s272 + $0x728] sm:$0xff]
        %v886 = vld [vmem:[%s272 + $0x730] sm:$0xff]
        %v887 = vld [vmem:[%s272 + $0x738] sm:$0xff]
        %v888 = vld [vmem:[%s272 + $0x740] sm:$0xff]
        %v889 = vld [vmem:[%s272 + $0x748] sm:$0xff]
        %v890 = vld [vmem:[%s272 + $0x750] sm:$0xff]
        %v891 = vld [vmem:[%s272 + $0x758] sm:$0xff]
        %v892 = vld [vmem:[%s272 + $0x760] sm:$0xff]
        %v893 = vld [vmem:[%s272 + $0x768] sm:$0xff]
        %v894 = vld [vmem:[%s272 + $0x770] sm:$0xff]
        %v895 = vld [vmem:[%s272 + $0x778] sm:$0xff]
        %v896 = vld [vmem:[%s272 + $0x780] sm:$0xff]
        %v897 = vld [vmem:[%s272 + $0x788] sm:$0xff]
        %v898 = vld [vmem:[%s272 + $0x790] sm:$0xff]
        %v899 = vld [vmem:[%s272 + $0x798] sm:$0xff]
        %v900 = vld [vmem:[%s272 + $0x7a0] sm:$0xff]
        %v901 = vld [vmem:[%s272 + $0x7a8] sm:$0xff]
        %v902 = vld [vmem:[%s272 + $0x7b0] sm:$0xff]
        %v903 = vld [vmem:[%s272 + $0x7b8] sm:$0xff]
        %v904 = vld [vmem:[%s272 + $0x7c0] sm:$0xff]
        %v905 = vld [vmem:[%s272 + $0x7c8] sm:$0xff]
        %v906 = vld [vmem:[%s272 + $0x7d0] sm:$0xff]
        %v907 = vld [vmem:[%s272 + $0x7d8] sm:$0xff]
        %v908 = vld [vmem:[%s272 + $0x7e0] sm:$0xff]
        %v909 = vld [vmem:[%s272 + $0x7e8] sm:$0xff]
        %v910 = vld [vmem:[%s272 + $0x7f0] sm:$0xff]
        %v911 = vld [vmem:[%s272 + $0x7f8] sm:$0xff]
        %v912 = vld [vmem:[%s272 + $0x800] sm:$0xff]
        %v913 = vld [vmem:[%s272 + $0x808] sm:$0xff]
        %v914 = vld [vmem:[%s272 + $0x810] sm:$0xff]
        %v915 = vld [vmem:[%s272 + $0x818] sm:$0xff]
        %v916 = vld [vmem:[%s272 + $0x820] sm:$0xff]
        %v917 = vld [vmem:[%s272 + $0x828] sm:$0xff]
        %v918 = vld [vmem:[%s272 + $0x830] sm:$0xff]
        %v919 = vld [vmem:[%s272 + $0x838] sm:$0xff]
        %v920 = vld [vmem:[%s272 + $0x840] sm:$0xff]
        %v921 = vld [vmem:[%s272 + $0x848] sm:$0xff]
        %v922 = vld [vmem:[%s272 + $0x850] sm:$0xff]
        %v923 = vld [vmem:[%s272 + $0x858] sm:$0xff]
        %v924 = vld [vmem:[%s272 + $0x860] sm:$0xff]
        %v925 = vld [vmem:[%s272 + $0x868] sm:$0xff]
        %v926 = vld [vmem:[%s272 + $0x870] sm:$0xff]
        %v927 = vld [vmem:[%s272 + $0x878] sm:$0xff]
        %v928 = vld [vmem:[%s272 + $0x880] sm:$0xff]
        %v929 = vld [vmem:[%s272 + $0x888] sm:$0xff]
        %v930 = vld [vmem:[%s272 + $0x890] sm:$0xff]
        %v931 = vld [vmem:[%s272 + $0x898] sm:$0xff]
        %v932 = vld [vmem:[%s272 + $0x8a0] sm:$0xff]
        %v933 = vld [vmem:[%s272 + $0x8a8] sm:$0xff]
        %v934 = vld [vmem:[%s272 + $0x8b0] sm:$0xff]
        %v935 = vld [vmem:[%s272 + $0x8b8] sm:$0xff]
        %v936 = vld [vmem:[%s272 + $0x8c0] sm:$0xff]
        %v937 = vld [vmem:[%s272 + $0x8c8] sm:$0xff]
        %v938 = vld [vmem:[%s272 + $0x8d0] sm:$0xff]
        %v939 = vld [vmem:[%s272 + $0x8d8] sm:$0xff]
        %v940 = vld [vmem:[%s272 + $0x8e0] sm:$0xff]
        %v941 = vld [vmem:[%s272 + $0x8e8] sm:$0xff]
        %v942 = vld [vmem:[%s272 + $0x8f0] sm:$0xff]
        %v943 = vld [vmem:[%s272 + $0x8f8] sm:$0xff]
        %v944 = vld [vmem:[%s272 + $0x900] sm:$0xff]
        %v945 = vld [vmem:[%s272 + $0x908] sm:$0xff]
        %v946 = vld [vmem:[%s272 + $0x910] sm:$0xff]
        %v947 = vld [vmem:[%s272 + $0x918] sm:$0xff]
        %v948 = vld [vmem:[%s272 + $0x920] sm:$0xff]
        %v949 = vld [vmem:[%s272 + $0x928] sm:$0xff]
        %v950 = vld [vmem:[%s272 + $0x930] sm:$0xff]
        %v951 = vld [vmem:[%s272 + $0x938] sm:$0xff]
        %v952 = vld [vmem:[%s272 + $0x940] sm:$0xff]
        %v953 = vld [vmem:[%s272 + $0x948] sm:$0xff]
        %v954 = vld [vmem:[%s272 + $0x950] sm:$0xff]
        %v955 = vld [vmem:[%s272 + $0x958] sm:$0xff]
        %v956 = vld [vmem:[%s272 + $0x960] sm:$0xff]
        %v957 = vld [vmem:[%s272 + $0x968] sm:$0xff]
        %v958 = vld [vmem:[%s272 + $0x970] sm:$0xff]
        %v959 = vld [vmem:[%s272 + $0x978] sm:$0xff]
        %v960 = vld [vmem:[%s272 + $0x980] sm:$0xff]
        %v961 = vld [vmem:[%s272 + $0x988] sm:$0xff]
        %v962 = vld [vmem:[%s272 + $0x990] sm:$0xff]
        %v963 = vld [vmem:[%s272 + $0x998] sm:$0xff]
        %v964 = vld [vmem:[%s272 + $0x9a0] sm:$0xff]
        %v965 = vld [vmem:[%s272 + $0x9a8] sm:$0xff]
        %v966 = vld [vmem:[%s272 + $0x9b0] sm:$0xff]
        %v967 = vld [vmem:[%s272 + $0x9b8] sm:$0xff]
        %v968 = vld [vmem:[%s272 + $0x9c0] sm:$0xff]
        %v969 = vld [vmem:[%s272 + $0x9c8] sm:$0xff]
        %v970 = vld [vmem:[%s272 + $0x9d0] sm:$0xff]
        %v971 = vld [vmem:[%s272 + $0x9d8] sm:$0xff]
        %v972 = vld [vmem:[%s272 + $0x9e0] sm:$0xff]
        %v973 = vld [vmem:[%s272 + $0x9e8] sm:$0xff]
        %v974 = vld [vmem:[%s272 + $0x9f0] sm:$0xff]
        %v975 = vld [vmem:[%s272 + $0x9f8] sm:$0xff]
        %v976 = vld [vmem:[%s272 + $0xa00] sm:$0xff]
        %v977 = vld [vmem:[%s272 + $0xa08] sm:$0xff]
        %v978 = vld [vmem:[%s272 + $0xa10] sm:$0xff]
        %v979 = vld [vmem:[%s272 + $0xa18] sm:$0xff]
        %v980 = vld [vmem:[%s272 + $0xa20] sm:$0xff]
        %v981 = vld [vmem:[%s272 + $0xa28] sm:$0xff]
        %v982 = vld [vmem:[%s272 + $0xa30] sm:$0xff]
        %v983 = vld [vmem:[%s272 + $0xa38] sm:$0xff]
        %v984 = vld [vmem:[%s272 + $0xa40] sm:$0xff]
        %v985 = vld [vmem:[%s272 + $0xa48] sm:$0xff]
        %v986 = vld [vmem:[%s272 + $0xa50] sm:$0xff]
        %v987 = vld [vmem:[%s272 + $0xa58] sm:$0xff]
        %v988 = vld [vmem:[%s272 + $0xa60] sm:$0xff]
        %v989 = vld [vmem:[%s272 + $0xa68] sm:$0xff]
        %v990 = vld [vmem:[%s272 + $0xa70] sm:$0xff]
        %v991 = vld [vmem:[%s272 + $0xa78] sm:$0xff]
        %v992 = vld [vmem:[%s272 + $0xa80] sm:$0xff]
        %v993 = vld [vmem:[%s272 + $0xa88] sm:$0xff]
        %v994 = vld [vmem:[%s272 + $0xa90] sm:$0xff]
        %v995 = vld [vmem:[%s272 + $0xa98] sm:$0xff]
        %v996 = vld [vmem:[%s272 + $0xaa0] sm:$0xff]
        %v997 = vld [vmem:[%s272 + $0xaa8] sm:$0xff]
        %v998 = vld [vmem:[%s272 + $0xab0] sm:$0xff]
        %v999 = vld [vmem:[%s272 + $0xab8] sm:$0xff]
        %v1000 = vld [vmem:[%s272 + $0xac0] sm:$0xff]
        %v1001 = vld [vmem:[%s272 + $0xac8] sm:$0xff]
        %v1002 = vld [vmem:[%s272 + $0xad0] sm:$0xff]
        %v1003 = vld [vmem:[%s272 + $0xad8] sm:$0xff]
        %v1004 = vld [vmem:[%s272 + $0xae0] sm:$0xff]
        %v1005 = vld [vmem:[%s272 + $0xae8] sm:$0xff]
        %v1006 = vld [vmem:[%s272 + $0xaf0] sm:$0xff]
        %v1007 = vld [vmem:[%s272 + $0xaf8] sm:$0xff]
        %v1008 = vld [vmem:[%s272 + $0xb00] sm:$0xff]
        %v1009 = vld [vmem:[%s272 + $0xb08] sm:$0xff]
        %v1010 = vld [vmem:[%s272 + $0xb10] sm:$0xff]
        %v1011 = vld [vmem:[%s272 + $0xb18] sm:$0xff]
        %v1012 = vld [vmem:[%s272 + $0xb20] sm:$0xff]
        %v1013 = vld [vmem:[%s272 + $0xb28] sm:$0xff]
        %v1014 = vld [vmem:[%s272 + $0xb30] sm:$0xff]
        %v1015 = vld [vmem:[%s272 + $0xb38] sm:$0xff]
        %v1016 = vld [vmem:[%s272 + $0xb40] sm:$0xff]
        %v1017 = vld [vmem:[%s272 + $0xb48] sm:$0xff]
        %v1018 = vld [vmem:[%s272 + $0xb50] sm:$0xff]
        %v1019 = vld [vmem:[%s272 + $0xb58] sm:$0xff]
        %v1020 = vld [vmem:[%s272 + $0xb60] sm:$0xff]
        %v1021 = vld [vmem:[%s272 + $0xb68] sm:$0xff]
        %v1022 = vld [vmem:[%s272 + $0xb70] sm:$0xff]
        %v1023 = vld [vmem:[%s272 + $0xb78] sm:$0xff]
        %v1024 = vld [vmem:[%s272 + $0xb80] sm:$0xff]
        %v1025 = vld [vmem:[%s272 + $0xb88] sm:$0xff]
        %v1026 = vld [vmem:[%s272 + $0xb90] sm:$0xff]
        %v1027 = vld [vmem:[%s272 + $0xb98] sm:$0xff]
        %v1028 = vld [vmem:[%s272 + $0xba0] sm:$0xff]
        %v1029 = vld [vmem:[%s272 + $0xba8] sm:$0xff]
        %v1030 = vld [vmem:[%s272 + $0xbb0] sm:$0xff]
        %v1031 = vld [vmem:[%s272 + $0xbb8] sm:$0xff]
        %v1032 = vld [vmem:[%s272 + $0xbc0] sm:$0xff]
        %v1033 = vld [vmem:[%s272 + $0xbc8] sm:$0xff]
        %v1034 = vld [vmem:[%s272 + $0xbd0] sm:$0xff]
        %v1035 = vld [vmem:[%s272 + $0xbd8] sm:$0xff]
        %v1036 = vld [vmem:[%s272 + $0xbe0] sm:$0xff]
        %v1037 = vld [vmem:[%s272 + $0xbe8] sm:$0xff]
        %v1038 = vld [vmem:[%s272 + $0xbf0] sm:$0xff]
        %v1039 = vld [vmem:[%s272 + $0xbf8] sm:$0xff]
        %v1040 = vld [vmem:[%s272 + $0xc00] sm:$0xff]
        %v1041 = vld [vmem:[%s272 + $0xc08] sm:$0xff]
        %v1042 = vld [vmem:[%s272 + $0xc10] sm:$0xff]
        %v1043 = vld [vmem:[%s272 + $0xc18] sm:$0xff]
        %v1044 = vld [vmem:[%s272 + $0xc20] sm:$0xff]
        %v1045 = vld [vmem:[%s272 + $0xc28] sm:$0xff]
        %v1046 = vld [vmem:[%s272 + $0xc30] sm:$0xff]
        %v1047 = vld [vmem:[%s272 + $0xc38] sm:$0xff]
        %v1048 = vld [vmem:[%s272 + $0xc40] sm:$0xff]
        %v1049 = vld [vmem:[%s272 + $0xc48] sm:$0xff]
        %v1050 = vld [vmem:[%s272 + $0xc50] sm:$0xff]
        %v1051 = vld [vmem:[%s272 + $0xc58] sm:$0xff]
        %v1052 = vld [vmem:[%s272 + $0xc60] sm:$0xff]
        %v1053 = vld [vmem:[%s272 + $0xc68] sm:$0xff]
        %v1054 = vld [vmem:[%s272 + $0xc70] sm:$0xff]
        %v1055 = vld [vmem:[%s272 + $0xc78] sm:$0xff]
        %v1056 = vld [vmem:[%s272 + $0xc80] sm:$0xff]
        %v1057 = vld [vmem:[%s272 + $0xc88] sm:$0xff]
        %v1058 = vld [vmem:[%s272 + $0xc90] sm:$0xff]
        %v1059 = vld [vmem:[%s272 + $0xc98] sm:$0xff]
        %v1060 = vld [vmem:[%s272 + $0xca0] sm:$0xff]
        %v1061 = vld [vmem:[%s272 + $0xca8] sm:$0xff]
        %v1062 = vld [vmem:[%s272 + $0xcb0] sm:$0xff]
        %v1063 = vld [vmem:[%s272 + $0xcb8] sm:$0xff]
        %v1064 = vld [vmem:[%s272 + $0xcc0] sm:$0xff]
        %v1065 = vld [vmem:[%s272 + $0xcc8] sm:$0xff]
        %v1066 = vld [vmem:[%s272 + $0xcd0] sm:$0xff]
        %v1067 = vld [vmem:[%s272 + $0xcd8] sm:$0xff]
        %v1068 = vld [vmem:[%s272 + $0xce0] sm:$0xff]
        %v1069 = vld [vmem:[%s272 + $0xce8] sm:$0xff]
        %v1070 = vld [vmem:[%s272 + $0xcf0] sm:$0xff]
        %v1071 = vld [vmem:[%s272 + $0xcf8] sm:$0xff]
        %v1072 = vld [vmem:[%s272 + $0xd00] sm:$0xff]
        %v1073 = vld [vmem:[%s272 + $0xd08] sm:$0xff]
        %v1074 = vld [vmem:[%s272 + $0xd10] sm:$0xff]
        %v1075 = vld [vmem:[%s272 + $0xd18] sm:$0xff]
        %v1076 = vld [vmem:[%s272 + $0xd20] sm:$0xff]
        %v1077 = vld [vmem:[%s272 + $0xd28] sm:$0xff]
        %v1078 = vld [vmem:[%s272 + $0xd30] sm:$0xff]
        %v1079 = vld [vmem:[%s272 + $0xd38] sm:$0xff]
        %v1080 = vld [vmem:[%s272 + $0xd40] sm:$0xff]
        %v1081 = vld [vmem:[%s272 + $0xd48] sm:$0xff]
        %v1082 = vld [vmem:[%s272 + $0xd50] sm:$0xff]
        %v1083 = vld [vmem:[%s272 + $0xd58] sm:$0xff]
        %v1084 = vld [vmem:[%s272 + $0xd60] sm:$0xff]
        %v1085 = vld [vmem:[%s272 + $0xd68] sm:$0xff]
        %v1086 = vld [vmem:[%s272 + $0xd70] sm:$0xff]
        %v1087 = vld [vmem:[%s272 + $0xd78] sm:$0xff]
        %v1088 = vld [vmem:[%s272 + $0xd80] sm:$0xff]
        %v1089 = vld [vmem:[%s272 + $0xd88] sm:$0xff]
        %v1090 = vld [vmem:[%s272 + $0xd90] sm:$0xff]
        %v1091 = vld [vmem:[%s272 + $0xd98] sm:$0xff]
        %v1092 = vld [vmem:[%s272 + $0xda0] sm:$0xff]
        %v1093 = vld [vmem:[%s272 + $0xda8] sm:$0xff]
        %v1094 = vld [vmem:[%s272 + $0xdb0] sm:$0xff]
        %v1095 = vld [vmem:[%s272 + $0xdb8] sm:$0xff]
        %v1096 = vld [vmem:[%s272 + $0xdc0] sm:$0xff]
        %v1097 = vld [vmem:[%s272 + $0xdc8] sm:$0xff]
        %v1098 = vld [vmem:[%s272 + $0xdd0] sm:$0xff]
        %v1099 = vld [vmem:[%s272 + $0xdd8] sm:$0xff]
        %v1100 = vld [vmem:[%s272 + $0xde0] sm:$0xff]
        %v1101 = vld [vmem:[%s272 + $0xde8] sm:$0xff]
        %v1102 = vld [vmem:[%s272 + $0xdf0] sm:$0xff]
        %v1103 = vld [vmem:[%s272 + $0xdf8] sm:$0xff]
        %v1104 = vld [vmem:[%s272 + $0xe00] sm:$0xff]
        %v1105 = vld [vmem:[%s272 + $0xe08] sm:$0xff]
        %v1106 = vld [vmem:[%s272 + $0xe10] sm:$0xff]
        %v1107 = vld [vmem:[%s272 + $0xe18] sm:$0xff]
        %v1108 = vld [vmem:[%s272 + $0xe20] sm:$0xff]
        %v1109 = vld [vmem:[%s272 + $0xe28] sm:$0xff]
        %v1110 = vld [vmem:[%s272 + $0xe30] sm:$0xff]
        %v1111 = vld [vmem:[%s272 + $0xe38] sm:$0xff]
        %v1112 = vld [vmem:[%s272 + $0xe40] sm:$0xff]
        %v1113 = vld [vmem:[%s272 + $0xe48] sm:$0xff]
        %v1114 = vld [vmem:[%s272 + $0xe50] sm:$0xff]
        %v1115 = vld [vmem:[%s272 + $0xe58] sm:$0xff]
        %v1116 = vld [vmem:[%s272 + $0xe60] sm:$0xff]
        %v1117 = vld [vmem:[%s272 + $0xe68] sm:$0xff]
        %v1118 = vld [vmem:[%s272 + $0xe70] sm:$0xff]
        %v1119 = vld [vmem:[%s272 + $0xe78] sm:$0xff]
        %v1120 = vld [vmem:[%s272 + $0xe80] sm:$0xff]
        %v1121 = vld [vmem:[%s272 + $0xe88] sm:$0xff]
        %v1122 = vld [vmem:[%s272 + $0xe90] sm:$0xff]
        %v1123 = vld [vmem:[%s272 + $0xe98] sm:$0xff]
        %v1124 = vld [vmem:[%s272 + $0xea0] sm:$0xff]
        %v1125 = vld [vmem:[%s272 + $0xea8] sm:$0xff]
        %v1126 = vld [vmem:[%s272 + $0xeb0] sm:$0xff]
        %v1127 = vld [vmem:[%s272 + $0xeb8] sm:$0xff]
        %v1128 = vld [vmem:[%s272 + $0xec0] sm:$0xff]
        %v1129 = vld [vmem:[%s272 + $0xec8] sm:$0xff]
        %v1130 = vld [vmem:[%s272 + $0xed0] sm:$0xff]
        %v1131 = vld [vmem:[%s272 + $0xed8] sm:$0xff]
        %v1132 = vld [vmem:[%s272 + $0xee0] sm:$0xff]
        %v1133 = vld [vmem:[%s272 + $0xee8] sm:$0xff]
        %v1134 = vld [vmem:[%s272 + $0xef0] sm:$0xff]
        %v1135 = vld [vmem:[%s272 + $0xef8] sm:$0xff]
        %v1136 = vld [vmem:[%s272 + $0xf00] sm:$0xff]
        %v1137 = vld [vmem:[%s272 + $0xf08] sm:$0xff]
        %v1138 = vld [vmem:[%s272 + $0xf10] sm:$0xff]
        %v1139 = vld [vmem:[%s272 + $0xf18] sm:$0xff]
        %v1140 = vld [vmem:[%s272 + $0xf20] sm:$0xff]
        %v1141 = vld [vmem:[%s272 + $0xf28] sm:$0xff]
        %v1142 = vld [vmem:[%s272 + $0xf30] sm:$0xff]
        %v1143 = vld [vmem:[%s272 + $0xf38] sm:$0xff]
        %v1144 = vld [vmem:[%s272 + $0xf40] sm:$0xff]
        %v1145 = vld [vmem:[%s272 + $0xf48] sm:$0xff]
        %v1146 = vld [vmem:[%s272 + $0xf50] sm:$0xff]
        %v1147 = vld [vmem:[%s272 + $0xf58] sm:$0xff]
        %v1148 = vld [vmem:[%s272 + $0xf60] sm:$0xff]
        %v1149 = vld [vmem:[%s272 + $0xf68] sm:$0xff]
        %v1150 = vld [vmem:[%s272 + $0xf70] sm:$0xff]
        %v1151 = vld [vmem:[%s272 + $0xf78] sm:$0xff]
        %v1152 = vld [vmem:[%s272 + $0xf80] sm:$0xff]
        %v1153 = vld [vmem:[%s272 + $0xf88] sm:$0xff]
        %v1154 = vld [vmem:[%s272 + $0xf90] sm:$0xff]
        %v1155 = vld [vmem:[%s272 + $0xf98] sm:$0xff]
        %v1156 = vld [vmem:[%s272 + $0xfa0] sm:$0xff]
        %v1157 = vld [vmem:[%s272 + $0xfa8] sm:$0xff]
        %v1158 = vld [vmem:[%s272 + $0xfb0] sm:$0xff]
        %v1159 = vld [vmem:[%s272 + $0xfb8] sm:$0xff]
        %v1160 = vld [vmem:[%s272 + $0xfc0] sm:$0xff]
        %v1161 = vld [vmem:[%s272 + $0xfc8] sm:$0xff]
        %v1162 = vld [vmem:[%s272 + $0xfd0] sm:$0xff]
        %v1163 = vld [vmem:[%s272 + $0xfd8] sm:$0xff]
        %v1164 = vld [vmem:[%s272 + $0xfe0] sm:$0xff]
        %v1165 = vld [vmem:[%s272 + $0xfe8] sm:$0xff]
        %v1166 = vld [vmem:[%s272 + $0xff0] sm:$0xff]
        %v1167 = vld [vmem:[%s272 + $0xff8] sm:$0xff]
        %v1168 = vld [vmem:[%s272 + $0x1000] sm:$0xff]
        %v1169 = vld [vmem:[%s272 + $0x1008] sm:$0xff]
        %v1170 = vld [vmem:[%s272 + $0x1010] sm:$0xff]
        %v1171 = vld [vmem:[%s272 + $0x1018] sm:$0xff]
        %v1172 = vld [vmem:[%s272 + $0x1020] sm:$0xff]
        %v1173 = vld [vmem:[%s272 + $0x1028] sm:$0xff]
        %v1174 = vld [vmem:[%s272 + $0x1030] sm:$0xff]
        %v1175 = vld [vmem:[%s272 + $0x1038] sm:$0xff]
        %v1176 = vld [vmem:[%s272 + $0x1040] sm:$0xff]
        %v1177 = vld [vmem:[%s272 + $0x1048] sm:$0xff]
        %v1178 = vld [vmem:[%s272 + $0x1050] sm:$0xff]
        %v1179 = vld [vmem:[%s272 + $0x1058] sm:$0xff]
        %v1180 = vld [vmem:[%s272 + $0x1060] sm:$0xff]
        %v1181 = vld [vmem:[%s272 + $0x1068] sm:$0xff]
        %v1182 = vld [vmem:[%s272 + $0x1070] sm:$0xff]
        %v1183 = vld [vmem:[%s272 + $0x1078] sm:$0xff]
        %v1184 = vld [vmem:[%s272 + $0x1080] sm:$0xff]
        %v1185 = vld [vmem:[%s272 + $0x1088] sm:$0xff]
        %v1186 = vld [vmem:[%s272 + $0x1090] sm:$0xff]
        %v1187 = vld [vmem:[%s272 + $0x1098] sm:$0xff]
        %v1188 = vld [vmem:[%s272 + $0x10a0] sm:$0xff]
        %v1189 = vld [vmem:[%s272 + $0x10a8] sm:$0xff]
        %v1190 = vld [vmem:[%s272 + $0x10b0] sm:$0xff]
        %v1191 = vld [vmem:[%s272 + $0x10b8] sm:$0xff]
        %v1192 = vld [vmem:[%s272 + $0x10c0] sm:$0xff]
        %v1193 = vld [vmem:[%s272 + $0x10c8] sm:$0xff]
        %v1194 = vld [vmem:[%s272 + $0x10d0] sm:$0xff]
        %v1195 = vld [vmem:[%s272 + $0x10d8] sm:$0xff]
        %v1196 = vld [vmem:[%s272 + $0x10e0] sm:$0xff]
        %v1197 = vld [vmem:[%s272 + $0x10e8] sm:$0xff]
        %v1198 = vld [vmem:[%s272 + $0x10f0] sm:$0xff]
        %v1199 = vld [vmem:[%s272 + $0x10f8] sm:$0xff]
        %v1200 = vld [vmem:[%s272 + $0x1100] sm:$0xff]
        %v1201 = vld [vmem:[%s272 + $0x1108] sm:$0xff]
        %v1202 = vld [vmem:[%s272 + $0x1110] sm:$0xff]
        %v1203 = vld [vmem:[%s272 + $0x1118] sm:$0xff]
        %v1204 = vld [vmem:[%s272 + $0x1120] sm:$0xff]
        %v1205 = vld [vmem:[%s272 + $0x1128] sm:$0xff]
        %v1206 = vld [vmem:[%s272 + $0x1130] sm:$0xff]
        %v1207 = vld [vmem:[%s272 + $0x1138] sm:$0xff]
        %v1208 = vld [vmem:[%s272 + $0x1140] sm:$0xff]
        %v1209 = vld [vmem:[%s272 + $0x1148] sm:$0xff]
        %v1210 = vld [vmem:[%s272 + $0x1150] sm:$0xff]
        %v1211 = vld [vmem:[%s272 + $0x1158] sm:$0xff]
        %v1212 = vld [vmem:[%s272 + $0x1160] sm:$0xff]
        %v1213 = vld [vmem:[%s272 + $0x1168] sm:$0xff]
        %v1214 = vld [vmem:[%s272 + $0x1170] sm:$0xff]
        %v1215 = vld [vmem:[%s272 + $0x1178] sm:$0xff]
        %v1216 = vld [vmem:[%s272 + $0x1180] sm:$0xff]
        %v1217 = vld [vmem:[%s272 + $0x1188] sm:$0xff]
        %v1218 = vld [vmem:[%s272 + $0x1190] sm:$0xff]
        %v1219 = vld [vmem:[%s272 + $0x1198] sm:$0xff]
        %v1220 = vld [vmem:[%s272 + $0x11a0] sm:$0xff]
        %v1221 = vld [vmem:[%s272 + $0x11a8] sm:$0xff]
        %v1222 = vld [vmem:[%s272 + $0x11b0] sm:$0xff]
        %v1223 = vld [vmem:[%s272 + $0x11b8] sm:$0xff]
        %v1224 = vld [vmem:[%s272 + $0x11c0] sm:$0xff]
        %v1225 = vld [vmem:[%s272 + $0x11c8] sm:$0xff]
        %v1226 = vld [vmem:[%s272 + $0x11d0] sm:$0xff]
        %v1227 = vld [vmem:[%s272 + $0x11d8] sm:$0xff]
        %v1228 = vld [vmem:[%s272 + $0x11e0] sm:$0xff]
        %v1229 = vld [vmem:[%s272 + $0x11e8] sm:$0xff]
        %v1230 = vld [vmem:[%s272 + $0x11f0] sm:$0xff]
        %v1231 = vld [vmem:[%s272 + $0x11f8] sm:$0xff]
        %v1232 = vld [vmem:[%s272 + $0x1200] sm:$0xff]
        %v1233 = vld [vmem:[%s272 + $0x1208] sm:$0xff]
        %v1234 = vld [vmem:[%s272 + $0x1210] sm:$0xff]
        %v1235 = vld [vmem:[%s272 + $0x1218] sm:$0xff]
        %v1236 = vld [vmem:[%s272 + $0x1220] sm:$0xff]
        %v1237 = vld [vmem:[%s272 + $0x1228] sm:$0xff]
        %v1238 = vld [vmem:[%s272 + $0x1230] sm:$0xff]
        %v1239 = vld [vmem:[%s272 + $0x1238] sm:$0xff]
        %v1240 = vld [vmem:[%s272 + $0x1240] sm:$0xff]
        %v1241 = vld [vmem:[%s272 + $0x1248] sm:$0xff]
        %v1242 = vld [vmem:[%s272 + $0x1250] sm:$0xff]
        %v1243 = vld [vmem:[%s272 + $0x1258] sm:$0xff]
        %v1244 = vld [vmem:[%s272 + $0x1260] sm:$0xff]
        %v1245 = vld [vmem:[%s272 + $0x1268] sm:$0xff]
        %v1246 = vld [vmem:[%s272 + $0x1270] sm:$0xff]
        %v1247 = vld [vmem:[%s272 + $0x1278] sm:$0xff]
        %v1248 = vld [vmem:[%s272 + $0x1280] sm:$0xff]
        %v1249 = vld [vmem:[%s272 + $0x1288] sm:$0xff]
        %v1250 = vld [vmem:[%s272 + $0x1290] sm:$0xff]
        %v1251 = vld [vmem:[%s272 + $0x1298] sm:$0xff]
        %v1252 = vld [vmem:[%s272 + $0x12a0] sm:$0xff]
        %v1253 = vld [vmem:[%s272 + $0x12a8] sm:$0xff]
        %v1254 = vld [vmem:[%s272 + $0x12b0] sm:$0xff]
        %v1255 = vld [vmem:[%s272 + $0x12b8] sm:$0xff]
        %v1256 = vld [vmem:[%s272 + $0x12c0] sm:$0xff]
        %v1257 = vld [vmem:[%s272 + $0x12c8] sm:$0xff]
        %v1258 = vld [vmem:[%s272 + $0x12d0] sm:$0xff]
        %v1259 = vld [vmem:[%s272 + $0x12d8] sm:$0xff]
        %v1260 = vld [vmem:[%s272 + $0x12e0] sm:$0xff]
        %v1261 = vld [vmem:[%s272 + $0x12e8] sm:$0xff]
        %v1262 = vld [vmem:[%s272 + $0x12f0] sm:$0xff]
        %v1263 = vld [vmem:[%s272 + $0x12f8] sm:$0xff]
        %v1264 = vld [vmem:[%s272 + $0x1300] sm:$0xff]
        %v1265 = vld [vmem:[%s272 + $0x1308] sm:$0xff]
        %v1266 = vld [vmem:[%s272 + $0x1310] sm:$0xff]
        %v1267 = vld [vmem:[%s272 + $0x1318] sm:$0xff]
        %v1268 = vld [vmem:[%s272 + $0x1320] sm:$0xff]
        %v1269 = vld [vmem:[%s272 + $0x1328] sm:$0xff]
        %v1270 = vld [vmem:[%s272 + $0x1330] sm:$0xff]
        %v1271 = vld [vmem:[%s272 + $0x1338] sm:$0xff]
        %v1272 = vld [vmem:[%s272 + $0x1340] sm:$0xff]
        %v1273 = vld [vmem:[%s272 + $0x1348] sm:$0xff]
        %v1274 = vld [vmem:[%s272 + $0x1350] sm:$0xff]
        %v1275 = vld [vmem:[%s272 + $0x1358] sm:$0xff]
        %v1276 = vld [vmem:[%s272 + $0x1360] sm:$0xff]
        %v1277 = vld [vmem:[%s272 + $0x1368] sm:$0xff]
        %v1278 = vld [vmem:[%s272 + $0x1370] sm:$0xff]
        %v1279 = vld [vmem:[%s272 + $0x1378] sm:$0xff]
        %v1280 = vld [vmem:[%s272 + $0x1380] sm:$0xff]
        %v1281 = vld [vmem:[%s272 + $0x1388] sm:$0xff]
        %v1282 = vld [vmem:[%s272 + $0x1390] sm:$0xff]
        %v1283 = vld [vmem:[%s272 + $0x1398] sm:$0xff]
        %v1284 = vld [vmem:[%s272 + $0x13a0] sm:$0xff]
        %v1285 = vld [vmem:[%s272 + $0x13a8] sm:$0xff]
        %v1286 = vld [vmem:[%s272 + $0x13b0] sm:$0xff]
        %v1287 = vld [vmem:[%s272 + $0x13b8] sm:$0xff]
        %v1288 = vld [vmem:[%s272 + $0x13c0] sm:$0xff]
        %v1289 = vld [vmem:[%s272 + $0x13c8] sm:$0xff]
        %v1290 = vld [vmem:[%s272 + $0x13d0] sm:$0xff]
        %v1291 = vld [vmem:[%s272 + $0x13d8] sm:$0xff]
        %v1292 = vld [vmem:[%s272 + $0x13e0] sm:$0xff]
        %v1293 = vld [vmem:[%s272 + $0x13e8] sm:$0xff]
        %v1294 = vld [vmem:[%s272 + $0x13f0] sm:$0xff]
        %v1295 = vld [vmem:[%s272 + $0x13f8] sm:$0xff]
        %v1296 = vld [vmem:[%s272 + $0x1400] sm:$0xff]
        %v1297 = vld [vmem:[%s272 + $0x1408] sm:$0xff]
        %v1298 = vld [vmem:[%s272 + $0x1410] sm:$0xff]
        %v1299 = vld [vmem:[%s272 + $0x1418] sm:$0xff]
        %v1300 = vld [vmem:[%s272 + $0x1420] sm:$0xff]
        %v1301 = vld [vmem:[%s272 + $0x1428] sm:$0xff]
        %v1302 = vld [vmem:[%s272 + $0x1430] sm:$0xff]
        %v1303 = vld [vmem:[%s272 + $0x1438] sm:$0xff]
        %v1304 = vld [vmem:[%s272 + $0x1440] sm:$0xff]
        %v1305 = vld [vmem:[%s272 + $0x1448] sm:$0xff]
        %v1306 = vld [vmem:[%s272 + $0x1450] sm:$0xff]
        %v1307 = vld [vmem:[%s272 + $0x1458] sm:$0xff]
        %v1308 = vld [vmem:[%s272 + $0x1460] sm:$0xff]
        %v1309 = vld [vmem:[%s272 + $0x1468] sm:$0xff]
        %v1310 = vld [vmem:[%s272 + $0x1470] sm:$0xff]
        %v1311 = vld [vmem:[%s272 + $0x1478] sm:$0xff]
        %v1312 = vld [vmem:[%s272 + $0x1480] sm:$0xff]
        %v1313 = vld [vmem:[%s272 + $0x1488] sm:$0xff]
        %v1314 = vld [vmem:[%s272 + $0x1490] sm:$0xff]
        %v1315 = vld [vmem:[%s272 + $0x1498] sm:$0xff]
        %v1316 = vld [vmem:[%s272 + $0x14a0] sm:$0xff]
        %v1317 = vld [vmem:[%s272 + $0x14a8] sm:$0xff]
        %v1318 = vld [vmem:[%s272 + $0x14b0] sm:$0xff]
        %v1319 = vld [vmem:[%s272 + $0x14b8] sm:$0xff]
        %v1320 = vld [vmem:[%s272 + $0x14c0] sm:$0xff]
        %v1321 = vld [vmem:[%s272 + $0x14c8] sm:$0xff]
        %v1322 = vld [vmem:[%s272 + $0x14d0] sm:$0xff]
        %v1323 = vld [vmem:[%s272 + $0x14d8] sm:$0xff]
        %v1324 = vld [vmem:[%s272 + $0x14e0] sm:$0xff]
        %v1325 = vld [vmem:[%s272 + $0x14e8] sm:$0xff]
        %v1326 = vld [vmem:[%s272 + $0x14f0] sm:$0xff]
        %v1327 = vld [vmem:[%s272 + $0x14f8] sm:$0xff]
        %v1328 = vld [vmem:[%s272 + $0x1500] sm:$0xff]
        %v1329 = vld [vmem:[%s272 + $0x1508] sm:$0xff]
        %v1330 = vld [vmem:[%s272 + $0x1510] sm:$0xff]
        %v1331 = vld [vmem:[%s272 + $0x1518] sm:$0xff]
        %v1332 = vld [vmem:[%s272 + $0x1520] sm:$0xff]
        %v1333 = vld [vmem:[%s272 + $0x1528] sm:$0xff]
        %v1334 = vld [vmem:[%s272 + $0x1530] sm:$0xff]
        %v1335 = vld [vmem:[%s272 + $0x1538] sm:$0xff]
        %v1336 = vld [vmem:[%s272 + $0x1540] sm:$0xff]
        %v1337 = vld [vmem:[%s272 + $0x1548] sm:$0xff]
        %v1338 = vld [vmem:[%s272 + $0x1550] sm:$0xff]
        %v1339 = vld [vmem:[%s272 + $0x1558] sm:$0xff]
        %v1340 = vld [vmem:[%s272 + $0x1560] sm:$0xff]
        %v1341 = vld [vmem:[%s272 + $0x1568] sm:$0xff]
        %v1342 = vld [vmem:[%s272 + $0x1570] sm:$0xff]
        %v1343 = vld [vmem:[%s272 + $0x1578] sm:$0xff]
        %v1344 = vld [vmem:[%s272 + $0x1580] sm:$0xff]
        %v1345 = vld [vmem:[%s272 + $0x1588] sm:$0xff]
        %v1346 = vld [vmem:[%s272 + $0x1590] sm:$0xff]
        %v1347 = vld [vmem:[%s272 + $0x1598] sm:$0xff]
        %v1348 = vld [vmem:[%s272 + $0x15a0] sm:$0xff]
        %v1349 = vld [vmem:[%s272 + $0x15a8] sm:$0xff]
        %v1350 = vld [vmem:[%s272 + $0x15b0] sm:$0xff]
        %v1351 = vld [vmem:[%s272 + $0x15b8] sm:$0xff]
        %v1352 = vld [vmem:[%s272 + $0x15c0] sm:$0xff]
        %v1353 = vld [vmem:[%s272 + $0x15c8] sm:$0xff]
        %v1354 = vld [vmem:[%s272 + $0x15d0] sm:$0xff]
        %v1355 = vld [vmem:[%s272 + $0x15d8] sm:$0xff]
        %v1356 = vld [vmem:[%s272 + $0x15e0] sm:$0xff]
        %v1357 = vld [vmem:[%s272 + $0x15e8] sm:$0xff]
        %v1358 = vld [vmem:[%s272 + $0x15f0] sm:$0xff]
        %v1359 = vld [vmem:[%s272 + $0x15f8] sm:$0xff]
        %v1360 = vld [vmem:[%s272 + $0x1600] sm:$0xff]
        %v1361 = vld [vmem:[%s272 + $0x1608] sm:$0xff]
        %v1362 = vld [vmem:[%s272 + $0x1610] sm:$0xff]
        %v1363 = vld [vmem:[%s272 + $0x1618] sm:$0xff]
        %v1364 = vld [vmem:[%s272 + $0x1620] sm:$0xff]
        %v1365 = vld [vmem:[%s272 + $0x1628] sm:$0xff]
        %v1366 = vld [vmem:[%s272 + $0x1630] sm:$0xff]
        %v1367 = vld [vmem:[%s272 + $0x1638] sm:$0xff]
        %v1368 = vld [vmem:[%s272 + $0x1640] sm:$0xff]
        %v1369 = vld [vmem:[%s272 + $0x1648] sm:$0xff]
        %v1370 = vld [vmem:[%s272 + $0x1650] sm:$0xff]
        %v1371 = vld [vmem:[%s272 + $0x1658] sm:$0xff]
        %v1372 = vld [vmem:[%s272 + $0x1660] sm:$0xff]
        %v1373 = vld [vmem:[%s272 + $0x1668] sm:$0xff]
        %v1374 = vld [vmem:[%s272 + $0x1670] sm:$0xff]
        %v1375 = vld [vmem:[%s272 + $0x1678] sm:$0xff]
        %v1376 = vld [vmem:[%s272 + $0x1680] sm:$0xff]
        %v1377 = vld [vmem:[%s272 + $0x1688] sm:$0xff]
        %v1378 = vld [vmem:[%s272 + $0x1690] sm:$0xff]
        %v1379 = vld [vmem:[%s272 + $0x1698] sm:$0xff]
        %v1380 = vld [vmem:[%s272 + $0x16a0] sm:$0xff]
        %v1381 = vld [vmem:[%s272 + $0x16a8] sm:$0xff]
        %v1382 = vld [vmem:[%s272 + $0x16b0] sm:$0xff]
        %v1383 = vld [vmem:[%s272 + $0x16b8] sm:$0xff]
        %v1384 = vld [vmem:[%s272 + $0x16c0] sm:$0xff]
        %v1385 = vld [vmem:[%s272 + $0x16c8] sm:$0xff]
        %v1386 = vld [vmem:[%s272 + $0x16d0] sm:$0xff]
        %v1387 = vld [vmem:[%s272 + $0x16d8] sm:$0xff]
        %v1388 = vld [vmem:[%s272 + $0x16e0] sm:$0xff]
        %v1389 = vld [vmem:[%s272 + $0x16e8] sm:$0xff]
        %v1390 = vld [vmem:[%s272 + $0x16f0] sm:$0xff]
        %v1391 = vld [vmem:[%s272 + $0x16f8] sm:$0xff]
        %v1392 = vld [vmem:[%s272 + $0x1700] sm:$0xff]
        %v1393 = vld [vmem:[%s272 + $0x1708] sm:$0xff]
        %v1394 = vld [vmem:[%s272 + $0x1710] sm:$0xff]
        %v1395 = vld [vmem:[%s272 + $0x1718] sm:$0xff]
        %v1396 = vld [vmem:[%s272 + $0x1720] sm:$0xff]
        %v1397 = vld [vmem:[%s272 + $0x1728] sm:$0xff]
        %v1398 = vld [vmem:[%s272 + $0x1730] sm:$0xff]
        %v1399 = vld [vmem:[%s272 + $0x1738] sm:$0xff]
        %v1400 = vld [vmem:[%s272 + $0x1740] sm:$0xff]
        %v1401 = vld [vmem:[%s272 + $0x1748] sm:$0xff]
        %v1402 = vld [vmem:[%s272 + $0x1750] sm:$0xff]
        %v1403 = vld [vmem:[%s272 + $0x1758] sm:$0xff]
        %v1404 = vld [vmem:[%s272 + $0x1760] sm:$0xff]
        %v1405 = vld [vmem:[%s272 + $0x1768] sm:$0xff]
        %v1406 = vld [vmem:[%s272 + $0x1770] sm:$0xff]
        %v1407 = vld [vmem:[%s272 + $0x1778] sm:$0xff]
        %v1408 = vld [vmem:[%s272 + $0x1780] sm:$0xff]
        %v1409 = vld [vmem:[%s272 + $0x1788] sm:$0xff]
        %v1410 = vld [vmem:[%s272 + $0x1790] sm:$0xff]
        %v1411 = vld [vmem:[%s272 + $0x1798] sm:$0xff]
        %v1412 = vld [vmem:[%s272 + $0x17a0] sm:$0xff]
        %v1413 = vld [vmem:[%s272 + $0x17a8] sm:$0xff]
        %v1414 = vld [vmem:[%s272 + $0x17b0] sm:$0xff]
        %v1415 = vld [vmem:[%s272 + $0x17b8] sm:$0xff]
        %v1416 = vld [vmem:[%s272 + $0x17c0] sm:$0xff]
        %v1417 = vld [vmem:[%s272 + $0x17c8] sm:$0xff]
        %v1418 = vld [vmem:[%s272 + $0x17d0] sm:$0xff]
        %v1419 = vld [vmem:[%s272 + $0x17d8] sm:$0xff]
        %v1420 = vld [vmem:[%s272 + $0x17e0] sm:$0xff]
        %v1421 = vld [vmem:[%s272 + $0x17e8] sm:$0xff]
        %v1422 = vld [vmem:[%s272 + $0x17f0] sm:$0xff]
        %v1423 = vld [vmem:[%s272 + $0x17f8] sm:$0xff]
        %v1424 = vld [vmem:[%s272 + $0x1800] sm:$0xff]
        %v1425 = vld [vmem:[%s272 + $0x1808] sm:$0xff]
        %v1426 = vld [vmem:[%s272 + $0x1810] sm:$0xff]
        %v1427 = vld [vmem:[%s272 + $0x1818] sm:$0xff]
        %v1428 = vld [vmem:[%s272 + $0x1820] sm:$0xff]
        %v1429 = vld [vmem:[%s272 + $0x1828] sm:$0xff]
        %v1430 = vld [vmem:[%s272 + $0x1830] sm:$0xff]
        %v1431 = vld [vmem:[%s272 + $0x1838] sm:$0xff]
        %v1432 = vld [vmem:[%s272 + $0x1840] sm:$0xff]
        %v1433 = vld [vmem:[%s272 + $0x1848] sm:$0xff]
        %v1434 = vld [vmem:[%s272 + $0x1850] sm:$0xff]
        %v1435 = vld [vmem:[%s272 + $0x1858] sm:$0xff]
        %v1436 = vld [vmem:[%s272 + $0x1860] sm:$0xff]
        %v1437 = vld [vmem:[%s272 + $0x1868] sm:$0xff]
        %v1438 = vld [vmem:[%s272 + $0x1870] sm:$0xff]
        %v1439 = vld [vmem:[%s272 + $0x1878] sm:$0xff]
        %v1440 = vld [vmem:[%s272 + $0x1880] sm:$0xff]
        %v1441 = vld [vmem:[%s272 + $0x1888] sm:$0xff]
        %v1442 = vld [vmem:[%s272 + $0x1890] sm:$0xff]
        %v1443 = vld [vmem:[%s272 + $0x1898] sm:$0xff]
        %v1444 = vld [vmem:[%s272 + $0x18a0] sm:$0xff]
        %v1445 = vld [vmem:[%s272 + $0x18a8] sm:$0xff]
        %v1446 = vld [vmem:[%s272 + $0x18b0] sm:$0xff]
        %v1447 = vld [vmem:[%s272 + $0x18b8] sm:$0xff]
        %v1448 = vld [vmem:[%s272 + $0x18c0] sm:$0xff]
        %v1449 = vld [vmem:[%s272 + $0x18c8] sm:$0xff]
        %v1450 = vld [vmem:[%s272 + $0x18d0] sm:$0xff]
        %v1451 = vld [vmem:[%s272 + $0x18d8] sm:$0xff]
        %v1452 = vld [vmem:[%s272 + $0x18e0] sm:$0xff]
        %v1453 = vld [vmem:[%s272 + $0x18e8] sm:$0xff]
        %v1454 = vld [vmem:[%s272 + $0x18f0] sm:$0xff]
        %v1455 = vld [vmem:[%s272 + $0x18f8] sm:$0xff]
        %v1456 = vld [vmem:[%s272 + $0x1900] sm:$0xff]
        %v1457 = vld [vmem:[%s272 + $0x1908] sm:$0xff]
        %v1458 = vld [vmem:[%s272 + $0x1910] sm:$0xff]
        %v1459 = vld [vmem:[%s272 + $0x1918] sm:$0xff]
        %v1460 = vld [vmem:[%s272 + $0x1920] sm:$0xff]
        %v1461 = vld [vmem:[%s272 + $0x1928] sm:$0xff]
        %v1462 = vld [vmem:[%s272 + $0x1930] sm:$0xff]
        %v1463 = vld [vmem:[%s272 + $0x1938] sm:$0xff]
        %v1464 = vld [vmem:[%s272 + $0x1940] sm:$0xff]
        %v1465 = vld [vmem:[%s272 + $0x1948] sm:$0xff]
        %v1466 = vld [vmem:[%s272 + $0x1950] sm:$0xff]
        %v1467 = vld [vmem:[%s272 + $0x1958] sm:$0xff]
        %v1468 = vld [vmem:[%s272 + $0x1960] sm:$0xff]
        %v1469 = vld [vmem:[%s272 + $0x1968] sm:$0xff]
        %v1470 = vld [vmem:[%s272 + $0x1970] sm:$0xff]
        %v1471 = vld [vmem:[%s272 + $0x1978] sm:$0xff]
        %v1472 = vld [vmem:[%s272 + $0x1980] sm:$0xff]
        %v1473 = vld [vmem:[%s272 + $0x1988] sm:$0xff]
        %v1474 = vld [vmem:[%s272 + $0x1990] sm:$0xff]
        %v1475 = vld [vmem:[%s272 + $0x1998] sm:$0xff]
        %v1476 = vld [vmem:[%s272 + $0x19a0] sm:$0xff]
        %v1477 = vld [vmem:[%s272 + $0x19a8] sm:$0xff]
        %v1478 = vld [vmem:[%s272 + $0x19b0] sm:$0xff]
        %v1479 = vld [vmem:[%s272 + $0x19b8] sm:$0xff]
        %v1480 = vld [vmem:[%s272 + $0x19c0] sm:$0xff]
        %v1481 = vld [vmem:[%s272 + $0x19c8] sm:$0xff]
        %v1482 = vld [vmem:[%s272 + $0x19d0] sm:$0xff]
        %v1483 = vld [vmem:[%s272 + $0x19d8] sm:$0xff]
        %v1484 = vld [vmem:[%s272 + $0x19e0] sm:$0xff]
        %v1485 = vld [vmem:[%s272 + $0x19e8] sm:$0xff]
        %v1486 = vld [vmem:[%s272 + $0x19f0] sm:$0xff]
        %v1487 = vld [vmem:[%s272 + $0x19f8] sm:$0xff]
        %v1488 = vld [vmem:[%s272 + $0x1a00] sm:$0xff]
        %v1489 = vld [vmem:[%s272 + $0x1a08] sm:$0xff]
        %v1490 = vld [vmem:[%s272 + $0x1a10] sm:$0xff]
        %v1491 = vld [vmem:[%s272 + $0x1a18] sm:$0xff]
        %v1492 = vld [vmem:[%s272 + $0x1a20] sm:$0xff]
        %v1493 = vld [vmem:[%s272 + $0x1a28] sm:$0xff]
        %v1494 = vld [vmem:[%s272 + $0x1a30] sm:$0xff]
        %v1495 = vld [vmem:[%s272 + $0x1a38] sm:$0xff]
        %v1496 = vld [vmem:[%s272 + $0x1a40] sm:$0xff]
        %v1497 = vld [vmem:[%s272 + $0x1a48] sm:$0xff]
        %v1498 = vld [vmem:[%s272 + $0x1a50] sm:$0xff]
        %v1499 = vld [vmem:[%s272 + $0x1a58] sm:$0xff]
        %v1500 = vld [vmem:[%s272 + $0x1a60] sm:$0xff]
        %v1501 = vld [vmem:[%s272 + $0x1a68] sm:$0xff]
        %v1502 = vld [vmem:[%s272 + $0x1a70] sm:$0xff]
        %v1503 = vld [vmem:[%s272 + $0x1a78] sm:$0xff]
        %v1504 = vld [vmem:[%s272 + $0x1a80] sm:$0xff]
        %v1505 = vld [vmem:[%s272 + $0x1a88] sm:$0xff]
        %v1506 = vld [vmem:[%s272 + $0x1a90] sm:$0xff]
        %v1507 = vld [vmem:[%s272 + $0x1a98] sm:$0xff]
        %v1508 = vld [vmem:[%s272 + $0x1aa0] sm:$0xff]
        %v1509 = vld [vmem:[%s272 + $0x1aa8] sm:$0xff]
        %v1510 = vld [vmem:[%s272 + $0x1ab0] sm:$0xff]
        %v1511 = vld [vmem:[%s272 + $0x1ab8] sm:$0xff]
        %v1512 = vld [vmem:[%s272 + $0x1ac0] sm:$0xff]
        %v1513 = vld [vmem:[%s272 + $0x1ac8] sm:$0xff]
        %v1514 = vld [vmem:[%s272 + $0x1ad0] sm:$0xff]
        %v1515 = vld [vmem:[%s272 + $0x1ad8] sm:$0xff]
        %v1516 = vld [vmem:[%s272 + $0x1ae0] sm:$0xff]
        %v1517 = vld [vmem:[%s272 + $0x1ae8] sm:$0xff]
        %v1518 = vld [vmem:[%s272 + $0x1af0] sm:$0xff]
        %v1519 = vld [vmem:[%s272 + $0x1af8] sm:$0xff]
        %v1520 = vld [vmem:[%s272 + $0x1b00] sm:$0xff]
        %v1521 = vld [vmem:[%s272 + $0x1b08] sm:$0xff]
        %v1522 = vld [vmem:[%s272 + $0x1b10] sm:$0xff]
        %v1523 = vld [vmem:[%s272 + $0x1b18] sm:$0xff]
        %v1524 = vld [vmem:[%s272 + $0x1b20] sm:$0xff]
        %v1525 = vld [vmem:[%s272 + $0x1b28] sm:$0xff]
        %v1526 = vld [vmem:[%s272 + $0x1b30] sm:$0xff]
        %v1527 = vld [vmem:[%s272 + $0x1b38] sm:$0xff]
        %v1528 = vld [vmem:[%s272 + $0x1b40] sm:$0xff]
        %v1529 = vld [vmem:[%s272 + $0x1b48] sm:$0xff]
        %v1530 = vld [vmem:[%s272 + $0x1b50] sm:$0xff]
        %v1531 = vld [vmem:[%s272 + $0x1b58] sm:$0xff]
        %v1532 = vld [vmem:[%s272 + $0x1b60] sm:$0xff]
        %v1533 = vld [vmem:[%s272 + $0x1b68] sm:$0xff]
        %v1534 = vld [vmem:[%s272 + $0x1b70] sm:$0xff]
        %v1535 = vld [vmem:[%s272 + $0x1b78] sm:$0xff]
        %v1536 = vld [vmem:[%s272 + $0x1b80] sm:$0xff]
        %v1537 = vld [vmem:[%s272 + $0x1b88] sm:$0xff]
        %v1538 = vld [vmem:[%s272 + $0x1b90] sm:$0xff]
        %v1539 = vld [vmem:[%s272 + $0x1b98] sm:$0xff]
        %v1540 = vld [vmem:[%s272 + $0x1ba0] sm:$0xff]
        %v1541 = vld [vmem:[%s272 + $0x1ba8] sm:$0xff]
        %v1542 = vld [vmem:[%s272 + $0x1bb0] sm:$0xff]
        %v1543 = vld [vmem:[%s272 + $0x1bb8] sm:$0xff]
        %v1544 = vld [vmem:[%s272 + $0x1bc0] sm:$0xff]
        %v1545 = vld [vmem:[%s272 + $0x1bc8] sm:$0xff]
        %v1546 = vld [vmem:[%s272 + $0x1bd0] sm:$0xff]
        %v1547 = vld [vmem:[%s272 + $0x1bd8] sm:$0xff]
        %v1548 = vld [vmem:[%s272 + $0x1be0] sm:$0xff]
        %v1549 = vld [vmem:[%s272 + $0x1be8] sm:$0xff]
        %v1550 = vld [vmem:[%s272 + $0x1bf0] sm:$0xff]
        %v1551 = vld [vmem:[%s272 + $0x1bf8] sm:$0xff]
        %v1552 = vld [vmem:[%s272 + $0x1c00] sm:$0xff]
        %v1553 = vld [vmem:[%s272 + $0x1c08] sm:$0xff]
        %v1554 = vld [vmem:[%s272 + $0x1c10] sm:$0xff]
        %v1555 = vld [vmem:[%s272 + $0x1c18] sm:$0xff]
        %v1556 = vld [vmem:[%s272 + $0x1c20] sm:$0xff]
        %v1557 = vld [vmem:[%s272 + $0x1c28] sm:$0xff]
        %v1558 = vld [vmem:[%s272 + $0x1c30] sm:$0xff]
        %v1559 = vld [vmem:[%s272 + $0x1c38] sm:$0xff]
        %v1560 = vld [vmem:[%s272 + $0x1c40] sm:$0xff]
        %v1561 = vld [vmem:[%s272 + $0x1c48] sm:$0xff]
        %v1562 = vld [vmem:[%s272 + $0x1c50] sm:$0xff]
        %v1563 = vld [vmem:[%s272 + $0x1c58] sm:$0xff]
        %v1564 = vld [vmem:[%s272 + $0x1c60] sm:$0xff]
        %v1565 = vld [vmem:[%s272 + $0x1c68] sm:$0xff]
        %v1566 = vld [vmem:[%s272 + $0x1c70] sm:$0xff]
        %v1567 = vld [vmem:[%s272 + $0x1c78] sm:$0xff]
        %v1568 = vld [vmem:[%s272 + $0x1c80] sm:$0xff]
        %v1569 = vld [vmem:[%s272 + $0x1c88] sm:$0xff]
        %v1570 = vld [vmem:[%s272 + $0x1c90] sm:$0xff]
        %v1571 = vld [vmem:[%s272 + $0x1c98] sm:$0xff]
        %v1572 = vld [vmem:[%s272 + $0x1ca0] sm:$0xff]
        %v1573 = vld [vmem:[%s272 + $0x1ca8] sm:$0xff]
        %v1574 = vld [vmem:[%s272 + $0x1cb0] sm:$0xff]
        %v1575 = vld [vmem:[%s272 + $0x1cb8] sm:$0xff]
        %v1576 = vld [vmem:[%s272 + $0x1cc0] sm:$0xff]
        %v1577 = vld [vmem:[%s272 + $0x1cc8] sm:$0xff]
        %v1578 = vld [vmem:[%s272 + $0x1cd0] sm:$0xff]
        %v1579 = vld [vmem:[%s272 + $0x1cd8] sm:$0xff]
        %v1580 = vld [vmem:[%s272 + $0x1ce0] sm:$0xff]
        %v1581 = vld [vmem:[%s272 + $0x1ce8] sm:$0xff]
        %v1582 = vld [vmem:[%s272 + $0x1cf0] sm:$0xff]
        %v1583 = vld [vmem:[%s272 + $0x1cf8] sm:$0xff]
        %v1584 = vld [vmem:[%s272 + $0x1d00] sm:$0xff]
        %v1585 = vld [vmem:[%s272 + $0x1d08] sm:$0xff]
        %v1586 = vld [vmem:[%s272 + $0x1d10] sm:$0xff]
        %v1587 = vld [vmem:[%s272 + $0x1d18] sm:$0xff]
        %v1588 = vld [vmem:[%s272 + $0x1d20] sm:$0xff]
        %v1589 = vld [vmem:[%s272 + $0x1d28] sm:$0xff]
        %v1590 = vld [vmem:[%s272 + $0x1d30] sm:$0xff]
        %v1591 = vld [vmem:[%s272 + $0x1d38] sm:$0xff]
        %v1592 = vld [vmem:[%s272 + $0x1d40] sm:$0xff]
        %v1593 = vld [vmem:[%s272 + $0x1d48] sm:$0xff]
        %v1594 = vld [vmem:[%s272 + $0x1d50] sm:$0xff]
        %v1595 = vld [vmem:[%s272 + $0x1d58] sm:$0xff]
        %v1596 = vld [vmem:[%s272 + $0x1d60] sm:$0xff]
        %v1597 = vld [vmem:[%s272 + $0x1d68] sm:$0xff]
        %v1598 = vld [vmem:[%s272 + $0x1d70] sm:$0xff]
        %v1599 = vld [vmem:[%s272 + $0x1d78] sm:$0xff]
        %v1600 = vld [vmem:[%s272 + $0x1d80] sm:$0xff]
        %v1601 = vld [vmem:[%s272 + $0x1d88] sm:$0xff]
        %v1602 = vld [vmem:[%s272 + $0x1d90] sm:$0xff]
        %v1603 = vld [vmem:[%s272 + $0x1d98] sm:$0xff]
        %v1604 = vld [vmem:[%s272 + $0x1da0] sm:$0xff]
        %v1605 = vld [vmem:[%s272 + $0x1da8] sm:$0xff]
        %v1606 = vld [vmem:[%s272 + $0x1db0] sm:$0xff]
        %v1607 = vld [vmem:[%s272 + $0x1db8] sm:$0xff]
        %v1608 = vld [vmem:[%s272 + $0x1dc0] sm:$0xff]
        %v1609 = vld [vmem:[%s272 + $0x1dc8] sm:$0xff]
        %v1610 = vld [vmem:[%s272 + $0x1dd0] sm:$0xff]
        %v1611 = vld [vmem:[%s272 + $0x1dd8] sm:$0xff]
        %v1612 = vld [vmem:[%s272 + $0x1de0] sm:$0xff]
        %v1613 = vld [vmem:[%s272 + $0x1de8] sm:$0xff]
        %v1614 = vld [vmem:[%s272 + $0x1df0] sm:$0xff]
        %v1615 = vld [vmem:[%s272 + $0x1df8] sm:$0xff]
        %v1616 = vld [vmem:[%s272 + $0x1e00] sm:$0xff]
        %v1617 = vld [vmem:[%s272 + $0x1e08] sm:$0xff]
        %v1618 = vld [vmem:[%s272 + $0x1e10] sm:$0xff]
        %v1619 = vld [vmem:[%s272 + $0x1e18] sm:$0xff]
        %v1620 = vld [vmem:[%s272 + $0x1e20] sm:$0xff]
        %v1621 = vld [vmem:[%s272 + $0x1e28] sm:$0xff]
        %v1622 = vld [vmem:[%s272 + $0x1e30] sm:$0xff]
        %v1623 = vld [vmem:[%s272 + $0x1e38] sm:$0xff]
        %v1624 = vld [vmem:[%s272 + $0x1e40] sm:$0xff]
        %v1625 = vld [vmem:[%s272 + $0x1e48] sm:$0xff]
        %v1626 = vld [vmem:[%s272 + $0x1e50] sm:$0xff]
        %v1627 = vld [vmem:[%s272 + $0x1e58] sm:$0xff]
        %v1628 = vld [vmem:[%s272 + $0x1e60] sm:$0xff]
        %v1629 = vld [vmem:[%s272 + $0x1e68] sm:$0xff]
        %v1630 = vld [vmem:[%s272 + $0x1e70] sm:$0xff]
        %v1631 = vld [vmem:[%s272 + $0x1e78] sm:$0xff]
        %v1632 = vld [vmem:[%s272 + $0x1e80] sm:$0xff]
        %v1633 = vld [vmem:[%s272 + $0x1e88] sm:$0xff]
        %v1634 = vld [vmem:[%s272 + $0x1e90] sm:$0xff]
        %v1635 = vld [vmem:[%s272 + $0x1e98] sm:$0xff]
        %v1636 = vld [vmem:[%s272 + $0x1ea0] sm:$0xff]
        %v1637 = vld [vmem:[%s272 + $0x1ea8] sm:$0xff]
        %v1638 = vld [vmem:[%s272 + $0x1eb0] sm:$0xff]
        %v1639 = vld [vmem:[%s272 + $0x1eb8] sm:$0xff]
        %v1640 = vld [vmem:[%s272 + $0x1ec0] sm:$0xff]
        %v1641 = vld [vmem:[%s272 + $0x1ec8] sm:$0xff]
        %v1642 = vld [vmem:[%s272 + $0x1ed0] sm:$0xff]
        %v1643 = vld [vmem:[%s272 + $0x1ed8] sm:$0xff]
        %v1644 = vld [vmem:[%s272 + $0x1ee0] sm:$0xff]
        %v1645 = vld [vmem:[%s272 + $0x1ee8] sm:$0xff]
        %v1646 = vld [vmem:[%s272 + $0x1ef0] sm:$0xff]
        %v1647 = vld [vmem:[%s272 + $0x1ef8] sm:$0xff]
        %v1648 = vld [vmem:[%s272 + $0x1f00] sm:$0xff]
        %v1649 = vld [vmem:[%s272 + $0x1f08] sm:$0xff]
        %v1650 = vld [vmem:[%s272 + $0x1f10] sm:$0xff]
        %v1651 = vld [vmem:[%s272 + $0x1f18] sm:$0xff]
        %v1652 = vld [vmem:[%s272 + $0x1f20] sm:$0xff]
        %v1653 = vld [vmem:[%s272 + $0x1f28] sm:$0xff]
        %v1654 = vld [vmem:[%s272 + $0x1f30] sm:$0xff]
        %v1655 = vld [vmem:[%s272 + $0x1f38] sm:$0xff]
        %v1656 = vld [vmem:[%s272 + $0x1f40] sm:$0xff]
        %v1657 = vld [vmem:[%s272 + $0x1f48] sm:$0xff]
        %v1658 = vld [vmem:[%s272 + $0x1f50] sm:$0xff]
        %v1659 = vld [vmem:[%s272 + $0x1f58] sm:$0xff]
        %v1660 = vld [vmem:[%s272 + $0x1f60] sm:$0xff]
        %v1661 = vld [vmem:[%s272 + $0x1f68] sm:$0xff]
        %v1662 = vld [vmem:[%s272 + $0x1f70] sm:$0xff]
        %v1663 = vld [vmem:[%s272 + $0x1f78] sm:$0xff]
        %v1664 = vld [vmem:[%s272 + $0x1f80] sm:$0xff]
        %v1665 = vld [vmem:[%s272 + $0x1f88] sm:$0xff]
        %v1666 = vld [vmem:[%s272 + $0x1f90] sm:$0xff]
        %v1667 = vld [vmem:[%s272 + $0x1f98] sm:$0xff]
        %v1668 = vld [vmem:[%s272 + $0x1fa0] sm:$0xff]
        %v1669 = vld [vmem:[%s272 + $0x1fa8] sm:$0xff]
        %v1670 = vld [vmem:[%s272 + $0x1fb0] sm:$0xff]
        %v1671 = vld [vmem:[%s272 + $0x1fb8] sm:$0xff]
        %v1672 = vld [vmem:[%s272 + $0x1fc0] sm:$0xff]
        %v1673 = vld [vmem:[%s272 + $0x1fc8] sm:$0xff]
        %v1674 = vld [vmem:[%s272 + $0x1fd0] sm:$0xff]
        %v1675 = vld [vmem:[%s272 + $0x1fd8] sm:$0xff]
        %v1676 = vld [vmem:[%s272 + $0x1fe0] sm:$0xff]
        %v1677 = vld [vmem:[%s272 + $0x1fe8] sm:$0xff]
        %v1678 = vld [vmem:[%s272 + $0x1ff0] sm:$0xff]
        %v1679 = vld [vmem:[%s272 + $0x1ff8] sm:$0xff]
        %v1680 = vld [vmem:[%s272 + $0x2000] sm:$0xff]
        %v1681 = vld [vmem:[%s272 + $0x2008] sm:$0xff]
        %v1682 = vld [vmem:[%s272 + $0x2010] sm:$0xff]
        %v1683 = vld [vmem:[%s272 + $0x2018] sm:$0xff]
        %v1684 = vld [vmem:[%s272 + $0x2020] sm:$0xff]
        %v1685 = vld [vmem:[%s272 + $0x2028] sm:$0xff]
        %v1686 = vld [vmem:[%s272 + $0x2030] sm:$0xff]
        %v1687 = vld [vmem:[%s272 + $0x2038] sm:$0xff]
        %v1688 = vld [vmem:[%s272 + $0x2040] sm:$0xff]
        %v1689 = vld [vmem:[%s272 + $0x2048] sm:$0xff]
        %v1690 = vld [vmem:[%s272 + $0x2050] sm:$0xff]
        %v1691 = vld [vmem:[%s272 + $0x2058] sm:$0xff]
        %v1692 = vld [vmem:[%s272 + $0x2060] sm:$0xff]
        %v1693 = vld [vmem:[%s272 + $0x2068] sm:$0xff]
        %v1694 = vld [vmem:[%s272 + $0x2070] sm:$0xff]
        %v1695 = vld [vmem:[%s272 + $0x2078] sm:$0xff]
        %v1696 = vld [vmem:[%s272 + $0x2080] sm:$0xff]
        %v1697 = vld [vmem:[%s272 + $0x2088] sm:$0xff]
        %v1698 = vld [vmem:[%s272 + $0x2090] sm:$0xff]
        %v1699 = vld [vmem:[%s272 + $0x2098] sm:$0xff]
        %v1700 = vld [vmem:[%s272 + $0x20a0] sm:$0xff]
        %v1701 = vld [vmem:[%s272 + $0x20a8] sm:$0xff]
        %v1702 = vld [vmem:[%s272 + $0x20b0] sm:$0xff]
        %v1703 = vld [vmem:[%s272 + $0x20b8] sm:$0xff]
        %v1704 = vld [vmem:[%s272 + $0x20c0] sm:$0xff]
        %v1705 = vld [vmem:[%s272 + $0x20c8] sm:$0xff]
        %v1706 = vld [vmem:[%s272 + $0x20d0] sm:$0xff]
        %v1707 = vld [vmem:[%s272 + $0x20d8] sm:$0xff]
        %v1708 = vld [vmem:[%s272 + $0x20e0] sm:$0xff]
        %v1709 = vld [vmem:[%s272 + $0x20e8] sm:$0xff]
        %v1710 = vld [vmem:[%s272 + $0x20f0] sm:$0xff]
        %v1711 = vld [vmem:[%s272 + $0x20f8] sm:$0xff]
        %v1712 = vld [vmem:[%s272 + $0x2100] sm:$0xff]
        %v1713 = vld [vmem:[%s272 + $0x2108] sm:$0xff]
        %v1714 = vld [vmem:[%s272 + $0x2110] sm:$0xff]
        %v1715 = vld [vmem:[%s272 + $0x2118] sm:$0xff]
        %v1716 = vld [vmem:[%s272 + $0x2120] sm:$0xff]
        %v1717 = vld [vmem:[%s272 + $0x2128] sm:$0xff]
        %v1718 = vld [vmem:[%s272 + $0x2130] sm:$0xff]
        %v1719 = vld [vmem:[%s272 + $0x2138] sm:$0xff]
        %v1720 = vld [vmem:[%s272 + $0x2140] sm:$0xff]
        %v1721 = vld [vmem:[%s272 + $0x2148] sm:$0xff]
        %v1722 = vld [vmem:[%s272 + $0x2150] sm:$0xff]
        %v1723 = vld [vmem:[%s272 + $0x2158] sm:$0xff]
        %v1724 = vld [vmem:[%s272 + $0x2160] sm:$0xff]
        %v1725 = vld [vmem:[%s272 + $0x2168] sm:$0xff]
        %v1726 = vld [vmem:[%s272 + $0x2170] sm:$0xff]
        %v1727 = vld [vmem:[%s272 + $0x2178] sm:$0xff]
        %v1728 = vld [vmem:[%s272 + $0x2180] sm:$0xff]
        %v1729 = vld [vmem:[%s272 + $0x2188] sm:$0xff]
        %v1730 = vld [vmem:[%s272 + $0x2190] sm:$0xff]
        %v1731 = vld [vmem:[%s272 + $0x2198] sm:$0xff]
        %v1732 = vld [vmem:[%s272 + $0x21a0] sm:$0xff]
        %v1733 = vld [vmem:[%s272 + $0x21a8] sm:$0xff]
        %v1734 = vld [vmem:[%s272 + $0x21b0] sm:$0xff]
        %v1735 = vld [vmem:[%s272 + $0x21b8] sm:$0xff]
        %v1736 = vld [vmem:[%s272 + $0x21c0] sm:$0xff]
        %v1737 = vld [vmem:[%s272 + $0x21c8] sm:$0xff]
        %v1738 = vld [vmem:[%s272 + $0x21d0] sm:$0xff]
        %v1739 = vld [vmem:[%s272 + $0x21d8] sm:$0xff]
        %v1740 = vld [vmem:[%s272 + $0x21e0] sm:$0xff]
        %v1741 = vld [vmem:[%s272 + $0x21e8] sm:$0xff]
        %v1742 = vld [vmem:[%s272 + $0x21f0] sm:$0xff]
        %v1743 = vld [vmem:[%s272 + $0x21f8] sm:$0xff]
        %v1744 = vld [vmem:[%s272 + $0x2200] sm:$0xff]
        %v1745 = vld [vmem:[%s272 + $0x2208] sm:$0xff]
        %v1746 = vld [vmem:[%s272 + $0x2210] sm:$0xff]
        %v1747 = vld [vmem:[%s272 + $0x2218] sm:$0xff]
        %v1748 = vld [vmem:[%s272 + $0x2220] sm:$0xff]
        %v1749 = vld [vmem:[%s272 + $0x2228] sm:$0xff]
        %v1750 = vld [vmem:[%s272 + $0x2230] sm:$0xff]
        %v1751 = vld [vmem:[%s272 + $0x2238] sm:$0xff]
        %v1752 = vld [vmem:[%s272 + $0x2240] sm:$0xff]
        %v1753 = vld [vmem:[%s272 + $0x2248] sm:$0xff]
        %v1754 = vld [vmem:[%s272 + $0x2250] sm:$0xff]
        %v1755 = vld [vmem:[%s272 + $0x2258] sm:$0xff]
        %v1756 = vld [vmem:[%s272 + $0x2260] sm:$0xff]
        %v1757 = vld [vmem:[%s272 + $0x2268] sm:$0xff]
        %v1758 = vld [vmem:[%s272 + $0x2270] sm:$0xff]
        %v1759 = vld [vmem:[%s272 + $0x2278] sm:$0xff]
        %v1760 = vld [vmem:[%s272 + $0x2280] sm:$0xff]
        %v1761 = vld [vmem:[%s272 + $0x2288] sm:$0xff]
        %v1762 = vld [vmem:[%s272 + $0x2290] sm:$0xff]
        %v1763 = vld [vmem:[%s272 + $0x2298] sm:$0xff]
        %v1764 = vld [vmem:[%s272 + $0x22a0] sm:$0xff]
        %v1765 = vld [vmem:[%s272 + $0x22a8] sm:$0xff]
        %v1766 = vld [vmem:[%s272 + $0x22b0] sm:$0xff]
        %v1767 = vld [vmem:[%s272 + $0x22b8] sm:$0xff]
        %v1768 = vld [vmem:[%s272 + $0x22c0] sm:$0xff]
        %v1769 = vld [vmem:[%s272 + $0x22c8] sm:$0xff]
        %v1770 = vld [vmem:[%s272 + $0x22d0] sm:$0xff]
        %v1771 = vld [vmem:[%s272 + $0x22d8] sm:$0xff]
        %v1772 = vld [vmem:[%s272 + $0x22e0] sm:$0xff]
        %v1773 = vld [vmem:[%s272 + $0x22e8] sm:$0xff]
        %v1774 = vld [vmem:[%s272 + $0x22f0] sm:$0xff]
        %v1775 = vld [vmem:[%s272 + $0x22f8] sm:$0xff]
        %v1776 = vld [vmem:[%s272 + $0x2300] sm:$0xff]
        %v1777 = vld [vmem:[%s272 + $0x2308] sm:$0xff]
        %v1778 = vld [vmem:[%s272 + $0x2310] sm:$0xff]
        %v1779 = vld [vmem:[%s272 + $0x2318] sm:$0xff]
        %v1780 = vld [vmem:[%s272 + $0x2320] sm:$0xff]
        %v1781 = vld [vmem:[%s272 + $0x2328] sm:$0xff]
        %v1782 = vld [vmem:[%s272 + $0x2330] sm:$0xff]
        %v1783 = vld [vmem:[%s272 + $0x2338] sm:$0xff]
        %v1784 = vld [vmem:[%s272 + $0x2340] sm:$0xff]
        %v1785 = vld [vmem:[%s272 + $0x2348] sm:$0xff]
        %v1786 = vld [vmem:[%s272 + $0x2350] sm:$0xff]
        %v1787 = vld [vmem:[%s272 + $0x2358] sm:$0xff]
        %v1788 = vld [vmem:[%s272 + $0x2360] sm:$0xff]
        %v1789 = vld [vmem:[%s272 + $0x2368] sm:$0xff]
        %v1790 = vld [vmem:[%s272 + $0x2370] sm:$0xff]
        %v1791 = vld [vmem:[%s272 + $0x2378] sm:$0xff]
        %v1792 = vld [vmem:[%s272 + $0x2380] sm:$0xff]
        %v1793 = vld [vmem:[%s272 + $0x2388] sm:$0xff]
        %v1794 = vld [vmem:[%s272 + $0x2390] sm:$0xff]
        %v1795 = vld [vmem:[%s272 + $0x2398] sm:$0xff]
        %v1796 = vld [vmem:[%s272 + $0x23a0] sm:$0xff]
        %v1797 = vld [vmem:[%s272 + $0x23a8] sm:$0xff]
        %v1798 = vld [vmem:[%s272 + $0x23b0] sm:$0xff]
        %v1799 = vld [vmem:[%s272 + $0x23b8] sm:$0xff]
        %v1800 = vld [vmem:[%s272 + $0x23c0] sm:$0xff]
        %v1801 = vld [vmem:[%s272 + $0x23c8] sm:$0xff]
        %v1802 = vld [vmem:[%s272 + $0x23d0] sm:$0xff]
        %v1803 = vld [vmem:[%s272 + $0x23d8] sm:$0xff]
        %v1804 = vld [vmem:[%s272 + $0x23e0] sm:$0xff]
        %v1805 = vld [vmem:[%s272 + $0x23e8] sm:$0xff]
        %v1806 = vld [vmem:[%s272 + $0x23f0] sm:$0xff]
        %v1807 = vld [vmem:[%s272 + $0x23f8] sm:$0xff]
        %v1808 = vld [vmem:[%s272 + $0x2400] sm:$0xff]
        %v1809 = vld [vmem:[%s272 + $0x2408] sm:$0xff]
        %v1810 = vld [vmem:[%s272 + $0x2410] sm:$0xff]
        %v1811 = vld [vmem:[%s272 + $0x2418] sm:$0xff]
        %v1812 = vld [vmem:[%s272 + $0x2420] sm:$0xff]
        %v1813 = vld [vmem:[%s272 + $0x2428] sm:$0xff]
        %v1814 = vld [vmem:[%s272 + $0x2430] sm:$0xff]
        %v1815 = vld [vmem:[%s272 + $0x2438] sm:$0xff]
        %v1816 = vld [vmem:[%s272 + $0x2440] sm:$0xff]
        %v1817 = vld [vmem:[%s272 + $0x2448] sm:$0xff]
        %v1818 = vld [vmem:[%s272 + $0x2450] sm:$0xff]
        %v1819 = vld [vmem:[%s272 + $0x2458] sm:$0xff]
        %v1820 = vld [vmem:[%s272 + $0x2460] sm:$0xff]
        %v1821 = vld [vmem:[%s272 + $0x2468] sm:$0xff]
        %v1822 = vld [vmem:[%s272 + $0x2470] sm:$0xff]
        %v1823 = vld [vmem:[%s272 + $0x2478] sm:$0xff]
        %v1824 = vld [vmem:[%s272 + $0x2480] sm:$0xff]
        %v1825 = vld [vmem:[%s272 + $0x2488] sm:$0xff]
        %v1826 = vld [vmem:[%s272 + $0x2490] sm:$0xff]
        %v1827 = vld [vmem:[%s272 + $0x2498] sm:$0xff]
        %v1828 = vld [vmem:[%s272 + $0x24a0] sm:$0xff]
        %v1829 = vld [vmem:[%s272 + $0x24a8] sm:$0xff]
        %v1830 = vld [vmem:[%s272 + $0x24b0] sm:$0xff]
        %v1831 = vld [vmem:[%s272 + $0x24b8] sm:$0xff]
        %v1832 = vld [vmem:[%s272 + $0x24c0] sm:$0xff]
        %v1833 = vld [vmem:[%s272 + $0x24c8] sm:$0xff]
        %v1834 = vld [vmem:[%s272 + $0x24d0] sm:$0xff]
        %v1835 = vld [vmem:[%s272 + $0x24d8] sm:$0xff]
        %v1836 = vld [vmem:[%s272 + $0x24e0] sm:$0xff]
        %v1837 = vld [vmem:[%s272 + $0x24e8] sm:$0xff]
        %v1838 = vld [vmem:[%s272 + $0x24f0] sm:$0xff]
        %v1839 = vld [vmem:[%s272 + $0x24f8] sm:$0xff]
        %v1840 = vld [vmem:[%s272 + $0x2500] sm:$0xff]
        %v1841 = vld [vmem:[%s272 + $0x2508] sm:$0xff]
        %v1842 = vld [vmem:[%s272 + $0x2510] sm:$0xff]
        %v1843 = vld [vmem:[%s272 + $0x2518] sm:$0xff]
        %v1844 = vld [vmem:[%s272 + $0x2520] sm:$0xff]
        %v1845 = vld [vmem:[%s272 + $0x2528] sm:$0xff]
        %v1846 = vld [vmem:[%s272 + $0x2530] sm:$0xff]
        %v1847 = vld [vmem:[%s272 + $0x2538] sm:$0xff]
        %v1848 = vld [vmem:[%s272 + $0x2540] sm:$0xff]
        %v1849 = vld [vmem:[%s272 + $0x2548] sm:$0xff]
        %v1850 = vld [vmem:[%s272 + $0x2550] sm:$0xff]
        %v1851 = vld [vmem:[%s272 + $0x2558] sm:$0xff]
        %v1852 = vld [vmem:[%s272 + $0x2560] sm:$0xff]
        %v1853 = vld [vmem:[%s272 + $0x2568] sm:$0xff]
        %v1854 = vld [vmem:[%s272 + $0x2570] sm:$0xff]
        %v1855 = vld [vmem:[%s272 + $0x2578] sm:$0xff]
        %v1856 = vld [vmem:[%s272 + $0x2580] sm:$0xff]
        %v1857 = vld [vmem:[%s272 + $0x2588] sm:$0xff]
        %v1858 = vld [vmem:[%s272 + $0x2590] sm:$0xff]
        %v1859 = vld [vmem:[%s272 + $0x2598] sm:$0xff]
        %v1860 = vld [vmem:[%s272 + $0x25a0] sm:$0xff]
        %v1861 = vld [vmem:[%s272 + $0x25a8] sm:$0xff]
        %v1862 = vld [vmem:[%s272 + $0x25b0] sm:$0xff]
        %v1863 = vld [vmem:[%s272 + $0x25b8] sm:$0xff]
        %v1864 = vld [vmem:[%s272 + $0x25c0] sm:$0xff]
        %v1865 = vld [vmem:[%s272 + $0x25c8] sm:$0xff]
        %v1866 = vld [vmem:[%s272 + $0x25d0] sm:$0xff]
        %v1867 = vld [vmem:[%s272 + $0x25d8] sm:$0xff]
        %v1868 = vld [vmem:[%s272 + $0x25e0] sm:$0xff]
        %v1869 = vld [vmem:[%s272 + $0x25e8] sm:$0xff]
        %v1870 = vld [vmem:[%s272 + $0x25f0] sm:$0xff]
        %v1871 = vld [vmem:[%s272 + $0x25f8] sm:$0xff]
        %v1872 = vld [vmem:[%s272 + $0x2600] sm:$0xff]
        %v1873 = vld [vmem:[%s272 + $0x2608] sm:$0xff]
        %v1874 = vld [vmem:[%s272 + $0x2610] sm:$0xff]
        %v1875 = vld [vmem:[%s272 + $0x2618] sm:$0xff]
        %v1876 = vld [vmem:[%s272 + $0x2620] sm:$0xff]
        %v1877 = vld [vmem:[%s272 + $0x2628] sm:$0xff]
        %v1878 = vld [vmem:[%s272 + $0x2630] sm:$0xff]
        %v1879 = vld [vmem:[%s272 + $0x2638] sm:$0xff]
        %v1880 = vld [vmem:[%s272 + $0x2640] sm:$0xff]
        %v1881 = vld [vmem:[%s272 + $0x2648] sm:$0xff]
        %v1882 = vld [vmem:[%s272 + $0x2650] sm:$0xff]
        %v1883 = vld [vmem:[%s272 + $0x2658] sm:$0xff]
        %v1884 = vld [vmem:[%s272 + $0x2660] sm:$0xff]
        %v1885 = vld [vmem:[%s272 + $0x2668] sm:$0xff]
        %v1886 = vld [vmem:[%s272 + $0x2670] sm:$0xff]
        %v1887 = vld [vmem:[%s272 + $0x2678] sm:$0xff]
        %v1888 = vld [vmem:[%s272 + $0x2680] sm:$0xff]
        %v1889 = vld [vmem:[%s272 + $0x2688] sm:$0xff]
        %v1890 = vld [vmem:[%s272 + $0x2690] sm:$0xff]
        %v1891 = vld [vmem:[%s272 + $0x2698] sm:$0xff]
        %v1892 = vld [vmem:[%s272 + $0x26a0] sm:$0xff]
        %v1893 = vld [vmem:[%s272 + $0x26a8] sm:$0xff]
        %v1894 = vld [vmem:[%s272 + $0x26b0] sm:$0xff]
        %v1895 = vld [vmem:[%s272 + $0x26b8] sm:$0xff]
        %v1896 = vld [vmem:[%s272 + $0x26c0] sm:$0xff]
        %v1897 = vld [vmem:[%s272 + $0x26c8] sm:$0xff]
        %v1898 = vld [vmem:[%s272 + $0x26d0] sm:$0xff]
        %v1899 = vld [vmem:[%s272 + $0x26d8] sm:$0xff]
        %v1900 = vld [vmem:[%s272 + $0x26e0] sm:$0xff]
        %v1901 = vld [vmem:[%s272 + $0x26e8] sm:$0xff]
        %v1902 = vld [vmem:[%s272 + $0x26f0] sm:$0xff]
        %v1903 = vld [vmem:[%s272 + $0x26f8] sm:$0xff]
        %v1904 = vld [vmem:[%s272 + $0x2700] sm:$0xff]
        %v1905 = vld [vmem:[%s272 + $0x2708] sm:$0xff]
        %v1906 = vld [vmem:[%s272 + $0x2710] sm:$0xff]
        %v1907 = vld [vmem:[%s272 + $0x2718] sm:$0xff]
        %v1908 = vld [vmem:[%s272 + $0x2720] sm:$0xff]
        %v1909 = vld [vmem:[%s272 + $0x2728] sm:$0xff]
        %v1910 = vld [vmem:[%s272 + $0x2730] sm:$0xff]
        %v1911 = vld [vmem:[%s272 + $0x2738] sm:$0xff]
        %v1912 = vld [vmem:[%s272 + $0x2740] sm:$0xff]
        %v1913 = vld [vmem:[%s272 + $0x2748] sm:$0xff]
        %v1914 = vld [vmem:[%s272 + $0x2750] sm:$0xff]
        %v1915 = vld [vmem:[%s272 + $0x2758] sm:$0xff]
        %v1916 = vld [vmem:[%s272 + $0x2760] sm:$0xff]
        %v1917 = vld [vmem:[%s272 + $0x2768] sm:$0xff]
        %v1918 = vld [vmem:[%s272 + $0x2770] sm:$0xff]
        %v1919 = vld [vmem:[%s272 + $0x2778] sm:$0xff]
        %v1920 = vld [vmem:[%s272 + $0x2780] sm:$0xff]
        %v1921 = vld [vmem:[%s272 + $0x2788] sm:$0xff]
        %v1922 = vld [vmem:[%s272 + $0x2790] sm:$0xff]
        %v1923 = vld [vmem:[%s272 + $0x2798] sm:$0xff]
        %v1924 = vld [vmem:[%s272 + $0x27a0] sm:$0xff]
        %v1925 = vld [vmem:[%s272 + $0x27a8] sm:$0xff]
        %v1926 = vld [vmem:[%s272 + $0x27b0] sm:$0xff]
        %v1927 = vld [vmem:[%s272 + $0x27b8] sm:$0xff]
        %v1928 = vld [vmem:[%s272 + $0x27c0] sm:$0xff]
        %v1929 = vld [vmem:[%s272 + $0x27c8] sm:$0xff]
        %v1930 = vld [vmem:[%s272 + $0x27d0] sm:$0xff]
        %v1931 = vld [vmem:[%s272 + $0x27d8] sm:$0xff]
        %v1932 = vld [vmem:[%s272 + $0x27e0] sm:$0xff]
        %v1933 = vld [vmem:[%s272 + $0x27e8] sm:$0xff]
        %v1934 = vld [vmem:[%s272 + $0x27f0] sm:$0xff]
        %v1935 = vld [vmem:[%s272 + $0x27f8] sm:$0xff]
        %v1936 = vld [vmem:[%s272 + $0x2800] sm:$0xff]
        %v1937 = vld [vmem:[%s272 + $0x2808] sm:$0xff]
        %v1938 = vld [vmem:[%s272 + $0x2810] sm:$0xff]
        %v1939 = vld [vmem:[%s272 + $0x2818] sm:$0xff]
        %v1940 = vld [vmem:[%s272 + $0x2820] sm:$0xff]
        %v1941 = vld [vmem:[%s272 + $0x2828] sm:$0xff]
        %v1942 = vld [vmem:[%s272 + $0x2830] sm:$0xff]
        %v1943 = vld [vmem:[%s272 + $0x2838] sm:$0xff]
        %v1944 = vld [vmem:[%s272 + $0x2840] sm:$0xff]
        %v1945 = vld [vmem:[%s272 + $0x2848] sm:$0xff]
        %v1946 = vld [vmem:[%s272 + $0x2850] sm:$0xff]
        %v1947 = vld [vmem:[%s272 + $0x2858] sm:$0xff]
        %v1948 = vld [vmem:[%s272 + $0x2860] sm:$0xff]
        %v1949 = vld [vmem:[%s272 + $0x2868] sm:$0xff]
        %v1950 = vld [vmem:[%s272 + $0x2870] sm:$0xff]
        %v1951 = vld [vmem:[%s272 + $0x2878] sm:$0xff]
        %v1952 = vld [vmem:[%s272 + $0x2880] sm:$0xff]
        %v1953 = vld [vmem:[%s272 + $0x2888] sm:$0xff]
        %v1954 = vld [vmem:[%s272 + $0x2890] sm:$0xff]
        %v1955 = vld [vmem:[%s272 + $0x2898] sm:$0xff]
        %v1956 = vld [vmem:[%s272 + $0x28a0] sm:$0xff]
        %v1957 = vld [vmem:[%s272 + $0x28a8] sm:$0xff]
        %v1958 = vld [vmem:[%s272 + $0x28b0] sm:$0xff]
        %v1959 = vld [vmem:[%s272 + $0x28b8] sm:$0xff]
        %v1960 = vld [vmem:[%s272 + $0x28c0] sm:$0xff]
        %v1961 = vld [vmem:[%s272 + $0x28c8] sm:$0xff]
        %v1962 = vld [vmem:[%s272 + $0x28d0] sm:$0xff]
        %v1963 = vld [vmem:[%s272 + $0x28d8] sm:$0xff]
        %v1964 = vld [vmem:[%s272 + $0x28e0] sm:$0xff]
        %v1965 = vld [vmem:[%s272 + $0x28e8] sm:$0xff]
        %v1966 = vld [vmem:[%s272 + $0x28f0] sm:$0xff]
        %v1967 = vld [vmem:[%s272 + $0x28f8] sm:$0xff]
        %v1968 = vld [vmem:[%s272 + $0x2900] sm:$0xff]
        %v1969 = vld [vmem:[%s272 + $0x2908] sm:$0xff]
        %v1970 = vld [vmem:[%s272 + $0x2910] sm:$0xff]
        %v1971 = vld [vmem:[%s272 + $0x2918] sm:$0xff]
        %v1972 = vld [vmem:[%s272 + $0x2920] sm:$0xff]
        %v1973 = vld [vmem:[%s272 + $0x2928] sm:$0xff]
        %v1974 = vld [vmem:[%s272 + $0x2930] sm:$0xff]
        %v1975 = vld [vmem:[%s272 + $0x2938] sm:$0xff]
        %v1976 = vld [vmem:[%s272 + $0x2940] sm:$0xff]
        %v1977 = vld [vmem:[%s272 + $0x2948] sm:$0xff]
        %v1978 = vld [vmem:[%s272 + $0x2950] sm:$0xff]
        %v1979 = vld [vmem:[%s272 + $0x2958] sm:$0xff]
        %v1980 = vld [vmem:[%s272 + $0x2960] sm:$0xff]
        %v1981 = vld [vmem:[%s272 + $0x2968] sm:$0xff]
        %v1982 = vld [vmem:[%s272 + $0x2970] sm:$0xff]
        %v1983 = vld [vmem:[%s272 + $0x2978] sm:$0xff]
        %v1984 = vld [vmem:[%s272 + $0x2980] sm:$0xff]
        %v1985 = vld [vmem:[%s272 + $0x2988] sm:$0xff]
        %v1986 = vld [vmem:[%s272 + $0x2990] sm:$0xff]
        %v1987 = vld [vmem:[%s272 + $0x2998] sm:$0xff]
        %v1988 = vld [vmem:[%s272 + $0x29a0] sm:$0xff]
        %v1989 = vld [vmem:[%s272 + $0x29a8] sm:$0xff]
        %v1990 = vld [vmem:[%s272 + $0x29b0] sm:$0xff]
        %v1991 = vld [vmem:[%s272 + $0x29b8] sm:$0xff]
        %v1992 = vld [vmem:[%s272 + $0x29c0] sm:$0xff]
        %v1993 = vld [vmem:[%s272 + $0x29c8] sm:$0xff]
        %v1994 = vld [vmem:[%s272 + $0x29d0] sm:$0xff]
        %v1995 = vld [vmem:[%s272 + $0x29d8] sm:$0xff]
        %v1996 = vld [vmem:[%s272 + $0x29e0] sm:$0xff]
        %v1997 = vld [vmem:[%s272 + $0x29e8] sm:$0xff]
        %v1998 = vld [vmem:[%s272 + $0x29f0] sm:$0xff]
        %v1999 = vld [vmem:[%s272 + $0x29f8] sm:$0xff]
        %v2000 = vld [vmem:[%s272 + $0x2a00] sm:$0xff]
        %v2001 = vld [vmem:[%s272 + $0x2a08] sm:$0xff]
        %v2002 = vld [vmem:[%s272 + $0x2a10] sm:$0xff]
        %v2003 = vld [vmem:[%s272 + $0x2a18] sm:$0xff]
        %v2004 = vld [vmem:[%s272 + $0x2a20] sm:$0xff]
        %v2005 = vld [vmem:[%s272 + $0x2a28] sm:$0xff]
        %v2006 = vld [vmem:[%s272 + $0x2a30] sm:$0xff]
        %v2007 = vld [vmem:[%s272 + $0x2a38] sm:$0xff]
        %v2008 = vld [vmem:[%s272 + $0x2a40] sm:$0xff]
        %v2009 = vld [vmem:[%s272 + $0x2a48] sm:$0xff]
        %v2010 = vld [vmem:[%s272 + $0x2a50] sm:$0xff]
        %v2011 = vld [vmem:[%s272 + $0x2a58] sm:$0xff]
        %v2012 = vld [vmem:[%s272 + $0x2a60] sm:$0xff]
        %v2013 = vld [vmem:[%s272 + $0x2a68] sm:$0xff]
        %v2014 = vld [vmem:[%s272 + $0x2a70] sm:$0xff]
        %v2015 = vld [vmem:[%s272 + $0x2a78] sm:$0xff]
        %v2016 = vld [vmem:[%s272 + $0x2a80] sm:$0xff]
        %v2017 = vld [vmem:[%s272 + $0x2a88] sm:$0xff]
        %v2018 = vld [vmem:[%s272 + $0x2a90] sm:$0xff]
        %v2019 = vld [vmem:[%s272 + $0x2a98] sm:$0xff]
        %v2020 = vld [vmem:[%s272 + $0x2aa0] sm:$0xff]
        %v2021 = vld [vmem:[%s272 + $0x2aa8] sm:$0xff]
        %v2022 = vld [vmem:[%s272 + $0x2ab0] sm:$0xff]
        %v2023 = vld [vmem:[%s272 + $0x2ab8] sm:$0xff]
        %v2024 = vld [vmem:[%s272 + $0x2ac0] sm:$0xff]
        %v2025 = vld [vmem:[%s272 + $0x2ac8] sm:$0xff]
        %v2026 = vld [vmem:[%s272 + $0x2ad0] sm:$0xff]
        %v2027 = vld [vmem:[%s272 + $0x2ad8] sm:$0xff]
        %v2028 = vld [vmem:[%s272 + $0x2ae0] sm:$0xff]
        %v2029 = vld [vmem:[%s272 + $0x2ae8] sm:$0xff]
        %v2030 = vld [vmem:[%s272 + $0x2af0] sm:$0xff]
        %v2031 = vld [vmem:[%s272 + $0x2af8] sm:$0xff]
        %v2032 = vld [vmem:[%s272 + $0x2b00] sm:$0xff]
        %v2033 = vld [vmem:[%s272 + $0x2b08] sm:$0xff]
        %v2034 = vld [vmem:[%s272 + $0x2b10] sm:$0xff]
        %v2035 = vld [vmem:[%s272 + $0x2b18] sm:$0xff]
        %v2036 = vld [vmem:[%s272 + $0x2b20] sm:$0xff]
        %v2037 = vld [vmem:[%s272 + $0x2b28] sm:$0xff]
        %v2038 = vld [vmem:[%s272 + $0x2b30] sm:$0xff]
        %v2039 = vld [vmem:[%s272 + $0x2b38] sm:$0xff]
        %v2040 = vld [vmem:[%s272 + $0x2b40] sm:$0xff]
        %v2041 = vld [vmem:[%s272 + $0x2b48] sm:$0xff]
        %v2042 = vld [vmem:[%s272 + $0x2b50] sm:$0xff]
        %v2043 = vld [vmem:[%s272 + $0x2b58] sm:$0xff]
        %v2044 = vld [vmem:[%s272 + $0x2b60] sm:$0xff]
        %v2045 = vld [vmem:[%s272 + $0x2b68] sm:$0xff]
        %v2046 = vld [vmem:[%s272 + $0x2b70] sm:$0xff]
        %v2047 = vld [vmem:[%s272 + $0x2b78] sm:$0xff]
        %v2048 = vld [vmem:[%s272 + $0x2b80] sm:$0xff]
        %v2049 = vld [vmem:[%s272 + $0x2b88] sm:$0xff]
        %v2050 = vld [vmem:[%s272 + $0x2b90] sm:$0xff]
        %v2051 = vld [vmem:[%s272 + $0x2b98] sm:$0xff]
        %v2052 = vld [vmem:[%s272 + $0x2ba0] sm:$0xff]
        %v2053 = vld [vmem:[%s272 + $0x2ba8] sm:$0xff]
        %v2054 = vld [vmem:[%s272 + $0x2bb0] sm:$0xff]
        %v2055 = vld [vmem:[%s272 + $0x2bb8] sm:$0xff]
        %v2056 = vld [vmem:[%s272 + $0x2bc0] sm:$0xff]
        %v2057 = vld [vmem:[%s272 + $0x2bc8] sm:$0xff]
        %v2058 = vld [vmem:[%s272 + $0x2bd0] sm:$0xff]
        %v2059 = vld [vmem:[%s272 + $0x2bd8] sm:$0xff]
        %v2060 = vld [vmem:[%s272 + $0x2be0] sm:$0xff]
        %v2061 = vld [vmem:[%s272 + $0x2be8] sm:$0xff]
        %v2062 = vld [vmem:[%s272 + $0x2bf0] sm:$0xff]
        %v2063 = vld [vmem:[%s272 + $0x2bf8] sm:$0xff]
        %v2064 = vld [vmem:[%s272 + $0x2c00] sm:$0xff]
        %v2065 = vld [vmem:[%s272 + $0x2c08] sm:$0xff]
        %v2066 = vld [vmem:[%s272 + $0x2c10] sm:$0xff]
        %v2067 = vld [vmem:[%s272 + $0x2c18] sm:$0xff]
        %v2068 = vld [vmem:[%s272 + $0x2c20] sm:$0xff]
        %v2069 = vld [vmem:[%s272 + $0x2c28] sm:$0xff]
        %v2070 = vld [vmem:[%s272 + $0x2c30] sm:$0xff]
        %v2071 = vld [vmem:[%s272 + $0x2c38] sm:$0xff]
        %v2072 = vld [vmem:[%s272 + $0x2c40] sm:$0xff]
        %v2073 = vld [vmem:[%s272 + $0x2c48] sm:$0xff]
        %v2074 = vld [vmem:[%s272 + $0x2c50] sm:$0xff]
        %v2075 = vld [vmem:[%s272 + $0x2c58] sm:$0xff]
        %v2076 = vld [vmem:[%s272 + $0x2c60] sm:$0xff]
        %v2077 = vld [vmem:[%s272 + $0x2c68] sm:$0xff]
        %v2078 = vld [vmem:[%s272 + $0x2c70] sm:$0xff]
        %v2079 = vld [vmem:[%s272 + $0x2c78] sm:$0xff]
        %v2080 = vld [vmem:[%s272 + $0x2c80] sm:$0xff]
        %v2081 = vld [vmem:[%s272 + $0x2c88] sm:$0xff]
        %v2082 = vld [vmem:[%s272 + $0x2c90] sm:$0xff]
        %v2083 = vld [vmem:[%s272 + $0x2c98] sm:$0xff]
        %v2084 = vld [vmem:[%s272 + $0x2ca0] sm:$0xff]
        %v2085 = vld [vmem:[%s272 + $0x2ca8] sm:$0xff]
        %v2086 = vld [vmem:[%s272 + $0x2cb0] sm:$0xff]
        %v2087 = vld [vmem:[%s272 + $0x2cb8] sm:$0xff]
        %v2088 = vld [vmem:[%s272 + $0x2cc0] sm:$0xff]
        %v2089 = vld [vmem:[%s272 + $0x2cc8] sm:$0xff]
        %v2090 = vld [vmem:[%s272 + $0x2cd0] sm:$0xff]
        %v2091 = vld [vmem:[%s272 + $0x2cd8] sm:$0xff]
        %v2092 = vld [vmem:[%s272 + $0x2ce0] sm:$0xff]
        %v2093 = vld [vmem:[%s272 + $0x2ce8] sm:$0xff]
        %v2094 = vld [vmem:[%s272 + $0x2cf0] sm:$0xff]
        %v2095 = vld [vmem:[%s272 + $0x2cf8] sm:$0xff]
        %v2096 = vld [vmem:[%s272 + $0x2d00] sm:$0xff]
        %v2097 = vld [vmem:[%s272 + $0x2d08] sm:$0xff]
        %v2098 = vld [vmem:[%s272 + $0x2d10] sm:$0xff]
        %v2099 = vld [vmem:[%s272 + $0x2d18] sm:$0xff]
        %v2100 = vld [vmem:[%s272 + $0x2d20] sm:$0xff]
        %v2101 = vld [vmem:[%s272 + $0x2d28] sm:$0xff]
        %v2102 = vld [vmem:[%s272 + $0x2d30] sm:$0xff]
        %v2103 = vld [vmem:[%s272 + $0x2d38] sm:$0xff]
        %v2104 = vld [vmem:[%s272 + $0x2d40] sm:$0xff]
        %v2105 = vld [vmem:[%s272 + $0x2d48] sm:$0xff]
        %v2106 = vld [vmem:[%s272 + $0x2d50] sm:$0xff]
        %v2107 = vld [vmem:[%s272 + $0x2d58] sm:$0xff]
        %v2108 = vld [vmem:[%s272 + $0x2d60] sm:$0xff]
        %v2109 = vld [vmem:[%s272 + $0x2d68] sm:$0xff]
        %v2110 = vld [vmem:[%s272 + $0x2d70] sm:$0xff]
        %v2111 = vld [vmem:[%s272 + $0x2d78] sm:$0xff]
        %v2112 = vld [vmem:[%s272 + $0x2d80] sm:$0xff]
        %v2113 = vld [vmem:[%s272 + $0x2d88] sm:$0xff]
        %v2114 = vld [vmem:[%s272 + $0x2d90] sm:$0xff]
        %v2115 = vld [vmem:[%s272 + $0x2d98] sm:$0xff]
        %v2116 = vld [vmem:[%s272 + $0x2da0] sm:$0xff]
        %v2117 = vld [vmem:[%s272 + $0x2da8] sm:$0xff]
        %v2118 = vld [vmem:[%s272 + $0x2db0] sm:$0xff]
        %v2119 = vld [vmem:[%s272 + $0x2db8] sm:$0xff]
        %v2120 = vld [vmem:[%s272 + $0x2dc0] sm:$0xff]
        %v2121 = vld [vmem:[%s272 + $0x2dc8] sm:$0xff]
        %v2122 = vld [vmem:[%s272 + $0x2dd0] sm:$0xff]
        %v2123 = vld [vmem:[%s272 + $0x2dd8] sm:$0xff]
        %v2124 = vld [vmem:[%s272 + $0x2de0] sm:$0xff]
        %v2125 = vld [vmem:[%s272 + $0x2de8] sm:$0xff]
        %v2126 = vld [vmem:[%s272 + $0x2df0] sm:$0xff]
        %v2127 = vld [vmem:[%s272 + $0x2df8] sm:$0xff]
        %v2128 = vld [vmem:[%s272 + $0x2e00] sm:$0xff]
        %v2129 = vld [vmem:[%s272 + $0x2e08] sm:$0xff]
        %v2130 = vld [vmem:[%s272 + $0x2e10] sm:$0xff]
        %v2131 = vld [vmem:[%s272 + $0x2e18] sm:$0xff]
        %v2132 = vld [vmem:[%s272 + $0x2e20] sm:$0xff]
        %v2133 = vld [vmem:[%s272 + $0x2e28] sm:$0xff]
        %v2134 = vld [vmem:[%s272 + $0x2e30] sm:$0xff]
        %v2135 = vld [vmem:[%s272 + $0x2e38] sm:$0xff]
        %v2136 = vld [vmem:[%s272 + $0x2e40] sm:$0xff]
        %v2137 = vld [vmem:[%s272 + $0x2e48] sm:$0xff]
        %v2138 = vld [vmem:[%s272 + $0x2e50] sm:$0xff]
        %v2139 = vld [vmem:[%s272 + $0x2e58] sm:$0xff]
        %v2140 = vld [vmem:[%s272 + $0x2e60] sm:$0xff]
        %v2141 = vld [vmem:[%s272 + $0x2e68] sm:$0xff]
        %v2142 = vld [vmem:[%s272 + $0x2e70] sm:$0xff]
        %v2143 = vld [vmem:[%s272 + $0x2e78] sm:$0xff]
        %v2144 = vld [vmem:[%s272 + $0x2e80] sm:$0xff]
        %v2145 = vld [vmem:[%s272 + $0x2e88] sm:$0xff]
        %v2146 = vld [vmem:[%s272 + $0x2e90] sm:$0xff]
        %v2147 = vld [vmem:[%s272 + $0x2e98] sm:$0xff]
        %v2148 = vld [vmem:[%s272 + $0x2ea0] sm:$0xff]
        %v2149 = vld [vmem:[%s272 + $0x2ea8] sm:$0xff]
        %v2150 = vld [vmem:[%s272 + $0x2eb0] sm:$0xff]
        %v2151 = vld [vmem:[%s272 + $0x2eb8] sm:$0xff]
        %v2152 = vld [vmem:[%s272 + $0x2ec0] sm:$0xff]
        %v2153 = vld [vmem:[%s272 + $0x2ec8] sm:$0xff]
        %v2154 = vld [vmem:[%s272 + $0x2ed0] sm:$0xff]
        %v2155 = vld [vmem:[%s272 + $0x2ed8] sm:$0xff]
        %v2156 = vld [vmem:[%s272 + $0x2ee0] sm:$0xff]
        %v2157 = vld [vmem:[%s272 + $0x2ee8] sm:$0xff]
        %v2158 = vld [vmem:[%s272 + $0x2ef0] sm:$0xff]
        %v2159 = vld [vmem:[%s272 + $0x2ef8] sm:$0xff]
        %v2160 = vld [vmem:[%s272 + $0x2f00] sm:$0xff]
        %v2161 = vld [vmem:[%s272 + $0x2f08] sm:$0xff]
        %v2162 = vld [vmem:[%s272 + $0x2f10] sm:$0xff]
        %v2163 = vld [vmem:[%s272 + $0x2f18] sm:$0xff]
        %v2164 = vld [vmem:[%s272 + $0x2f20] sm:$0xff]
        %v2165 = vld [vmem:[%s272 + $0x2f28] sm:$0xff]
        %v2166 = vld [vmem:[%s272 + $0x2f30] sm:$0xff]
        %v2167 = vld [vmem:[%s272 + $0x2f38] sm:$0xff]
        %v2168 = vld [vmem:[%s272 + $0x2f40] sm:$0xff]
        %v2169 = vld [vmem:[%s272 + $0x2f48] sm:$0xff]
        %v2170 = vld [vmem:[%s272 + $0x2f50] sm:$0xff]
        %v2171 = vld [vmem:[%s272 + $0x2f58] sm:$0xff]
        %v2172 = vld [vmem:[%s272 + $0x2f60] sm:$0xff]
        %v2173 = vld [vmem:[%s272 + $0x2f68] sm:$0xff]
        %v2174 = vld [vmem:[%s272 + $0x2f70] sm:$0xff]
        %v2175 = vld [vmem:[%s272 + $0x2f78] sm:$0xff]
        %v2176 = vld [vmem:[%s272 + $0x2f80] sm:$0xff]
        %v2177 = vld [vmem:[%s272 + $0x2f88] sm:$0xff]
        %v2178 = vld [vmem:[%s272 + $0x2f90] sm:$0xff]
        %v2179 = vld [vmem:[%s272 + $0x2f98] sm:$0xff]
        %v2180 = vld [vmem:[%s272 + $0x2fa0] sm:$0xff]
        %v2181 = vld [vmem:[%s272 + $0x2fa8] sm:$0xff]
        %v2182 = vld [vmem:[%s272 + $0x2fb0] sm:$0xff]
        %v2183 = vld [vmem:[%s272 + $0x2fb8] sm:$0xff]
        %v2184 = vld [vmem:[%s272 + $0x2fc0] sm:$0xff]
        %v2185 = vld [vmem:[%s272 + $0x2fc8] sm:$0xff]
        %v2186 = vld [vmem:[%s272 + $0x2fd0] sm:$0xff]
        %v2187 = vld [vmem:[%s272 + $0x2fd8] sm:$0xff]
        %v2188 = vld [vmem:[%s272 + $0x2fe0] sm:$0xff]
        %v2189 = vld [vmem:[%s272 + $0x2fe8] sm:$0xff]
        %v2190 = vld [vmem:[%s272 + $0x2ff0] sm:$0xff]
        %v2191 = vld [vmem:[%s272 + $0x2ff8] sm:$0xff]
        %v2192 = vld [vmem:[%s272 + $0x3000] sm:$0xff]
        %v2193 = vld [vmem:[%s272 + $0x3008] sm:$0xff]
        %v2194 = vld [vmem:[%s272 + $0x3010] sm:$0xff]
        %v2195 = vld [vmem:[%s272 + $0x3018] sm:$0xff]
        %v2196 = vld [vmem:[%s272 + $0x3020] sm:$0xff]
        %v2197 = vld [vmem:[%s272 + $0x3028] sm:$0xff]
        %v2198 = vld [vmem:[%s272 + $0x3030] sm:$0xff]
        %v2199 = vld [vmem:[%s272 + $0x3038] sm:$0xff]
        %v2200 = vld [vmem:[%s272 + $0x3040] sm:$0xff]
        %v2201 = vld [vmem:[%s272 + $0x3048] sm:$0xff]
        %v2202 = vld [vmem:[%s272 + $0x3050] sm:$0xff]
        %v2203 = vld [vmem:[%s272 + $0x3058] sm:$0xff]
        %v2204 = vld [vmem:[%s272 + $0x3060] sm:$0xff]
        %v2205 = vld [vmem:[%s272 + $0x3068] sm:$0xff]
        %v2206 = vld [vmem:[%s272 + $0x3070] sm:$0xff]
        %v2207 = vld [vmem:[%s272 + $0x3078] sm:$0xff]
        %v2208 = vld [vmem:[%s272 + $0x3080] sm:$0xff]
        %v2209 = vld [vmem:[%s272 + $0x3088] sm:$0xff]
        %v2210 = vld [vmem:[%s272 + $0x3090] sm:$0xff]
        %v2211 = vld [vmem:[%s272 + $0x3098] sm:$0xff]
        %v2212 = vld [vmem:[%s272 + $0x30a0] sm:$0xff]
        %v2213 = vld [vmem:[%s272 + $0x30a8] sm:$0xff]
        %v2214 = vld [vmem:[%s272 + $0x30b0] sm:$0xff]
        %v2215 = vld [vmem:[%s272 + $0x30b8] sm:$0xff]
        %v2216 = vld [vmem:[%s272 + $0x30c0] sm:$0xff]
        %v2217 = vld [vmem:[%s272 + $0x30c8] sm:$0xff]
        %v2218 = vld [vmem:[%s272 + $0x30d0] sm:$0xff]
        %v2219 = vld [vmem:[%s272 + $0x30d8] sm:$0xff]
        %v2220 = vld [vmem:[%s272 + $0x30e0] sm:$0xff]
        %v2221 = vld [vmem:[%s272 + $0x30e8] sm:$0xff]
        %v2222 = vld [vmem:[%s272 + $0x30f0] sm:$0xff]
        %v2223 = vld [vmem:[%s272 + $0x30f8] sm:$0xff]
        %v2224 = vld [vmem:[%s272 + $0x3100] sm:$0xff]
        %v2225 = vld [vmem:[%s272 + $0x3108] sm:$0xff]
        %v2226 = vld [vmem:[%s272 + $0x3110] sm:$0xff]
        %v2227 = vld [vmem:[%s272 + $0x3118] sm:$0xff]
        %v2228 = vld [vmem:[%s272 + $0x3120] sm:$0xff]
        %v2229 = vld [vmem:[%s272 + $0x3128] sm:$0xff]
        %v2230 = vld [vmem:[%s272 + $0x3130] sm:$0xff]
        %v2231 = vld [vmem:[%s272 + $0x3138] sm:$0xff]
        %v2232 = vld [vmem:[%s272 + $0x3140] sm:$0xff]
        %v2233 = vld [vmem:[%s272 + $0x3148] sm:$0xff]
        %v2234 = vld [vmem:[%s272 + $0x3150] sm:$0xff]
        %v2235 = vld [vmem:[%s272 + $0x3158] sm:$0xff]
        %v2236 = vld [vmem:[%s272 + $0x3160] sm:$0xff]
        %v2237 = vld [vmem:[%s272 + $0x3168] sm:$0xff]
        %v2238 = vld [vmem:[%s272 + $0x3170] sm:$0xff]
        %v2239 = vld [vmem:[%s272 + $0x3178] sm:$0xff]
        %v2240 = vld [vmem:[%s272 + $0x3180] sm:$0xff]
        %v2241 = vld [vmem:[%s272 + $0x3188] sm:$0xff]
        %v2242 = vld [vmem:[%s272 + $0x3190] sm:$0xff]
        %v2243 = vld [vmem:[%s272 + $0x3198] sm:$0xff]
        %v2244 = vld [vmem:[%s272 + $0x31a0] sm:$0xff]
        %v2245 = vld [vmem:[%s272 + $0x31a8] sm:$0xff]
        %v2246 = vld [vmem:[%s272 + $0x31b0] sm:$0xff]
        %v2247 = vld [vmem:[%s272 + $0x31b8] sm:$0xff]
        %v2248 = vld [vmem:[%s272 + $0x31c0] sm:$0xff]
        %v2249 = vld [vmem:[%s272 + $0x31c8] sm:$0xff]
        %v2250 = vld [vmem:[%s272 + $0x31d0] sm:$0xff]
        %v2251 = vld [vmem:[%s272 + $0x31d8] sm:$0xff]
        %v2252 = vld [vmem:[%s272 + $0x31e0] sm:$0xff]
        %v2253 = vld [vmem:[%s272 + $0x31e8] sm:$0xff]
        %v2254 = vld [vmem:[%s272 + $0x31f0] sm:$0xff]
        %v2255 = vld [vmem:[%s272 + $0x31f8] sm:$0xff]
        %v2256 = vunpack.c.l.s8.bf16 %v656
        %v2257 = vunpack.c.l.s8.bf16 %v657
        %v2258 = vunpack.c.l.s8.bf16 %v658
        %v2259 = vunpack.c.l.s8.bf16 %v659
        %v2260 = vunpack.c.l.s8.bf16 %v660
        %v2261 = vunpack.c.l.s8.bf16 %v661
        %v2262 = vunpack.c.l.s8.bf16 %v662
        %v2263 = vunpack.c.l.s8.bf16 %v663
        %v2264 = vunpack.c.h.s8.bf16 %v656
        %v2265 = vunpack.c.h.s8.bf16 %v657
        %v2266 = vunpack.c.h.s8.bf16 %v658
        %v2267 = vunpack.c.h.s8.bf16 %v659
        %v2268 = vunpack.c.h.s8.bf16 %v660
        %v2269 = vunpack.c.h.s8.bf16 %v661
        %v2270 = vunpack.c.h.s8.bf16 %v662
        %v2271 = vunpack.c.h.s8.bf16 %v663
        %v2272 = vunpack.c.l.s8.bf16 %v664
        %v2273 = vunpack.c.l.s8.bf16 %v665
        %v2274 = vunpack.c.l.s8.bf16 %v666
        %v2275 = vunpack.c.l.s8.bf16 %v667
        %v2276 = vunpack.c.l.s8.bf16 %v668
        %v2277 = vunpack.c.l.s8.bf16 %v669
        %v2278 = vunpack.c.l.s8.bf16 %v670
        %v2279 = vunpack.c.l.s8.bf16 %v671
        %v2280 = vunpack.c.h.s8.bf16 %v664
        %v2281 = vunpack.c.h.s8.bf16 %v665
        %v2282 = vunpack.c.h.s8.bf16 %v666
        %v2283 = vunpack.c.h.s8.bf16 %v667
        %v2284 = vunpack.c.h.s8.bf16 %v668
        %v2285 = vunpack.c.h.s8.bf16 %v669
        %v2286 = vunpack.c.h.s8.bf16 %v670
        %v2287 = vunpack.c.h.s8.bf16 %v671
        %v2288 = vunpack.c.l.s8.bf16 %v672
        %v2289 = vunpack.c.l.s8.bf16 %v673
        %v2290 = vunpack.c.l.s8.bf16 %v674
        %v2291 = vunpack.c.l.s8.bf16 %v675
        %v2292 = vunpack.c.l.s8.bf16 %v676
        %v2293 = vunpack.c.l.s8.bf16 %v677
        %v2294 = vunpack.c.l.s8.bf16 %v678
        %v2295 = vunpack.c.l.s8.bf16 %v679
        %v2296 = vunpack.c.h.s8.bf16 %v672
        %v2297 = vunpack.c.h.s8.bf16 %v673
        %v2298 = vunpack.c.h.s8.bf16 %v674
        %v2299 = vunpack.c.h.s8.bf16 %v675
        %v2300 = vunpack.c.h.s8.bf16 %v676
        %v2301 = vunpack.c.h.s8.bf16 %v677
        %v2302 = vunpack.c.h.s8.bf16 %v678
        %v2303 = vunpack.c.h.s8.bf16 %v679
        %v2304 = vunpack.c.l.s8.bf16 %v680
        %v2305 = vunpack.c.l.s8.bf16 %v681
        %v2306 = vunpack.c.l.s8.bf16 %v682
        %v2307 = vunpack.c.l.s8.bf16 %v683
        %v2308 = vunpack.c.l.s8.bf16 %v684
        %v2309 = vunpack.c.l.s8.bf16 %v685
        %v2310 = vunpack.c.l.s8.bf16 %v686
        %v2311 = vunpack.c.l.s8.bf16 %v687
        %v2312 = vunpack.c.h.s8.bf16 %v680
        %v2313 = vunpack.c.h.s8.bf16 %v681
        %v2314 = vunpack.c.h.s8.bf16 %v682
        %v2315 = vunpack.c.h.s8.bf16 %v683
        %v2316 = vunpack.c.h.s8.bf16 %v684
        %v2317 = vunpack.c.h.s8.bf16 %v685
        %v2318 = vunpack.c.h.s8.bf16 %v686
        %v2319 = vunpack.c.h.s8.bf16 %v687
        %v2320 = vunpack.c.l.s8.bf16 %v688
        %v2321 = vunpack.c.l.s8.bf16 %v689
        %v2322 = vunpack.c.l.s8.bf16 %v690
        %v2323 = vunpack.c.l.s8.bf16 %v691
        %v2324 = vunpack.c.l.s8.bf16 %v692
        %v2325 = vunpack.c.l.s8.bf16 %v693
        %v2326 = vunpack.c.l.s8.bf16 %v694
        %v2327 = vunpack.c.l.s8.bf16 %v695
        %v2328 = vunpack.c.h.s8.bf16 %v688
        %v2329 = vunpack.c.h.s8.bf16 %v689
        %v2330 = vunpack.c.h.s8.bf16 %v690
        %v2331 = vunpack.c.h.s8.bf16 %v691
        %v2332 = vunpack.c.h.s8.bf16 %v692
        %v2333 = vunpack.c.h.s8.bf16 %v693
        %v2334 = vunpack.c.h.s8.bf16 %v694
        %v2335 = vunpack.c.h.s8.bf16 %v695
        %v2336 = vunpack.c.l.s8.bf16 %v696
        %v2337 = vunpack.c.l.s8.bf16 %v697
        %v2338 = vunpack.c.l.s8.bf16 %v698
        %v2339 = vunpack.c.l.s8.bf16 %v699
        %v2340 = vunpack.c.l.s8.bf16 %v700
        %v2341 = vunpack.c.l.s8.bf16 %v701
        %v2342 = vunpack.c.l.s8.bf16 %v702
        %v2343 = vunpack.c.l.s8.bf16 %v703
        %v2344 = vunpack.c.h.s8.bf16 %v696
        %v2345 = vunpack.c.h.s8.bf16 %v697
        %v2346 = vunpack.c.h.s8.bf16 %v698
        %v2347 = vunpack.c.h.s8.bf16 %v699
        %v2348 = vunpack.c.h.s8.bf16 %v700
        %v2349 = vunpack.c.h.s8.bf16 %v701
        %v2350 = vunpack.c.h.s8.bf16 %v702
        %v2351 = vunpack.c.h.s8.bf16 %v703
        %v2352 = vunpack.c.l.s8.bf16 %v704
        %v2353 = vunpack.c.l.s8.bf16 %v705
        %v2354 = vunpack.c.l.s8.bf16 %v706
        %v2355 = vunpack.c.l.s8.bf16 %v707
        %v2356 = vunpack.c.l.s8.bf16 %v708
        %v2357 = vunpack.c.l.s8.bf16 %v709
        %v2358 = vunpack.c.l.s8.bf16 %v710
        %v2359 = vunpack.c.l.s8.bf16 %v711
        %v2360 = vunpack.c.h.s8.bf16 %v704
        %v2361 = vunpack.c.h.s8.bf16 %v705
        %v2362 = vunpack.c.h.s8.bf16 %v706
        %v2363 = vunpack.c.h.s8.bf16 %v707
        %v2364 = vunpack.c.h.s8.bf16 %v708
        %v2365 = vunpack.c.h.s8.bf16 %v709
        %v2366 = vunpack.c.h.s8.bf16 %v710
        %v2367 = vunpack.c.h.s8.bf16 %v711
        %v2368 = vunpack.c.l.s8.bf16 %v712
        %v2369 = vunpack.c.l.s8.bf16 %v713
        %v2370 = vunpack.c.l.s8.bf16 %v714
        %v2371 = vunpack.c.l.s8.bf16 %v715
        %v2372 = vunpack.c.l.s8.bf16 %v716
        %v2373 = vunpack.c.l.s8.bf16 %v717
        %v2374 = vunpack.c.l.s8.bf16 %v718
        %v2375 = vunpack.c.l.s8.bf16 %v719
        %v2376 = vunpack.c.h.s8.bf16 %v712
        %v2377 = vunpack.c.h.s8.bf16 %v713
        %v2378 = vunpack.c.h.s8.bf16 %v714
        %v2379 = vunpack.c.h.s8.bf16 %v715
        %v2380 = vunpack.c.h.s8.bf16 %v716
        %v2381 = vunpack.c.h.s8.bf16 %v717
        %v2382 = vunpack.c.h.s8.bf16 %v718
        %v2383 = vunpack.c.h.s8.bf16 %v719
        %v2384 = vunpack.c.l.s8.bf16 %v720
        %v2385 = vunpack.c.l.s8.bf16 %v721
        %v2386 = vunpack.c.l.s8.bf16 %v722
        %v2387 = vunpack.c.l.s8.bf16 %v723
        %v2388 = vunpack.c.l.s8.bf16 %v724
        %v2389 = vunpack.c.l.s8.bf16 %v725
        %v2390 = vunpack.c.l.s8.bf16 %v726
        %v2391 = vunpack.c.l.s8.bf16 %v727
        %v2392 = vunpack.c.h.s8.bf16 %v720
        %v2393 = vunpack.c.h.s8.bf16 %v721
        %v2394 = vunpack.c.h.s8.bf16 %v722
        %v2395 = vunpack.c.h.s8.bf16 %v723
        %v2396 = vunpack.c.h.s8.bf16 %v724
        %v2397 = vunpack.c.h.s8.bf16 %v725
        %v2398 = vunpack.c.h.s8.bf16 %v726
        %v2399 = vunpack.c.h.s8.bf16 %v727
        %v2400 = vunpack.c.l.s8.bf16 %v728
        %v2401 = vunpack.c.l.s8.bf16 %v729
        %v2402 = vunpack.c.l.s8.bf16 %v730
        %v2403 = vunpack.c.l.s8.bf16 %v731
        %v2404 = vunpack.c.l.s8.bf16 %v732
        %v2405 = vunpack.c.l.s8.bf16 %v733
        %v2406 = vunpack.c.l.s8.bf16 %v734
        %v2407 = vunpack.c.l.s8.bf16 %v735
        %v2408 = vunpack.c.h.s8.bf16 %v728
        %v2409 = vunpack.c.h.s8.bf16 %v729
        %v2410 = vunpack.c.h.s8.bf16 %v730
        %v2411 = vunpack.c.h.s8.bf16 %v731
        %v2412 = vunpack.c.h.s8.bf16 %v732
        %v2413 = vunpack.c.h.s8.bf16 %v733
        %v2414 = vunpack.c.h.s8.bf16 %v734
        %v2415 = vunpack.c.h.s8.bf16 %v735
        %v2416 = vunpack.c.l.s8.bf16 %v736
        %v2417 = vunpack.c.l.s8.bf16 %v737
        %v2418 = vunpack.c.l.s8.bf16 %v738
        %v2419 = vunpack.c.l.s8.bf16 %v739
        %v2420 = vunpack.c.l.s8.bf16 %v740
        %v2421 = vunpack.c.l.s8.bf16 %v741
        %v2422 = vunpack.c.l.s8.bf16 %v742
        %v2423 = vunpack.c.l.s8.bf16 %v743
        %v2424 = vunpack.c.h.s8.bf16 %v736
        %v2425 = vunpack.c.h.s8.bf16 %v737
        %v2426 = vunpack.c.h.s8.bf16 %v738
        %v2427 = vunpack.c.h.s8.bf16 %v739
        %v2428 = vunpack.c.h.s8.bf16 %v740
        %v2429 = vunpack.c.h.s8.bf16 %v741
        %v2430 = vunpack.c.h.s8.bf16 %v742
        %v2431 = vunpack.c.h.s8.bf16 %v743
        %v2432 = vunpack.c.l.s8.bf16 %v744
        %v2433 = vunpack.c.l.s8.bf16 %v745
        %v2434 = vunpack.c.l.s8.bf16 %v746
        %v2435 = vunpack.c.l.s8.bf16 %v747
        %v2436 = vunpack.c.l.s8.bf16 %v748
        %v2437 = vunpack.c.l.s8.bf16 %v749
        %v2438 = vunpack.c.l.s8.bf16 %v750
        %v2439 = vunpack.c.l.s8.bf16 %v751
        %v2440 = vunpack.c.h.s8.bf16 %v744
        %v2441 = vunpack.c.h.s8.bf16 %v745
        %v2442 = vunpack.c.h.s8.bf16 %v746
        %v2443 = vunpack.c.h.s8.bf16 %v747
        %v2444 = vunpack.c.h.s8.bf16 %v748
        %v2445 = vunpack.c.h.s8.bf16 %v749
        %v2446 = vunpack.c.h.s8.bf16 %v750
        %v2447 = vunpack.c.h.s8.bf16 %v751
        %v2448 = vunpack.c.l.s8.bf16 %v752
        %v2449 = vunpack.c.l.s8.bf16 %v753
        %v2450 = vunpack.c.l.s8.bf16 %v754
        %v2451 = vunpack.c.l.s8.bf16 %v755
        %v2452 = vunpack.c.l.s8.bf16 %v756
        %v2453 = vunpack.c.l.s8.bf16 %v757
        %v2454 = vunpack.c.l.s8.bf16 %v758
        %v2455 = vunpack.c.l.s8.bf16 %v759
        %v2456 = vunpack.c.h.s8.bf16 %v752
        %v2457 = vunpack.c.h.s8.bf16 %v753
        %v2458 = vunpack.c.h.s8.bf16 %v754
        %v2459 = vunpack.c.h.s8.bf16 %v755
        %v2460 = vunpack.c.h.s8.bf16 %v756
        %v2461 = vunpack.c.h.s8.bf16 %v757
        %v2462 = vunpack.c.h.s8.bf16 %v758
        %v2463 = vunpack.c.h.s8.bf16 %v759
        %v2464 = vunpack.c.l.s8.bf16 %v760
        %v2465 = vunpack.c.l.s8.bf16 %v761
        %v2466 = vunpack.c.l.s8.bf16 %v762
        %v2467 = vunpack.c.l.s8.bf16 %v763
        %v2468 = vunpack.c.l.s8.bf16 %v764
        %v2469 = vunpack.c.l.s8.bf16 %v765
        %v2470 = vunpack.c.l.s8.bf16 %v766
        %v2471 = vunpack.c.l.s8.bf16 %v767
        %v2472 = vunpack.c.h.s8.bf16 %v760
        %v2473 = vunpack.c.h.s8.bf16 %v761
        %v2474 = vunpack.c.h.s8.bf16 %v762
        %v2475 = vunpack.c.h.s8.bf16 %v763
        %v2476 = vunpack.c.h.s8.bf16 %v764
        %v2477 = vunpack.c.h.s8.bf16 %v765
        %v2478 = vunpack.c.h.s8.bf16 %v766
        %v2479 = vunpack.c.h.s8.bf16 %v767
        %v2480 = vunpack.c.l.s8.bf16 %v768
        %v2481 = vunpack.c.l.s8.bf16 %v769
        %v2482 = vunpack.c.l.s8.bf16 %v770
        %v2483 = vunpack.c.l.s8.bf16 %v771
        %v2484 = vunpack.c.l.s8.bf16 %v772
        %v2485 = vunpack.c.l.s8.bf16 %v773
        %v2486 = vunpack.c.l.s8.bf16 %v774
        %v2487 = vunpack.c.l.s8.bf16 %v775
        %v2488 = vunpack.c.h.s8.bf16 %v768
        %v2489 = vunpack.c.h.s8.bf16 %v769
        %v2490 = vunpack.c.h.s8.bf16 %v770
        %v2491 = vunpack.c.h.s8.bf16 %v771
        %v2492 = vunpack.c.h.s8.bf16 %v772
        %v2493 = vunpack.c.h.s8.bf16 %v773
        %v2494 = vunpack.c.h.s8.bf16 %v774
        %v2495 = vunpack.c.h.s8.bf16 %v775
        %v2496 = vunpack.c.l.s8.bf16 %v776
        %v2497 = vunpack.c.l.s8.bf16 %v777
        %v2498 = vunpack.c.l.s8.bf16 %v778
        %v2499 = vunpack.c.l.s8.bf16 %v779
        %v2500 = vunpack.c.l.s8.bf16 %v780
        %v2501 = vunpack.c.l.s8.bf16 %v781
        %v2502 = vunpack.c.l.s8.bf16 %v782
        %v2503 = vunpack.c.l.s8.bf16 %v783
        %v2504 = vunpack.c.h.s8.bf16 %v776
        %v2505 = vunpack.c.h.s8.bf16 %v777
        %v2506 = vunpack.c.h.s8.bf16 %v778
        %v2507 = vunpack.c.h.s8.bf16 %v779
        %v2508 = vunpack.c.h.s8.bf16 %v780
        %v2509 = vunpack.c.h.s8.bf16 %v781
        %v2510 = vunpack.c.h.s8.bf16 %v782
        %v2511 = vunpack.c.h.s8.bf16 %v783
        %v2512 = vunpack.c.l.s8.bf16 %v784
        %v2513 = vunpack.c.l.s8.bf16 %v785
        %v2514 = vunpack.c.l.s8.bf16 %v786
        %v2515 = vunpack.c.l.s8.bf16 %v787
        %v2516 = vunpack.c.l.s8.bf16 %v788
        %v2517 = vunpack.c.l.s8.bf16 %v789
        %v2518 = vunpack.c.l.s8.bf16 %v790
        %v2519 = vunpack.c.l.s8.bf16 %v791
        %v2520 = vunpack.c.h.s8.bf16 %v784
        %v2521 = vunpack.c.h.s8.bf16 %v785
        %v2522 = vunpack.c.h.s8.bf16 %v786
        %v2523 = vunpack.c.h.s8.bf16 %v787
        %v2524 = vunpack.c.h.s8.bf16 %v788
        %v2525 = vunpack.c.h.s8.bf16 %v789
        %v2526 = vunpack.c.h.s8.bf16 %v790
        %v2527 = vunpack.c.h.s8.bf16 %v791
        %v2528 = vunpack.c.l.s8.bf16 %v792
        %v2529 = vunpack.c.l.s8.bf16 %v793
        %v2530 = vunpack.c.l.s8.bf16 %v794
        %v2531 = vunpack.c.l.s8.bf16 %v795
        %v2532 = vunpack.c.l.s8.bf16 %v796
        %v2533 = vunpack.c.l.s8.bf16 %v797
        %v2534 = vunpack.c.l.s8.bf16 %v798
        %v2535 = vunpack.c.l.s8.bf16 %v799
        %v2536 = vunpack.c.h.s8.bf16 %v792
        %v2537 = vunpack.c.h.s8.bf16 %v793
        %v2538 = vunpack.c.h.s8.bf16 %v794
        %v2539 = vunpack.c.h.s8.bf16 %v795
        %v2540 = vunpack.c.h.s8.bf16 %v796
        %v2541 = vunpack.c.h.s8.bf16 %v797
        %v2542 = vunpack.c.h.s8.bf16 %v798
        %v2543 = vunpack.c.h.s8.bf16 %v799
        %v2544 = vunpack.c.l.s8.bf16 %v800
        %v2545 = vunpack.c.l.s8.bf16 %v801
        %v2546 = vunpack.c.l.s8.bf16 %v802
        %v2547 = vunpack.c.l.s8.bf16 %v803
        %v2548 = vunpack.c.l.s8.bf16 %v804
        %v2549 = vunpack.c.l.s8.bf16 %v805
        %v2550 = vunpack.c.l.s8.bf16 %v806
        %v2551 = vunpack.c.l.s8.bf16 %v807
        %v2552 = vunpack.c.h.s8.bf16 %v800
        %v2553 = vunpack.c.h.s8.bf16 %v801
        %v2554 = vunpack.c.h.s8.bf16 %v802
        %v2555 = vunpack.c.h.s8.bf16 %v803
        %v2556 = vunpack.c.h.s8.bf16 %v804
        %v2557 = vunpack.c.h.s8.bf16 %v805
        %v2558 = vunpack.c.h.s8.bf16 %v806
        %v2559 = vunpack.c.h.s8.bf16 %v807
        %v2560 = vunpack.c.l.s8.bf16 %v808
        %v2561 = vunpack.c.l.s8.bf16 %v809
        %v2562 = vunpack.c.l.s8.bf16 %v810
        %v2563 = vunpack.c.l.s8.bf16 %v811
        %v2564 = vunpack.c.l.s8.bf16 %v812
        %v2565 = vunpack.c.l.s8.bf16 %v813
        %v2566 = vunpack.c.l.s8.bf16 %v814
        %v2567 = vunpack.c.l.s8.bf16 %v815
        %v2568 = vunpack.c.h.s8.bf16 %v808
        %v2569 = vunpack.c.h.s8.bf16 %v809
        %v2570 = vunpack.c.h.s8.bf16 %v810
        %v2571 = vunpack.c.h.s8.bf16 %v811
        %v2572 = vunpack.c.h.s8.bf16 %v812
        %v2573 = vunpack.c.h.s8.bf16 %v813
        %v2574 = vunpack.c.h.s8.bf16 %v814
        %v2575 = vunpack.c.h.s8.bf16 %v815
        %v2576 = vunpack.c.l.s8.bf16 %v816
        %v2577 = vunpack.c.l.s8.bf16 %v817
        %v2578 = vunpack.c.l.s8.bf16 %v818
        %v2579 = vunpack.c.l.s8.bf16 %v819
        %v2580 = vunpack.c.l.s8.bf16 %v820
        %v2581 = vunpack.c.l.s8.bf16 %v821
        %v2582 = vunpack.c.l.s8.bf16 %v822
        %v2583 = vunpack.c.l.s8.bf16 %v823
        %v2584 = vunpack.c.h.s8.bf16 %v816
        %v2585 = vunpack.c.h.s8.bf16 %v817
        %v2586 = vunpack.c.h.s8.bf16 %v818
        %v2587 = vunpack.c.h.s8.bf16 %v819
        %v2588 = vunpack.c.h.s8.bf16 %v820
        %v2589 = vunpack.c.h.s8.bf16 %v821
        %v2590 = vunpack.c.h.s8.bf16 %v822
        %v2591 = vunpack.c.h.s8.bf16 %v823
        %v2592 = vunpack.c.l.s8.bf16 %v824
        %v2593 = vunpack.c.l.s8.bf16 %v825
        %v2594 = vunpack.c.l.s8.bf16 %v826
        %v2595 = vunpack.c.l.s8.bf16 %v827
        %v2596 = vunpack.c.l.s8.bf16 %v828
        %v2597 = vunpack.c.l.s8.bf16 %v829
        %v2598 = vunpack.c.l.s8.bf16 %v830
        %v2599 = vunpack.c.l.s8.bf16 %v831
        %v2600 = vunpack.c.h.s8.bf16 %v824
        %v2601 = vunpack.c.h.s8.bf16 %v825
        %v2602 = vunpack.c.h.s8.bf16 %v826
        %v2603 = vunpack.c.h.s8.bf16 %v827
        %v2604 = vunpack.c.h.s8.bf16 %v828
        %v2605 = vunpack.c.h.s8.bf16 %v829
        %v2606 = vunpack.c.h.s8.bf16 %v830
        %v2607 = vunpack.c.h.s8.bf16 %v831
        %v2608 = vunpack.c.l.s8.bf16 %v832
        %v2609 = vunpack.c.l.s8.bf16 %v833
        %v2610 = vunpack.c.l.s8.bf16 %v834
        %v2611 = vunpack.c.l.s8.bf16 %v835
        %v2612 = vunpack.c.l.s8.bf16 %v836
        %v2613 = vunpack.c.l.s8.bf16 %v837
        %v2614 = vunpack.c.l.s8.bf16 %v838
        %v2615 = vunpack.c.l.s8.bf16 %v839
        %v2616 = vunpack.c.h.s8.bf16 %v832
        %v2617 = vunpack.c.h.s8.bf16 %v833
        %v2618 = vunpack.c.h.s8.bf16 %v834
        %v2619 = vunpack.c.h.s8.bf16 %v835
        %v2620 = vunpack.c.h.s8.bf16 %v836
        %v2621 = vunpack.c.h.s8.bf16 %v837
        %v2622 = vunpack.c.h.s8.bf16 %v838
        %v2623 = vunpack.c.h.s8.bf16 %v839
        %v2624 = vunpack.c.l.s8.bf16 %v840
        %v2625 = vunpack.c.l.s8.bf16 %v841
        %v2626 = vunpack.c.l.s8.bf16 %v842
        %v2627 = vunpack.c.l.s8.bf16 %v843
        %v2628 = vunpack.c.l.s8.bf16 %v844
        %v2629 = vunpack.c.l.s8.bf16 %v845
        %v2630 = vunpack.c.l.s8.bf16 %v846
        %v2631 = vunpack.c.l.s8.bf16 %v847
        %v2632 = vunpack.c.h.s8.bf16 %v840
        %v2633 = vunpack.c.h.s8.bf16 %v841
        %v2634 = vunpack.c.h.s8.bf16 %v842
        %v2635 = vunpack.c.h.s8.bf16 %v843
        %v2636 = vunpack.c.h.s8.bf16 %v844
        %v2637 = vunpack.c.h.s8.bf16 %v845
        %v2638 = vunpack.c.h.s8.bf16 %v846
        %v2639 = vunpack.c.h.s8.bf16 %v847
        %v2640 = vunpack.c.l.s8.bf16 %v848
        %v2641 = vunpack.c.l.s8.bf16 %v849
        %v2642 = vunpack.c.l.s8.bf16 %v850
        %v2643 = vunpack.c.l.s8.bf16 %v851
        %v2644 = vunpack.c.l.s8.bf16 %v852
        %v2645 = vunpack.c.l.s8.bf16 %v853
        %v2646 = vunpack.c.l.s8.bf16 %v854
        %v2647 = vunpack.c.l.s8.bf16 %v855
        %v2648 = vunpack.c.h.s8.bf16 %v848
        %v2649 = vunpack.c.h.s8.bf16 %v849
        %v2650 = vunpack.c.h.s8.bf16 %v850
        %v2651 = vunpack.c.h.s8.bf16 %v851
        %v2652 = vunpack.c.h.s8.bf16 %v852
        %v2653 = vunpack.c.h.s8.bf16 %v853
        %v2654 = vunpack.c.h.s8.bf16 %v854
        %v2655 = vunpack.c.h.s8.bf16 %v855
        %v2656 = vunpack.c.l.s8.bf16 %v856
        %v2657 = vunpack.c.l.s8.bf16 %v857
        %v2658 = vunpack.c.l.s8.bf16 %v858
        %v2659 = vunpack.c.l.s8.bf16 %v859
        %v2660 = vunpack.c.l.s8.bf16 %v860
        %v2661 = vunpack.c.l.s8.bf16 %v861
        %v2662 = vunpack.c.l.s8.bf16 %v862
        %v2663 = vunpack.c.l.s8.bf16 %v863
        %v2664 = vunpack.c.h.s8.bf16 %v856
        %v2665 = vunpack.c.h.s8.bf16 %v857
        %v2666 = vunpack.c.h.s8.bf16 %v858
        %v2667 = vunpack.c.h.s8.bf16 %v859
        %v2668 = vunpack.c.h.s8.bf16 %v860
        %v2669 = vunpack.c.h.s8.bf16 %v861
        %v2670 = vunpack.c.h.s8.bf16 %v862
        %v2671 = vunpack.c.h.s8.bf16 %v863
        %v2672 = vunpack.c.l.s8.bf16 %v864
        %v2673 = vunpack.c.l.s8.bf16 %v865
        %v2674 = vunpack.c.l.s8.bf16 %v866
        %v2675 = vunpack.c.l.s8.bf16 %v867
        %v2676 = vunpack.c.l.s8.bf16 %v868
        %v2677 = vunpack.c.l.s8.bf16 %v869
        %v2678 = vunpack.c.l.s8.bf16 %v870
        %v2679 = vunpack.c.l.s8.bf16 %v871
        %v2680 = vunpack.c.h.s8.bf16 %v864
        %v2681 = vunpack.c.h.s8.bf16 %v865
        %v2682 = vunpack.c.h.s8.bf16 %v866
        %v2683 = vunpack.c.h.s8.bf16 %v867
        %v2684 = vunpack.c.h.s8.bf16 %v868
        %v2685 = vunpack.c.h.s8.bf16 %v869
        %v2686 = vunpack.c.h.s8.bf16 %v870
        %v2687 = vunpack.c.h.s8.bf16 %v871
        %v2688 = vunpack.c.l.s8.bf16 %v872
        %v2689 = vunpack.c.l.s8.bf16 %v873
        %v2690 = vunpack.c.l.s8.bf16 %v874
        %v2691 = vunpack.c.l.s8.bf16 %v875
        %v2692 = vunpack.c.l.s8.bf16 %v876
        %v2693 = vunpack.c.l.s8.bf16 %v877
        %v2694 = vunpack.c.l.s8.bf16 %v878
        %v2695 = vunpack.c.l.s8.bf16 %v879
        %v2696 = vunpack.c.h.s8.bf16 %v872
        %v2697 = vunpack.c.h.s8.bf16 %v873
        %v2698 = vunpack.c.h.s8.bf16 %v874
        %v2699 = vunpack.c.h.s8.bf16 %v875
        %v2700 = vunpack.c.h.s8.bf16 %v876
        %v2701 = vunpack.c.h.s8.bf16 %v877
        %v2702 = vunpack.c.h.s8.bf16 %v878
        %v2703 = vunpack.c.h.s8.bf16 %v879
        %v2704 = vunpack.c.l.s8.bf16 %v880
        %v2705 = vunpack.c.l.s8.bf16 %v881
        %v2706 = vunpack.c.l.s8.bf16 %v882
        %v2707 = vunpack.c.l.s8.bf16 %v883
        %v2708 = vunpack.c.l.s8.bf16 %v884
        %v2709 = vunpack.c.l.s8.bf16 %v885
        %v2710 = vunpack.c.l.s8.bf16 %v886
        %v2711 = vunpack.c.l.s8.bf16 %v887
        %v2712 = vunpack.c.h.s8.bf16 %v880
        %v2713 = vunpack.c.h.s8.bf16 %v881
        %v2714 = vunpack.c.h.s8.bf16 %v882
        %v2715 = vunpack.c.h.s8.bf16 %v883
        %v2716 = vunpack.c.h.s8.bf16 %v884
        %v2717 = vunpack.c.h.s8.bf16 %v885
        %v2718 = vunpack.c.h.s8.bf16 %v886
        %v2719 = vunpack.c.h.s8.bf16 %v887
        %v2720 = vunpack.c.l.s8.bf16 %v888
        %v2721 = vunpack.c.l.s8.bf16 %v889
        %v2722 = vunpack.c.l.s8.bf16 %v890
        %v2723 = vunpack.c.l.s8.bf16 %v891
        %v2724 = vunpack.c.l.s8.bf16 %v892
        %v2725 = vunpack.c.l.s8.bf16 %v893
        %v2726 = vunpack.c.l.s8.bf16 %v894
        %v2727 = vunpack.c.l.s8.bf16 %v895
        %v2728 = vunpack.c.h.s8.bf16 %v888
        %v2729 = vunpack.c.h.s8.bf16 %v889
        %v2730 = vunpack.c.h.s8.bf16 %v890
        %v2731 = vunpack.c.h.s8.bf16 %v891
        %v2732 = vunpack.c.h.s8.bf16 %v892
        %v2733 = vunpack.c.h.s8.bf16 %v893
        %v2734 = vunpack.c.h.s8.bf16 %v894
        %v2735 = vunpack.c.h.s8.bf16 %v895
        %v2736 = vunpack.c.l.s8.bf16 %v896
        %v2737 = vunpack.c.l.s8.bf16 %v897
        %v2738 = vunpack.c.l.s8.bf16 %v898
        %v2739 = vunpack.c.l.s8.bf16 %v899
        %v2740 = vunpack.c.l.s8.bf16 %v900
        %v2741 = vunpack.c.l.s8.bf16 %v901
        %v2742 = vunpack.c.l.s8.bf16 %v902
        %v2743 = vunpack.c.l.s8.bf16 %v903
        %v2744 = vunpack.c.h.s8.bf16 %v896
        %v2745 = vunpack.c.h.s8.bf16 %v897
        %v2746 = vunpack.c.h.s8.bf16 %v898
        %v2747 = vunpack.c.h.s8.bf16 %v899
        %v2748 = vunpack.c.h.s8.bf16 %v900
        %v2749 = vunpack.c.h.s8.bf16 %v901
        %v2750 = vunpack.c.h.s8.bf16 %v902
        %v2751 = vunpack.c.h.s8.bf16 %v903
        %v2752 = vunpack.c.l.s8.bf16 %v904
        %v2753 = vunpack.c.l.s8.bf16 %v905
        %v2754 = vunpack.c.l.s8.bf16 %v906
        %v2755 = vunpack.c.l.s8.bf16 %v907
        %v2756 = vunpack.c.l.s8.bf16 %v908
        %v2757 = vunpack.c.l.s8.bf16 %v909
        %v2758 = vunpack.c.l.s8.bf16 %v910
        %v2759 = vunpack.c.l.s8.bf16 %v911
        %v2760 = vunpack.c.h.s8.bf16 %v904
        %v2761 = vunpack.c.h.s8.bf16 %v905
        %v2762 = vunpack.c.h.s8.bf16 %v906
        %v2763 = vunpack.c.h.s8.bf16 %v907
        %v2764 = vunpack.c.h.s8.bf16 %v908
        %v2765 = vunpack.c.h.s8.bf16 %v909
        %v2766 = vunpack.c.h.s8.bf16 %v910
        %v2767 = vunpack.c.h.s8.bf16 %v911
        %v2768 = vunpack.c.l.s8.bf16 %v912
        %v2769 = vunpack.c.l.s8.bf16 %v913
        %v2770 = vunpack.c.l.s8.bf16 %v914
        %v2771 = vunpack.c.l.s8.bf16 %v915
        %v2772 = vunpack.c.l.s8.bf16 %v916
        %v2773 = vunpack.c.l.s8.bf16 %v917
        %v2774 = vunpack.c.l.s8.bf16 %v918
        %v2775 = vunpack.c.l.s8.bf16 %v919
        %v2776 = vunpack.c.h.s8.bf16 %v912
        %v2777 = vunpack.c.h.s8.bf16 %v913
        %v2778 = vunpack.c.h.s8.bf16 %v914
        %v2779 = vunpack.c.h.s8.bf16 %v915
        %v2780 = vunpack.c.h.s8.bf16 %v916
        %v2781 = vunpack.c.h.s8.bf16 %v917
        %v2782 = vunpack.c.h.s8.bf16 %v918
        %v2783 = vunpack.c.h.s8.bf16 %v919
        %v2784 = vunpack.c.l.s8.bf16 %v920
        %v2785 = vunpack.c.l.s8.bf16 %v921
        %v2786 = vunpack.c.l.s8.bf16 %v922
        %v2787 = vunpack.c.l.s8.bf16 %v923
        %v2788 = vunpack.c.l.s8.bf16 %v924
        %v2789 = vunpack.c.l.s8.bf16 %v925
        %v2790 = vunpack.c.l.s8.bf16 %v926
        %v2791 = vunpack.c.l.s8.bf16 %v927
        %v2792 = vunpack.c.h.s8.bf16 %v920
        %v2793 = vunpack.c.h.s8.bf16 %v921
        %v2794 = vunpack.c.h.s8.bf16 %v922
        %v2795 = vunpack.c.h.s8.bf16 %v923
        %v2796 = vunpack.c.h.s8.bf16 %v924
        %v2797 = vunpack.c.h.s8.bf16 %v925
        %v2798 = vunpack.c.h.s8.bf16 %v926
        %v2799 = vunpack.c.h.s8.bf16 %v927
        %v2800 = vunpack.c.l.s8.bf16 %v928
        %v2801 = vunpack.c.l.s8.bf16 %v929
        %v2802 = vunpack.c.l.s8.bf16 %v930
        %v2803 = vunpack.c.l.s8.bf16 %v931
        %v2804 = vunpack.c.l.s8.bf16 %v932
        %v2805 = vunpack.c.l.s8.bf16 %v933
        %v2806 = vunpack.c.l.s8.bf16 %v934
        %v2807 = vunpack.c.l.s8.bf16 %v935
        %v2808 = vunpack.c.h.s8.bf16 %v928
        %v2809 = vunpack.c.h.s8.bf16 %v929
        %v2810 = vunpack.c.h.s8.bf16 %v930
        %v2811 = vunpack.c.h.s8.bf16 %v931
        %v2812 = vunpack.c.h.s8.bf16 %v932
        %v2813 = vunpack.c.h.s8.bf16 %v933
        %v2814 = vunpack.c.h.s8.bf16 %v934
        %v2815 = vunpack.c.h.s8.bf16 %v935
        %v2816 = vunpack.c.l.s8.bf16 %v936
        %v2817 = vunpack.c.l.s8.bf16 %v937
        %v2818 = vunpack.c.l.s8.bf16 %v938
        %v2819 = vunpack.c.l.s8.bf16 %v939
        %v2820 = vunpack.c.l.s8.bf16 %v940
        %v2821 = vunpack.c.l.s8.bf16 %v941
        %v2822 = vunpack.c.l.s8.bf16 %v942
        %v2823 = vunpack.c.l.s8.bf16 %v943
        %v2824 = vunpack.c.h.s8.bf16 %v936
        %v2825 = vunpack.c.h.s8.bf16 %v937
        %v2826 = vunpack.c.h.s8.bf16 %v938
        %v2827 = vunpack.c.h.s8.bf16 %v939
        %v2828 = vunpack.c.h.s8.bf16 %v940
        %v2829 = vunpack.c.h.s8.bf16 %v941
        %v2830 = vunpack.c.h.s8.bf16 %v942
        %v2831 = vunpack.c.h.s8.bf16 %v943
        %v2832 = vunpack.c.l.s8.bf16 %v944
        %v2833 = vunpack.c.l.s8.bf16 %v945
        %v2834 = vunpack.c.l.s8.bf16 %v946
        %v2835 = vunpack.c.l.s8.bf16 %v947
        %v2836 = vunpack.c.l.s8.bf16 %v948
        %v2837 = vunpack.c.l.s8.bf16 %v949
        %v2838 = vunpack.c.l.s8.bf16 %v950
        %v2839 = vunpack.c.l.s8.bf16 %v951
        %v2840 = vunpack.c.h.s8.bf16 %v944
        %v2841 = vunpack.c.h.s8.bf16 %v945
        %v2842 = vunpack.c.h.s8.bf16 %v946
        %v2843 = vunpack.c.h.s8.bf16 %v947
        %v2844 = vunpack.c.h.s8.bf16 %v948
        %v2845 = vunpack.c.h.s8.bf16 %v949
        %v2846 = vunpack.c.h.s8.bf16 %v950
        %v2847 = vunpack.c.h.s8.bf16 %v951
        %v2848 = vunpack.c.l.s8.bf16 %v952
        %v2849 = vunpack.c.l.s8.bf16 %v953
        %v2850 = vunpack.c.l.s8.bf16 %v954
        %v2851 = vunpack.c.l.s8.bf16 %v955
        %v2852 = vunpack.c.l.s8.bf16 %v956
        %v2853 = vunpack.c.l.s8.bf16 %v957
        %v2854 = vunpack.c.l.s8.bf16 %v958
        %v2855 = vunpack.c.l.s8.bf16 %v959
        %v2856 = vunpack.c.h.s8.bf16 %v952
        %v2857 = vunpack.c.h.s8.bf16 %v953
        %v2858 = vunpack.c.h.s8.bf16 %v954
        %v2859 = vunpack.c.h.s8.bf16 %v955
        %v2860 = vunpack.c.h.s8.bf16 %v956
        %v2861 = vunpack.c.h.s8.bf16 %v957
        %v2862 = vunpack.c.h.s8.bf16 %v958
        %v2863 = vunpack.c.h.s8.bf16 %v959
        %v2864 = vunpack.c.l.s8.bf16 %v960
        %v2865 = vunpack.c.l.s8.bf16 %v961
        %v2866 = vunpack.c.l.s8.bf16 %v962
        %v2867 = vunpack.c.l.s8.bf16 %v963
        %v2868 = vunpack.c.l.s8.bf16 %v964
        %v2869 = vunpack.c.l.s8.bf16 %v965
        %v2870 = vunpack.c.l.s8.bf16 %v966
        %v2871 = vunpack.c.l.s8.bf16 %v967
        %v2872 = vunpack.c.h.s8.bf16 %v960
        %v2873 = vunpack.c.h.s8.bf16 %v961
        %v2874 = vunpack.c.h.s8.bf16 %v962
        %v2875 = vunpack.c.h.s8.bf16 %v963
        %v2876 = vunpack.c.h.s8.bf16 %v964
        %v2877 = vunpack.c.h.s8.bf16 %v965
        %v2878 = vunpack.c.h.s8.bf16 %v966
        %v2879 = vunpack.c.h.s8.bf16 %v967
        %v2880 = vunpack.c.l.s8.bf16 %v968
        %v2881 = vunpack.c.l.s8.bf16 %v969
        %v2882 = vunpack.c.l.s8.bf16 %v970
        %v2883 = vunpack.c.l.s8.bf16 %v971
        %v2884 = vunpack.c.l.s8.bf16 %v972
        %v2885 = vunpack.c.l.s8.bf16 %v973
        %v2886 = vunpack.c.l.s8.bf16 %v974
        %v2887 = vunpack.c.l.s8.bf16 %v975
        %v2888 = vunpack.c.h.s8.bf16 %v968
        %v2889 = vunpack.c.h.s8.bf16 %v969
        %v2890 = vunpack.c.h.s8.bf16 %v970
        %v2891 = vunpack.c.h.s8.bf16 %v971
        %v2892 = vunpack.c.h.s8.bf16 %v972
        %v2893 = vunpack.c.h.s8.bf16 %v973
        %v2894 = vunpack.c.h.s8.bf16 %v974
        %v2895 = vunpack.c.h.s8.bf16 %v975
        %v2896 = vunpack.c.l.s8.bf16 %v976
        %v2897 = vunpack.c.l.s8.bf16 %v977
        %v2898 = vunpack.c.l.s8.bf16 %v978
        %v2899 = vunpack.c.l.s8.bf16 %v979
        %v2900 = vunpack.c.l.s8.bf16 %v980
        %v2901 = vunpack.c.l.s8.bf16 %v981
        %v2902 = vunpack.c.l.s8.bf16 %v982
        %v2903 = vunpack.c.l.s8.bf16 %v983
        %v2904 = vunpack.c.h.s8.bf16 %v976
        %v2905 = vunpack.c.h.s8.bf16 %v977
        %v2906 = vunpack.c.h.s8.bf16 %v978
        %v2907 = vunpack.c.h.s8.bf16 %v979
        %v2908 = vunpack.c.h.s8.bf16 %v980
        %v2909 = vunpack.c.h.s8.bf16 %v981
        %v2910 = vunpack.c.h.s8.bf16 %v982
        %v2911 = vunpack.c.h.s8.bf16 %v983
        %v2912 = vunpack.c.l.s8.bf16 %v984
        %v2913 = vunpack.c.l.s8.bf16 %v985
        %v2914 = vunpack.c.l.s8.bf16 %v986
        %v2915 = vunpack.c.l.s8.bf16 %v987
        %v2916 = vunpack.c.l.s8.bf16 %v988
        %v2917 = vunpack.c.l.s8.bf16 %v989
        %v2918 = vunpack.c.l.s8.bf16 %v990
        %v2919 = vunpack.c.l.s8.bf16 %v991
        %v2920 = vunpack.c.h.s8.bf16 %v984
        %v2921 = vunpack.c.h.s8.bf16 %v985
        %v2922 = vunpack.c.h.s8.bf16 %v986
        %v2923 = vunpack.c.h.s8.bf16 %v987
        %v2924 = vunpack.c.h.s8.bf16 %v988
        %v2925 = vunpack.c.h.s8.bf16 %v989
        %v2926 = vunpack.c.h.s8.bf16 %v990
        %v2927 = vunpack.c.h.s8.bf16 %v991
        %v2928 = vunpack.c.l.s8.bf16 %v992
        %v2929 = vunpack.c.l.s8.bf16 %v993
        %v2930 = vunpack.c.l.s8.bf16 %v994
        %v2931 = vunpack.c.l.s8.bf16 %v995
        %v2932 = vunpack.c.l.s8.bf16 %v996
        %v2933 = vunpack.c.l.s8.bf16 %v997
        %v2934 = vunpack.c.l.s8.bf16 %v998
        %v2935 = vunpack.c.l.s8.bf16 %v999
        %v2936 = vunpack.c.h.s8.bf16 %v992
        %v2937 = vunpack.c.h.s8.bf16 %v993
        %v2938 = vunpack.c.h.s8.bf16 %v994
        %v2939 = vunpack.c.h.s8.bf16 %v995
        %v2940 = vunpack.c.h.s8.bf16 %v996
        %v2941 = vunpack.c.h.s8.bf16 %v997
        %v2942 = vunpack.c.h.s8.bf16 %v998
        %v2943 = vunpack.c.h.s8.bf16 %v999
        %v2944 = vunpack.c.l.s8.bf16 %v1000
        %v2945 = vunpack.c.l.s8.bf16 %v1001
        %v2946 = vunpack.c.l.s8.bf16 %v1002
        %v2947 = vunpack.c.l.s8.bf16 %v1003
        %v2948 = vunpack.c.l.s8.bf16 %v1004
        %v2949 = vunpack.c.l.s8.bf16 %v1005
        %v2950 = vunpack.c.l.s8.bf16 %v1006
        %v2951 = vunpack.c.l.s8.bf16 %v1007
        %v2952 = vunpack.c.h.s8.bf16 %v1000
        %v2953 = vunpack.c.h.s8.bf16 %v1001
        %v2954 = vunpack.c.h.s8.bf16 %v1002
        %v2955 = vunpack.c.h.s8.bf16 %v1003
        %v2956 = vunpack.c.h.s8.bf16 %v1004
        %v2957 = vunpack.c.h.s8.bf16 %v1005
        %v2958 = vunpack.c.h.s8.bf16 %v1006
        %v2959 = vunpack.c.h.s8.bf16 %v1007
        %v2960 = vunpack.c.l.s8.bf16 %v1008
        %v2961 = vunpack.c.l.s8.bf16 %v1009
        %v2962 = vunpack.c.l.s8.bf16 %v1010
        %v2963 = vunpack.c.l.s8.bf16 %v1011
        %v2964 = vunpack.c.l.s8.bf16 %v1012
        %v2965 = vunpack.c.l.s8.bf16 %v1013
        %v2966 = vunpack.c.l.s8.bf16 %v1014
        %v2967 = vunpack.c.l.s8.bf16 %v1015
        %v2968 = vunpack.c.h.s8.bf16 %v1008
        %v2969 = vunpack.c.h.s8.bf16 %v1009
        %v2970 = vunpack.c.h.s8.bf16 %v1010
        %v2971 = vunpack.c.h.s8.bf16 %v1011
        %v2972 = vunpack.c.h.s8.bf16 %v1012
        %v2973 = vunpack.c.h.s8.bf16 %v1013
        %v2974 = vunpack.c.h.s8.bf16 %v1014
        %v2975 = vunpack.c.h.s8.bf16 %v1015
        %v2976 = vunpack.c.l.s8.bf16 %v1016
        %v2977 = vunpack.c.l.s8.bf16 %v1017
        %v2978 = vunpack.c.l.s8.bf16 %v1018
        %v2979 = vunpack.c.l.s8.bf16 %v1019
        %v2980 = vunpack.c.l.s8.bf16 %v1020
        %v2981 = vunpack.c.l.s8.bf16 %v1021
        %v2982 = vunpack.c.l.s8.bf16 %v1022
        %v2983 = vunpack.c.l.s8.bf16 %v1023
        %v2984 = vunpack.c.h.s8.bf16 %v1016
        %v2985 = vunpack.c.h.s8.bf16 %v1017
        %v2986 = vunpack.c.h.s8.bf16 %v1018
        %v2987 = vunpack.c.h.s8.bf16 %v1019
        %v2988 = vunpack.c.h.s8.bf16 %v1020
        %v2989 = vunpack.c.h.s8.bf16 %v1021
        %v2990 = vunpack.c.h.s8.bf16 %v1022
        %v2991 = vunpack.c.h.s8.bf16 %v1023
        %v2992 = vunpack.c.l.s8.bf16 %v1024
        %v2993 = vunpack.c.l.s8.bf16 %v1025
        %v2994 = vunpack.c.l.s8.bf16 %v1026
        %v2995 = vunpack.c.l.s8.bf16 %v1027
        %v2996 = vunpack.c.l.s8.bf16 %v1028
        %v2997 = vunpack.c.l.s8.bf16 %v1029
        %v2998 = vunpack.c.l.s8.bf16 %v1030
        %v2999 = vunpack.c.l.s8.bf16 %v1031
        %v3000 = vunpack.c.h.s8.bf16 %v1024
        %v3001 = vunpack.c.h.s8.bf16 %v1025
        %v3002 = vunpack.c.h.s8.bf16 %v1026
        %v3003 = vunpack.c.h.s8.bf16 %v1027
        %v3004 = vunpack.c.h.s8.bf16 %v1028
        %v3005 = vunpack.c.h.s8.bf16 %v1029
        %v3006 = vunpack.c.h.s8.bf16 %v1030
        %v3007 = vunpack.c.h.s8.bf16 %v1031
        %v3008 = vunpack.c.l.s8.bf16 %v1032
        %v3009 = vunpack.c.l.s8.bf16 %v1033
        %v3010 = vunpack.c.l.s8.bf16 %v1034
        %v3011 = vunpack.c.l.s8.bf16 %v1035
        %v3012 = vunpack.c.l.s8.bf16 %v1036
        %v3013 = vunpack.c.l.s8.bf16 %v1037
        %v3014 = vunpack.c.l.s8.bf16 %v1038
        %v3015 = vunpack.c.l.s8.bf16 %v1039
        %v3016 = vunpack.c.h.s8.bf16 %v1032
        %v3017 = vunpack.c.h.s8.bf16 %v1033
        %v3018 = vunpack.c.h.s8.bf16 %v1034
        %v3019 = vunpack.c.h.s8.bf16 %v1035
        %v3020 = vunpack.c.h.s8.bf16 %v1036
        %v3021 = vunpack.c.h.s8.bf16 %v1037
        %v3022 = vunpack.c.h.s8.bf16 %v1038
        %v3023 = vunpack.c.h.s8.bf16 %v1039
        %v3024 = vunpack.c.l.s8.bf16 %v1040
        %v3025 = vunpack.c.l.s8.bf16 %v1041
        %v3026 = vunpack.c.l.s8.bf16 %v1042
        %v3027 = vunpack.c.l.s8.bf16 %v1043
        %v3028 = vunpack.c.l.s8.bf16 %v1044
        %v3029 = vunpack.c.l.s8.bf16 %v1045
        %v3030 = vunpack.c.l.s8.bf16 %v1046
        %v3031 = vunpack.c.l.s8.bf16 %v1047
        %v3032 = vunpack.c.h.s8.bf16 %v1040
        %v3033 = vunpack.c.h.s8.bf16 %v1041
        %v3034 = vunpack.c.h.s8.bf16 %v1042
        %v3035 = vunpack.c.h.s8.bf16 %v1043
        %v3036 = vunpack.c.h.s8.bf16 %v1044
        %v3037 = vunpack.c.h.s8.bf16 %v1045
        %v3038 = vunpack.c.h.s8.bf16 %v1046
        %v3039 = vunpack.c.h.s8.bf16 %v1047
        %v3040 = vunpack.c.l.s8.bf16 %v1048
        %v3041 = vunpack.c.l.s8.bf16 %v1049
        %v3042 = vunpack.c.l.s8.bf16 %v1050
        %v3043 = vunpack.c.l.s8.bf16 %v1051
        %v3044 = vunpack.c.l.s8.bf16 %v1052
        %v3045 = vunpack.c.l.s8.bf16 %v1053
        %v3046 = vunpack.c.l.s8.bf16 %v1054
        %v3047 = vunpack.c.l.s8.bf16 %v1055
        %v3048 = vunpack.c.h.s8.bf16 %v1048
        %v3049 = vunpack.c.h.s8.bf16 %v1049
        %v3050 = vunpack.c.h.s8.bf16 %v1050
        %v3051 = vunpack.c.h.s8.bf16 %v1051
        %v3052 = vunpack.c.h.s8.bf16 %v1052
        %v3053 = vunpack.c.h.s8.bf16 %v1053
        %v3054 = vunpack.c.h.s8.bf16 %v1054
        %v3055 = vunpack.c.h.s8.bf16 %v1055
        %v3056 = vunpack.c.l.s8.bf16 %v1056
        %v3057 = vunpack.c.l.s8.bf16 %v1057
        %v3058 = vunpack.c.l.s8.bf16 %v1058
        %v3059 = vunpack.c.l.s8.bf16 %v1059
        %v3060 = vunpack.c.l.s8.bf16 %v1060
        %v3061 = vunpack.c.l.s8.bf16 %v1061
        %v3062 = vunpack.c.l.s8.bf16 %v1062
        %v3063 = vunpack.c.l.s8.bf16 %v1063
        %v3064 = vunpack.c.h.s8.bf16 %v1056
        %v3065 = vunpack.c.h.s8.bf16 %v1057
        %v3066 = vunpack.c.h.s8.bf16 %v1058
        %v3067 = vunpack.c.h.s8.bf16 %v1059
        %v3068 = vunpack.c.h.s8.bf16 %v1060
        %v3069 = vunpack.c.h.s8.bf16 %v1061
        %v3070 = vunpack.c.h.s8.bf16 %v1062
        %v3071 = vunpack.c.h.s8.bf16 %v1063
        %v3072 = vunpack.c.l.s8.bf16 %v1064
        %v3073 = vunpack.c.l.s8.bf16 %v1065
        %v3074 = vunpack.c.l.s8.bf16 %v1066
        %v3075 = vunpack.c.l.s8.bf16 %v1067
        %v3076 = vunpack.c.l.s8.bf16 %v1068
        %v3077 = vunpack.c.l.s8.bf16 %v1069
        %v3078 = vunpack.c.l.s8.bf16 %v1070
        %v3079 = vunpack.c.l.s8.bf16 %v1071
        %v3080 = vunpack.c.h.s8.bf16 %v1064
        %v3081 = vunpack.c.h.s8.bf16 %v1065
        %v3082 = vunpack.c.h.s8.bf16 %v1066
        %v3083 = vunpack.c.h.s8.bf16 %v1067
        %v3084 = vunpack.c.h.s8.bf16 %v1068
        %v3085 = vunpack.c.h.s8.bf16 %v1069
        %v3086 = vunpack.c.h.s8.bf16 %v1070
        %v3087 = vunpack.c.h.s8.bf16 %v1071
        %v3088 = vunpack.c.l.s8.bf16 %v1072
        %v3089 = vunpack.c.l.s8.bf16 %v1073
        %v3090 = vunpack.c.l.s8.bf16 %v1074
        %v3091 = vunpack.c.l.s8.bf16 %v1075
        %v3092 = vunpack.c.l.s8.bf16 %v1076
        %v3093 = vunpack.c.l.s8.bf16 %v1077
        %v3094 = vunpack.c.l.s8.bf16 %v1078
        %v3095 = vunpack.c.l.s8.bf16 %v1079
        %v3096 = vunpack.c.h.s8.bf16 %v1072
        %v3097 = vunpack.c.h.s8.bf16 %v1073
        %v3098 = vunpack.c.h.s8.bf16 %v1074
        %v3099 = vunpack.c.h.s8.bf16 %v1075
        %v3100 = vunpack.c.h.s8.bf16 %v1076
        %v3101 = vunpack.c.h.s8.bf16 %v1077
        %v3102 = vunpack.c.h.s8.bf16 %v1078
        %v3103 = vunpack.c.h.s8.bf16 %v1079
        %v3104 = vunpack.c.l.s8.bf16 %v1080
        %v3105 = vunpack.c.l.s8.bf16 %v1081
        %v3106 = vunpack.c.l.s8.bf16 %v1082
        %v3107 = vunpack.c.l.s8.bf16 %v1083
        %v3108 = vunpack.c.l.s8.bf16 %v1084
        %v3109 = vunpack.c.l.s8.bf16 %v1085
        %v3110 = vunpack.c.l.s8.bf16 %v1086
        %v3111 = vunpack.c.l.s8.bf16 %v1087
        %v3112 = vunpack.c.h.s8.bf16 %v1080
        %v3113 = vunpack.c.h.s8.bf16 %v1081
        %v3114 = vunpack.c.h.s8.bf16 %v1082
        %v3115 = vunpack.c.h.s8.bf16 %v1083
        %v3116 = vunpack.c.h.s8.bf16 %v1084
        %v3117 = vunpack.c.h.s8.bf16 %v1085
        %v3118 = vunpack.c.h.s8.bf16 %v1086
        %v3119 = vunpack.c.h.s8.bf16 %v1087
        %v3120 = vunpack.c.l.s8.bf16 %v1088
        %v3121 = vunpack.c.l.s8.bf16 %v1089
        %v3122 = vunpack.c.l.s8.bf16 %v1090
        %v3123 = vunpack.c.l.s8.bf16 %v1091
        %v3124 = vunpack.c.l.s8.bf16 %v1092
        %v3125 = vunpack.c.l.s8.bf16 %v1093
        %v3126 = vunpack.c.l.s8.bf16 %v1094
        %v3127 = vunpack.c.l.s8.bf16 %v1095
        %v3128 = vunpack.c.h.s8.bf16 %v1088
        %v3129 = vunpack.c.h.s8.bf16 %v1089
        %v3130 = vunpack.c.h.s8.bf16 %v1090
        %v3131 = vunpack.c.h.s8.bf16 %v1091
        %v3132 = vunpack.c.h.s8.bf16 %v1092
        %v3133 = vunpack.c.h.s8.bf16 %v1093
        %v3134 = vunpack.c.h.s8.bf16 %v1094
        %v3135 = vunpack.c.h.s8.bf16 %v1095
        %v3136 = vunpack.c.l.s8.bf16 %v1096
        %v3137 = vunpack.c.l.s8.bf16 %v1097
        %v3138 = vunpack.c.l.s8.bf16 %v1098
        %v3139 = vunpack.c.l.s8.bf16 %v1099
        %v3140 = vunpack.c.l.s8.bf16 %v1100
        %v3141 = vunpack.c.l.s8.bf16 %v1101
        %v3142 = vunpack.c.l.s8.bf16 %v1102
        %v3143 = vunpack.c.l.s8.bf16 %v1103
        %v3144 = vunpack.c.h.s8.bf16 %v1096
        %v3145 = vunpack.c.h.s8.bf16 %v1097
        %v3146 = vunpack.c.h.s8.bf16 %v1098
        %v3147 = vunpack.c.h.s8.bf16 %v1099
        %v3148 = vunpack.c.h.s8.bf16 %v1100
        %v3149 = vunpack.c.h.s8.bf16 %v1101
        %v3150 = vunpack.c.h.s8.bf16 %v1102
        %v3151 = vunpack.c.h.s8.bf16 %v1103
        %v3152 = vunpack.c.l.s8.bf16 %v1104
        %v3153 = vunpack.c.l.s8.bf16 %v1105
        %v3154 = vunpack.c.l.s8.bf16 %v1106
        %v3155 = vunpack.c.l.s8.bf16 %v1107
        %v3156 = vunpack.c.l.s8.bf16 %v1108
        %v3157 = vunpack.c.l.s8.bf16 %v1109
        %v3158 = vunpack.c.l.s8.bf16 %v1110
        %v3159 = vunpack.c.l.s8.bf16 %v1111
        %v3160 = vunpack.c.h.s8.bf16 %v1104
        %v3161 = vunpack.c.h.s8.bf16 %v1105
        %v3162 = vunpack.c.h.s8.bf16 %v1106
        %v3163 = vunpack.c.h.s8.bf16 %v1107
        %v3164 = vunpack.c.h.s8.bf16 %v1108
        %v3165 = vunpack.c.h.s8.bf16 %v1109
        %v3166 = vunpack.c.h.s8.bf16 %v1110
        %v3167 = vunpack.c.h.s8.bf16 %v1111
        %v3168 = vunpack.c.l.s8.bf16 %v1112
        %v3169 = vunpack.c.l.s8.bf16 %v1113
        %v3170 = vunpack.c.l.s8.bf16 %v1114
        %v3171 = vunpack.c.l.s8.bf16 %v1115
        %v3172 = vunpack.c.l.s8.bf16 %v1116
        %v3173 = vunpack.c.l.s8.bf16 %v1117
        %v3174 = vunpack.c.l.s8.bf16 %v1118
        %v3175 = vunpack.c.l.s8.bf16 %v1119
        %v3176 = vunpack.c.h.s8.bf16 %v1112
        %v3177 = vunpack.c.h.s8.bf16 %v1113
        %v3178 = vunpack.c.h.s8.bf16 %v1114
        %v3179 = vunpack.c.h.s8.bf16 %v1115
        %v3180 = vunpack.c.h.s8.bf16 %v1116
        %v3181 = vunpack.c.h.s8.bf16 %v1117
        %v3182 = vunpack.c.h.s8.bf16 %v1118
        %v3183 = vunpack.c.h.s8.bf16 %v1119
        %v3184 = vunpack.c.l.s8.bf16 %v1120
        %v3185 = vunpack.c.l.s8.bf16 %v1121
        %v3186 = vunpack.c.l.s8.bf16 %v1122
        %v3187 = vunpack.c.l.s8.bf16 %v1123
        %v3188 = vunpack.c.l.s8.bf16 %v1124
        %v3189 = vunpack.c.l.s8.bf16 %v1125
        %v3190 = vunpack.c.l.s8.bf16 %v1126
        %v3191 = vunpack.c.l.s8.bf16 %v1127
        %v3192 = vunpack.c.h.s8.bf16 %v1120
        %v3193 = vunpack.c.h.s8.bf16 %v1121
        %v3194 = vunpack.c.h.s8.bf16 %v1122
        %v3195 = vunpack.c.h.s8.bf16 %v1123
        %v3196 = vunpack.c.h.s8.bf16 %v1124
        %v3197 = vunpack.c.h.s8.bf16 %v1125
        %v3198 = vunpack.c.h.s8.bf16 %v1126
        %v3199 = vunpack.c.h.s8.bf16 %v1127
        %v3200 = vunpack.c.l.s8.bf16 %v1128
        %v3201 = vunpack.c.l.s8.bf16 %v1129
        %v3202 = vunpack.c.l.s8.bf16 %v1130
        %v3203 = vunpack.c.l.s8.bf16 %v1131
        %v3204 = vunpack.c.l.s8.bf16 %v1132
        %v3205 = vunpack.c.l.s8.bf16 %v1133
        %v3206 = vunpack.c.l.s8.bf16 %v1134
        %v3207 = vunpack.c.l.s8.bf16 %v1135
        %v3208 = vunpack.c.h.s8.bf16 %v1128
        %v3209 = vunpack.c.h.s8.bf16 %v1129
        %v3210 = vunpack.c.h.s8.bf16 %v1130
        %v3211 = vunpack.c.h.s8.bf16 %v1131
        %v3212 = vunpack.c.h.s8.bf16 %v1132
        %v3213 = vunpack.c.h.s8.bf16 %v1133
        %v3214 = vunpack.c.h.s8.bf16 %v1134
        %v3215 = vunpack.c.h.s8.bf16 %v1135
        %v3216 = vunpack.c.l.s8.bf16 %v1136
        %v3217 = vunpack.c.l.s8.bf16 %v1137
        %v3218 = vunpack.c.l.s8.bf16 %v1138
        %v3219 = vunpack.c.l.s8.bf16 %v1139
        %v3220 = vunpack.c.l.s8.bf16 %v1140
        %v3221 = vunpack.c.l.s8.bf16 %v1141
        %v3222 = vunpack.c.l.s8.bf16 %v1142
        %v3223 = vunpack.c.l.s8.bf16 %v1143
        %v3224 = vunpack.c.h.s8.bf16 %v1136
        %v3225 = vunpack.c.h.s8.bf16 %v1137
        %v3226 = vunpack.c.h.s8.bf16 %v1138
        %v3227 = vunpack.c.h.s8.bf16 %v1139
        %v3228 = vunpack.c.h.s8.bf16 %v1140
        %v3229 = vunpack.c.h.s8.bf16 %v1141
        %v3230 = vunpack.c.h.s8.bf16 %v1142
        %v3231 = vunpack.c.h.s8.bf16 %v1143
        %v3232 = vunpack.c.l.s8.bf16 %v1144
        %v3233 = vunpack.c.l.s8.bf16 %v1145
        %v3234 = vunpack.c.l.s8.bf16 %v1146
        %v3235 = vunpack.c.l.s8.bf16 %v1147
        %v3236 = vunpack.c.l.s8.bf16 %v1148
        %v3237 = vunpack.c.l.s8.bf16 %v1149
        %v3238 = vunpack.c.l.s8.bf16 %v1150
        %v3239 = vunpack.c.l.s8.bf16 %v1151
        %v3240 = vunpack.c.h.s8.bf16 %v1144
        %v3241 = vunpack.c.h.s8.bf16 %v1145
        %v3242 = vunpack.c.h.s8.bf16 %v1146
        %v3243 = vunpack.c.h.s8.bf16 %v1147
        %v3244 = vunpack.c.h.s8.bf16 %v1148
        %v3245 = vunpack.c.h.s8.bf16 %v1149
        %v3246 = vunpack.c.h.s8.bf16 %v1150
        %v3247 = vunpack.c.h.s8.bf16 %v1151
        %v3248 = vunpack.c.l.s8.bf16 %v1152
        %v3249 = vunpack.c.l.s8.bf16 %v1153
        %v3250 = vunpack.c.l.s8.bf16 %v1154
        %v3251 = vunpack.c.l.s8.bf16 %v1155
        %v3252 = vunpack.c.l.s8.bf16 %v1156
        %v3253 = vunpack.c.l.s8.bf16 %v1157
        %v3254 = vunpack.c.l.s8.bf16 %v1158
        %v3255 = vunpack.c.l.s8.bf16 %v1159
        %v3256 = vunpack.c.h.s8.bf16 %v1152
        %v3257 = vunpack.c.h.s8.bf16 %v1153
        %v3258 = vunpack.c.h.s8.bf16 %v1154
        %v3259 = vunpack.c.h.s8.bf16 %v1155
        %v3260 = vunpack.c.h.s8.bf16 %v1156
        %v3261 = vunpack.c.h.s8.bf16 %v1157
        %v3262 = vunpack.c.h.s8.bf16 %v1158
        %v3263 = vunpack.c.h.s8.bf16 %v1159
        %v3264 = vunpack.c.l.s8.bf16 %v1160
        %v3265 = vunpack.c.l.s8.bf16 %v1161
        %v3266 = vunpack.c.l.s8.bf16 %v1162
        %v3267 = vunpack.c.l.s8.bf16 %v1163
        %v3268 = vunpack.c.l.s8.bf16 %v1164
        %v3269 = vunpack.c.l.s8.bf16 %v1165
        %v3270 = vunpack.c.l.s8.bf16 %v1166
        %v3271 = vunpack.c.l.s8.bf16 %v1167
        %v3272 = vunpack.c.h.s8.bf16 %v1160
        %v3273 = vunpack.c.h.s8.bf16 %v1161
        %v3274 = vunpack.c.h.s8.bf16 %v1162
        %v3275 = vunpack.c.h.s8.bf16 %v1163
        %v3276 = vunpack.c.h.s8.bf16 %v1164
        %v3277 = vunpack.c.h.s8.bf16 %v1165
        %v3278 = vunpack.c.h.s8.bf16 %v1166
        %v3279 = vunpack.c.h.s8.bf16 %v1167
        %v3280 = vunpack.c.l.s8.bf16 %v1168
        %v3281 = vunpack.c.l.s8.bf16 %v1169
        %v3282 = vunpack.c.l.s8.bf16 %v1170
        %v3283 = vunpack.c.l.s8.bf16 %v1171
        %v3284 = vunpack.c.l.s8.bf16 %v1172
        %v3285 = vunpack.c.l.s8.bf16 %v1173
        %v3286 = vunpack.c.l.s8.bf16 %v1174
        %v3287 = vunpack.c.l.s8.bf16 %v1175
        %v3288 = vunpack.c.h.s8.bf16 %v1168
        %v3289 = vunpack.c.h.s8.bf16 %v1169
        %v3290 = vunpack.c.h.s8.bf16 %v1170
        %v3291 = vunpack.c.h.s8.bf16 %v1171
        %v3292 = vunpack.c.h.s8.bf16 %v1172
        %v3293 = vunpack.c.h.s8.bf16 %v1173
        %v3294 = vunpack.c.h.s8.bf16 %v1174
        %v3295 = vunpack.c.h.s8.bf16 %v1175
        %v3296 = vunpack.c.l.s8.bf16 %v1176
        %v3297 = vunpack.c.l.s8.bf16 %v1177
        %v3298 = vunpack.c.l.s8.bf16 %v1178
        %v3299 = vunpack.c.l.s8.bf16 %v1179
        %v3300 = vunpack.c.l.s8.bf16 %v1180
        %v3301 = vunpack.c.l.s8.bf16 %v1181
        %v3302 = vunpack.c.l.s8.bf16 %v1182
        %v3303 = vunpack.c.l.s8.bf16 %v1183
        %v3304 = vunpack.c.h.s8.bf16 %v1176
        %v3305 = vunpack.c.h.s8.bf16 %v1177
        %v3306 = vunpack.c.h.s8.bf16 %v1178
        %v3307 = vunpack.c.h.s8.bf16 %v1179
        %v3308 = vunpack.c.h.s8.bf16 %v1180
        %v3309 = vunpack.c.h.s8.bf16 %v1181
        %v3310 = vunpack.c.h.s8.bf16 %v1182
        %v3311 = vunpack.c.h.s8.bf16 %v1183
        %v3312 = vunpack.c.l.s8.bf16 %v1184
        %v3313 = vunpack.c.l.s8.bf16 %v1185
        %v3314 = vunpack.c.l.s8.bf16 %v1186
        %v3315 = vunpack.c.l.s8.bf16 %v1187
        %v3316 = vunpack.c.l.s8.bf16 %v1188
        %v3317 = vunpack.c.l.s8.bf16 %v1189
        %v3318 = vunpack.c.l.s8.bf16 %v1190
        %v3319 = vunpack.c.l.s8.bf16 %v1191
        %v3320 = vunpack.c.h.s8.bf16 %v1184
        %v3321 = vunpack.c.h.s8.bf16 %v1185
        %v3322 = vunpack.c.h.s8.bf16 %v1186
        %v3323 = vunpack.c.h.s8.bf16 %v1187
        %v3324 = vunpack.c.h.s8.bf16 %v1188
        %v3325 = vunpack.c.h.s8.bf16 %v1189
        %v3326 = vunpack.c.h.s8.bf16 %v1190
        %v3327 = vunpack.c.h.s8.bf16 %v1191
        %v3328 = vunpack.c.l.s8.bf16 %v1192
        %v3329 = vunpack.c.l.s8.bf16 %v1193
        %v3330 = vunpack.c.l.s8.bf16 %v1194
        %v3331 = vunpack.c.l.s8.bf16 %v1195
        %v3332 = vunpack.c.l.s8.bf16 %v1196
        %v3333 = vunpack.c.l.s8.bf16 %v1197
        %v3334 = vunpack.c.l.s8.bf16 %v1198
        %v3335 = vunpack.c.l.s8.bf16 %v1199
        %v3336 = vunpack.c.h.s8.bf16 %v1192
        %v3337 = vunpack.c.h.s8.bf16 %v1193
        %v3338 = vunpack.c.h.s8.bf16 %v1194
        %v3339 = vunpack.c.h.s8.bf16 %v1195
        %v3340 = vunpack.c.h.s8.bf16 %v1196
        %v3341 = vunpack.c.h.s8.bf16 %v1197
        %v3342 = vunpack.c.h.s8.bf16 %v1198
        %v3343 = vunpack.c.h.s8.bf16 %v1199
        %v3344 = vunpack.c.l.s8.bf16 %v1200
        %v3345 = vunpack.c.l.s8.bf16 %v1201
        %v3346 = vunpack.c.l.s8.bf16 %v1202
        %v3347 = vunpack.c.l.s8.bf16 %v1203
        %v3348 = vunpack.c.l.s8.bf16 %v1204
        %v3349 = vunpack.c.l.s8.bf16 %v1205
        %v3350 = vunpack.c.l.s8.bf16 %v1206
        %v3351 = vunpack.c.l.s8.bf16 %v1207
        %v3352 = vunpack.c.h.s8.bf16 %v1200
        %v3353 = vunpack.c.h.s8.bf16 %v1201
        %v3354 = vunpack.c.h.s8.bf16 %v1202
        %v3355 = vunpack.c.h.s8.bf16 %v1203
        %v3356 = vunpack.c.h.s8.bf16 %v1204
        %v3357 = vunpack.c.h.s8.bf16 %v1205
        %v3358 = vunpack.c.h.s8.bf16 %v1206
        %v3359 = vunpack.c.h.s8.bf16 %v1207
        %v3360 = vunpack.c.l.s8.bf16 %v1208
        %v3361 = vunpack.c.l.s8.bf16 %v1209
        %v3362 = vunpack.c.l.s8.bf16 %v1210
        %v3363 = vunpack.c.l.s8.bf16 %v1211
        %v3364 = vunpack.c.l.s8.bf16 %v1212
        %v3365 = vunpack.c.l.s8.bf16 %v1213
        %v3366 = vunpack.c.l.s8.bf16 %v1214
        %v3367 = vunpack.c.l.s8.bf16 %v1215
        %v3368 = vunpack.c.h.s8.bf16 %v1208
        %v3369 = vunpack.c.h.s8.bf16 %v1209
        %v3370 = vunpack.c.h.s8.bf16 %v1210
        %v3371 = vunpack.c.h.s8.bf16 %v1211
        %v3372 = vunpack.c.h.s8.bf16 %v1212
        %v3373 = vunpack.c.h.s8.bf16 %v1213
        %v3374 = vunpack.c.h.s8.bf16 %v1214
        %v3375 = vunpack.c.h.s8.bf16 %v1215
        %v3376 = vunpack.c.l.s8.bf16 %v1216
        %v3377 = vunpack.c.l.s8.bf16 %v1217
        %v3378 = vunpack.c.l.s8.bf16 %v1218
        %v3379 = vunpack.c.l.s8.bf16 %v1219
        %v3380 = vunpack.c.l.s8.bf16 %v1220
        %v3381 = vunpack.c.l.s8.bf16 %v1221
        %v3382 = vunpack.c.l.s8.bf16 %v1222
        %v3383 = vunpack.c.l.s8.bf16 %v1223
        %v3384 = vunpack.c.h.s8.bf16 %v1216
        %v3385 = vunpack.c.h.s8.bf16 %v1217
        %v3386 = vunpack.c.h.s8.bf16 %v1218
        %v3387 = vunpack.c.h.s8.bf16 %v1219
        %v3388 = vunpack.c.h.s8.bf16 %v1220
        %v3389 = vunpack.c.h.s8.bf16 %v1221
        %v3390 = vunpack.c.h.s8.bf16 %v1222
        %v3391 = vunpack.c.h.s8.bf16 %v1223
        %v3392 = vunpack.c.l.s8.bf16 %v1224
        %v3393 = vunpack.c.l.s8.bf16 %v1225
        %v3394 = vunpack.c.l.s8.bf16 %v1226
        %v3395 = vunpack.c.l.s8.bf16 %v1227
        %v3396 = vunpack.c.l.s8.bf16 %v1228
        %v3397 = vunpack.c.l.s8.bf16 %v1229
        %v3398 = vunpack.c.l.s8.bf16 %v1230
        %v3399 = vunpack.c.l.s8.bf16 %v1231
        %v3400 = vunpack.c.h.s8.bf16 %v1224
        %v3401 = vunpack.c.h.s8.bf16 %v1225
        %v3402 = vunpack.c.h.s8.bf16 %v1226
        %v3403 = vunpack.c.h.s8.bf16 %v1227
        %v3404 = vunpack.c.h.s8.bf16 %v1228
        %v3405 = vunpack.c.h.s8.bf16 %v1229
        %v3406 = vunpack.c.h.s8.bf16 %v1230
        %v3407 = vunpack.c.h.s8.bf16 %v1231
        %v3408 = vunpack.c.l.s8.bf16 %v1232
        %v3409 = vunpack.c.l.s8.bf16 %v1233
        %v3410 = vunpack.c.l.s8.bf16 %v1234
        %v3411 = vunpack.c.l.s8.bf16 %v1235
        %v3412 = vunpack.c.l.s8.bf16 %v1236
        %v3413 = vunpack.c.l.s8.bf16 %v1237
        %v3414 = vunpack.c.l.s8.bf16 %v1238
        %v3415 = vunpack.c.l.s8.bf16 %v1239
        %v3416 = vunpack.c.h.s8.bf16 %v1232
        %v3417 = vunpack.c.h.s8.bf16 %v1233
        %v3418 = vunpack.c.h.s8.bf16 %v1234
        %v3419 = vunpack.c.h.s8.bf16 %v1235
        %v3420 = vunpack.c.h.s8.bf16 %v1236
        %v3421 = vunpack.c.h.s8.bf16 %v1237
        %v3422 = vunpack.c.h.s8.bf16 %v1238
        %v3423 = vunpack.c.h.s8.bf16 %v1239
        %v3424 = vunpack.c.l.s8.bf16 %v1240
        %v3425 = vunpack.c.l.s8.bf16 %v1241
        %v3426 = vunpack.c.l.s8.bf16 %v1242
        %v3427 = vunpack.c.l.s8.bf16 %v1243
        %v3428 = vunpack.c.l.s8.bf16 %v1244
        %v3429 = vunpack.c.l.s8.bf16 %v1245
        %v3430 = vunpack.c.l.s8.bf16 %v1246
        %v3431 = vunpack.c.l.s8.bf16 %v1247
        %v3432 = vunpack.c.h.s8.bf16 %v1240
        %v3433 = vunpack.c.h.s8.bf16 %v1241
        %v3434 = vunpack.c.h.s8.bf16 %v1242
        %v3435 = vunpack.c.h.s8.bf16 %v1243
        %v3436 = vunpack.c.h.s8.bf16 %v1244
        %v3437 = vunpack.c.h.s8.bf16 %v1245
        %v3438 = vunpack.c.h.s8.bf16 %v1246
        %v3439 = vunpack.c.h.s8.bf16 %v1247
        %v3440 = vunpack.c.l.s8.bf16 %v1248
        %v3441 = vunpack.c.l.s8.bf16 %v1249
        %v3442 = vunpack.c.l.s8.bf16 %v1250
        %v3443 = vunpack.c.l.s8.bf16 %v1251
        %v3444 = vunpack.c.l.s8.bf16 %v1252
        %v3445 = vunpack.c.l.s8.bf16 %v1253
        %v3446 = vunpack.c.l.s8.bf16 %v1254
        %v3447 = vunpack.c.l.s8.bf16 %v1255
        %v3448 = vunpack.c.h.s8.bf16 %v1248
        %v3449 = vunpack.c.h.s8.bf16 %v1249
        %v3450 = vunpack.c.h.s8.bf16 %v1250
        %v3451 = vunpack.c.h.s8.bf16 %v1251
        %v3452 = vunpack.c.h.s8.bf16 %v1252
        %v3453 = vunpack.c.h.s8.bf16 %v1253
        %v3454 = vunpack.c.h.s8.bf16 %v1254
        %v3455 = vunpack.c.h.s8.bf16 %v1255
        %v3456 = vunpack.c.l.s8.bf16 %v1256
        %v3457 = vunpack.c.l.s8.bf16 %v1257
        %v3458 = vunpack.c.l.s8.bf16 %v1258
        %v3459 = vunpack.c.l.s8.bf16 %v1259
        %v3460 = vunpack.c.l.s8.bf16 %v1260
        %v3461 = vunpack.c.l.s8.bf16 %v1261
        %v3462 = vunpack.c.l.s8.bf16 %v1262
        %v3463 = vunpack.c.l.s8.bf16 %v1263
        %v3464 = vunpack.c.h.s8.bf16 %v1256
        %v3465 = vunpack.c.h.s8.bf16 %v1257
        %v3466 = vunpack.c.h.s8.bf16 %v1258
        %v3467 = vunpack.c.h.s8.bf16 %v1259
        %v3468 = vunpack.c.h.s8.bf16 %v1260
        %v3469 = vunpack.c.h.s8.bf16 %v1261
        %v3470 = vunpack.c.h.s8.bf16 %v1262
        %v3471 = vunpack.c.h.s8.bf16 %v1263
        %v3472 = vunpack.c.l.s8.bf16 %v1264
        %v3473 = vunpack.c.l.s8.bf16 %v1265
        %v3474 = vunpack.c.l.s8.bf16 %v1266
        %v3475 = vunpack.c.l.s8.bf16 %v1267
        %v3476 = vunpack.c.l.s8.bf16 %v1268
        %v3477 = vunpack.c.l.s8.bf16 %v1269
        %v3478 = vunpack.c.l.s8.bf16 %v1270
        %v3479 = vunpack.c.l.s8.bf16 %v1271
        %v3480 = vunpack.c.h.s8.bf16 %v1264
        %v3481 = vunpack.c.h.s8.bf16 %v1265
        %v3482 = vunpack.c.h.s8.bf16 %v1266
        %v3483 = vunpack.c.h.s8.bf16 %v1267
        %v3484 = vunpack.c.h.s8.bf16 %v1268
        %v3485 = vunpack.c.h.s8.bf16 %v1269
        %v3486 = vunpack.c.h.s8.bf16 %v1270
        %v3487 = vunpack.c.h.s8.bf16 %v1271
        %v3488 = vunpack.c.l.s8.bf16 %v1272
        %v3489 = vunpack.c.l.s8.bf16 %v1273
        %v3490 = vunpack.c.l.s8.bf16 %v1274
        %v3491 = vunpack.c.l.s8.bf16 %v1275
        %v3492 = vunpack.c.l.s8.bf16 %v1276
        %v3493 = vunpack.c.l.s8.bf16 %v1277
        %v3494 = vunpack.c.l.s8.bf16 %v1278
        %v3495 = vunpack.c.l.s8.bf16 %v1279
        %v3496 = vunpack.c.h.s8.bf16 %v1272
        %v3497 = vunpack.c.h.s8.bf16 %v1273
        %v3498 = vunpack.c.h.s8.bf16 %v1274
        %v3499 = vunpack.c.h.s8.bf16 %v1275
        %v3500 = vunpack.c.h.s8.bf16 %v1276
        %v3501 = vunpack.c.h.s8.bf16 %v1277
        %v3502 = vunpack.c.h.s8.bf16 %v1278
        %v3503 = vunpack.c.h.s8.bf16 %v1279
        %v3504 = vunpack.c.l.s8.bf16 %v1280
        %v3505 = vunpack.c.l.s8.bf16 %v1281
        %v3506 = vunpack.c.l.s8.bf16 %v1282
        %v3507 = vunpack.c.l.s8.bf16 %v1283
        %v3508 = vunpack.c.l.s8.bf16 %v1284
        %v3509 = vunpack.c.l.s8.bf16 %v1285
        %v3510 = vunpack.c.l.s8.bf16 %v1286
        %v3511 = vunpack.c.l.s8.bf16 %v1287
        %v3512 = vunpack.c.h.s8.bf16 %v1280
        %v3513 = vunpack.c.h.s8.bf16 %v1281
        %v3514 = vunpack.c.h.s8.bf16 %v1282
        %v3515 = vunpack.c.h.s8.bf16 %v1283
        %v3516 = vunpack.c.h.s8.bf16 %v1284
        %v3517 = vunpack.c.h.s8.bf16 %v1285
        %v3518 = vunpack.c.h.s8.bf16 %v1286
        %v3519 = vunpack.c.h.s8.bf16 %v1287
        %v3520 = vunpack.c.l.s8.bf16 %v1288
        %v3521 = vunpack.c.l.s8.bf16 %v1289
        %v3522 = vunpack.c.l.s8.bf16 %v1290
        %v3523 = vunpack.c.l.s8.bf16 %v1291
        %v3524 = vunpack.c.l.s8.bf16 %v1292
        %v3525 = vunpack.c.l.s8.bf16 %v1293
        %v3526 = vunpack.c.l.s8.bf16 %v1294
        %v3527 = vunpack.c.l.s8.bf16 %v1295
        %v3528 = vunpack.c.h.s8.bf16 %v1288
        %v3529 = vunpack.c.h.s8.bf16 %v1289
        %v3530 = vunpack.c.h.s8.bf16 %v1290
        %v3531 = vunpack.c.h.s8.bf16 %v1291
        %v3532 = vunpack.c.h.s8.bf16 %v1292
        %v3533 = vunpack.c.h.s8.bf16 %v1293
        %v3534 = vunpack.c.h.s8.bf16 %v1294
        %v3535 = vunpack.c.h.s8.bf16 %v1295
        %v3536 = vunpack.c.l.s8.bf16 %v1296
        %v3537 = vunpack.c.l.s8.bf16 %v1297
        %v3538 = vunpack.c.l.s8.bf16 %v1298
        %v3539 = vunpack.c.l.s8.bf16 %v1299
        %v3540 = vunpack.c.l.s8.bf16 %v1300
        %v3541 = vunpack.c.l.s8.bf16 %v1301
        %v3542 = vunpack.c.l.s8.bf16 %v1302
        %v3543 = vunpack.c.l.s8.bf16 %v1303
        %v3544 = vunpack.c.h.s8.bf16 %v1296
        %v3545 = vunpack.c.h.s8.bf16 %v1297
        %v3546 = vunpack.c.h.s8.bf16 %v1298
        %v3547 = vunpack.c.h.s8.bf16 %v1299
        %v3548 = vunpack.c.h.s8.bf16 %v1300
        %v3549 = vunpack.c.h.s8.bf16 %v1301
        %v3550 = vunpack.c.h.s8.bf16 %v1302
        %v3551 = vunpack.c.h.s8.bf16 %v1303
        %v3552 = vunpack.c.l.s8.bf16 %v1304
        %v3553 = vunpack.c.l.s8.bf16 %v1305
        %v3554 = vunpack.c.l.s8.bf16 %v1306
        %v3555 = vunpack.c.l.s8.bf16 %v1307
        %v3556 = vunpack.c.l.s8.bf16 %v1308
        %v3557 = vunpack.c.l.s8.bf16 %v1309
        %v3558 = vunpack.c.l.s8.bf16 %v1310
        %v3559 = vunpack.c.l.s8.bf16 %v1311
        %v3560 = vunpack.c.h.s8.bf16 %v1304
        %v3561 = vunpack.c.h.s8.bf16 %v1305
        %v3562 = vunpack.c.h.s8.bf16 %v1306
        %v3563 = vunpack.c.h.s8.bf16 %v1307
        %v3564 = vunpack.c.h.s8.bf16 %v1308
        %v3565 = vunpack.c.h.s8.bf16 %v1309
        %v3566 = vunpack.c.h.s8.bf16 %v1310
        %v3567 = vunpack.c.h.s8.bf16 %v1311
        %v3568 = vunpack.c.l.s8.bf16 %v1312
        %v3569 = vunpack.c.l.s8.bf16 %v1313
        %v3570 = vunpack.c.l.s8.bf16 %v1314
        %v3571 = vunpack.c.l.s8.bf16 %v1315
        %v3572 = vunpack.c.l.s8.bf16 %v1316
        %v3573 = vunpack.c.l.s8.bf16 %v1317
        %v3574 = vunpack.c.l.s8.bf16 %v1318
        %v3575 = vunpack.c.l.s8.bf16 %v1319
        %v3576 = vunpack.c.h.s8.bf16 %v1312
        %v3577 = vunpack.c.h.s8.bf16 %v1313
        %v3578 = vunpack.c.h.s8.bf16 %v1314
        %v3579 = vunpack.c.h.s8.bf16 %v1315
        %v3580 = vunpack.c.h.s8.bf16 %v1316
        %v3581 = vunpack.c.h.s8.bf16 %v1317
        %v3582 = vunpack.c.h.s8.bf16 %v1318
        %v3583 = vunpack.c.h.s8.bf16 %v1319
        %v3584 = vunpack.c.l.s8.bf16 %v1320
        %v3585 = vunpack.c.l.s8.bf16 %v1321
        %v3586 = vunpack.c.l.s8.bf16 %v1322
        %v3587 = vunpack.c.l.s8.bf16 %v1323
        %v3588 = vunpack.c.l.s8.bf16 %v1324
        %v3589 = vunpack.c.l.s8.bf16 %v1325
        %v3590 = vunpack.c.l.s8.bf16 %v1326
        %v3591 = vunpack.c.l.s8.bf16 %v1327
        %v3592 = vunpack.c.h.s8.bf16 %v1320
        %v3593 = vunpack.c.h.s8.bf16 %v1321
        %v3594 = vunpack.c.h.s8.bf16 %v1322
        %v3595 = vunpack.c.h.s8.bf16 %v1323
        %v3596 = vunpack.c.h.s8.bf16 %v1324
        %v3597 = vunpack.c.h.s8.bf16 %v1325
        %v3598 = vunpack.c.h.s8.bf16 %v1326
        %v3599 = vunpack.c.h.s8.bf16 %v1327
        %v3600 = vunpack.c.l.s8.bf16 %v1328
        %v3601 = vunpack.c.l.s8.bf16 %v1329
        %v3602 = vunpack.c.l.s8.bf16 %v1330
        %v3603 = vunpack.c.l.s8.bf16 %v1331
        %v3604 = vunpack.c.l.s8.bf16 %v1332
        %v3605 = vunpack.c.l.s8.bf16 %v1333
        %v3606 = vunpack.c.l.s8.bf16 %v1334
        %v3607 = vunpack.c.l.s8.bf16 %v1335
        %v3608 = vunpack.c.h.s8.bf16 %v1328
        %v3609 = vunpack.c.h.s8.bf16 %v1329
        %v3610 = vunpack.c.h.s8.bf16 %v1330
        %v3611 = vunpack.c.h.s8.bf16 %v1331
        %v3612 = vunpack.c.h.s8.bf16 %v1332
        %v3613 = vunpack.c.h.s8.bf16 %v1333
        %v3614 = vunpack.c.h.s8.bf16 %v1334
        %v3615 = vunpack.c.h.s8.bf16 %v1335
        %v3616 = vunpack.c.l.s8.bf16 %v1336
        %v3617 = vunpack.c.l.s8.bf16 %v1337
        %v3618 = vunpack.c.l.s8.bf16 %v1338
        %v3619 = vunpack.c.l.s8.bf16 %v1339
        %v3620 = vunpack.c.l.s8.bf16 %v1340
        %v3621 = vunpack.c.l.s8.bf16 %v1341
        %v3622 = vunpack.c.l.s8.bf16 %v1342
        %v3623 = vunpack.c.l.s8.bf16 %v1343
        %v3624 = vunpack.c.h.s8.bf16 %v1336
        %v3625 = vunpack.c.h.s8.bf16 %v1337
        %v3626 = vunpack.c.h.s8.bf16 %v1338
        %v3627 = vunpack.c.h.s8.bf16 %v1339
        %v3628 = vunpack.c.h.s8.bf16 %v1340
        %v3629 = vunpack.c.h.s8.bf16 %v1341
        %v3630 = vunpack.c.h.s8.bf16 %v1342
        %v3631 = vunpack.c.h.s8.bf16 %v1343
        %v3632 = vunpack.c.l.s8.bf16 %v1344
        %v3633 = vunpack.c.l.s8.bf16 %v1345
        %v3634 = vunpack.c.l.s8.bf16 %v1346
        %v3635 = vunpack.c.l.s8.bf16 %v1347
        %v3636 = vunpack.c.l.s8.bf16 %v1348
        %v3637 = vunpack.c.l.s8.bf16 %v1349
        %v3638 = vunpack.c.l.s8.bf16 %v1350
        %v3639 = vunpack.c.l.s8.bf16 %v1351
        %v3640 = vunpack.c.h.s8.bf16 %v1344
        %v3641 = vunpack.c.h.s8.bf16 %v1345
        %v3642 = vunpack.c.h.s8.bf16 %v1346
        %v3643 = vunpack.c.h.s8.bf16 %v1347
        %v3644 = vunpack.c.h.s8.bf16 %v1348
        %v3645 = vunpack.c.h.s8.bf16 %v1349
        %v3646 = vunpack.c.h.s8.bf16 %v1350
        %v3647 = vunpack.c.h.s8.bf16 %v1351
        %v3648 = vunpack.c.l.s8.bf16 %v1352
        %v3649 = vunpack.c.l.s8.bf16 %v1353
        %v3650 = vunpack.c.l.s8.bf16 %v1354
        %v3651 = vunpack.c.l.s8.bf16 %v1355
        %v3652 = vunpack.c.l.s8.bf16 %v1356
        %v3653 = vunpack.c.l.s8.bf16 %v1357
        %v3654 = vunpack.c.l.s8.bf16 %v1358
        %v3655 = vunpack.c.l.s8.bf16 %v1359
        %v3656 = vunpack.c.h.s8.bf16 %v1352
        %v3657 = vunpack.c.h.s8.bf16 %v1353
        %v3658 = vunpack.c.h.s8.bf16 %v1354
        %v3659 = vunpack.c.h.s8.bf16 %v1355
        %v3660 = vunpack.c.h.s8.bf16 %v1356
        %v3661 = vunpack.c.h.s8.bf16 %v1357
        %v3662 = vunpack.c.h.s8.bf16 %v1358
        %v3663 = vunpack.c.h.s8.bf16 %v1359
        %v3664 = vunpack.c.l.s8.bf16 %v1360
        %v3665 = vunpack.c.l.s8.bf16 %v1361
        %v3666 = vunpack.c.l.s8.bf16 %v1362
        %v3667 = vunpack.c.l.s8.bf16 %v1363
        %v3668 = vunpack.c.l.s8.bf16 %v1364
        %v3669 = vunpack.c.l.s8.bf16 %v1365
        %v3670 = vunpack.c.l.s8.bf16 %v1366
        %v3671 = vunpack.c.l.s8.bf16 %v1367
        %v3672 = vunpack.c.h.s8.bf16 %v1360
        %v3673 = vunpack.c.h.s8.bf16 %v1361
        %v3674 = vunpack.c.h.s8.bf16 %v1362
        %v3675 = vunpack.c.h.s8.bf16 %v1363
        %v3676 = vunpack.c.h.s8.bf16 %v1364
        %v3677 = vunpack.c.h.s8.bf16 %v1365
        %v3678 = vunpack.c.h.s8.bf16 %v1366
        %v3679 = vunpack.c.h.s8.bf16 %v1367
        %v3680 = vunpack.c.l.s8.bf16 %v1368
        %v3681 = vunpack.c.l.s8.bf16 %v1369
        %v3682 = vunpack.c.l.s8.bf16 %v1370
        %v3683 = vunpack.c.l.s8.bf16 %v1371
        %v3684 = vunpack.c.l.s8.bf16 %v1372
        %v3685 = vunpack.c.l.s8.bf16 %v1373
        %v3686 = vunpack.c.l.s8.bf16 %v1374
        %v3687 = vunpack.c.l.s8.bf16 %v1375
        %v3688 = vunpack.c.h.s8.bf16 %v1368
        %v3689 = vunpack.c.h.s8.bf16 %v1369
        %v3690 = vunpack.c.h.s8.bf16 %v1370
        %v3691 = vunpack.c.h.s8.bf16 %v1371
        %v3692 = vunpack.c.h.s8.bf16 %v1372
        %v3693 = vunpack.c.h.s8.bf16 %v1373
        %v3694 = vunpack.c.h.s8.bf16 %v1374
        %v3695 = vunpack.c.h.s8.bf16 %v1375
        %v3696 = vunpack.c.l.s8.bf16 %v1376
        %v3697 = vunpack.c.l.s8.bf16 %v1377
        %v3698 = vunpack.c.l.s8.bf16 %v1378
        %v3699 = vunpack.c.l.s8.bf16 %v1379
        %v3700 = vunpack.c.l.s8.bf16 %v1380
        %v3701 = vunpack.c.l.s8.bf16 %v1381
        %v3702 = vunpack.c.l.s8.bf16 %v1382
        %v3703 = vunpack.c.l.s8.bf16 %v1383
        %v3704 = vunpack.c.h.s8.bf16 %v1376
        %v3705 = vunpack.c.h.s8.bf16 %v1377
        %v3706 = vunpack.c.h.s8.bf16 %v1378
        %v3707 = vunpack.c.h.s8.bf16 %v1379
        %v3708 = vunpack.c.h.s8.bf16 %v1380
        %v3709 = vunpack.c.h.s8.bf16 %v1381
        %v3710 = vunpack.c.h.s8.bf16 %v1382
        %v3711 = vunpack.c.h.s8.bf16 %v1383
        %v3712 = vunpack.c.l.s8.bf16 %v1384
        %v3713 = vunpack.c.l.s8.bf16 %v1385
        %v3714 = vunpack.c.l.s8.bf16 %v1386
        %v3715 = vunpack.c.l.s8.bf16 %v1387
        %v3716 = vunpack.c.l.s8.bf16 %v1388
        %v3717 = vunpack.c.l.s8.bf16 %v1389
        %v3718 = vunpack.c.l.s8.bf16 %v1390
        %v3719 = vunpack.c.l.s8.bf16 %v1391
        %v3720 = vunpack.c.h.s8.bf16 %v1384
        %v3721 = vunpack.c.h.s8.bf16 %v1385
        %v3722 = vunpack.c.h.s8.bf16 %v1386
        %v3723 = vunpack.c.h.s8.bf16 %v1387
        %v3724 = vunpack.c.h.s8.bf16 %v1388
        %v3725 = vunpack.c.h.s8.bf16 %v1389
        %v3726 = vunpack.c.h.s8.bf16 %v1390
        %v3727 = vunpack.c.h.s8.bf16 %v1391
        %v3728 = vunpack.c.l.s8.bf16 %v1392
        %v3729 = vunpack.c.l.s8.bf16 %v1393
        %v3730 = vunpack.c.l.s8.bf16 %v1394
        %v3731 = vunpack.c.l.s8.bf16 %v1395
        %v3732 = vunpack.c.l.s8.bf16 %v1396
        %v3733 = vunpack.c.l.s8.bf16 %v1397
        %v3734 = vunpack.c.l.s8.bf16 %v1398
        %v3735 = vunpack.c.l.s8.bf16 %v1399
        %v3736 = vunpack.c.h.s8.bf16 %v1392
        %v3737 = vunpack.c.h.s8.bf16 %v1393
        %v3738 = vunpack.c.h.s8.bf16 %v1394
        %v3739 = vunpack.c.h.s8.bf16 %v1395
        %v3740 = vunpack.c.h.s8.bf16 %v1396
        %v3741 = vunpack.c.h.s8.bf16 %v1397
        %v3742 = vunpack.c.h.s8.bf16 %v1398
        %v3743 = vunpack.c.h.s8.bf16 %v1399
        %v3744 = vunpack.c.l.s8.bf16 %v1400
        %v3745 = vunpack.c.l.s8.bf16 %v1401
        %v3746 = vunpack.c.l.s8.bf16 %v1402
        %v3747 = vunpack.c.l.s8.bf16 %v1403
        %v3748 = vunpack.c.l.s8.bf16 %v1404
        %v3749 = vunpack.c.l.s8.bf16 %v1405
        %v3750 = vunpack.c.l.s8.bf16 %v1406
        %v3751 = vunpack.c.l.s8.bf16 %v1407
        %v3752 = vunpack.c.h.s8.bf16 %v1400
        %v3753 = vunpack.c.h.s8.bf16 %v1401
        %v3754 = vunpack.c.h.s8.bf16 %v1402
        %v3755 = vunpack.c.h.s8.bf16 %v1403
        %v3756 = vunpack.c.h.s8.bf16 %v1404
        %v3757 = vunpack.c.h.s8.bf16 %v1405
        %v3758 = vunpack.c.h.s8.bf16 %v1406
        %v3759 = vunpack.c.h.s8.bf16 %v1407
        %v3760 = vunpack.c.l.s8.bf16 %v1408
        %v3761 = vunpack.c.l.s8.bf16 %v1409
        %v3762 = vunpack.c.l.s8.bf16 %v1410
        %v3763 = vunpack.c.l.s8.bf16 %v1411
        %v3764 = vunpack.c.l.s8.bf16 %v1412
        %v3765 = vunpack.c.l.s8.bf16 %v1413
        %v3766 = vunpack.c.l.s8.bf16 %v1414
        %v3767 = vunpack.c.l.s8.bf16 %v1415
        %v3768 = vunpack.c.h.s8.bf16 %v1408
        %v3769 = vunpack.c.h.s8.bf16 %v1409
        %v3770 = vunpack.c.h.s8.bf16 %v1410
        %v3771 = vunpack.c.h.s8.bf16 %v1411
        %v3772 = vunpack.c.h.s8.bf16 %v1412
        %v3773 = vunpack.c.h.s8.bf16 %v1413
        %v3774 = vunpack.c.h.s8.bf16 %v1414
        %v3775 = vunpack.c.h.s8.bf16 %v1415
        %v3776 = vunpack.c.l.s8.bf16 %v1416
        %v3777 = vunpack.c.l.s8.bf16 %v1417
        %v3778 = vunpack.c.l.s8.bf16 %v1418
        %v3779 = vunpack.c.l.s8.bf16 %v1419
        %v3780 = vunpack.c.l.s8.bf16 %v1420
        %v3781 = vunpack.c.l.s8.bf16 %v1421
        %v3782 = vunpack.c.l.s8.bf16 %v1422
        %v3783 = vunpack.c.l.s8.bf16 %v1423
        %v3784 = vunpack.c.h.s8.bf16 %v1416
        %v3785 = vunpack.c.h.s8.bf16 %v1417
        %v3786 = vunpack.c.h.s8.bf16 %v1418
        %v3787 = vunpack.c.h.s8.bf16 %v1419
        %v3788 = vunpack.c.h.s8.bf16 %v1420
        %v3789 = vunpack.c.h.s8.bf16 %v1421
        %v3790 = vunpack.c.h.s8.bf16 %v1422
        %v3791 = vunpack.c.h.s8.bf16 %v1423
        %v3792 = vunpack.c.l.s8.bf16 %v1424
        %v3793 = vunpack.c.l.s8.bf16 %v1425
        %v3794 = vunpack.c.l.s8.bf16 %v1426
        %v3795 = vunpack.c.l.s8.bf16 %v1427
        %v3796 = vunpack.c.l.s8.bf16 %v1428
        %v3797 = vunpack.c.l.s8.bf16 %v1429
        %v3798 = vunpack.c.l.s8.bf16 %v1430
        %v3799 = vunpack.c.l.s8.bf16 %v1431
        %v3800 = vunpack.c.h.s8.bf16 %v1424
        %v3801 = vunpack.c.h.s8.bf16 %v1425
        %v3802 = vunpack.c.h.s8.bf16 %v1426
        %v3803 = vunpack.c.h.s8.bf16 %v1427
        %v3804 = vunpack.c.h.s8.bf16 %v1428
        %v3805 = vunpack.c.h.s8.bf16 %v1429
        %v3806 = vunpack.c.h.s8.bf16 %v1430
        %v3807 = vunpack.c.h.s8.bf16 %v1431
        %v3808 = vunpack.c.l.s8.bf16 %v1432
        %v3809 = vunpack.c.l.s8.bf16 %v1433
        %v3810 = vunpack.c.l.s8.bf16 %v1434
        %v3811 = vunpack.c.l.s8.bf16 %v1435
        %v3812 = vunpack.c.l.s8.bf16 %v1436
        %v3813 = vunpack.c.l.s8.bf16 %v1437
        %v3814 = vunpack.c.l.s8.bf16 %v1438
        %v3815 = vunpack.c.l.s8.bf16 %v1439
        %v3816 = vunpack.c.h.s8.bf16 %v1432
        %v3817 = vunpack.c.h.s8.bf16 %v1433
        %v3818 = vunpack.c.h.s8.bf16 %v1434
        %v3819 = vunpack.c.h.s8.bf16 %v1435
        %v3820 = vunpack.c.h.s8.bf16 %v1436
        %v3821 = vunpack.c.h.s8.bf16 %v1437
        %v3822 = vunpack.c.h.s8.bf16 %v1438
        %v3823 = vunpack.c.h.s8.bf16 %v1439
        %v3824 = vunpack.c.l.s8.bf16 %v1440
        %v3825 = vunpack.c.l.s8.bf16 %v1441
        %v3826 = vunpack.c.l.s8.bf16 %v1442
        %v3827 = vunpack.c.l.s8.bf16 %v1443
        %v3828 = vunpack.c.l.s8.bf16 %v1444
        %v3829 = vunpack.c.l.s8.bf16 %v1445
        %v3830 = vunpack.c.l.s8.bf16 %v1446
        %v3831 = vunpack.c.l.s8.bf16 %v1447
        %v3832 = vunpack.c.h.s8.bf16 %v1440
        %v3833 = vunpack.c.h.s8.bf16 %v1441
        %v3834 = vunpack.c.h.s8.bf16 %v1442
        %v3835 = vunpack.c.h.s8.bf16 %v1443
        %v3836 = vunpack.c.h.s8.bf16 %v1444
        %v3837 = vunpack.c.h.s8.bf16 %v1445
        %v3838 = vunpack.c.h.s8.bf16 %v1446
        %v3839 = vunpack.c.h.s8.bf16 %v1447
        %v3840 = vunpack.c.l.s8.bf16 %v1448
        %v3841 = vunpack.c.l.s8.bf16 %v1449
        %v3842 = vunpack.c.l.s8.bf16 %v1450
        %v3843 = vunpack.c.l.s8.bf16 %v1451
        %v3844 = vunpack.c.l.s8.bf16 %v1452
        %v3845 = vunpack.c.l.s8.bf16 %v1453
        %v3846 = vunpack.c.l.s8.bf16 %v1454
        %v3847 = vunpack.c.l.s8.bf16 %v1455
        %v3848 = vunpack.c.h.s8.bf16 %v1448
        %v3849 = vunpack.c.h.s8.bf16 %v1449
        %v3850 = vunpack.c.h.s8.bf16 %v1450
        %v3851 = vunpack.c.h.s8.bf16 %v1451
        %v3852 = vunpack.c.h.s8.bf16 %v1452
        %v3853 = vunpack.c.h.s8.bf16 %v1453
        %v3854 = vunpack.c.h.s8.bf16 %v1454
        %v3855 = vunpack.c.h.s8.bf16 %v1455
        %v3856 = vunpack.c.l.s8.bf16 %v1456
        %v3857 = vunpack.c.l.s8.bf16 %v1457
        %v3858 = vunpack.c.l.s8.bf16 %v1458
        %v3859 = vunpack.c.l.s8.bf16 %v1459
        %v3860 = vunpack.c.l.s8.bf16 %v1460
        %v3861 = vunpack.c.l.s8.bf16 %v1461
        %v3862 = vunpack.c.l.s8.bf16 %v1462
        %v3863 = vunpack.c.l.s8.bf16 %v1463
        %v3864 = vunpack.c.h.s8.bf16 %v1456
        %v3865 = vunpack.c.h.s8.bf16 %v1457
        %v3866 = vunpack.c.h.s8.bf16 %v1458
        %v3867 = vunpack.c.h.s8.bf16 %v1459
        %v3868 = vunpack.c.h.s8.bf16 %v1460
        %v3869 = vunpack.c.h.s8.bf16 %v1461
        %v3870 = vunpack.c.h.s8.bf16 %v1462
        %v3871 = vunpack.c.h.s8.bf16 %v1463
        %v3872 = vunpack.c.l.s8.bf16 %v1464
        %v3873 = vunpack.c.l.s8.bf16 %v1465
        %v3874 = vunpack.c.l.s8.bf16 %v1466
        %v3875 = vunpack.c.l.s8.bf16 %v1467
        %v3876 = vunpack.c.l.s8.bf16 %v1468
        %v3877 = vunpack.c.l.s8.bf16 %v1469
        %v3878 = vunpack.c.l.s8.bf16 %v1470
        %v3879 = vunpack.c.l.s8.bf16 %v1471
        %v3880 = vunpack.c.h.s8.bf16 %v1464
        %v3881 = vunpack.c.h.s8.bf16 %v1465
        %v3882 = vunpack.c.h.s8.bf16 %v1466
        %v3883 = vunpack.c.h.s8.bf16 %v1467
        %v3884 = vunpack.c.h.s8.bf16 %v1468
        %v3885 = vunpack.c.h.s8.bf16 %v1469
        %v3886 = vunpack.c.h.s8.bf16 %v1470
        %v3887 = vunpack.c.h.s8.bf16 %v1471
        %v3888 = vunpack.c.l.s8.bf16 %v1472
        %v3889 = vunpack.c.l.s8.bf16 %v1473
        %v3890 = vunpack.c.l.s8.bf16 %v1474
        %v3891 = vunpack.c.l.s8.bf16 %v1475
        %v3892 = vunpack.c.l.s8.bf16 %v1476
        %v3893 = vunpack.c.l.s8.bf16 %v1477
        %v3894 = vunpack.c.l.s8.bf16 %v1478
        %v3895 = vunpack.c.l.s8.bf16 %v1479
        %v3896 = vunpack.c.h.s8.bf16 %v1472
        %v3897 = vunpack.c.h.s8.bf16 %v1473
        %v3898 = vunpack.c.h.s8.bf16 %v1474
        %v3899 = vunpack.c.h.s8.bf16 %v1475
        %v3900 = vunpack.c.h.s8.bf16 %v1476
        %v3901 = vunpack.c.h.s8.bf16 %v1477
        %v3902 = vunpack.c.h.s8.bf16 %v1478
        %v3903 = vunpack.c.h.s8.bf16 %v1479
        %v3904 = vunpack.c.l.s8.bf16 %v1480
        %v3905 = vunpack.c.l.s8.bf16 %v1481
        %v3906 = vunpack.c.l.s8.bf16 %v1482
        %v3907 = vunpack.c.l.s8.bf16 %v1483
        %v3908 = vunpack.c.l.s8.bf16 %v1484
        %v3909 = vunpack.c.l.s8.bf16 %v1485
        %v3910 = vunpack.c.l.s8.bf16 %v1486
        %v3911 = vunpack.c.l.s8.bf16 %v1487
        %v3912 = vunpack.c.h.s8.bf16 %v1480
        %v3913 = vunpack.c.h.s8.bf16 %v1481
        %v3914 = vunpack.c.h.s8.bf16 %v1482
        %v3915 = vunpack.c.h.s8.bf16 %v1483
        %v3916 = vunpack.c.h.s8.bf16 %v1484
        %v3917 = vunpack.c.h.s8.bf16 %v1485
        %v3918 = vunpack.c.h.s8.bf16 %v1486
        %v3919 = vunpack.c.h.s8.bf16 %v1487
        %v3920 = vunpack.c.l.s8.bf16 %v1488
        %v3921 = vunpack.c.l.s8.bf16 %v1489
        %v3922 = vunpack.c.l.s8.bf16 %v1490
        %v3923 = vunpack.c.l.s8.bf16 %v1491
        %v3924 = vunpack.c.l.s8.bf16 %v1492
        %v3925 = vunpack.c.l.s8.bf16 %v1493
        %v3926 = vunpack.c.l.s8.bf16 %v1494
        %v3927 = vunpack.c.l.s8.bf16 %v1495
        %v3928 = vunpack.c.h.s8.bf16 %v1488
        %v3929 = vunpack.c.h.s8.bf16 %v1489
        %v3930 = vunpack.c.h.s8.bf16 %v1490
        %v3931 = vunpack.c.h.s8.bf16 %v1491
        %v3932 = vunpack.c.h.s8.bf16 %v1492
        %v3933 = vunpack.c.h.s8.bf16 %v1493
        %v3934 = vunpack.c.h.s8.bf16 %v1494
        %v3935 = vunpack.c.h.s8.bf16 %v1495
        %v3936 = vunpack.c.l.s8.bf16 %v1496
        %v3937 = vunpack.c.l.s8.bf16 %v1497
        %v3938 = vunpack.c.l.s8.bf16 %v1498
        %v3939 = vunpack.c.l.s8.bf16 %v1499
        %v3940 = vunpack.c.l.s8.bf16 %v1500
        %v3941 = vunpack.c.l.s8.bf16 %v1501
        %v3942 = vunpack.c.l.s8.bf16 %v1502
        %v3943 = vunpack.c.l.s8.bf16 %v1503
        %v3944 = vunpack.c.h.s8.bf16 %v1496
        %v3945 = vunpack.c.h.s8.bf16 %v1497
        %v3946 = vunpack.c.h.s8.bf16 %v1498
        %v3947 = vunpack.c.h.s8.bf16 %v1499
        %v3948 = vunpack.c.h.s8.bf16 %v1500
        %v3949 = vunpack.c.h.s8.bf16 %v1501
        %v3950 = vunpack.c.h.s8.bf16 %v1502
        %v3951 = vunpack.c.h.s8.bf16 %v1503
        %v3952 = vunpack.c.l.s8.bf16 %v1504
        %v3953 = vunpack.c.l.s8.bf16 %v1505
        %v3954 = vunpack.c.l.s8.bf16 %v1506
        %v3955 = vunpack.c.l.s8.bf16 %v1507
        %v3956 = vunpack.c.l.s8.bf16 %v1508
        %v3957 = vunpack.c.l.s8.bf16 %v1509
        %v3958 = vunpack.c.l.s8.bf16 %v1510
        %v3959 = vunpack.c.l.s8.bf16 %v1511
        %v3960 = vunpack.c.h.s8.bf16 %v1504
        %v3961 = vunpack.c.h.s8.bf16 %v1505
        %v3962 = vunpack.c.h.s8.bf16 %v1506
        %v3963 = vunpack.c.h.s8.bf16 %v1507
        %v3964 = vunpack.c.h.s8.bf16 %v1508
        %v3965 = vunpack.c.h.s8.bf16 %v1509
        %v3966 = vunpack.c.h.s8.bf16 %v1510
        %v3967 = vunpack.c.h.s8.bf16 %v1511
        %v3968 = vunpack.c.l.s8.bf16 %v1512
        %v3969 = vunpack.c.l.s8.bf16 %v1513
        %v3970 = vunpack.c.l.s8.bf16 %v1514
        %v3971 = vunpack.c.l.s8.bf16 %v1515
        %v3972 = vunpack.c.l.s8.bf16 %v1516
        %v3973 = vunpack.c.l.s8.bf16 %v1517
        %v3974 = vunpack.c.l.s8.bf16 %v1518
        %v3975 = vunpack.c.l.s8.bf16 %v1519
        %v3976 = vunpack.c.h.s8.bf16 %v1512
        %v3977 = vunpack.c.h.s8.bf16 %v1513
        %v3978 = vunpack.c.h.s8.bf16 %v1514
        %v3979 = vunpack.c.h.s8.bf16 %v1515
        %v3980 = vunpack.c.h.s8.bf16 %v1516
        %v3981 = vunpack.c.h.s8.bf16 %v1517
        %v3982 = vunpack.c.h.s8.bf16 %v1518
        %v3983 = vunpack.c.h.s8.bf16 %v1519
        %v3984 = vunpack.c.l.s8.bf16 %v1520
        %v3985 = vunpack.c.l.s8.bf16 %v1521
        %v3986 = vunpack.c.l.s8.bf16 %v1522
        %v3987 = vunpack.c.l.s8.bf16 %v1523
        %v3988 = vunpack.c.l.s8.bf16 %v1524
        %v3989 = vunpack.c.l.s8.bf16 %v1525
        %v3990 = vunpack.c.l.s8.bf16 %v1526
        %v3991 = vunpack.c.l.s8.bf16 %v1527
        %v3992 = vunpack.c.h.s8.bf16 %v1520
        %v3993 = vunpack.c.h.s8.bf16 %v1521
        %v3994 = vunpack.c.h.s8.bf16 %v1522
        %v3995 = vunpack.c.h.s8.bf16 %v1523
        %v3996 = vunpack.c.h.s8.bf16 %v1524
        %v3997 = vunpack.c.h.s8.bf16 %v1525
        %v3998 = vunpack.c.h.s8.bf16 %v1526
        %v3999 = vunpack.c.h.s8.bf16 %v1527
        %v4000 = vunpack.c.l.s8.bf16 %v1528
        %v4001 = vunpack.c.l.s8.bf16 %v1529
        %v4002 = vunpack.c.l.s8.bf16 %v1530
        %v4003 = vunpack.c.l.s8.bf16 %v1531
        %v4004 = vunpack.c.l.s8.bf16 %v1532
        %v4005 = vunpack.c.l.s8.bf16 %v1533
        %v4006 = vunpack.c.l.s8.bf16 %v1534
        %v4007 = vunpack.c.l.s8.bf16 %v1535
        %v4008 = vunpack.c.h.s8.bf16 %v1528
        %v4009 = vunpack.c.h.s8.bf16 %v1529
        %v4010 = vunpack.c.h.s8.bf16 %v1530
        %v4011 = vunpack.c.h.s8.bf16 %v1531
        %v4012 = vunpack.c.h.s8.bf16 %v1532
        %v4013 = vunpack.c.h.s8.bf16 %v1533
        %v4014 = vunpack.c.h.s8.bf16 %v1534
        %v4015 = vunpack.c.h.s8.bf16 %v1535
        %v4016 = vunpack.c.l.s8.bf16 %v1536
        %v4017 = vunpack.c.l.s8.bf16 %v1537
        %v4018 = vunpack.c.l.s8.bf16 %v1538
        %v4019 = vunpack.c.l.s8.bf16 %v1539
        %v4020 = vunpack.c.l.s8.bf16 %v1540
        %v4021 = vunpack.c.l.s8.bf16 %v1541
        %v4022 = vunpack.c.l.s8.bf16 %v1542
        %v4023 = vunpack.c.l.s8.bf16 %v1543
        %v4024 = vunpack.c.h.s8.bf16 %v1536
        %v4025 = vunpack.c.h.s8.bf16 %v1537
        %v4026 = vunpack.c.h.s8.bf16 %v1538
        %v4027 = vunpack.c.h.s8.bf16 %v1539
        %v4028 = vunpack.c.h.s8.bf16 %v1540
        %v4029 = vunpack.c.h.s8.bf16 %v1541
        %v4030 = vunpack.c.h.s8.bf16 %v1542
        %v4031 = vunpack.c.h.s8.bf16 %v1543
        %v4032 = vunpack.c.l.s8.bf16 %v1544
        %v4033 = vunpack.c.l.s8.bf16 %v1545
        %v4034 = vunpack.c.l.s8.bf16 %v1546
        %v4035 = vunpack.c.l.s8.bf16 %v1547
        %v4036 = vunpack.c.l.s8.bf16 %v1548
        %v4037 = vunpack.c.l.s8.bf16 %v1549
        %v4038 = vunpack.c.l.s8.bf16 %v1550
        %v4039 = vunpack.c.l.s8.bf16 %v1551
        %v4040 = vunpack.c.h.s8.bf16 %v1544
        %v4041 = vunpack.c.h.s8.bf16 %v1545
        %v4042 = vunpack.c.h.s8.bf16 %v1546
        %v4043 = vunpack.c.h.s8.bf16 %v1547
        %v4044 = vunpack.c.h.s8.bf16 %v1548
        %v4045 = vunpack.c.h.s8.bf16 %v1549
        %v4046 = vunpack.c.h.s8.bf16 %v1550
        %v4047 = vunpack.c.h.s8.bf16 %v1551
        %v4048 = vunpack.c.l.s8.bf16 %v1552
        %v4049 = vunpack.c.l.s8.bf16 %v1553
        %v4050 = vunpack.c.l.s8.bf16 %v1554
        %v4051 = vunpack.c.l.s8.bf16 %v1555
        %v4052 = vunpack.c.l.s8.bf16 %v1556
        %v4053 = vunpack.c.l.s8.bf16 %v1557
        %v4054 = vunpack.c.l.s8.bf16 %v1558
        %v4055 = vunpack.c.l.s8.bf16 %v1559
        %v4056 = vunpack.c.h.s8.bf16 %v1552
        %v4057 = vunpack.c.h.s8.bf16 %v1553
        %v4058 = vunpack.c.h.s8.bf16 %v1554
        %v4059 = vunpack.c.h.s8.bf16 %v1555
        %v4060 = vunpack.c.h.s8.bf16 %v1556
        %v4061 = vunpack.c.h.s8.bf16 %v1557
        %v4062 = vunpack.c.h.s8.bf16 %v1558
        %v4063 = vunpack.c.h.s8.bf16 %v1559
        %v4064 = vunpack.c.l.s8.bf16 %v1560
        %v4065 = vunpack.c.l.s8.bf16 %v1561
        %v4066 = vunpack.c.l.s8.bf16 %v1562
        %v4067 = vunpack.c.l.s8.bf16 %v1563
        %v4068 = vunpack.c.l.s8.bf16 %v1564
        %v4069 = vunpack.c.l.s8.bf16 %v1565
        %v4070 = vunpack.c.l.s8.bf16 %v1566
        %v4071 = vunpack.c.l.s8.bf16 %v1567
        %v4072 = vunpack.c.h.s8.bf16 %v1560
        %v4073 = vunpack.c.h.s8.bf16 %v1561
        %v4074 = vunpack.c.h.s8.bf16 %v1562
        %v4075 = vunpack.c.h.s8.bf16 %v1563
        %v4076 = vunpack.c.h.s8.bf16 %v1564
        %v4077 = vunpack.c.h.s8.bf16 %v1565
        %v4078 = vunpack.c.h.s8.bf16 %v1566
        %v4079 = vunpack.c.h.s8.bf16 %v1567
        %v4080 = vunpack.c.l.s8.bf16 %v1568
        %v4081 = vunpack.c.l.s8.bf16 %v1569
        %v4082 = vunpack.c.l.s8.bf16 %v1570
        %v4083 = vunpack.c.l.s8.bf16 %v1571
        %v4084 = vunpack.c.l.s8.bf16 %v1572
        %v4085 = vunpack.c.l.s8.bf16 %v1573
        %v4086 = vunpack.c.l.s8.bf16 %v1574
        %v4087 = vunpack.c.l.s8.bf16 %v1575
        %v4088 = vunpack.c.h.s8.bf16 %v1568
        %v4089 = vunpack.c.h.s8.bf16 %v1569
        %v4090 = vunpack.c.h.s8.bf16 %v1570
        %v4091 = vunpack.c.h.s8.bf16 %v1571
        %v4092 = vunpack.c.h.s8.bf16 %v1572
        %v4093 = vunpack.c.h.s8.bf16 %v1573
        %v4094 = vunpack.c.h.s8.bf16 %v1574
        %v4095 = vunpack.c.h.s8.bf16 %v1575
        %v4096 = vunpack.c.l.s8.bf16 %v1576
        %v4097 = vunpack.c.l.s8.bf16 %v1577
        %v4098 = vunpack.c.l.s8.bf16 %v1578
        %v4099 = vunpack.c.l.s8.bf16 %v1579
        %v4100 = vunpack.c.l.s8.bf16 %v1580
        %v4101 = vunpack.c.l.s8.bf16 %v1581
        %v4102 = vunpack.c.l.s8.bf16 %v1582
        %v4103 = vunpack.c.l.s8.bf16 %v1583
        %v4104 = vunpack.c.h.s8.bf16 %v1576
        %v4105 = vunpack.c.h.s8.bf16 %v1577
        %v4106 = vunpack.c.h.s8.bf16 %v1578
        %v4107 = vunpack.c.h.s8.bf16 %v1579
        %v4108 = vunpack.c.h.s8.bf16 %v1580
        %v4109 = vunpack.c.h.s8.bf16 %v1581
        %v4110 = vunpack.c.h.s8.bf16 %v1582
        %v4111 = vunpack.c.h.s8.bf16 %v1583
        %v4112 = vunpack.c.l.s8.bf16 %v1584
        %v4113 = vunpack.c.l.s8.bf16 %v1585
        %v4114 = vunpack.c.l.s8.bf16 %v1586
        %v4115 = vunpack.c.l.s8.bf16 %v1587
        %v4116 = vunpack.c.l.s8.bf16 %v1588
        %v4117 = vunpack.c.l.s8.bf16 %v1589
        %v4118 = vunpack.c.l.s8.bf16 %v1590
        %v4119 = vunpack.c.l.s8.bf16 %v1591
        %v4120 = vunpack.c.h.s8.bf16 %v1584
        %v4121 = vunpack.c.h.s8.bf16 %v1585
        %v4122 = vunpack.c.h.s8.bf16 %v1586
        %v4123 = vunpack.c.h.s8.bf16 %v1587
        %v4124 = vunpack.c.h.s8.bf16 %v1588
        %v4125 = vunpack.c.h.s8.bf16 %v1589
        %v4126 = vunpack.c.h.s8.bf16 %v1590
        %v4127 = vunpack.c.h.s8.bf16 %v1591
        %v4128 = vunpack.c.l.s8.bf16 %v1592
        %v4129 = vunpack.c.l.s8.bf16 %v1593
        %v4130 = vunpack.c.l.s8.bf16 %v1594
        %v4131 = vunpack.c.l.s8.bf16 %v1595
        %v4132 = vunpack.c.l.s8.bf16 %v1596
        %v4133 = vunpack.c.l.s8.bf16 %v1597
        %v4134 = vunpack.c.l.s8.bf16 %v1598
        %v4135 = vunpack.c.l.s8.bf16 %v1599
        %v4136 = vunpack.c.h.s8.bf16 %v1592
        %v4137 = vunpack.c.h.s8.bf16 %v1593
        %v4138 = vunpack.c.h.s8.bf16 %v1594
        %v4139 = vunpack.c.h.s8.bf16 %v1595
        %v4140 = vunpack.c.h.s8.bf16 %v1596
        %v4141 = vunpack.c.h.s8.bf16 %v1597
        %v4142 = vunpack.c.h.s8.bf16 %v1598
        %v4143 = vunpack.c.h.s8.bf16 %v1599
        %v4144 = vunpack.c.l.s8.bf16 %v1600
        %v4145 = vunpack.c.l.s8.bf16 %v1601
        %v4146 = vunpack.c.l.s8.bf16 %v1602
        %v4147 = vunpack.c.l.s8.bf16 %v1603
        %v4148 = vunpack.c.l.s8.bf16 %v1604
        %v4149 = vunpack.c.l.s8.bf16 %v1605
        %v4150 = vunpack.c.l.s8.bf16 %v1606
        %v4151 = vunpack.c.l.s8.bf16 %v1607
        %v4152 = vunpack.c.h.s8.bf16 %v1600
        %v4153 = vunpack.c.h.s8.bf16 %v1601
        %v4154 = vunpack.c.h.s8.bf16 %v1602
        %v4155 = vunpack.c.h.s8.bf16 %v1603
        %v4156 = vunpack.c.h.s8.bf16 %v1604
        %v4157 = vunpack.c.h.s8.bf16 %v1605
        %v4158 = vunpack.c.h.s8.bf16 %v1606
        %v4159 = vunpack.c.h.s8.bf16 %v1607
        %v4160 = vunpack.c.l.s8.bf16 %v1608
        %v4161 = vunpack.c.l.s8.bf16 %v1609
        %v4162 = vunpack.c.l.s8.bf16 %v1610
        %v4163 = vunpack.c.l.s8.bf16 %v1611
        %v4164 = vunpack.c.l.s8.bf16 %v1612
        %v4165 = vunpack.c.l.s8.bf16 %v1613
        %v4166 = vunpack.c.l.s8.bf16 %v1614
        %v4167 = vunpack.c.l.s8.bf16 %v1615
        %v4168 = vunpack.c.h.s8.bf16 %v1608
        %v4169 = vunpack.c.h.s8.bf16 %v1609
        %v4170 = vunpack.c.h.s8.bf16 %v1610
        %v4171 = vunpack.c.h.s8.bf16 %v1611
        %v4172 = vunpack.c.h.s8.bf16 %v1612
        %v4173 = vunpack.c.h.s8.bf16 %v1613
        %v4174 = vunpack.c.h.s8.bf16 %v1614
        %v4175 = vunpack.c.h.s8.bf16 %v1615
        %v4176 = vunpack.c.l.s8.bf16 %v1616
        %v4177 = vunpack.c.l.s8.bf16 %v1617
        %v4178 = vunpack.c.l.s8.bf16 %v1618
        %v4179 = vunpack.c.l.s8.bf16 %v1619
        %v4180 = vunpack.c.l.s8.bf16 %v1620
        %v4181 = vunpack.c.l.s8.bf16 %v1621
        %v4182 = vunpack.c.l.s8.bf16 %v1622
        %v4183 = vunpack.c.l.s8.bf16 %v1623
        %v4184 = vunpack.c.h.s8.bf16 %v1616
        %v4185 = vunpack.c.h.s8.bf16 %v1617
        %v4186 = vunpack.c.h.s8.bf16 %v1618
        %v4187 = vunpack.c.h.s8.bf16 %v1619
        %v4188 = vunpack.c.h.s8.bf16 %v1620
        %v4189 = vunpack.c.h.s8.bf16 %v1621
        %v4190 = vunpack.c.h.s8.bf16 %v1622
        %v4191 = vunpack.c.h.s8.bf16 %v1623
        %v4192 = vunpack.c.l.s8.bf16 %v1624
        %v4193 = vunpack.c.l.s8.bf16 %v1625
        %v4194 = vunpack.c.l.s8.bf16 %v1626
        %v4195 = vunpack.c.l.s8.bf16 %v1627
        %v4196 = vunpack.c.l.s8.bf16 %v1628
        %v4197 = vunpack.c.l.s8.bf16 %v1629
        %v4198 = vunpack.c.l.s8.bf16 %v1630
        %v4199 = vunpack.c.l.s8.bf16 %v1631
        %v4200 = vunpack.c.h.s8.bf16 %v1624
        %v4201 = vunpack.c.h.s8.bf16 %v1625
        %v4202 = vunpack.c.h.s8.bf16 %v1626
        %v4203 = vunpack.c.h.s8.bf16 %v1627
        %v4204 = vunpack.c.h.s8.bf16 %v1628
        %v4205 = vunpack.c.h.s8.bf16 %v1629
        %v4206 = vunpack.c.h.s8.bf16 %v1630
        %v4207 = vunpack.c.h.s8.bf16 %v1631
        %v4208 = vunpack.c.l.s8.bf16 %v1632
        %v4209 = vunpack.c.l.s8.bf16 %v1633
        %v4210 = vunpack.c.l.s8.bf16 %v1634
        %v4211 = vunpack.c.l.s8.bf16 %v1635
        %v4212 = vunpack.c.l.s8.bf16 %v1636
        %v4213 = vunpack.c.l.s8.bf16 %v1637
        %v4214 = vunpack.c.l.s8.bf16 %v1638
        %v4215 = vunpack.c.l.s8.bf16 %v1639
        %v4216 = vunpack.c.h.s8.bf16 %v1632
        %v4217 = vunpack.c.h.s8.bf16 %v1633
        %v4218 = vunpack.c.h.s8.bf16 %v1634
        %v4219 = vunpack.c.h.s8.bf16 %v1635
        %v4220 = vunpack.c.h.s8.bf16 %v1636
        %v4221 = vunpack.c.h.s8.bf16 %v1637
        %v4222 = vunpack.c.h.s8.bf16 %v1638
        %v4223 = vunpack.c.h.s8.bf16 %v1639
        %v4224 = vunpack.c.l.s8.bf16 %v1640
        %v4225 = vunpack.c.l.s8.bf16 %v1641
        %v4226 = vunpack.c.l.s8.bf16 %v1642
        %v4227 = vunpack.c.l.s8.bf16 %v1643
        %v4228 = vunpack.c.l.s8.bf16 %v1644
        %v4229 = vunpack.c.l.s8.bf16 %v1645
        %v4230 = vunpack.c.l.s8.bf16 %v1646
        %v4231 = vunpack.c.l.s8.bf16 %v1647
        %v4232 = vunpack.c.h.s8.bf16 %v1640
        %v4233 = vunpack.c.h.s8.bf16 %v1641
        %v4234 = vunpack.c.h.s8.bf16 %v1642
        %v4235 = vunpack.c.h.s8.bf16 %v1643
        %v4236 = vunpack.c.h.s8.bf16 %v1644
        %v4237 = vunpack.c.h.s8.bf16 %v1645
        %v4238 = vunpack.c.h.s8.bf16 %v1646
        %v4239 = vunpack.c.h.s8.bf16 %v1647
        %v4240 = vunpack.c.l.s8.bf16 %v1648
        %v4241 = vunpack.c.l.s8.bf16 %v1649
        %v4242 = vunpack.c.l.s8.bf16 %v1650
        %v4243 = vunpack.c.l.s8.bf16 %v1651
        %v4244 = vunpack.c.l.s8.bf16 %v1652
        %v4245 = vunpack.c.l.s8.bf16 %v1653
        %v4246 = vunpack.c.l.s8.bf16 %v1654
        %v4247 = vunpack.c.l.s8.bf16 %v1655
        %v4248 = vunpack.c.h.s8.bf16 %v1648
        %v4249 = vunpack.c.h.s8.bf16 %v1649
        %v4250 = vunpack.c.h.s8.bf16 %v1650
        %v4251 = vunpack.c.h.s8.bf16 %v1651
        %v4252 = vunpack.c.h.s8.bf16 %v1652
        %v4253 = vunpack.c.h.s8.bf16 %v1653
        %v4254 = vunpack.c.h.s8.bf16 %v1654
        %v4255 = vunpack.c.h.s8.bf16 %v1655
        %v4256 = vunpack.c.l.s8.bf16 %v1656
        %v4257 = vunpack.c.l.s8.bf16 %v1657
        %v4258 = vunpack.c.l.s8.bf16 %v1658
        %v4259 = vunpack.c.l.s8.bf16 %v1659
        %v4260 = vunpack.c.l.s8.bf16 %v1660
        %v4261 = vunpack.c.l.s8.bf16 %v1661
        %v4262 = vunpack.c.l.s8.bf16 %v1662
        %v4263 = vunpack.c.l.s8.bf16 %v1663
        %v4264 = vunpack.c.h.s8.bf16 %v1656
        %v4265 = vunpack.c.h.s8.bf16 %v1657
        %v4266 = vunpack.c.h.s8.bf16 %v1658
        %v4267 = vunpack.c.h.s8.bf16 %v1659
        %v4268 = vunpack.c.h.s8.bf16 %v1660
        %v4269 = vunpack.c.h.s8.bf16 %v1661
        %v4270 = vunpack.c.h.s8.bf16 %v1662
        %v4271 = vunpack.c.h.s8.bf16 %v1663
        %v4272 = vunpack.c.l.s8.bf16 %v1664
        %v4273 = vunpack.c.l.s8.bf16 %v1665
        %v4274 = vunpack.c.l.s8.bf16 %v1666
        %v4275 = vunpack.c.l.s8.bf16 %v1667
        %v4276 = vunpack.c.l.s8.bf16 %v1668
        %v4277 = vunpack.c.l.s8.bf16 %v1669
        %v4278 = vunpack.c.l.s8.bf16 %v1670
        %v4279 = vunpack.c.l.s8.bf16 %v1671
        %v4280 = vunpack.c.h.s8.bf16 %v1664
        %v4281 = vunpack.c.h.s8.bf16 %v1665
        %v4282 = vunpack.c.h.s8.bf16 %v1666
        %v4283 = vunpack.c.h.s8.bf16 %v1667
        %v4284 = vunpack.c.h.s8.bf16 %v1668
        %v4285 = vunpack.c.h.s8.bf16 %v1669
        %v4286 = vunpack.c.h.s8.bf16 %v1670
        %v4287 = vunpack.c.h.s8.bf16 %v1671
        %v4288 = vunpack.c.l.s8.bf16 %v1672
        %v4289 = vunpack.c.l.s8.bf16 %v1673
        %v4290 = vunpack.c.l.s8.bf16 %v1674
        %v4291 = vunpack.c.l.s8.bf16 %v1675
        %v4292 = vunpack.c.l.s8.bf16 %v1676
        %v4293 = vunpack.c.l.s8.bf16 %v1677
        %v4294 = vunpack.c.l.s8.bf16 %v1678
        %v4295 = vunpack.c.l.s8.bf16 %v1679
        %v4296 = vunpack.c.h.s8.bf16 %v1672
        %v4297 = vunpack.c.h.s8.bf16 %v1673
        %v4298 = vunpack.c.h.s8.bf16 %v1674
        %v4299 = vunpack.c.h.s8.bf16 %v1675
        %v4300 = vunpack.c.h.s8.bf16 %v1676
        %v4301 = vunpack.c.h.s8.bf16 %v1677
        %v4302 = vunpack.c.h.s8.bf16 %v1678
        %v4303 = vunpack.c.h.s8.bf16 %v1679
        %v4304 = vunpack.c.l.s8.bf16 %v1680
        %v4305 = vunpack.c.l.s8.bf16 %v1681
        %v4306 = vunpack.c.l.s8.bf16 %v1682
        %v4307 = vunpack.c.l.s8.bf16 %v1683
        %v4308 = vunpack.c.l.s8.bf16 %v1684
        %v4309 = vunpack.c.l.s8.bf16 %v1685
        %v4310 = vunpack.c.l.s8.bf16 %v1686
        %v4311 = vunpack.c.l.s8.bf16 %v1687
        %v4312 = vunpack.c.h.s8.bf16 %v1680
        %v4313 = vunpack.c.h.s8.bf16 %v1681
        %v4314 = vunpack.c.h.s8.bf16 %v1682
        %v4315 = vunpack.c.h.s8.bf16 %v1683
        %v4316 = vunpack.c.h.s8.bf16 %v1684
        %v4317 = vunpack.c.h.s8.bf16 %v1685
        %v4318 = vunpack.c.h.s8.bf16 %v1686
        %v4319 = vunpack.c.h.s8.bf16 %v1687
        %v4320 = vunpack.c.l.s8.bf16 %v1688
        %v4321 = vunpack.c.l.s8.bf16 %v1689
        %v4322 = vunpack.c.l.s8.bf16 %v1690
        %v4323 = vunpack.c.l.s8.bf16 %v1691
        %v4324 = vunpack.c.l.s8.bf16 %v1692
        %v4325 = vunpack.c.l.s8.bf16 %v1693
        %v4326 = vunpack.c.l.s8.bf16 %v1694
        %v4327 = vunpack.c.l.s8.bf16 %v1695
        %v4328 = vunpack.c.h.s8.bf16 %v1688
        %v4329 = vunpack.c.h.s8.bf16 %v1689
        %v4330 = vunpack.c.h.s8.bf16 %v1690
        %v4331 = vunpack.c.h.s8.bf16 %v1691
        %v4332 = vunpack.c.h.s8.bf16 %v1692
        %v4333 = vunpack.c.h.s8.bf16 %v1693
        %v4334 = vunpack.c.h.s8.bf16 %v1694
        %v4335 = vunpack.c.h.s8.bf16 %v1695
        %v4336 = vunpack.c.l.s8.bf16 %v1696
        %v4337 = vunpack.c.l.s8.bf16 %v1697
        %v4338 = vunpack.c.l.s8.bf16 %v1698
        %v4339 = vunpack.c.l.s8.bf16 %v1699
        %v4340 = vunpack.c.l.s8.bf16 %v1700
        %v4341 = vunpack.c.l.s8.bf16 %v1701
        %v4342 = vunpack.c.l.s8.bf16 %v1702
        %v4343 = vunpack.c.l.s8.bf16 %v1703
        %v4344 = vunpack.c.h.s8.bf16 %v1696
        %v4345 = vunpack.c.h.s8.bf16 %v1697
        %v4346 = vunpack.c.h.s8.bf16 %v1698
        %v4347 = vunpack.c.h.s8.bf16 %v1699
        %v4348 = vunpack.c.h.s8.bf16 %v1700
        %v4349 = vunpack.c.h.s8.bf16 %v1701
        %v4350 = vunpack.c.h.s8.bf16 %v1702
        %v4351 = vunpack.c.h.s8.bf16 %v1703
        %v4352 = vunpack.c.l.s8.bf16 %v1704
        %v4353 = vunpack.c.l.s8.bf16 %v1705
        %v4354 = vunpack.c.l.s8.bf16 %v1706
        %v4355 = vunpack.c.l.s8.bf16 %v1707
        %v4356 = vunpack.c.l.s8.bf16 %v1708
        %v4357 = vunpack.c.l.s8.bf16 %v1709
        %v4358 = vunpack.c.l.s8.bf16 %v1710
        %v4359 = vunpack.c.l.s8.bf16 %v1711
        %v4360 = vunpack.c.h.s8.bf16 %v1704
        %v4361 = vunpack.c.h.s8.bf16 %v1705
        %v4362 = vunpack.c.h.s8.bf16 %v1706
        %v4363 = vunpack.c.h.s8.bf16 %v1707
        %v4364 = vunpack.c.h.s8.bf16 %v1708
        %v4365 = vunpack.c.h.s8.bf16 %v1709
        %v4366 = vunpack.c.h.s8.bf16 %v1710
        %v4367 = vunpack.c.h.s8.bf16 %v1711
        %v4368 = vunpack.c.l.s8.bf16 %v1712
        %v4369 = vunpack.c.l.s8.bf16 %v1713
        %v4370 = vunpack.c.l.s8.bf16 %v1714
        %v4371 = vunpack.c.l.s8.bf16 %v1715
        %v4372 = vunpack.c.l.s8.bf16 %v1716
        %v4373 = vunpack.c.l.s8.bf16 %v1717
        %v4374 = vunpack.c.l.s8.bf16 %v1718
        %v4375 = vunpack.c.l.s8.bf16 %v1719
        %v4376 = vunpack.c.h.s8.bf16 %v1712
        %v4377 = vunpack.c.h.s8.bf16 %v1713
        %v4378 = vunpack.c.h.s8.bf16 %v1714
        %v4379 = vunpack.c.h.s8.bf16 %v1715
        %v4380 = vunpack.c.h.s8.bf16 %v1716
        %v4381 = vunpack.c.h.s8.bf16 %v1717
        %v4382 = vunpack.c.h.s8.bf16 %v1718
        %v4383 = vunpack.c.h.s8.bf16 %v1719
        %v4384 = vunpack.c.l.s8.bf16 %v1720
        %v4385 = vunpack.c.l.s8.bf16 %v1721
        %v4386 = vunpack.c.l.s8.bf16 %v1722
        %v4387 = vunpack.c.l.s8.bf16 %v1723
        %v4388 = vunpack.c.l.s8.bf16 %v1724
        %v4389 = vunpack.c.l.s8.bf16 %v1725
        %v4390 = vunpack.c.l.s8.bf16 %v1726
        %v4391 = vunpack.c.l.s8.bf16 %v1727
        %v4392 = vunpack.c.h.s8.bf16 %v1720
        %v4393 = vunpack.c.h.s8.bf16 %v1721
        %v4394 = vunpack.c.h.s8.bf16 %v1722
        %v4395 = vunpack.c.h.s8.bf16 %v1723
        %v4396 = vunpack.c.h.s8.bf16 %v1724
        %v4397 = vunpack.c.h.s8.bf16 %v1725
        %v4398 = vunpack.c.h.s8.bf16 %v1726
        %v4399 = vunpack.c.h.s8.bf16 %v1727
        %v4400 = vunpack.c.l.s8.bf16 %v1728
        %v4401 = vunpack.c.l.s8.bf16 %v1729
        %v4402 = vunpack.c.l.s8.bf16 %v1730
        %v4403 = vunpack.c.l.s8.bf16 %v1731
        %v4404 = vunpack.c.l.s8.bf16 %v1732
        %v4405 = vunpack.c.l.s8.bf16 %v1733
        %v4406 = vunpack.c.l.s8.bf16 %v1734
        %v4407 = vunpack.c.l.s8.bf16 %v1735
        %v4408 = vunpack.c.h.s8.bf16 %v1728
        %v4409 = vunpack.c.h.s8.bf16 %v1729
        %v4410 = vunpack.c.h.s8.bf16 %v1730
        %v4411 = vunpack.c.h.s8.bf16 %v1731
        %v4412 = vunpack.c.h.s8.bf16 %v1732
        %v4413 = vunpack.c.h.s8.bf16 %v1733
        %v4414 = vunpack.c.h.s8.bf16 %v1734
        %v4415 = vunpack.c.h.s8.bf16 %v1735
        %v4416 = vunpack.c.l.s8.bf16 %v1736
        %v4417 = vunpack.c.l.s8.bf16 %v1737
        %v4418 = vunpack.c.l.s8.bf16 %v1738
        %v4419 = vunpack.c.l.s8.bf16 %v1739
        %v4420 = vunpack.c.l.s8.bf16 %v1740
        %v4421 = vunpack.c.l.s8.bf16 %v1741
        %v4422 = vunpack.c.l.s8.bf16 %v1742
        %v4423 = vunpack.c.l.s8.bf16 %v1743
        %v4424 = vunpack.c.h.s8.bf16 %v1736
        %v4425 = vunpack.c.h.s8.bf16 %v1737
        %v4426 = vunpack.c.h.s8.bf16 %v1738
        %v4427 = vunpack.c.h.s8.bf16 %v1739
        %v4428 = vunpack.c.h.s8.bf16 %v1740
        %v4429 = vunpack.c.h.s8.bf16 %v1741
        %v4430 = vunpack.c.h.s8.bf16 %v1742
        %v4431 = vunpack.c.h.s8.bf16 %v1743
        %v4432 = vunpack.c.l.s8.bf16 %v1744
        %v4433 = vunpack.c.l.s8.bf16 %v1745
        %v4434 = vunpack.c.l.s8.bf16 %v1746
        %v4435 = vunpack.c.l.s8.bf16 %v1747
        %v4436 = vunpack.c.l.s8.bf16 %v1748
        %v4437 = vunpack.c.l.s8.bf16 %v1749
        %v4438 = vunpack.c.l.s8.bf16 %v1750
        %v4439 = vunpack.c.l.s8.bf16 %v1751
        %v4440 = vunpack.c.h.s8.bf16 %v1744
        %v4441 = vunpack.c.h.s8.bf16 %v1745
        %v4442 = vunpack.c.h.s8.bf16 %v1746
        %v4443 = vunpack.c.h.s8.bf16 %v1747
        %v4444 = vunpack.c.h.s8.bf16 %v1748
        %v4445 = vunpack.c.h.s8.bf16 %v1749
        %v4446 = vunpack.c.h.s8.bf16 %v1750
        %v4447 = vunpack.c.h.s8.bf16 %v1751
        %v4448 = vunpack.c.l.s8.bf16 %v1752
        %v4449 = vunpack.c.l.s8.bf16 %v1753
        %v4450 = vunpack.c.l.s8.bf16 %v1754
        %v4451 = vunpack.c.l.s8.bf16 %v1755
        %v4452 = vunpack.c.l.s8.bf16 %v1756
        %v4453 = vunpack.c.l.s8.bf16 %v1757
        %v4454 = vunpack.c.l.s8.bf16 %v1758
        %v4455 = vunpack.c.l.s8.bf16 %v1759
        %v4456 = vunpack.c.h.s8.bf16 %v1752
        %v4457 = vunpack.c.h.s8.bf16 %v1753
        %v4458 = vunpack.c.h.s8.bf16 %v1754
        %v4459 = vunpack.c.h.s8.bf16 %v1755
        %v4460 = vunpack.c.h.s8.bf16 %v1756
        %v4461 = vunpack.c.h.s8.bf16 %v1757
        %v4462 = vunpack.c.h.s8.bf16 %v1758
        %v4463 = vunpack.c.h.s8.bf16 %v1759
        %v4464 = vunpack.c.l.s8.bf16 %v1760
        %v4465 = vunpack.c.l.s8.bf16 %v1761
        %v4466 = vunpack.c.l.s8.bf16 %v1762
        %v4467 = vunpack.c.l.s8.bf16 %v1763
        %v4468 = vunpack.c.l.s8.bf16 %v1764
        %v4469 = vunpack.c.l.s8.bf16 %v1765
        %v4470 = vunpack.c.l.s8.bf16 %v1766
        %v4471 = vunpack.c.l.s8.bf16 %v1767
        %v4472 = vunpack.c.h.s8.bf16 %v1760
        %v4473 = vunpack.c.h.s8.bf16 %v1761
        %v4474 = vunpack.c.h.s8.bf16 %v1762
        %v4475 = vunpack.c.h.s8.bf16 %v1763
        %v4476 = vunpack.c.h.s8.bf16 %v1764
        %v4477 = vunpack.c.h.s8.bf16 %v1765
        %v4478 = vunpack.c.h.s8.bf16 %v1766
        %v4479 = vunpack.c.h.s8.bf16 %v1767
        %v4480 = vunpack.c.l.s8.bf16 %v1768
        %v4481 = vunpack.c.l.s8.bf16 %v1769
        %v4482 = vunpack.c.l.s8.bf16 %v1770
        %v4483 = vunpack.c.l.s8.bf16 %v1771
        %v4484 = vunpack.c.l.s8.bf16 %v1772
        %v4485 = vunpack.c.l.s8.bf16 %v1773
        %v4486 = vunpack.c.l.s8.bf16 %v1774
        %v4487 = vunpack.c.l.s8.bf16 %v1775
        %v4488 = vunpack.c.h.s8.bf16 %v1768
        %v4489 = vunpack.c.h.s8.bf16 %v1769
        %v4490 = vunpack.c.h.s8.bf16 %v1770
        %v4491 = vunpack.c.h.s8.bf16 %v1771
        %v4492 = vunpack.c.h.s8.bf16 %v1772
        %v4493 = vunpack.c.h.s8.bf16 %v1773
        %v4494 = vunpack.c.h.s8.bf16 %v1774
        %v4495 = vunpack.c.h.s8.bf16 %v1775
        %v4496 = vunpack.c.l.s8.bf16 %v1776
        %v4497 = vunpack.c.l.s8.bf16 %v1777
        %v4498 = vunpack.c.l.s8.bf16 %v1778
        %v4499 = vunpack.c.l.s8.bf16 %v1779
        %v4500 = vunpack.c.l.s8.bf16 %v1780
        %v4501 = vunpack.c.l.s8.bf16 %v1781
        %v4502 = vunpack.c.l.s8.bf16 %v1782
        %v4503 = vunpack.c.l.s8.bf16 %v1783
        %v4504 = vunpack.c.h.s8.bf16 %v1776
        %v4505 = vunpack.c.h.s8.bf16 %v1777
        %v4506 = vunpack.c.h.s8.bf16 %v1778
        %v4507 = vunpack.c.h.s8.bf16 %v1779
        %v4508 = vunpack.c.h.s8.bf16 %v1780
        %v4509 = vunpack.c.h.s8.bf16 %v1781
        %v4510 = vunpack.c.h.s8.bf16 %v1782
        %v4511 = vunpack.c.h.s8.bf16 %v1783
        %v4512 = vunpack.c.l.s8.bf16 %v1784
        %v4513 = vunpack.c.l.s8.bf16 %v1785
        %v4514 = vunpack.c.l.s8.bf16 %v1786
        %v4515 = vunpack.c.l.s8.bf16 %v1787
        %v4516 = vunpack.c.l.s8.bf16 %v1788
        %v4517 = vunpack.c.l.s8.bf16 %v1789
        %v4518 = vunpack.c.l.s8.bf16 %v1790
        %v4519 = vunpack.c.l.s8.bf16 %v1791
        %v4520 = vunpack.c.h.s8.bf16 %v1784
        %v4521 = vunpack.c.h.s8.bf16 %v1785
        %v4522 = vunpack.c.h.s8.bf16 %v1786
        %v4523 = vunpack.c.h.s8.bf16 %v1787
        %v4524 = vunpack.c.h.s8.bf16 %v1788
        %v4525 = vunpack.c.h.s8.bf16 %v1789
        %v4526 = vunpack.c.h.s8.bf16 %v1790
        %v4527 = vunpack.c.h.s8.bf16 %v1791
        %v4528 = vunpack.c.l.s8.bf16 %v1792
        %v4529 = vunpack.c.l.s8.bf16 %v1793
        %v4530 = vunpack.c.l.s8.bf16 %v1794
        %v4531 = vunpack.c.l.s8.bf16 %v1795
        %v4532 = vunpack.c.l.s8.bf16 %v1796
        %v4533 = vunpack.c.l.s8.bf16 %v1797
        %v4534 = vunpack.c.l.s8.bf16 %v1798
        %v4535 = vunpack.c.l.s8.bf16 %v1799
        %v4536 = vunpack.c.h.s8.bf16 %v1792
        %v4537 = vunpack.c.h.s8.bf16 %v1793
        %v4538 = vunpack.c.h.s8.bf16 %v1794
        %v4539 = vunpack.c.h.s8.bf16 %v1795
        %v4540 = vunpack.c.h.s8.bf16 %v1796
        %v4541 = vunpack.c.h.s8.bf16 %v1797
        %v4542 = vunpack.c.h.s8.bf16 %v1798
        %v4543 = vunpack.c.h.s8.bf16 %v1799
        %v4544 = vunpack.c.l.s8.bf16 %v1800
        %v4545 = vunpack.c.l.s8.bf16 %v1801
        %v4546 = vunpack.c.l.s8.bf16 %v1802
        %v4547 = vunpack.c.l.s8.bf16 %v1803
        %v4548 = vunpack.c.l.s8.bf16 %v1804
        %v4549 = vunpack.c.l.s8.bf16 %v1805
        %v4550 = vunpack.c.l.s8.bf16 %v1806
        %v4551 = vunpack.c.l.s8.bf16 %v1807
        %v4552 = vunpack.c.h.s8.bf16 %v1800
        %v4553 = vunpack.c.h.s8.bf16 %v1801
        %v4554 = vunpack.c.h.s8.bf16 %v1802
        %v4555 = vunpack.c.h.s8.bf16 %v1803
        %v4556 = vunpack.c.h.s8.bf16 %v1804
        %v4557 = vunpack.c.h.s8.bf16 %v1805
        %v4558 = vunpack.c.h.s8.bf16 %v1806
        %v4559 = vunpack.c.h.s8.bf16 %v1807
        %v4560 = vunpack.c.l.s8.bf16 %v1808
        %v4561 = vunpack.c.l.s8.bf16 %v1809
        %v4562 = vunpack.c.l.s8.bf16 %v1810
        %v4563 = vunpack.c.l.s8.bf16 %v1811
        %v4564 = vunpack.c.l.s8.bf16 %v1812
        %v4565 = vunpack.c.l.s8.bf16 %v1813
        %v4566 = vunpack.c.l.s8.bf16 %v1814
        %v4567 = vunpack.c.l.s8.bf16 %v1815
        %v4568 = vunpack.c.h.s8.bf16 %v1808
        %v4569 = vunpack.c.h.s8.bf16 %v1809
        %v4570 = vunpack.c.h.s8.bf16 %v1810
        %v4571 = vunpack.c.h.s8.bf16 %v1811
        %v4572 = vunpack.c.h.s8.bf16 %v1812
        %v4573 = vunpack.c.h.s8.bf16 %v1813
        %v4574 = vunpack.c.h.s8.bf16 %v1814
        %v4575 = vunpack.c.h.s8.bf16 %v1815
        %v4576 = vunpack.c.l.s8.bf16 %v1816
        %v4577 = vunpack.c.l.s8.bf16 %v1817
        %v4578 = vunpack.c.l.s8.bf16 %v1818
        %v4579 = vunpack.c.l.s8.bf16 %v1819
        %v4580 = vunpack.c.l.s8.bf16 %v1820
        %v4581 = vunpack.c.l.s8.bf16 %v1821
        %v4582 = vunpack.c.l.s8.bf16 %v1822
        %v4583 = vunpack.c.l.s8.bf16 %v1823
        %v4584 = vunpack.c.h.s8.bf16 %v1816
        %v4585 = vunpack.c.h.s8.bf16 %v1817
        %v4586 = vunpack.c.h.s8.bf16 %v1818
        %v4587 = vunpack.c.h.s8.bf16 %v1819
        %v4588 = vunpack.c.h.s8.bf16 %v1820
        %v4589 = vunpack.c.h.s8.bf16 %v1821
        %v4590 = vunpack.c.h.s8.bf16 %v1822
        %v4591 = vunpack.c.h.s8.bf16 %v1823
        %v4592 = vunpack.c.l.s8.bf16 %v1824
        %v4593 = vunpack.c.l.s8.bf16 %v1825
        %v4594 = vunpack.c.l.s8.bf16 %v1826
        %v4595 = vunpack.c.l.s8.bf16 %v1827
        %v4596 = vunpack.c.l.s8.bf16 %v1828
        %v4597 = vunpack.c.l.s8.bf16 %v1829
        %v4598 = vunpack.c.l.s8.bf16 %v1830
        %v4599 = vunpack.c.l.s8.bf16 %v1831
        %v4600 = vunpack.c.h.s8.bf16 %v1824
        %v4601 = vunpack.c.h.s8.bf16 %v1825
        %v4602 = vunpack.c.h.s8.bf16 %v1826
        %v4603 = vunpack.c.h.s8.bf16 %v1827
        %v4604 = vunpack.c.h.s8.bf16 %v1828
        %v4605 = vunpack.c.h.s8.bf16 %v1829
        %v4606 = vunpack.c.h.s8.bf16 %v1830
        %v4607 = vunpack.c.h.s8.bf16 %v1831
        %v4608 = vunpack.c.l.s8.bf16 %v1832
        %v4609 = vunpack.c.l.s8.bf16 %v1833
        %v4610 = vunpack.c.l.s8.bf16 %v1834
        %v4611 = vunpack.c.l.s8.bf16 %v1835
        %v4612 = vunpack.c.l.s8.bf16 %v1836
        %v4613 = vunpack.c.l.s8.bf16 %v1837
        %v4614 = vunpack.c.l.s8.bf16 %v1838
        %v4615 = vunpack.c.l.s8.bf16 %v1839
        %v4616 = vunpack.c.h.s8.bf16 %v1832
        %v4617 = vunpack.c.h.s8.bf16 %v1833
        %v4618 = vunpack.c.h.s8.bf16 %v1834
        %v4619 = vunpack.c.h.s8.bf16 %v1835
        %v4620 = vunpack.c.h.s8.bf16 %v1836
        %v4621 = vunpack.c.h.s8.bf16 %v1837
        %v4622 = vunpack.c.h.s8.bf16 %v1838
        %v4623 = vunpack.c.h.s8.bf16 %v1839
        %v4624 = vunpack.c.l.s8.bf16 %v1840
        %v4625 = vunpack.c.l.s8.bf16 %v1841
        %v4626 = vunpack.c.l.s8.bf16 %v1842
        %v4627 = vunpack.c.l.s8.bf16 %v1843
        %v4628 = vunpack.c.l.s8.bf16 %v1844
        %v4629 = vunpack.c.l.s8.bf16 %v1845
        %v4630 = vunpack.c.l.s8.bf16 %v1846
        %v4631 = vunpack.c.l.s8.bf16 %v1847
        %v4632 = vunpack.c.h.s8.bf16 %v1840
        %v4633 = vunpack.c.h.s8.bf16 %v1841
        %v4634 = vunpack.c.h.s8.bf16 %v1842
        %v4635 = vunpack.c.h.s8.bf16 %v1843
        %v4636 = vunpack.c.h.s8.bf16 %v1844
        %v4637 = vunpack.c.h.s8.bf16 %v1845
        %v4638 = vunpack.c.h.s8.bf16 %v1846
        %v4639 = vunpack.c.h.s8.bf16 %v1847
        %v4640 = vunpack.c.l.s8.bf16 %v1848
        %v4641 = vunpack.c.l.s8.bf16 %v1849
        %v4642 = vunpack.c.l.s8.bf16 %v1850
        %v4643 = vunpack.c.l.s8.bf16 %v1851
        %v4644 = vunpack.c.l.s8.bf16 %v1852
        %v4645 = vunpack.c.l.s8.bf16 %v1853
        %v4646 = vunpack.c.l.s8.bf16 %v1854
        %v4647 = vunpack.c.l.s8.bf16 %v1855
        %v4648 = vunpack.c.h.s8.bf16 %v1848
        %v4649 = vunpack.c.h.s8.bf16 %v1849
        %v4650 = vunpack.c.h.s8.bf16 %v1850
        %v4651 = vunpack.c.h.s8.bf16 %v1851
        %v4652 = vunpack.c.h.s8.bf16 %v1852
        %v4653 = vunpack.c.h.s8.bf16 %v1853
        %v4654 = vunpack.c.h.s8.bf16 %v1854
        %v4655 = vunpack.c.h.s8.bf16 %v1855
        %v4656 = vunpack.c.l.s8.bf16 %v1856
        %v4657 = vunpack.c.l.s8.bf16 %v1857
        %v4658 = vunpack.c.l.s8.bf16 %v1858
        %v4659 = vunpack.c.l.s8.bf16 %v1859
        %v4660 = vunpack.c.l.s8.bf16 %v1860
        %v4661 = vunpack.c.l.s8.bf16 %v1861
        %v4662 = vunpack.c.l.s8.bf16 %v1862
        %v4663 = vunpack.c.l.s8.bf16 %v1863
        %v4664 = vunpack.c.h.s8.bf16 %v1856
        %v4665 = vunpack.c.h.s8.bf16 %v1857
        %v4666 = vunpack.c.h.s8.bf16 %v1858
        %v4667 = vunpack.c.h.s8.bf16 %v1859
        %v4668 = vunpack.c.h.s8.bf16 %v1860
        %v4669 = vunpack.c.h.s8.bf16 %v1861
        %v4670 = vunpack.c.h.s8.bf16 %v1862
        %v4671 = vunpack.c.h.s8.bf16 %v1863
        %v4672 = vunpack.c.l.s8.bf16 %v1864
        %v4673 = vunpack.c.l.s8.bf16 %v1865
        %v4674 = vunpack.c.l.s8.bf16 %v1866
        %v4675 = vunpack.c.l.s8.bf16 %v1867
        %v4676 = vunpack.c.l.s8.bf16 %v1868
        %v4677 = vunpack.c.l.s8.bf16 %v1869
        %v4678 = vunpack.c.l.s8.bf16 %v1870
        %v4679 = vunpack.c.l.s8.bf16 %v1871
        %v4680 = vunpack.c.h.s8.bf16 %v1864
        %v4681 = vunpack.c.h.s8.bf16 %v1865
        %v4682 = vunpack.c.h.s8.bf16 %v1866
        %v4683 = vunpack.c.h.s8.bf16 %v1867
        %v4684 = vunpack.c.h.s8.bf16 %v1868
        %v4685 = vunpack.c.h.s8.bf16 %v1869
        %v4686 = vunpack.c.h.s8.bf16 %v1870
        %v4687 = vunpack.c.h.s8.bf16 %v1871
        %v4688 = vunpack.c.l.s8.bf16 %v1872
        %v4689 = vunpack.c.l.s8.bf16 %v1873
        %v4690 = vunpack.c.l.s8.bf16 %v1874
        %v4691 = vunpack.c.l.s8.bf16 %v1875
        %v4692 = vunpack.c.l.s8.bf16 %v1876
        %v4693 = vunpack.c.l.s8.bf16 %v1877
        %v4694 = vunpack.c.l.s8.bf16 %v1878
        %v4695 = vunpack.c.l.s8.bf16 %v1879
        %v4696 = vunpack.c.h.s8.bf16 %v1872
        %v4697 = vunpack.c.h.s8.bf16 %v1873
        %v4698 = vunpack.c.h.s8.bf16 %v1874
        %v4699 = vunpack.c.h.s8.bf16 %v1875
        %v4700 = vunpack.c.h.s8.bf16 %v1876
        %v4701 = vunpack.c.h.s8.bf16 %v1877
        %v4702 = vunpack.c.h.s8.bf16 %v1878
        %v4703 = vunpack.c.h.s8.bf16 %v1879
        %v4704 = vunpack.c.l.s8.bf16 %v1880
        %v4705 = vunpack.c.l.s8.bf16 %v1881
        %v4706 = vunpack.c.l.s8.bf16 %v1882
        %v4707 = vunpack.c.l.s8.bf16 %v1883
        %v4708 = vunpack.c.l.s8.bf16 %v1884
        %v4709 = vunpack.c.l.s8.bf16 %v1885
        %v4710 = vunpack.c.l.s8.bf16 %v1886
        %v4711 = vunpack.c.l.s8.bf16 %v1887
        %v4712 = vunpack.c.h.s8.bf16 %v1880
        %v4713 = vunpack.c.h.s8.bf16 %v1881
        %v4714 = vunpack.c.h.s8.bf16 %v1882
        %v4715 = vunpack.c.h.s8.bf16 %v1883
        %v4716 = vunpack.c.h.s8.bf16 %v1884
        %v4717 = vunpack.c.h.s8.bf16 %v1885
        %v4718 = vunpack.c.h.s8.bf16 %v1886
        %v4719 = vunpack.c.h.s8.bf16 %v1887
        %v4720 = vunpack.c.l.s8.bf16 %v1888
        %v4721 = vunpack.c.l.s8.bf16 %v1889
        %v4722 = vunpack.c.l.s8.bf16 %v1890
        %v4723 = vunpack.c.l.s8.bf16 %v1891
        %v4724 = vunpack.c.l.s8.bf16 %v1892
        %v4725 = vunpack.c.l.s8.bf16 %v1893
        %v4726 = vunpack.c.l.s8.bf16 %v1894
        %v4727 = vunpack.c.l.s8.bf16 %v1895
        %v4728 = vunpack.c.h.s8.bf16 %v1888
        %v4729 = vunpack.c.h.s8.bf16 %v1889
        %v4730 = vunpack.c.h.s8.bf16 %v1890
        %v4731 = vunpack.c.h.s8.bf16 %v1891
        %v4732 = vunpack.c.h.s8.bf16 %v1892
        %v4733 = vunpack.c.h.s8.bf16 %v1893
        %v4734 = vunpack.c.h.s8.bf16 %v1894
        %v4735 = vunpack.c.h.s8.bf16 %v1895
        %v4736 = vunpack.c.l.s8.bf16 %v1896
        %v4737 = vunpack.c.l.s8.bf16 %v1897
        %v4738 = vunpack.c.l.s8.bf16 %v1898
        %v4739 = vunpack.c.l.s8.bf16 %v1899
        %v4740 = vunpack.c.l.s8.bf16 %v1900
        %v4741 = vunpack.c.l.s8.bf16 %v1901
        %v4742 = vunpack.c.l.s8.bf16 %v1902
        %v4743 = vunpack.c.l.s8.bf16 %v1903
        %v4744 = vunpack.c.h.s8.bf16 %v1896
        %v4745 = vunpack.c.h.s8.bf16 %v1897
        %v4746 = vunpack.c.h.s8.bf16 %v1898
        %v4747 = vunpack.c.h.s8.bf16 %v1899
        %v4748 = vunpack.c.h.s8.bf16 %v1900
        %v4749 = vunpack.c.h.s8.bf16 %v1901
        %v4750 = vunpack.c.h.s8.bf16 %v1902
        %v4751 = vunpack.c.h.s8.bf16 %v1903
        %v4752 = vunpack.c.l.s8.bf16 %v1904
        %v4753 = vunpack.c.l.s8.bf16 %v1905
        %v4754 = vunpack.c.l.s8.bf16 %v1906
        %v4755 = vunpack.c.l.s8.bf16 %v1907
        %v4756 = vunpack.c.l.s8.bf16 %v1908
        %v4757 = vunpack.c.l.s8.bf16 %v1909
        %v4758 = vunpack.c.l.s8.bf16 %v1910
        %v4759 = vunpack.c.l.s8.bf16 %v1911
        %v4760 = vunpack.c.h.s8.bf16 %v1904
        %v4761 = vunpack.c.h.s8.bf16 %v1905
        %v4762 = vunpack.c.h.s8.bf16 %v1906
        %v4763 = vunpack.c.h.s8.bf16 %v1907
        %v4764 = vunpack.c.h.s8.bf16 %v1908
        %v4765 = vunpack.c.h.s8.bf16 %v1909
        %v4766 = vunpack.c.h.s8.bf16 %v1910
        %v4767 = vunpack.c.h.s8.bf16 %v1911
        %v4768 = vunpack.c.l.s8.bf16 %v1912
        %v4769 = vunpack.c.l.s8.bf16 %v1913
        %v4770 = vunpack.c.l.s8.bf16 %v1914
        %v4771 = vunpack.c.l.s8.bf16 %v1915
        %v4772 = vunpack.c.l.s8.bf16 %v1916
        %v4773 = vunpack.c.l.s8.bf16 %v1917
        %v4774 = vunpack.c.l.s8.bf16 %v1918
        %v4775 = vunpack.c.l.s8.bf16 %v1919
        %v4776 = vunpack.c.h.s8.bf16 %v1912
        %v4777 = vunpack.c.h.s8.bf16 %v1913
        %v4778 = vunpack.c.h.s8.bf16 %v1914
        %v4779 = vunpack.c.h.s8.bf16 %v1915
        %v4780 = vunpack.c.h.s8.bf16 %v1916
        %v4781 = vunpack.c.h.s8.bf16 %v1917
        %v4782 = vunpack.c.h.s8.bf16 %v1918
        %v4783 = vunpack.c.h.s8.bf16 %v1919
        %v4784 = vunpack.c.l.s8.bf16 %v1920
        %v4785 = vunpack.c.l.s8.bf16 %v1921
        %v4786 = vunpack.c.l.s8.bf16 %v1922
        %v4787 = vunpack.c.l.s8.bf16 %v1923
        %v4788 = vunpack.c.l.s8.bf16 %v1924
        %v4789 = vunpack.c.l.s8.bf16 %v1925
        %v4790 = vunpack.c.l.s8.bf16 %v1926
        %v4791 = vunpack.c.l.s8.bf16 %v1927
        %v4792 = vunpack.c.h.s8.bf16 %v1920
        %v4793 = vunpack.c.h.s8.bf16 %v1921
        %v4794 = vunpack.c.h.s8.bf16 %v1922
        %v4795 = vunpack.c.h.s8.bf16 %v1923
        %v4796 = vunpack.c.h.s8.bf16 %v1924
        %v4797 = vunpack.c.h.s8.bf16 %v1925
        %v4798 = vunpack.c.h.s8.bf16 %v1926
        %v4799 = vunpack.c.h.s8.bf16 %v1927
        %v4800 = vunpack.c.l.s8.bf16 %v1928
        %v4801 = vunpack.c.l.s8.bf16 %v1929
        %v4802 = vunpack.c.l.s8.bf16 %v1930
        %v4803 = vunpack.c.l.s8.bf16 %v1931
        %v4804 = vunpack.c.l.s8.bf16 %v1932
        %v4805 = vunpack.c.l.s8.bf16 %v1933
        %v4806 = vunpack.c.l.s8.bf16 %v1934
        %v4807 = vunpack.c.l.s8.bf16 %v1935
        %v4808 = vunpack.c.h.s8.bf16 %v1928
        %v4809 = vunpack.c.h.s8.bf16 %v1929
        %v4810 = vunpack.c.h.s8.bf16 %v1930
        %v4811 = vunpack.c.h.s8.bf16 %v1931
        %v4812 = vunpack.c.h.s8.bf16 %v1932
        %v4813 = vunpack.c.h.s8.bf16 %v1933
        %v4814 = vunpack.c.h.s8.bf16 %v1934
        %v4815 = vunpack.c.h.s8.bf16 %v1935
        %v4816 = vunpack.c.l.s8.bf16 %v1936
        %v4817 = vunpack.c.l.s8.bf16 %v1937
        %v4818 = vunpack.c.l.s8.bf16 %v1938
        %v4819 = vunpack.c.l.s8.bf16 %v1939
        %v4820 = vunpack.c.l.s8.bf16 %v1940
        %v4821 = vunpack.c.l.s8.bf16 %v1941
        %v4822 = vunpack.c.l.s8.bf16 %v1942
        %v4823 = vunpack.c.l.s8.bf16 %v1943
        %v4824 = vunpack.c.h.s8.bf16 %v1936
        %v4825 = vunpack.c.h.s8.bf16 %v1937
        %v4826 = vunpack.c.h.s8.bf16 %v1938
        %v4827 = vunpack.c.h.s8.bf16 %v1939
        %v4828 = vunpack.c.h.s8.bf16 %v1940
        %v4829 = vunpack.c.h.s8.bf16 %v1941
        %v4830 = vunpack.c.h.s8.bf16 %v1942
        %v4831 = vunpack.c.h.s8.bf16 %v1943
        %v4832 = vunpack.c.l.s8.bf16 %v1944
        %v4833 = vunpack.c.l.s8.bf16 %v1945
        %v4834 = vunpack.c.l.s8.bf16 %v1946
        %v4835 = vunpack.c.l.s8.bf16 %v1947
        %v4836 = vunpack.c.l.s8.bf16 %v1948
        %v4837 = vunpack.c.l.s8.bf16 %v1949
        %v4838 = vunpack.c.l.s8.bf16 %v1950
        %v4839 = vunpack.c.l.s8.bf16 %v1951
        %v4840 = vunpack.c.h.s8.bf16 %v1944
        %v4841 = vunpack.c.h.s8.bf16 %v1945
        %v4842 = vunpack.c.h.s8.bf16 %v1946
        %v4843 = vunpack.c.h.s8.bf16 %v1947
        %v4844 = vunpack.c.h.s8.bf16 %v1948
        %v4845 = vunpack.c.h.s8.bf16 %v1949
        %v4846 = vunpack.c.h.s8.bf16 %v1950
        %v4847 = vunpack.c.h.s8.bf16 %v1951
        %v4848 = vunpack.c.l.s8.bf16 %v1952
        %v4849 = vunpack.c.l.s8.bf16 %v1953
        %v4850 = vunpack.c.l.s8.bf16 %v1954
        %v4851 = vunpack.c.l.s8.bf16 %v1955
        %v4852 = vunpack.c.l.s8.bf16 %v1956
        %v4853 = vunpack.c.l.s8.bf16 %v1957
        %v4854 = vunpack.c.l.s8.bf16 %v1958
        %v4855 = vunpack.c.l.s8.bf16 %v1959
        %v4856 = vunpack.c.h.s8.bf16 %v1952
        %v4857 = vunpack.c.h.s8.bf16 %v1953
        %v4858 = vunpack.c.h.s8.bf16 %v1954
        %v4859 = vunpack.c.h.s8.bf16 %v1955
        %v4860 = vunpack.c.h.s8.bf16 %v1956
        %v4861 = vunpack.c.h.s8.bf16 %v1957
        %v4862 = vunpack.c.h.s8.bf16 %v1958
        %v4863 = vunpack.c.h.s8.bf16 %v1959
        %v4864 = vunpack.c.l.s8.bf16 %v1960
        %v4865 = vunpack.c.l.s8.bf16 %v1961
        %v4866 = vunpack.c.l.s8.bf16 %v1962
        %v4867 = vunpack.c.l.s8.bf16 %v1963
        %v4868 = vunpack.c.l.s8.bf16 %v1964
        %v4869 = vunpack.c.l.s8.bf16 %v1965
        %v4870 = vunpack.c.l.s8.bf16 %v1966
        %v4871 = vunpack.c.l.s8.bf16 %v1967
        %v4872 = vunpack.c.h.s8.bf16 %v1960
        %v4873 = vunpack.c.h.s8.bf16 %v1961
        %v4874 = vunpack.c.h.s8.bf16 %v1962
        %v4875 = vunpack.c.h.s8.bf16 %v1963
        %v4876 = vunpack.c.h.s8.bf16 %v1964
        %v4877 = vunpack.c.h.s8.bf16 %v1965
        %v4878 = vunpack.c.h.s8.bf16 %v1966
        %v4879 = vunpack.c.h.s8.bf16 %v1967
        %v4880 = vunpack.c.l.s8.bf16 %v1968
        %v4881 = vunpack.c.l.s8.bf16 %v1969
        %v4882 = vunpack.c.l.s8.bf16 %v1970
        %v4883 = vunpack.c.l.s8.bf16 %v1971
        %v4884 = vunpack.c.l.s8.bf16 %v1972
        %v4885 = vunpack.c.l.s8.bf16 %v1973
        %v4886 = vunpack.c.l.s8.bf16 %v1974
        %v4887 = vunpack.c.l.s8.bf16 %v1975
        %v4888 = vunpack.c.h.s8.bf16 %v1968
        %v4889 = vunpack.c.h.s8.bf16 %v1969
        %v4890 = vunpack.c.h.s8.bf16 %v1970
        %v4891 = vunpack.c.h.s8.bf16 %v1971
        %v4892 = vunpack.c.h.s8.bf16 %v1972
        %v4893 = vunpack.c.h.s8.bf16 %v1973
        %v4894 = vunpack.c.h.s8.bf16 %v1974
        %v4895 = vunpack.c.h.s8.bf16 %v1975
        %v4896 = vunpack.c.l.s8.bf16 %v1976
        %v4897 = vunpack.c.l.s8.bf16 %v1977
        %v4898 = vunpack.c.l.s8.bf16 %v1978
        %v4899 = vunpack.c.l.s8.bf16 %v1979
        %v4900 = vunpack.c.l.s8.bf16 %v1980
        %v4901 = vunpack.c.l.s8.bf16 %v1981
        %v4902 = vunpack.c.l.s8.bf16 %v1982
        %v4903 = vunpack.c.l.s8.bf16 %v1983
        %v4904 = vunpack.c.h.s8.bf16 %v1976
        %v4905 = vunpack.c.h.s8.bf16 %v1977
        %v4906 = vunpack.c.h.s8.bf16 %v1978
        %v4907 = vunpack.c.h.s8.bf16 %v1979
        %v4908 = vunpack.c.h.s8.bf16 %v1980
        %v4909 = vunpack.c.h.s8.bf16 %v1981
        %v4910 = vunpack.c.h.s8.bf16 %v1982
        %v4911 = vunpack.c.h.s8.bf16 %v1983
        %v4912 = vunpack.c.l.s8.bf16 %v1984
        %v4913 = vunpack.c.l.s8.bf16 %v1985
        %v4914 = vunpack.c.l.s8.bf16 %v1986
        %v4915 = vunpack.c.l.s8.bf16 %v1987
        %v4916 = vunpack.c.l.s8.bf16 %v1988
        %v4917 = vunpack.c.l.s8.bf16 %v1989
        %v4918 = vunpack.c.l.s8.bf16 %v1990
        %v4919 = vunpack.c.l.s8.bf16 %v1991
        %v4920 = vunpack.c.h.s8.bf16 %v1984
        %v4921 = vunpack.c.h.s8.bf16 %v1985
        %v4922 = vunpack.c.h.s8.bf16 %v1986
        %v4923 = vunpack.c.h.s8.bf16 %v1987
        %v4924 = vunpack.c.h.s8.bf16 %v1988
        %v4925 = vunpack.c.h.s8.bf16 %v1989
        %v4926 = vunpack.c.h.s8.bf16 %v1990
        %v4927 = vunpack.c.h.s8.bf16 %v1991
        %v4928 = vunpack.c.l.s8.bf16 %v1992
        %v4929 = vunpack.c.l.s8.bf16 %v1993
        %v4930 = vunpack.c.l.s8.bf16 %v1994
        %v4931 = vunpack.c.l.s8.bf16 %v1995
        %v4932 = vunpack.c.l.s8.bf16 %v1996
        %v4933 = vunpack.c.l.s8.bf16 %v1997
        %v4934 = vunpack.c.l.s8.bf16 %v1998
        %v4935 = vunpack.c.l.s8.bf16 %v1999
        %v4936 = vunpack.c.h.s8.bf16 %v1992
        %v4937 = vunpack.c.h.s8.bf16 %v1993
        %v4938 = vunpack.c.h.s8.bf16 %v1994
        %v4939 = vunpack.c.h.s8.bf16 %v1995
        %v4940 = vunpack.c.h.s8.bf16 %v1996
        %v4941 = vunpack.c.h.s8.bf16 %v1997
        %v4942 = vunpack.c.h.s8.bf16 %v1998
        %v4943 = vunpack.c.h.s8.bf16 %v1999
        %v4944 = vunpack.c.l.s8.bf16 %v2000
        %v4945 = vunpack.c.l.s8.bf16 %v2001
        %v4946 = vunpack.c.l.s8.bf16 %v2002
        %v4947 = vunpack.c.l.s8.bf16 %v2003
        %v4948 = vunpack.c.l.s8.bf16 %v2004
        %v4949 = vunpack.c.l.s8.bf16 %v2005
        %v4950 = vunpack.c.l.s8.bf16 %v2006
        %v4951 = vunpack.c.l.s8.bf16 %v2007
        %v4952 = vunpack.c.h.s8.bf16 %v2000
        %v4953 = vunpack.c.h.s8.bf16 %v2001
        %v4954 = vunpack.c.h.s8.bf16 %v2002
        %v4955 = vunpack.c.h.s8.bf16 %v2003
        %v4956 = vunpack.c.h.s8.bf16 %v2004
        %v4957 = vunpack.c.h.s8.bf16 %v2005
        %v4958 = vunpack.c.h.s8.bf16 %v2006
        %v4959 = vunpack.c.h.s8.bf16 %v2007
        %v4960 = vunpack.c.l.s8.bf16 %v2008
        %v4961 = vunpack.c.l.s8.bf16 %v2009
        %v4962 = vunpack.c.l.s8.bf16 %v2010
        %v4963 = vunpack.c.l.s8.bf16 %v2011
        %v4964 = vunpack.c.l.s8.bf16 %v2012
        %v4965 = vunpack.c.l.s8.bf16 %v2013
        %v4966 = vunpack.c.l.s8.bf16 %v2014
        %v4967 = vunpack.c.l.s8.bf16 %v2015
        %v4968 = vunpack.c.h.s8.bf16 %v2008
        %v4969 = vunpack.c.h.s8.bf16 %v2009
        %v4970 = vunpack.c.h.s8.bf16 %v2010
        %v4971 = vunpack.c.h.s8.bf16 %v2011
        %v4972 = vunpack.c.h.s8.bf16 %v2012
        %v4973 = vunpack.c.h.s8.bf16 %v2013
        %v4974 = vunpack.c.h.s8.bf16 %v2014
        %v4975 = vunpack.c.h.s8.bf16 %v2015
        %v4976 = vunpack.c.l.s8.bf16 %v2016
        %v4977 = vunpack.c.l.s8.bf16 %v2017
        %v4978 = vunpack.c.l.s8.bf16 %v2018
        %v4979 = vunpack.c.l.s8.bf16 %v2019
        %v4980 = vunpack.c.l.s8.bf16 %v2020
        %v4981 = vunpack.c.l.s8.bf16 %v2021
        %v4982 = vunpack.c.l.s8.bf16 %v2022
        %v4983 = vunpack.c.l.s8.bf16 %v2023
        %v4984 = vunpack.c.h.s8.bf16 %v2016
        %v4985 = vunpack.c.h.s8.bf16 %v2017
        %v4986 = vunpack.c.h.s8.bf16 %v2018
        %v4987 = vunpack.c.h.s8.bf16 %v2019
        %v4988 = vunpack.c.h.s8.bf16 %v2020
        %v4989 = vunpack.c.h.s8.bf16 %v2021
        %v4990 = vunpack.c.h.s8.bf16 %v2022
        %v4991 = vunpack.c.h.s8.bf16 %v2023
        %v4992 = vunpack.c.l.s8.bf16 %v2024
        %v4993 = vunpack.c.l.s8.bf16 %v2025
        %v4994 = vunpack.c.l.s8.bf16 %v2026
        %v4995 = vunpack.c.l.s8.bf16 %v2027
        %v4996 = vunpack.c.l.s8.bf16 %v2028
        %v4997 = vunpack.c.l.s8.bf16 %v2029
        %v4998 = vunpack.c.l.s8.bf16 %v2030
        %v4999 = vunpack.c.l.s8.bf16 %v2031
        %v5000 = vunpack.c.h.s8.bf16 %v2024
        %v5001 = vunpack.c.h.s8.bf16 %v2025
        %v5002 = vunpack.c.h.s8.bf16 %v2026
        %v5003 = vunpack.c.h.s8.bf16 %v2027
        %v5004 = vunpack.c.h.s8.bf16 %v2028
        %v5005 = vunpack.c.h.s8.bf16 %v2029
        %v5006 = vunpack.c.h.s8.bf16 %v2030
        %v5007 = vunpack.c.h.s8.bf16 %v2031
        %v5008 = vunpack.c.l.s8.bf16 %v2032
        %v5009 = vunpack.c.l.s8.bf16 %v2033
        %v5010 = vunpack.c.l.s8.bf16 %v2034
        %v5011 = vunpack.c.l.s8.bf16 %v2035
        %v5012 = vunpack.c.l.s8.bf16 %v2036
        %v5013 = vunpack.c.l.s8.bf16 %v2037
        %v5014 = vunpack.c.l.s8.bf16 %v2038
        %v5015 = vunpack.c.l.s8.bf16 %v2039
        %v5016 = vunpack.c.h.s8.bf16 %v2032
        %v5017 = vunpack.c.h.s8.bf16 %v2033
        %v5018 = vunpack.c.h.s8.bf16 %v2034
        %v5019 = vunpack.c.h.s8.bf16 %v2035
        %v5020 = vunpack.c.h.s8.bf16 %v2036
        %v5021 = vunpack.c.h.s8.bf16 %v2037
        %v5022 = vunpack.c.h.s8.bf16 %v2038
        %v5023 = vunpack.c.h.s8.bf16 %v2039
        %v5024 = vunpack.c.l.s8.bf16 %v2040
        %v5025 = vunpack.c.l.s8.bf16 %v2041
        %v5026 = vunpack.c.l.s8.bf16 %v2042
        %v5027 = vunpack.c.l.s8.bf16 %v2043
        %v5028 = vunpack.c.l.s8.bf16 %v2044
        %v5029 = vunpack.c.l.s8.bf16 %v2045
        %v5030 = vunpack.c.l.s8.bf16 %v2046
        %v5031 = vunpack.c.l.s8.bf16 %v2047
        %v5032 = vunpack.c.h.s8.bf16 %v2040
        %v5033 = vunpack.c.h.s8.bf16 %v2041
        %v5034 = vunpack.c.h.s8.bf16 %v2042
        %v5035 = vunpack.c.h.s8.bf16 %v2043
        %v5036 = vunpack.c.h.s8.bf16 %v2044
        %v5037 = vunpack.c.h.s8.bf16 %v2045
        %v5038 = vunpack.c.h.s8.bf16 %v2046
        %v5039 = vunpack.c.h.s8.bf16 %v2047
        %v5040 = vunpack.c.l.s8.bf16 %v2048
        %v5041 = vunpack.c.l.s8.bf16 %v2049
        %v5042 = vunpack.c.l.s8.bf16 %v2050
        %v5043 = vunpack.c.l.s8.bf16 %v2051
        %v5044 = vunpack.c.l.s8.bf16 %v2052
        %v5045 = vunpack.c.l.s8.bf16 %v2053
        %v5046 = vunpack.c.l.s8.bf16 %v2054
        %v5047 = vunpack.c.l.s8.bf16 %v2055
        %v5048 = vunpack.c.h.s8.bf16 %v2048
        %v5049 = vunpack.c.h.s8.bf16 %v2049
        %v5050 = vunpack.c.h.s8.bf16 %v2050
        %v5051 = vunpack.c.h.s8.bf16 %v2051
        %v5052 = vunpack.c.h.s8.bf16 %v2052
        %v5053 = vunpack.c.h.s8.bf16 %v2053
        %v5054 = vunpack.c.h.s8.bf16 %v2054
        %v5055 = vunpack.c.h.s8.bf16 %v2055
        %v5056 = vunpack.c.l.s8.bf16 %v2056
        %v5057 = vunpack.c.l.s8.bf16 %v2057
        %v5058 = vunpack.c.l.s8.bf16 %v2058
        %v5059 = vunpack.c.l.s8.bf16 %v2059
        %v5060 = vunpack.c.l.s8.bf16 %v2060
        %v5061 = vunpack.c.l.s8.bf16 %v2061
        %v5062 = vunpack.c.l.s8.bf16 %v2062
        %v5063 = vunpack.c.l.s8.bf16 %v2063
        %v5064 = vunpack.c.h.s8.bf16 %v2056
        %v5065 = vunpack.c.h.s8.bf16 %v2057
        %v5066 = vunpack.c.h.s8.bf16 %v2058
        %v5067 = vunpack.c.h.s8.bf16 %v2059
        %v5068 = vunpack.c.h.s8.bf16 %v2060
        %v5069 = vunpack.c.h.s8.bf16 %v2061
        %v5070 = vunpack.c.h.s8.bf16 %v2062
        %v5071 = vunpack.c.h.s8.bf16 %v2063
        %v5072 = vunpack.c.l.s8.bf16 %v2064
        %v5073 = vunpack.c.l.s8.bf16 %v2065
        %v5074 = vunpack.c.l.s8.bf16 %v2066
        %v5075 = vunpack.c.l.s8.bf16 %v2067
        %v5076 = vunpack.c.l.s8.bf16 %v2068
        %v5077 = vunpack.c.l.s8.bf16 %v2069
        %v5078 = vunpack.c.l.s8.bf16 %v2070
        %v5079 = vunpack.c.l.s8.bf16 %v2071
        %v5080 = vunpack.c.h.s8.bf16 %v2064
        %v5081 = vunpack.c.h.s8.bf16 %v2065
        %v5082 = vunpack.c.h.s8.bf16 %v2066
        %v5083 = vunpack.c.h.s8.bf16 %v2067
        %v5084 = vunpack.c.h.s8.bf16 %v2068
        %v5085 = vunpack.c.h.s8.bf16 %v2069
        %v5086 = vunpack.c.h.s8.bf16 %v2070
        %v5087 = vunpack.c.h.s8.bf16 %v2071
        %v5088 = vunpack.c.l.s8.bf16 %v2072
        %v5089 = vunpack.c.l.s8.bf16 %v2073
        %v5090 = vunpack.c.l.s8.bf16 %v2074
        %v5091 = vunpack.c.l.s8.bf16 %v2075
        %v5092 = vunpack.c.l.s8.bf16 %v2076
        %v5093 = vunpack.c.l.s8.bf16 %v2077
        %v5094 = vunpack.c.l.s8.bf16 %v2078
        %v5095 = vunpack.c.l.s8.bf16 %v2079
        %v5096 = vunpack.c.h.s8.bf16 %v2072
        %v5097 = vunpack.c.h.s8.bf16 %v2073
        %v5098 = vunpack.c.h.s8.bf16 %v2074
        %v5099 = vunpack.c.h.s8.bf16 %v2075
        %v5100 = vunpack.c.h.s8.bf16 %v2076
        %v5101 = vunpack.c.h.s8.bf16 %v2077
        %v5102 = vunpack.c.h.s8.bf16 %v2078
        %v5103 = vunpack.c.h.s8.bf16 %v2079
        %v5104 = vunpack.c.l.s8.bf16 %v2080
        %v5105 = vunpack.c.l.s8.bf16 %v2081
        %v5106 = vunpack.c.l.s8.bf16 %v2082
        %v5107 = vunpack.c.l.s8.bf16 %v2083
        %v5108 = vunpack.c.l.s8.bf16 %v2084
        %v5109 = vunpack.c.l.s8.bf16 %v2085
        %v5110 = vunpack.c.l.s8.bf16 %v2086
        %v5111 = vunpack.c.l.s8.bf16 %v2087
        %v5112 = vunpack.c.h.s8.bf16 %v2080
        %v5113 = vunpack.c.h.s8.bf16 %v2081
        %v5114 = vunpack.c.h.s8.bf16 %v2082
        %v5115 = vunpack.c.h.s8.bf16 %v2083
        %v5116 = vunpack.c.h.s8.bf16 %v2084
        %v5117 = vunpack.c.h.s8.bf16 %v2085
        %v5118 = vunpack.c.h.s8.bf16 %v2086
        %v5119 = vunpack.c.h.s8.bf16 %v2087
        %v5120 = vunpack.c.l.s8.bf16 %v2088
        %v5121 = vunpack.c.l.s8.bf16 %v2089
        %v5122 = vunpack.c.l.s8.bf16 %v2090
        %v5123 = vunpack.c.l.s8.bf16 %v2091
        %v5124 = vunpack.c.l.s8.bf16 %v2092
        %v5125 = vunpack.c.l.s8.bf16 %v2093
        %v5126 = vunpack.c.l.s8.bf16 %v2094
        %v5127 = vunpack.c.l.s8.bf16 %v2095
        %v5128 = vunpack.c.h.s8.bf16 %v2088
        %v5129 = vunpack.c.h.s8.bf16 %v2089
        %v5130 = vunpack.c.h.s8.bf16 %v2090
        %v5131 = vunpack.c.h.s8.bf16 %v2091
        %v5132 = vunpack.c.h.s8.bf16 %v2092
        %v5133 = vunpack.c.h.s8.bf16 %v2093
        %v5134 = vunpack.c.h.s8.bf16 %v2094
        %v5135 = vunpack.c.h.s8.bf16 %v2095
        %v5136 = vunpack.c.l.s8.bf16 %v2096
        %v5137 = vunpack.c.l.s8.bf16 %v2097
        %v5138 = vunpack.c.l.s8.bf16 %v2098
        %v5139 = vunpack.c.l.s8.bf16 %v2099
        %v5140 = vunpack.c.l.s8.bf16 %v2100
        %v5141 = vunpack.c.l.s8.bf16 %v2101
        %v5142 = vunpack.c.l.s8.bf16 %v2102
        %v5143 = vunpack.c.l.s8.bf16 %v2103
        %v5144 = vunpack.c.h.s8.bf16 %v2096
        %v5145 = vunpack.c.h.s8.bf16 %v2097
        %v5146 = vunpack.c.h.s8.bf16 %v2098
        %v5147 = vunpack.c.h.s8.bf16 %v2099
        %v5148 = vunpack.c.h.s8.bf16 %v2100
        %v5149 = vunpack.c.h.s8.bf16 %v2101
        %v5150 = vunpack.c.h.s8.bf16 %v2102
        %v5151 = vunpack.c.h.s8.bf16 %v2103
        %v5152 = vunpack.c.l.s8.bf16 %v2104
        %v5153 = vunpack.c.l.s8.bf16 %v2105
        %v5154 = vunpack.c.l.s8.bf16 %v2106
        %v5155 = vunpack.c.l.s8.bf16 %v2107
        %v5156 = vunpack.c.l.s8.bf16 %v2108
        %v5157 = vunpack.c.l.s8.bf16 %v2109
        %v5158 = vunpack.c.l.s8.bf16 %v2110
        %v5159 = vunpack.c.l.s8.bf16 %v2111
        %v5160 = vunpack.c.h.s8.bf16 %v2104
        %v5161 = vunpack.c.h.s8.bf16 %v2105
        %v5162 = vunpack.c.h.s8.bf16 %v2106
        %v5163 = vunpack.c.h.s8.bf16 %v2107
        %v5164 = vunpack.c.h.s8.bf16 %v2108
        %v5165 = vunpack.c.h.s8.bf16 %v2109
        %v5166 = vunpack.c.h.s8.bf16 %v2110
        %v5167 = vunpack.c.h.s8.bf16 %v2111
        %v5168 = vunpack.c.l.s8.bf16 %v2112
        %v5169 = vunpack.c.l.s8.bf16 %v2113
        %v5170 = vunpack.c.l.s8.bf16 %v2114
        %v5171 = vunpack.c.l.s8.bf16 %v2115
        %v5172 = vunpack.c.l.s8.bf16 %v2116
        %v5173 = vunpack.c.l.s8.bf16 %v2117
        %v5174 = vunpack.c.l.s8.bf16 %v2118
        %v5175 = vunpack.c.l.s8.bf16 %v2119
        %v5176 = vunpack.c.h.s8.bf16 %v2112
        %v5177 = vunpack.c.h.s8.bf16 %v2113
        %v5178 = vunpack.c.h.s8.bf16 %v2114
        %v5179 = vunpack.c.h.s8.bf16 %v2115
        %v5180 = vunpack.c.h.s8.bf16 %v2116
        %v5181 = vunpack.c.h.s8.bf16 %v2117
        %v5182 = vunpack.c.h.s8.bf16 %v2118
        %v5183 = vunpack.c.h.s8.bf16 %v2119
        %v5184 = vunpack.c.l.s8.bf16 %v2120
        %v5185 = vunpack.c.l.s8.bf16 %v2121
        %v5186 = vunpack.c.l.s8.bf16 %v2122
        %v5187 = vunpack.c.l.s8.bf16 %v2123
        %v5188 = vunpack.c.l.s8.bf16 %v2124
        %v5189 = vunpack.c.l.s8.bf16 %v2125
        %v5190 = vunpack.c.l.s8.bf16 %v2126
        %v5191 = vunpack.c.l.s8.bf16 %v2127
        %v5192 = vunpack.c.h.s8.bf16 %v2120
        %v5193 = vunpack.c.h.s8.bf16 %v2121
        %v5194 = vunpack.c.h.s8.bf16 %v2122
        %v5195 = vunpack.c.h.s8.bf16 %v2123
        %v5196 = vunpack.c.h.s8.bf16 %v2124
        %v5197 = vunpack.c.h.s8.bf16 %v2125
        %v5198 = vunpack.c.h.s8.bf16 %v2126
        %v5199 = vunpack.c.h.s8.bf16 %v2127
        %v5200 = vunpack.c.l.s8.bf16 %v2128
        %v5201 = vunpack.c.l.s8.bf16 %v2129
        %v5202 = vunpack.c.l.s8.bf16 %v2130
        %v5203 = vunpack.c.l.s8.bf16 %v2131
        %v5204 = vunpack.c.l.s8.bf16 %v2132
        %v5205 = vunpack.c.l.s8.bf16 %v2133
        %v5206 = vunpack.c.l.s8.bf16 %v2134
        %v5207 = vunpack.c.l.s8.bf16 %v2135
        %v5208 = vunpack.c.h.s8.bf16 %v2128
        %v5209 = vunpack.c.h.s8.bf16 %v2129
        %v5210 = vunpack.c.h.s8.bf16 %v2130
        %v5211 = vunpack.c.h.s8.bf16 %v2131
        %v5212 = vunpack.c.h.s8.bf16 %v2132
        %v5213 = vunpack.c.h.s8.bf16 %v2133
        %v5214 = vunpack.c.h.s8.bf16 %v2134
        %v5215 = vunpack.c.h.s8.bf16 %v2135
        %v5216 = vunpack.c.l.s8.bf16 %v2136
        %v5217 = vunpack.c.l.s8.bf16 %v2137
        %v5218 = vunpack.c.l.s8.bf16 %v2138
        %v5219 = vunpack.c.l.s8.bf16 %v2139
        %v5220 = vunpack.c.l.s8.bf16 %v2140
        %v5221 = vunpack.c.l.s8.bf16 %v2141
        %v5222 = vunpack.c.l.s8.bf16 %v2142
        %v5223 = vunpack.c.l.s8.bf16 %v2143
        %v5224 = vunpack.c.h.s8.bf16 %v2136
        %v5225 = vunpack.c.h.s8.bf16 %v2137
        %v5226 = vunpack.c.h.s8.bf16 %v2138
        %v5227 = vunpack.c.h.s8.bf16 %v2139
        %v5228 = vunpack.c.h.s8.bf16 %v2140
        %v5229 = vunpack.c.h.s8.bf16 %v2141
        %v5230 = vunpack.c.h.s8.bf16 %v2142
        %v5231 = vunpack.c.h.s8.bf16 %v2143
        %v5232 = vunpack.c.l.s8.bf16 %v2144
        %v5233 = vunpack.c.l.s8.bf16 %v2145
        %v5234 = vunpack.c.l.s8.bf16 %v2146
        %v5235 = vunpack.c.l.s8.bf16 %v2147
        %v5236 = vunpack.c.l.s8.bf16 %v2148
        %v5237 = vunpack.c.l.s8.bf16 %v2149
        %v5238 = vunpack.c.l.s8.bf16 %v2150
        %v5239 = vunpack.c.l.s8.bf16 %v2151
        %v5240 = vunpack.c.h.s8.bf16 %v2144
        %v5241 = vunpack.c.h.s8.bf16 %v2145
        %v5242 = vunpack.c.h.s8.bf16 %v2146
        %v5243 = vunpack.c.h.s8.bf16 %v2147
        %v5244 = vunpack.c.h.s8.bf16 %v2148
        %v5245 = vunpack.c.h.s8.bf16 %v2149
        %v5246 = vunpack.c.h.s8.bf16 %v2150
        %v5247 = vunpack.c.h.s8.bf16 %v2151
        %v5248 = vunpack.c.l.s8.bf16 %v2152
        %v5249 = vunpack.c.l.s8.bf16 %v2153
        %v5250 = vunpack.c.l.s8.bf16 %v2154
        %v5251 = vunpack.c.l.s8.bf16 %v2155
        %v5252 = vunpack.c.l.s8.bf16 %v2156
        %v5253 = vunpack.c.l.s8.bf16 %v2157
        %v5254 = vunpack.c.l.s8.bf16 %v2158
        %v5255 = vunpack.c.l.s8.bf16 %v2159
        %v5256 = vunpack.c.h.s8.bf16 %v2152
        %v5257 = vunpack.c.h.s8.bf16 %v2153
        %v5258 = vunpack.c.h.s8.bf16 %v2154
        %v5259 = vunpack.c.h.s8.bf16 %v2155
        %v5260 = vunpack.c.h.s8.bf16 %v2156
        %v5261 = vunpack.c.h.s8.bf16 %v2157
        %v5262 = vunpack.c.h.s8.bf16 %v2158
        %v5263 = vunpack.c.h.s8.bf16 %v2159
        %v5264 = vunpack.c.l.s8.bf16 %v2160
        %v5265 = vunpack.c.l.s8.bf16 %v2161
        %v5266 = vunpack.c.l.s8.bf16 %v2162
        %v5267 = vunpack.c.l.s8.bf16 %v2163
        %v5268 = vunpack.c.l.s8.bf16 %v2164
        %v5269 = vunpack.c.l.s8.bf16 %v2165
        %v5270 = vunpack.c.l.s8.bf16 %v2166
        %v5271 = vunpack.c.l.s8.bf16 %v2167
        %v5272 = vunpack.c.h.s8.bf16 %v2160
        %v5273 = vunpack.c.h.s8.bf16 %v2161
        %v5274 = vunpack.c.h.s8.bf16 %v2162
        %v5275 = vunpack.c.h.s8.bf16 %v2163
        %v5276 = vunpack.c.h.s8.bf16 %v2164
        %v5277 = vunpack.c.h.s8.bf16 %v2165
        %v5278 = vunpack.c.h.s8.bf16 %v2166
        %v5279 = vunpack.c.h.s8.bf16 %v2167
        %v5280 = vunpack.c.l.s8.bf16 %v2168
        %v5281 = vunpack.c.l.s8.bf16 %v2169
        %v5282 = vunpack.c.l.s8.bf16 %v2170
        %v5283 = vunpack.c.l.s8.bf16 %v2171
        %v5284 = vunpack.c.l.s8.bf16 %v2172
        %v5285 = vunpack.c.l.s8.bf16 %v2173
        %v5286 = vunpack.c.l.s8.bf16 %v2174
        %v5287 = vunpack.c.l.s8.bf16 %v2175
        %v5288 = vunpack.c.h.s8.bf16 %v2168
        %v5289 = vunpack.c.h.s8.bf16 %v2169
        %v5290 = vunpack.c.h.s8.bf16 %v2170
        %v5291 = vunpack.c.h.s8.bf16 %v2171
        %v5292 = vunpack.c.h.s8.bf16 %v2172
        %v5293 = vunpack.c.h.s8.bf16 %v2173
        %v5294 = vunpack.c.h.s8.bf16 %v2174
        %v5295 = vunpack.c.h.s8.bf16 %v2175
        %v5296 = vunpack.c.l.s8.bf16 %v2176
        %v5297 = vunpack.c.l.s8.bf16 %v2177
        %v5298 = vunpack.c.l.s8.bf16 %v2178
        %v5299 = vunpack.c.l.s8.bf16 %v2179
        %v5300 = vunpack.c.l.s8.bf16 %v2180
        %v5301 = vunpack.c.l.s8.bf16 %v2181
        %v5302 = vunpack.c.l.s8.bf16 %v2182
        %v5303 = vunpack.c.l.s8.bf16 %v2183
        %v5304 = vunpack.c.h.s8.bf16 %v2176
        %v5305 = vunpack.c.h.s8.bf16 %v2177
        %v5306 = vunpack.c.h.s8.bf16 %v2178
        %v5307 = vunpack.c.h.s8.bf16 %v2179
        %v5308 = vunpack.c.h.s8.bf16 %v2180
        %v5309 = vunpack.c.h.s8.bf16 %v2181
        %v5310 = vunpack.c.h.s8.bf16 %v2182
        %v5311 = vunpack.c.h.s8.bf16 %v2183
        %v5312 = vunpack.c.l.s8.bf16 %v2184
        %v5313 = vunpack.c.l.s8.bf16 %v2185
        %v5314 = vunpack.c.l.s8.bf16 %v2186
        %v5315 = vunpack.c.l.s8.bf16 %v2187
        %v5316 = vunpack.c.l.s8.bf16 %v2188
        %v5317 = vunpack.c.l.s8.bf16 %v2189
        %v5318 = vunpack.c.l.s8.bf16 %v2190
        %v5319 = vunpack.c.l.s8.bf16 %v2191
        %v5320 = vunpack.c.h.s8.bf16 %v2184
        %v5321 = vunpack.c.h.s8.bf16 %v2185
        %v5322 = vunpack.c.h.s8.bf16 %v2186
        %v5323 = vunpack.c.h.s8.bf16 %v2187
        %v5324 = vunpack.c.h.s8.bf16 %v2188
        %v5325 = vunpack.c.h.s8.bf16 %v2189
        %v5326 = vunpack.c.h.s8.bf16 %v2190
        %v5327 = vunpack.c.h.s8.bf16 %v2191
        %v5328 = vunpack.c.l.s8.bf16 %v2192
        %v5329 = vunpack.c.l.s8.bf16 %v2193
        %v5330 = vunpack.c.l.s8.bf16 %v2194
        %v5331 = vunpack.c.l.s8.bf16 %v2195
        %v5332 = vunpack.c.l.s8.bf16 %v2196
        %v5333 = vunpack.c.l.s8.bf16 %v2197
        %v5334 = vunpack.c.l.s8.bf16 %v2198
        %v5335 = vunpack.c.l.s8.bf16 %v2199
        %v5336 = vunpack.c.h.s8.bf16 %v2192
        %v5337 = vunpack.c.h.s8.bf16 %v2193
        %v5338 = vunpack.c.h.s8.bf16 %v2194
        %v5339 = vunpack.c.h.s8.bf16 %v2195
        %v5340 = vunpack.c.h.s8.bf16 %v2196
        %v5341 = vunpack.c.h.s8.bf16 %v2197
        %v5342 = vunpack.c.h.s8.bf16 %v2198
        %v5343 = vunpack.c.h.s8.bf16 %v2199
        %v5344 = vunpack.c.l.s8.bf16 %v2200
        %v5345 = vunpack.c.l.s8.bf16 %v2201
        %v5346 = vunpack.c.l.s8.bf16 %v2202
        %v5347 = vunpack.c.l.s8.bf16 %v2203
        %v5348 = vunpack.c.l.s8.bf16 %v2204
        %v5349 = vunpack.c.l.s8.bf16 %v2205
        %v5350 = vunpack.c.l.s8.bf16 %v2206
        %v5351 = vunpack.c.l.s8.bf16 %v2207
        %v5352 = vunpack.c.h.s8.bf16 %v2200
        %v5353 = vunpack.c.h.s8.bf16 %v2201
        %v5354 = vunpack.c.h.s8.bf16 %v2202
        %v5355 = vunpack.c.h.s8.bf16 %v2203
        %v5356 = vunpack.c.h.s8.bf16 %v2204
        %v5357 = vunpack.c.h.s8.bf16 %v2205
        %v5358 = vunpack.c.h.s8.bf16 %v2206
        %v5359 = vunpack.c.h.s8.bf16 %v2207
        %v5360 = vunpack.c.l.s8.bf16 %v2208
        %v5361 = vunpack.c.l.s8.bf16 %v2209
        %v5362 = vunpack.c.l.s8.bf16 %v2210
        %v5363 = vunpack.c.l.s8.bf16 %v2211
        %v5364 = vunpack.c.l.s8.bf16 %v2212
        %v5365 = vunpack.c.l.s8.bf16 %v2213
        %v5366 = vunpack.c.l.s8.bf16 %v2214
        %v5367 = vunpack.c.l.s8.bf16 %v2215
        %v5368 = vunpack.c.h.s8.bf16 %v2208
        %v5369 = vunpack.c.h.s8.bf16 %v2209
        %v5370 = vunpack.c.h.s8.bf16 %v2210
        %v5371 = vunpack.c.h.s8.bf16 %v2211
        %v5372 = vunpack.c.h.s8.bf16 %v2212
        %v5373 = vunpack.c.h.s8.bf16 %v2213
        %v5374 = vunpack.c.h.s8.bf16 %v2214
        %v5375 = vunpack.c.h.s8.bf16 %v2215
        %v5376 = vunpack.c.l.s8.bf16 %v2216
        %v5377 = vunpack.c.l.s8.bf16 %v2217
        %v5378 = vunpack.c.l.s8.bf16 %v2218
        %v5379 = vunpack.c.l.s8.bf16 %v2219
        %v5380 = vunpack.c.l.s8.bf16 %v2220
        %v5381 = vunpack.c.l.s8.bf16 %v2221
        %v5382 = vunpack.c.l.s8.bf16 %v2222
        %v5383 = vunpack.c.l.s8.bf16 %v2223
        %v5384 = vunpack.c.h.s8.bf16 %v2216
        %v5385 = vunpack.c.h.s8.bf16 %v2217
        %v5386 = vunpack.c.h.s8.bf16 %v2218
        %v5387 = vunpack.c.h.s8.bf16 %v2219
        %v5388 = vunpack.c.h.s8.bf16 %v2220
        %v5389 = vunpack.c.h.s8.bf16 %v2221
        %v5390 = vunpack.c.h.s8.bf16 %v2222
        %v5391 = vunpack.c.h.s8.bf16 %v2223
        %v5392 = vunpack.c.l.s8.bf16 %v2224
        %v5393 = vunpack.c.l.s8.bf16 %v2225
        %v5394 = vunpack.c.l.s8.bf16 %v2226
        %v5395 = vunpack.c.l.s8.bf16 %v2227
        %v5396 = vunpack.c.l.s8.bf16 %v2228
        %v5397 = vunpack.c.l.s8.bf16 %v2229
        %v5398 = vunpack.c.l.s8.bf16 %v2230
        %v5399 = vunpack.c.l.s8.bf16 %v2231
        %v5400 = vunpack.c.h.s8.bf16 %v2224
        %v5401 = vunpack.c.h.s8.bf16 %v2225
        %v5402 = vunpack.c.h.s8.bf16 %v2226
        %v5403 = vunpack.c.h.s8.bf16 %v2227
        %v5404 = vunpack.c.h.s8.bf16 %v2228
        %v5405 = vunpack.c.h.s8.bf16 %v2229
        %v5406 = vunpack.c.h.s8.bf16 %v2230
        %v5407 = vunpack.c.h.s8.bf16 %v2231
        %v5408 = vunpack.c.l.s8.bf16 %v2232
        %v5409 = vunpack.c.l.s8.bf16 %v2233
        %v5410 = vunpack.c.l.s8.bf16 %v2234
        %v5411 = vunpack.c.l.s8.bf16 %v2235
        %v5412 = vunpack.c.l.s8.bf16 %v2236
        %v5413 = vunpack.c.l.s8.bf16 %v2237
        %v5414 = vunpack.c.l.s8.bf16 %v2238
        %v5415 = vunpack.c.l.s8.bf16 %v2239
        %v5416 = vunpack.c.h.s8.bf16 %v2232
        %v5417 = vunpack.c.h.s8.bf16 %v2233
        %v5418 = vunpack.c.h.s8.bf16 %v2234
        %v5419 = vunpack.c.h.s8.bf16 %v2235
        %v5420 = vunpack.c.h.s8.bf16 %v2236
        %v5421 = vunpack.c.h.s8.bf16 %v2237
        %v5422 = vunpack.c.h.s8.bf16 %v2238
        %v5423 = vunpack.c.h.s8.bf16 %v2239
        %v5424 = vunpack.c.l.s8.bf16 %v2240
        %v5425 = vunpack.c.l.s8.bf16 %v2241
        %v5426 = vunpack.c.l.s8.bf16 %v2242
        %v5427 = vunpack.c.l.s8.bf16 %v2243
        %v5428 = vunpack.c.l.s8.bf16 %v2244
        %v5429 = vunpack.c.l.s8.bf16 %v2245
        %v5430 = vunpack.c.l.s8.bf16 %v2246
        %v5431 = vunpack.c.l.s8.bf16 %v2247
        %v5432 = vunpack.c.h.s8.bf16 %v2240
        %v5433 = vunpack.c.h.s8.bf16 %v2241
        %v5434 = vunpack.c.h.s8.bf16 %v2242
        %v5435 = vunpack.c.h.s8.bf16 %v2243
        %v5436 = vunpack.c.h.s8.bf16 %v2244
        %v5437 = vunpack.c.h.s8.bf16 %v2245
        %v5438 = vunpack.c.h.s8.bf16 %v2246
        %v5439 = vunpack.c.h.s8.bf16 %v2247
        %v5440 = vunpack.c.l.s8.bf16 %v2248
        %v5441 = vunpack.c.l.s8.bf16 %v2249
        %v5442 = vunpack.c.l.s8.bf16 %v2250
        %v5443 = vunpack.c.l.s8.bf16 %v2251
        %v5444 = vunpack.c.l.s8.bf16 %v2252
        %v5445 = vunpack.c.l.s8.bf16 %v2253
        %v5446 = vunpack.c.l.s8.bf16 %v2254
        %v5447 = vunpack.c.l.s8.bf16 %v2255
        %v5448 = vunpack.c.h.s8.bf16 %v2248
        %v5449 = vunpack.c.h.s8.bf16 %v2249
        %v5450 = vunpack.c.h.s8.bf16 %v2250
        %v5451 = vunpack.c.h.s8.bf16 %v2251
        %v5452 = vunpack.c.h.s8.bf16 %v2252
        %v5453 = vunpack.c.h.s8.bf16 %v2253
        %v5454 = vunpack.c.h.s8.bf16 %v2254
        %v5455 = vunpack.c.h.s8.bf16 %v2255
        %5456 = vmatprep.subr.bf16.mxu0 %v2257
        %5457 = vmatpush1.bf16.msra.mxu0 %v2256
        %5458 = vmatprep.subr.bf16.mxu0 %v2265
        %5459 = vmatpush1.bf16.msra.mxu0 %v2264
        %5460 = vmatprep.subr.bf16.mxu0 %v2273
        %5461 = vmatpush1.bf16.msra.mxu0 %v2272
        %5462 = vmatprep.subr.bf16.mxu0 %v2281
        %5463 = vmatpush1.bf16.msra.mxu0 %v2280
        %5464 = vmatprep.subr.bf16.mxu0 %v2289
        %5465 = vmatpush1.bf16.msra.mxu0 %v2288
        %5466 = vmatprep.subr.bf16.mxu0 %v2297
        %5467 = vmatpush1.bf16.msra.mxu0 %v2296
        %5468 = vmatprep.subr.bf16.mxu0 %v2305
        %5469 = vmatpush1.bf16.msra.mxu0 %v2304
        %5470 = vmatprep.subr.bf16.mxu0 %v2313
        %5471 = vmatpush1.bf16.msra.mxu0 %v2312
        %5472 = vmatprep.subr.bf16.mxu0 %v2321
        %5473 = vmatpush1.bf16.msra.mxu0 %v2320
        %5474 = vmatprep.subr.bf16.mxu0 %v2329
        %5475 = vmatpush1.bf16.msra.mxu0 %v2328
        %5476 = vmatprep.subr.bf16.mxu0 %v2337
        %5477 = vmatpush1.bf16.msra.mxu0 %v2336
        %5478 = vmatprep.subr.bf16.mxu0 %v2345
        %5479 = vmatpush1.bf16.msra.mxu0 %v2344
        %5480 = vmatprep.subr.bf16.mxu0 %v2353
        %5481 = vmatpush1.bf16.msra.mxu0 %v2352
        %5482 = vmatprep.subr.bf16.mxu0 %v2361
        %5483 = vmatpush1.bf16.msra.mxu0 %v2360
        %5484 = vmatprep.subr.bf16.mxu0 %v2369
        %5485 = vmatpush1.bf16.msra.mxu0 %v2368
        %5486 = vmatprep.subr.bf16.mxu0 %v2377
        %5487 = vmatpush1.bf16.msra.mxu0 %v2376
        %5488 = vmatprep.mubr.bf16.mxu0 %v607
        %5489 = vmatmul.mubr.bf16.gmra.mrb[0].mxu0 %v606
        %v5490 = vpop.f32.mrb[0].mxu0
        %v5491 = vadd.f32 0.0, %v5490
        %v5492 = vpop.f32.mrb[0].mxu0
        %v5493 = vadd.f32 0.0, %v5492
        %v5494 = vpop.f32.mrb[0].mxu0
        %v5495 = vpop.f32.mrb[0].mxu0
        %5496 = vdwg.mxu0
        %5497 = vmatprep.subr.bf16.mxu0 %v2385
        %5498 = vmatpush1.bf16.msra.mxu0 %v2384
        %5499 = vmatprep.subr.bf16.mxu0 %v2393
        %5500 = vmatpush1.bf16.msra.mxu0 %v2392
        %5501 = vmatprep.subr.bf16.mxu0 %v2401
        %5502 = vmatpush1.bf16.msra.mxu0 %v2400
        %5503 = vmatprep.subr.bf16.mxu0 %v2409
        %5504 = vmatpush1.bf16.msra.mxu0 %v2408
        %5505 = vmatprep.subr.bf16.mxu0 %v2417
        %5506 = vmatpush1.bf16.msra.mxu0 %v2416
        %5507 = vmatprep.subr.bf16.mxu0 %v2425
        %5508 = vmatpush1.bf16.msra.mxu0 %v2424
        %5509 = vmatprep.subr.bf16.mxu0 %v2433
        %5510 = vmatpush1.bf16.msra.mxu0 %v2432
        %5511 = vmatprep.subr.bf16.mxu0 %v2441
        %5512 = vmatpush1.bf16.msra.mxu0 %v2440
        %5513 = vmatprep.subr.bf16.mxu0 %v2449
        %5514 = vmatpush1.bf16.msra.mxu0 %v2448
        %5515 = vmatprep.subr.bf16.mxu0 %v2457
        %5516 = vmatpush1.bf16.msra.mxu0 %v2456
        %5517 = vmatprep.subr.bf16.mxu0 %v2465
        %5518 = vmatpush1.bf16.msra.mxu0 %v2464
        %5519 = vmatprep.subr.bf16.mxu0 %v2473
        %5520 = vmatpush1.bf16.msra.mxu0 %v2472
        %5521 = vmatprep.subr.bf16.mxu0 %v2481
        %5522 = vmatpush1.bf16.msra.mxu0 %v2480
        %5523 = vmatprep.subr.bf16.mxu0 %v2489
        %5524 = vmatpush1.bf16.msra.mxu0 %v2488
        %5525 = vmatprep.subr.bf16.mxu0 %v2497
        %5526 = vmatpush1.bf16.msra.mxu0 %v2496
        %5527 = vmatprep.subr.bf16.mxu0 %v2505
        %5528 = vmatpush1.bf16.msra.mxu0 %v2504
        %5529 = vmatprep.mubr.bf16.mxu0 %v609
        %5530 = vmatmul.mubr.bf16.gmra.mrb[0].mxu0 %v608
        %v5531 = vpop.f32.mrb[0].mxu0
        %v5532 = vadd.f32 %v5491, %v5531
        %v5533 = vpop.f32.mrb[0].mxu0
        %v5534 = vadd.f32 %v5493, %v5533
        %v5535 = vpop.f32.mrb[0].mxu0
        %v5536 = vpop.f32.mrb[0].mxu0
        %5537 = vdwg.mxu0
        %5538 = vmatprep.subr.bf16.mxu0 %v2513
        %5539 = vmatpush1.bf16.msra.mxu0 %v2512
        %5540 = vmatprep.subr.bf16.mxu0 %v2521
        %5541 = vmatpush1.bf16.msra.mxu0 %v2520
        %5542 = vmatprep.subr.bf16.mxu0 %v2529
        %5543 = vmatpush1.bf16.msra.mxu0 %v2528
        %5544 = vmatprep.subr.bf16.mxu0 %v2537
        %5545 = vmatpush1.bf16.msra.mxu0 %v2536
        %5546 = vmatprep.subr.bf16.mxu0 %v2545
        %5547 = vmatpush1.bf16.msra.mxu0 %v2544
        %5548 = vmatprep.subr.bf16.mxu0 %v2553
        %5549 = vmatpush1.bf16.msra.mxu0 %v2552
        %5550 = vmatprep.subr.bf16.mxu0 %v2561
        %5551 = vmatpush1.bf16.msra.mxu0 %v2560
        %5552 = vmatprep.subr.bf16.mxu0 %v2569
        %5553 = vmatpush1.bf16.msra.mxu0 %v2568
        %5554 = vmatprep.subr.bf16.mxu0 %v2577
        %5555 = vmatpush1.bf16.msra.mxu0 %v2576
        %5556 = vmatprep.subr.bf16.mxu0 %v2585
        %5557 = vmatpush1.bf16.msra.mxu0 %v2584
        %5558 = vmatprep.subr.bf16.mxu0 %v2593
        %5559 = vmatpush1.bf16.msra.mxu0 %v2592
        %5560 = vmatprep.subr.bf16.mxu0 %v2601
        %5561 = vmatpush1.bf16.msra.mxu0 %v2600
        %5562 = vmatprep.subr.bf16.mxu0 %v2609
        %5563 = vmatpush1.bf16.msra.mxu0 %v2608
        %5564 = vmatprep.subr.bf16.mxu0 %v2617
        %5565 = vmatpush1.bf16.msra.mxu0 %v2616
        %5566 = vmatprep.subr.bf16.mxu0 %v2625
        %5567 = vmatpush1.bf16.msra.mxu0 %v2624
        %5568 = vmatprep.subr.bf16.mxu0 %v2633
        %5569 = vmatpush1.bf16.msra.mxu0 %v2632
        %5570 = vmatprep.mubr.bf16.mxu0 %v611
        %5571 = vmatmul.mubr.bf16.gmra.mrb[0].mxu0 %v610
        %v5572 = vpop.f32.mrb[0].mxu0
        %v5573 = vadd.f32 %v5532, %v5572
        %v5574 = vpop.f32.mrb[0].mxu0
        %v5575 = vadd.f32 %v5534, %v5574
        %v5576 = vpop.f32.mrb[0].mxu0
        %v5577 = vpop.f32.mrb[0].mxu0
        %5578 = vdwg.mxu0
        %5579 = vmatprep.subr.bf16.mxu0 %v2641
        %5580 = vmatpush1.bf16.msra.mxu0 %v2640
        %5581 = vmatprep.subr.bf16.mxu0 %v2649
        %5582 = vmatpush1.bf16.msra.mxu0 %v2648
        %5583 = vmatprep.subr.bf16.mxu0 %v2657
        %5584 = vmatpush1.bf16.msra.mxu0 %v2656
        %5585 = vmatprep.subr.bf16.mxu0 %v2665
        %5586 = vmatpush1.bf16.msra.mxu0 %v2664
        %5587 = vmatprep.subr.bf16.mxu0 %v2673
        %5588 = vmatpush1.bf16.msra.mxu0 %v2672
        %5589 = vmatprep.subr.bf16.mxu0 %v2681
        %5590 = vmatpush1.bf16.msra.mxu0 %v2680
        %5591 = vmatprep.subr.bf16.mxu0 %v2689
        %5592 = vmatpush1.bf16.msra.mxu0 %v2688
        %5593 = vmatprep.subr.bf16.mxu0 %v2697
        %5594 = vmatpush1.bf16.msra.mxu0 %v2696
        %5595 = vmatprep.subr.bf16.mxu0 %v2705
        %5596 = vmatpush1.bf16.msra.mxu0 %v2704
        %5597 = vmatprep.subr.bf16.mxu0 %v2713
        %5598 = vmatpush1.bf16.msra.mxu0 %v2712
        %5599 = vmatprep.subr.bf16.mxu0 %v2721
        %5600 = vmatpush1.bf16.msra.mxu0 %v2720
        %5601 = vmatprep.subr.bf16.mxu0 %v2729
        %5602 = vmatpush1.bf16.msra.mxu0 %v2728
        %5603 = vmatprep.subr.bf16.mxu0 %v2737
        %5604 = vmatpush1.bf16.msra.mxu0 %v2736
        %5605 = vmatprep.subr.bf16.mxu0 %v2745
        %5606 = vmatpush1.bf16.msra.mxu0 %v2744
        %5607 = vmatprep.subr.bf16.mxu0 %v2753
        %5608 = vmatpush1.bf16.msra.mxu0 %v2752
        %5609 = vmatprep.subr.bf16.mxu0 %v2761
        %5610 = vmatpush1.bf16.msra.mxu0 %v2760
        %5611 = vmatprep.mubr.bf16.mxu0 %v613
        %5612 = vmatmul.mubr.bf16.gmra.mrb[0].mxu0 %v612
        %v5613 = vpop.f32.mrb[0].mxu0
        %v5614 = vadd.f32 %v5573, %v5613
        %v5615 = vpop.f32.mrb[0].mxu0
        %v5616 = vadd.f32 %v5575, %v5615
        %v5617 = vpop.f32.mrb[0].mxu0
        %v5618 = vpop.f32.mrb[0].mxu0
        %5619 = vdwg.mxu0
        %5620 = vmatprep.subr.bf16.mxu0 %v2769
        %5621 = vmatpush1.bf16.msra.mxu0 %v2768
        %5622 = vmatprep.subr.bf16.mxu0 %v2777
        %5623 = vmatpush1.bf16.msra.mxu0 %v2776
        %5624 = vmatprep.subr.bf16.mxu0 %v2785
        %5625 = vmatpush1.bf16.msra.mxu0 %v2784
        %5626 = vmatprep.subr.bf16.mxu0 %v2793
        %5627 = vmatpush1.bf16.msra.mxu0 %v2792
        %5628 = vmatprep.subr.bf16.mxu0 %v2801
        %5629 = vmatpush1.bf16.msra.mxu0 %v2800
        %5630 = vmatprep.subr.bf16.mxu0 %v2809
        %5631 = vmatpush1.bf16.msra.mxu0 %v2808
        %5632 = vmatprep.subr.bf16.mxu0 %v2817
        %5633 = vmatpush1.bf16.msra.mxu0 %v2816
        %5634 = vmatprep.subr.bf16.mxu0 %v2825
        %5635 = vmatpush1.bf16.msra.mxu0 %v2824
        %5636 = vmatprep.subr.bf16.mxu0 %v2833
        %5637 = vmatpush1.bf16.msra.mxu0 %v2832
        %5638 = vmatprep.subr.bf16.mxu0 %v2841
        %5639 = vmatpush1.bf16.msra.mxu0 %v2840
        %5640 = vmatprep.subr.bf16.mxu0 %v2849
        %5641 = vmatpush1.bf16.msra.mxu0 %v2848
        %5642 = vmatprep.subr.bf16.mxu0 %v2857
        %5643 = vmatpush1.bf16.msra.mxu0 %v2856
        %5644 = vmatprep.subr.bf16.mxu0 %v2865
        %5645 = vmatpush1.bf16.msra.mxu0 %v2864
        %5646 = vmatprep.subr.bf16.mxu0 %v2873
        %5647 = vmatpush1.bf16.msra.mxu0 %v2872
        %5648 = vmatprep.subr.bf16.mxu0 %v2881
        %5649 = vmatpush1.bf16.msra.mxu0 %v2880
        %5650 = vmatprep.subr.bf16.mxu0 %v2889
        %5651 = vmatpush1.bf16.msra.mxu0 %v2888
        %5652 = vmatprep.mubr.bf16.mxu0 %v615
        %5653 = vmatmul.mubr.bf16.gmra.mrb[0].mxu0 %v614
        %v5654 = vpop.f32.mrb[0].mxu0
        %v5655 = vadd.f32 %v5614, %v5654
        %v5656 = vpop.f32.mrb[0].mxu0
        %v5657 = vadd.f32 %v5616, %v5656
        %v5658 = vpop.f32.mrb[0].mxu0
        %v5659 = vpop.f32.mrb[0].mxu0
        %5660 = vdwg.mxu0
        %5661 = vmatprep.subr.bf16.mxu0 %v2897
        %5662 = vmatpush1.bf16.msra.mxu0 %v2896
        %5663 = vmatprep.subr.bf16.mxu0 %v2905
        %5664 = vmatpush1.bf16.msra.mxu0 %v2904
        %5665 = vmatprep.subr.bf16.mxu0 %v2913
        %5666 = vmatpush1.bf16.msra.mxu0 %v2912
        %5667 = vmatprep.subr.bf16.mxu0 %v2921
        %5668 = vmatpush1.bf16.msra.mxu0 %v2920
        %5669 = vmatprep.subr.bf16.mxu0 %v2929
        %5670 = vmatpush1.bf16.msra.mxu0 %v2928
        %5671 = vmatprep.subr.bf16.mxu0 %v2937
        %5672 = vmatpush1.bf16.msra.mxu0 %v2936
        %5673 = vmatprep.subr.bf16.mxu0 %v2945
        %5674 = vmatpush1.bf16.msra.mxu0 %v2944
        %5675 = vmatprep.subr.bf16.mxu0 %v2953
        %5676 = vmatpush1.bf16.msra.mxu0 %v2952
        %5677 = vmatprep.subr.bf16.mxu0 %v2961
        %5678 = vmatpush1.bf16.msra.mxu0 %v2960
        %5679 = vmatprep.subr.bf16.mxu0 %v2969
        %5680 = vmatpush1.bf16.msra.mxu0 %v2968
        %5681 = vmatprep.subr.bf16.mxu0 %v2977
        %5682 = vmatpush1.bf16.msra.mxu0 %v2976
        %5683 = vmatprep.subr.bf16.mxu0 %v2985
        %5684 = vmatpush1.bf16.msra.mxu0 %v2984
        %5685 = vmatprep.subr.bf16.mxu0 %v2993
        %5686 = vmatpush1.bf16.msra.mxu0 %v2992
        %5687 = vmatprep.subr.bf16.mxu0 %v3001
        %5688 = vmatpush1.bf16.msra.mxu0 %v3000
        %5689 = vmatprep.subr.bf16.mxu0 %v3009
        %5690 = vmatpush1.bf16.msra.mxu0 %v3008
        %5691 = vmatprep.subr.bf16.mxu0 %v3017
        %5692 = vmatpush1.bf16.msra.mxu0 %v3016
        %5693 = vmatprep.mubr.bf16.mxu0 %v617
        %5694 = vmatmul.mubr.bf16.gmra.mrb[0].mxu0 %v616
        %v5695 = vpop.f32.mrb[0].mxu0
        %v5696 = vadd.f32 %v5655, %v5695
        %v5697 = vpop.f32.mrb[0].mxu0
        %v5698 = vadd.f32 %v5657, %v5697
        %v5699 = vpop.f32.mrb[0].mxu0
        %v5700 = vpop.f32.mrb[0].mxu0
        %5701 = vdwg.mxu0
        %5702 = vmatprep.subr.bf16.mxu0 %v3025
        %5703 = vmatpush1.bf16.msra.mxu0 %v3024
        %5704 = vmatprep.subr.bf16.mxu0 %v3033
        %5705 = vmatpush1.bf16.msra.mxu0 %v3032
        %5706 = vmatprep.subr.bf16.mxu0 %v3041
        %5707 = vmatpush1.bf16.msra.mxu0 %v3040
        %5708 = vmatprep.subr.bf16.mxu0 %v3049
        %5709 = vmatpush1.bf16.msra.mxu0 %v3048
        %5710 = vmatprep.subr.bf16.mxu0 %v3057
        %5711 = vmatpush1.bf16.msra.mxu0 %v3056
        %5712 = vmatprep.subr.bf16.mxu0 %v3065
        %5713 = vmatpush1.bf16.msra.mxu0 %v3064
        %5714 = vmatprep.subr.bf16.mxu0 %v3073
        %5715 = vmatpush1.bf16.msra.mxu0 %v3072
        %5716 = vmatprep.subr.bf16.mxu0 %v3081
        %5717 = vmatpush1.bf16.msra.mxu0 %v3080
        %5718 = vmatprep.subr.bf16.mxu0 %v3089
        %5719 = vmatpush1.bf16.msra.mxu0 %v3088
        %5720 = vmatprep.subr.bf16.mxu0 %v3097
        %5721 = vmatpush1.bf16.msra.mxu0 %v3096
        %5722 = vmatprep.subr.bf16.mxu0 %v3105
        %5723 = vmatpush1.bf16.msra.mxu0 %v3104
        %5724 = vmatprep.subr.bf16.mxu0 %v3113
        %5725 = vmatpush1.bf16.msra.mxu0 %v3112
        %5726 = vmatprep.subr.bf16.mxu0 %v3121
        %5727 = vmatpush1.bf16.msra.mxu0 %v3120
        %5728 = vmatprep.subr.bf16.mxu0 %v3129
        %5729 = vmatpush1.bf16.msra.mxu0 %v3128
        %5730 = vmatprep.subr.bf16.mxu0 %v3137
        %5731 = vmatpush1.bf16.msra.mxu0 %v3136
        %5732 = vmatprep.subr.bf16.mxu0 %v3145
        %5733 = vmatpush1.bf16.msra.mxu0 %v3144
        %5734 = vmatprep.mubr.bf16.mxu0 %v619
        %5735 = vmatmul.mubr.bf16.gmra.mrb[0].mxu0 %v618
        %v5736 = vpop.f32.mrb[0].mxu0
        %v5737 = vadd.f32 %v5696, %v5736
        %v5738 = vpop.f32.mrb[0].mxu0
        %v5739 = vadd.f32 %v5698, %v5738
        %v5740 = vpop.f32.mrb[0].mxu0
        %v5741 = vpop.f32.mrb[0].mxu0
        %5742 = vdwg.mxu0
        %5743 = vmatprep.subr.bf16.mxu0 %v3153
        %5744 = vmatpush1.bf16.msra.mxu0 %v3152
        %5745 = vmatprep.subr.bf16.mxu0 %v3161
        %5746 = vmatpush1.bf16.msra.mxu0 %v3160
        %5747 = vmatprep.subr.bf16.mxu0 %v3169
        %5748 = vmatpush1.bf16.msra.mxu0 %v3168
        %5749 = vmatprep.subr.bf16.mxu0 %v3177
        %5750 = vmatpush1.bf16.msra.mxu0 %v3176
        %5751 = vmatprep.subr.bf16.mxu0 %v3185
        %5752 = vmatpush1.bf16.msra.mxu0 %v3184
        %5753 = vmatprep.subr.bf16.mxu0 %v3193
        %5754 = vmatpush1.bf16.msra.mxu0 %v3192
        %5755 = vmatprep.subr.bf16.mxu0 %v3201
        %5756 = vmatpush1.bf16.msra.mxu0 %v3200
        %5757 = vmatprep.subr.bf16.mxu0 %v3209
        %5758 = vmatpush1.bf16.msra.mxu0 %v3208
        %5759 = vmatprep.subr.bf16.mxu0 %v3217
        %5760 = vmatpush1.bf16.msra.mxu0 %v3216
        %5761 = vmatprep.subr.bf16.mxu0 %v3225
        %5762 = vmatpush1.bf16.msra.mxu0 %v3224
        %5763 = vmatprep.subr.bf16.mxu0 %v3233
        %5764 = vmatpush1.bf16.msra.mxu0 %v3232
        %5765 = vmatprep.subr.bf16.mxu0 %v3241
        %5766 = vmatpush1.bf16.msra.mxu0 %v3240
        %5767 = vmatprep.subr.bf16.mxu0 %v3249
        %5768 = vmatpush1.bf16.msra.mxu0 %v3248
        %5769 = vmatprep.subr.bf16.mxu0 %v3257
        %5770 = vmatpush1.bf16.msra.mxu0 %v3256
        %5771 = vmatprep.subr.bf16.mxu0 %v3265
        %5772 = vmatpush1.bf16.msra.mxu0 %v3264
        %5773 = vmatprep.subr.bf16.mxu0 %v3273
        %5774 = vmatpush1.bf16.msra.mxu0 %v3272
        %5775 = vmatprep.mubr.bf16.mxu0 %v621
        %5776 = vmatmul.mubr.bf16.gmra.mrb[0].mxu0 %v620
        %v5777 = vpop.f32.mrb[0].mxu0
        %v5778 = vadd.f32 %v5737, %v5777
        %v5779 = vpop.f32.mrb[0].mxu0
        %v5780 = vadd.f32 %v5739, %v5779
        %v5781 = vpop.f32.mrb[0].mxu0
        %v5782 = vpop.f32.mrb[0].mxu0
        %5783 = vdwg.mxu0
        %5784 = vmatprep.subr.bf16.mxu0 %v3281
        %5785 = vmatpush1.bf16.msra.mxu0 %v3280
        %5786 = vmatprep.subr.bf16.mxu0 %v3289
        %5787 = vmatpush1.bf16.msra.mxu0 %v3288
        %5788 = vmatprep.subr.bf16.mxu0 %v3297
        %5789 = vmatpush1.bf16.msra.mxu0 %v3296
        %5790 = vmatprep.subr.bf16.mxu0 %v3305
        %5791 = vmatpush1.bf16.msra.mxu0 %v3304
        %5792 = vmatprep.subr.bf16.mxu0 %v3313
        %5793 = vmatpush1.bf16.msra.mxu0 %v3312
        %5794 = vmatprep.subr.bf16.mxu0 %v3321
        %5795 = vmatpush1.bf16.msra.mxu0 %v3320
        %5796 = vmatprep.subr.bf16.mxu0 %v3329
        %5797 = vmatpush1.bf16.msra.mxu0 %v3328
        %5798 = vmatprep.subr.bf16.mxu0 %v3337
        %5799 = vmatpush1.bf16.msra.mxu0 %v3336
        %5800 = vmatprep.subr.bf16.mxu0 %v3345
        %5801 = vmatpush1.bf16.msra.mxu0 %v3344
        %5802 = vmatprep.subr.bf16.mxu0 %v3353
        %5803 = vmatpush1.bf16.msra.mxu0 %v3352
        %5804 = vmatprep.subr.bf16.mxu0 %v3361
        %5805 = vmatpush1.bf16.msra.mxu0 %v3360
        %5806 = vmatprep.subr.bf16.mxu0 %v3369
        %5807 = vmatpush1.bf16.msra.mxu0 %v3368
        %5808 = vmatprep.subr.bf16.mxu0 %v3377
        %5809 = vmatpush1.bf16.msra.mxu0 %v3376
        %5810 = vmatprep.subr.bf16.mxu0 %v3385
        %5811 = vmatpush1.bf16.msra.mxu0 %v3384
        %5812 = vmatprep.subr.bf16.mxu0 %v3393
        %5813 = vmatpush1.bf16.msra.mxu0 %v3392
        %5814 = vmatprep.subr.bf16.mxu0 %v3401
        %5815 = vmatpush1.bf16.msra.mxu0 %v3400
        %5816 = vmatprep.mubr.bf16.mxu0 %v623
        %5817 = vmatmul.mubr.bf16.gmra.mrb[0].mxu0 %v622
        %v5818 = vpop.f32.mrb[0].mxu0
        %v5819 = vadd.f32 %v5778, %v5818
        %v5820 = vpop.f32.mrb[0].mxu0
        %v5821 = vadd.f32 %v5780, %v5820
        %v5822 = vpop.f32.mrb[0].mxu0
        %v5823 = vpop.f32.mrb[0].mxu0
        %5824 = vdwg.mxu0
        %5825 = vmatprep.subr.bf16.mxu0 %v3409
        %5826 = vmatpush1.bf16.msra.mxu0 %v3408
        %5827 = vmatprep.subr.bf16.mxu0 %v3417
        %5828 = vmatpush1.bf16.msra.mxu0 %v3416
        %5829 = vmatprep.subr.bf16.mxu0 %v3425
        %5830 = vmatpush1.bf16.msra.mxu0 %v3424
        %5831 = vmatprep.subr.bf16.mxu0 %v3433
        %5832 = vmatpush1.bf16.msra.mxu0 %v3432
        %5833 = vmatprep.subr.bf16.mxu0 %v3441
        %5834 = vmatpush1.bf16.msra.mxu0 %v3440
        %5835 = vmatprep.subr.bf16.mxu0 %v3449
        %5836 = vmatpush1.bf16.msra.mxu0 %v3448
        %5837 = vmatprep.subr.bf16.mxu0 %v3457
        %5838 = vmatpush1.bf16.msra.mxu0 %v3456
        %5839 = vmatprep.subr.bf16.mxu0 %v3465
        %5840 = vmatpush1.bf16.msra.mxu0 %v3464
        %5841 = vmatprep.subr.bf16.mxu0 %v3473
        %5842 = vmatpush1.bf16.msra.mxu0 %v3472
        %5843 = vmatprep.subr.bf16.mxu0 %v3481
        %5844 = vmatpush1.bf16.msra.mxu0 %v3480
        %5845 = vmatprep.subr.bf16.mxu0 %v3489
        %5846 = vmatpush1.bf16.msra.mxu0 %v3488
        %5847 = vmatprep.subr.bf16.mxu0 %v3497
        %5848 = vmatpush1.bf16.msra.mxu0 %v3496
        %5849 = vmatprep.subr.bf16.mxu0 %v3505
        %5850 = vmatpush1.bf16.msra.mxu0 %v3504
        %5851 = vmatprep.subr.bf16.mxu0 %v3513
        %5852 = vmatpush1.bf16.msra.mxu0 %v3512
        %5853 = vmatprep.subr.bf16.mxu0 %v3521
        %5854 = vmatpush1.bf16.msra.mxu0 %v3520
        %5855 = vmatprep.subr.bf16.mxu0 %v3529
        %5856 = vmatpush1.bf16.msra.mxu0 %v3528
        %5857 = vmatprep.mubr.bf16.mxu0 %v625
        %5858 = vmatmul.mubr.bf16.gmra.mrb[0].mxu0 %v624
        %v5859 = vpop.f32.mrb[0].mxu0
        %v5860 = vadd.f32 %v5819, %v5859
        %v5861 = vpop.f32.mrb[0].mxu0
        %v5862 = vadd.f32 %v5821, %v5861
        %v5863 = vpop.f32.mrb[0].mxu0
        %v5864 = vpop.f32.mrb[0].mxu0
        %5865 = vdwg.mxu0
        %5866 = vmatprep.subr.bf16.mxu0 %v3537
        %5867 = vmatpush1.bf16.msra.mxu0 %v3536
        %5868 = vmatprep.subr.bf16.mxu0 %v3545
        %5869 = vmatpush1.bf16.msra.mxu0 %v3544
        %5870 = vmatprep.subr.bf16.mxu0 %v3553
        %5871 = vmatpush1.bf16.msra.mxu0 %v3552
        %5872 = vmatprep.subr.bf16.mxu0 %v3561
        %5873 = vmatpush1.bf16.msra.mxu0 %v3560
        %5874 = vmatprep.subr.bf16.mxu0 %v3569
        %5875 = vmatpush1.bf16.msra.mxu0 %v3568
        %5876 = vmatprep.subr.bf16.mxu0 %v3577
        %5877 = vmatpush1.bf16.msra.mxu0 %v3576
        %5878 = vmatprep.subr.bf16.mxu0 %v3585
        %5879 = vmatpush1.bf16.msra.mxu0 %v3584
        %5880 = vmatprep.subr.bf16.mxu0 %v3593
        %5881 = vmatpush1.bf16.msra.mxu0 %v3592
        %5882 = vmatprep.subr.bf16.mxu0 %v3601
        %5883 = vmatpush1.bf16.msra.mxu0 %v3600
        %5884 = vmatprep.subr.bf16.mxu0 %v3609
        %5885 = vmatpush1.bf16.msra.mxu0 %v3608
        %5886 = vmatprep.subr.bf16.mxu0 %v3617
        %5887 = vmatpush1.bf16.msra.mxu0 %v3616
        %5888 = vmatprep.subr.bf16.mxu0 %v3625
        %5889 = vmatpush1.bf16.msra.mxu0 %v3624
        %5890 = vmatprep.subr.bf16.mxu0 %v3633
        %5891 = vmatpush1.bf16.msra.mxu0 %v3632
        %5892 = vmatprep.subr.bf16.mxu0 %v3641
        %5893 = vmatpush1.bf16.msra.mxu0 %v3640
        %5894 = vmatprep.subr.bf16.mxu0 %v3649
        %5895 = vmatpush1.bf16.msra.mxu0 %v3648
        %5896 = vmatprep.subr.bf16.mxu0 %v3657
        %5897 = vmatpush1.bf16.msra.mxu0 %v3656
        %5898 = vmatprep.mubr.bf16.mxu0 %v627
        %5899 = vmatmul.mubr.bf16.gmra.mrb[0].mxu0 %v626
        %v5900 = vpop.f32.mrb[0].mxu0
        %v5901 = vadd.f32 %v5860, %v5900
        %v5902 = vpop.f32.mrb[0].mxu0
        %v5903 = vadd.f32 %v5862, %v5902
        %v5904 = vpop.f32.mrb[0].mxu0
        %v5905 = vpop.f32.mrb[0].mxu0
        %5906 = vdwg.mxu0
        %5907 = vmatprep.subr.bf16.mxu0 %v3665
        %5908 = vmatpush1.bf16.msra.mxu0 %v3664
        %5909 = vmatprep.subr.bf16.mxu0 %v3673
        %5910 = vmatpush1.bf16.msra.mxu0 %v3672
        %5911 = vmatprep.subr.bf16.mxu0 %v3681
        %5912 = vmatpush1.bf16.msra.mxu0 %v3680
        %5913 = vmatprep.subr.bf16.mxu0 %v3689
        %5914 = vmatpush1.bf16.msra.mxu0 %v3688
        %5915 = vmatprep.subr.bf16.mxu0 %v3697
        %5916 = vmatpush1.bf16.msra.mxu0 %v3696
        %5917 = vmatprep.subr.bf16.mxu0 %v3705
        %5918 = vmatpush1.bf16.msra.mxu0 %v3704
        %5919 = vmatprep.subr.bf16.mxu0 %v3713
        %5920 = vmatpush1.bf16.msra.mxu0 %v3712
        %5921 = vmatprep.subr.bf16.mxu0 %v3721
        %5922 = vmatpush1.bf16.msra.mxu0 %v3720
        %5923 = vmatprep.subr.bf16.mxu0 %v3729
        %5924 = vmatpush1.bf16.msra.mxu0 %v3728
        %5925 = vmatprep.subr.bf16.mxu0 %v3737
        %5926 = vmatpush1.bf16.msra.mxu0 %v3736
        %5927 = vmatprep.subr.bf16.mxu0 %v3745
        %5928 = vmatpush1.bf16.msra.mxu0 %v3744
        %5929 = vmatprep.subr.bf16.mxu0 %v3753
        %5930 = vmatpush1.bf16.msra.mxu0 %v3752
        %5931 = vmatprep.subr.bf16.mxu0 %v3761
        %5932 = vmatpush1.bf16.msra.mxu0 %v3760
        %5933 = vmatprep.subr.bf16.mxu0 %v3769
        %5934 = vmatpush1.bf16.msra.mxu0 %v3768
        %5935 = vmatprep.subr.bf16.mxu0 %v3777
        %5936 = vmatpush1.bf16.msra.mxu0 %v3776
        %5937 = vmatprep.subr.bf16.mxu0 %v3785
        %5938 = vmatpush1.bf16.msra.mxu0 %v3784
        %5939 = vmatprep.mubr.bf16.mxu0 %v629
        %5940 = vmatmul.mubr.bf16.gmra.mrb[0].mxu0 %v628
        %v5941 = vpop.f32.mrb[0].mxu0
        %v5942 = vadd.f32 %v5901, %v5941
        %v5943 = vpop.f32.mrb[0].mxu0
        %v5944 = vadd.f32 %v5903, %v5943
        %v5945 = vpop.f32.mrb[0].mxu0
        %v5946 = vpop.f32.mrb[0].mxu0
        %5947 = vdwg.mxu0
        %5948 = vmatprep.subr.bf16.mxu0 %v3793
        %5949 = vmatpush1.bf16.msra.mxu0 %v3792
        %5950 = vmatprep.subr.bf16.mxu0 %v3801
        %5951 = vmatpush1.bf16.msra.mxu0 %v3800
        %5952 = vmatprep.subr.bf16.mxu0 %v3809
        %5953 = vmatpush1.bf16.msra.mxu0 %v3808
        %5954 = vmatprep.subr.bf16.mxu0 %v3817
        %5955 = vmatpush1.bf16.msra.mxu0 %v3816
        %5956 = vmatprep.subr.bf16.mxu0 %v3825
        %5957 = vmatpush1.bf16.msra.mxu0 %v3824
        %5958 = vmatprep.subr.bf16.mxu0 %v3833
        %5959 = vmatpush1.bf16.msra.mxu0 %v3832
        %5960 = vmatprep.subr.bf16.mxu0 %v3841
        %5961 = vmatpush1.bf16.msra.mxu0 %v3840
        %5962 = vmatprep.subr.bf16.mxu0 %v3849
        %5963 = vmatpush1.bf16.msra.mxu0 %v3848
        %5964 = vmatprep.subr.bf16.mxu0 %v3857
        %5965 = vmatpush1.bf16.msra.mxu0 %v3856
        %5966 = vmatprep.subr.bf16.mxu0 %v3865
        %5967 = vmatpush1.bf16.msra.mxu0 %v3864
        %5968 = vmatprep.subr.bf16.mxu0 %v3873
        %5969 = vmatpush1.bf16.msra.mxu0 %v3872
        %5970 = vmatprep.subr.bf16.mxu0 %v3881
        %5971 = vmatpush1.bf16.msra.mxu0 %v3880
        %5972 = vmatprep.subr.bf16.mxu0 %v3889
        %5973 = vmatpush1.bf16.msra.mxu0 %v3888
        %5974 = vmatprep.subr.bf16.mxu0 %v3897
        %5975 = vmatpush1.bf16.msra.mxu0 %v3896
        %5976 = vmatprep.subr.bf16.mxu0 %v3905
        %5977 = vmatpush1.bf16.msra.mxu0 %v3904
        %5978 = vmatprep.subr.bf16.mxu0 %v3913
        %5979 = vmatpush1.bf16.msra.mxu0 %v3912
        %5980 = vmatprep.mubr.bf16.mxu0 %v631
        %5981 = vmatmul.mubr.bf16.gmra.mrb[0].mxu0 %v630
        %v5982 = vpop.f32.mrb[0].mxu0
        %v5983 = vadd.f32 %v5942, %v5982
        %v5984 = vpop.f32.mrb[0].mxu0
        %v5985 = vadd.f32 %v5944, %v5984
        %v5986 = vpop.f32.mrb[0].mxu0
        %v5987 = vpop.f32.mrb[0].mxu0
        %5988 = vdwg.mxu0
        %5989 = vmatprep.subr.bf16.mxu0 %v3921
        %5990 = vmatpush1.bf16.msra.mxu0 %v3920
        %5991 = vmatprep.subr.bf16.mxu0 %v3929
        %5992 = vmatpush1.bf16.msra.mxu0 %v3928
        %5993 = vmatprep.subr.bf16.mxu0 %v3937
        %5994 = vmatpush1.bf16.msra.mxu0 %v3936
        %5995 = vmatprep.subr.bf16.mxu0 %v3945
        %5996 = vmatpush1.bf16.msra.mxu0 %v3944
        %5997 = vmatprep.subr.bf16.mxu0 %v3953
        %5998 = vmatpush1.bf16.msra.mxu0 %v3952
        %5999 = vmatprep.subr.bf16.mxu0 %v3961
        %6000 = vmatpush1.bf16.msra.mxu0 %v3960
        %6001 = vmatprep.subr.bf16.mxu0 %v3969
        %6002 = vmatpush1.bf16.msra.mxu0 %v3968
        %6003 = vmatprep.subr.bf16.mxu0 %v3977
        %6004 = vmatpush1.bf16.msra.mxu0 %v3976
        %6005 = vmatprep.subr.bf16.mxu0 %v3985
        %6006 = vmatpush1.bf16.msra.mxu0 %v3984
        %6007 = vmatprep.subr.bf16.mxu0 %v3993
        %6008 = vmatpush1.bf16.msra.mxu0 %v3992
        %6009 = vmatprep.subr.bf16.mxu0 %v4001
        %6010 = vmatpush1.bf16.msra.mxu0 %v4000
        %6011 = vmatprep.subr.bf16.mxu0 %v4009
        %6012 = vmatpush1.bf16.msra.mxu0 %v4008
        %6013 = vmatprep.subr.bf16.mxu0 %v4017
        %6014 = vmatpush1.bf16.msra.mxu0 %v4016
        %6015 = vmatprep.subr.bf16.mxu0 %v4025
        %6016 = vmatpush1.bf16.msra.mxu0 %v4024
        %6017 = vmatprep.subr.bf16.mxu0 %v4033
        %6018 = vmatpush1.bf16.msra.mxu0 %v4032
        %6019 = vmatprep.subr.bf16.mxu0 %v4041
        %6020 = vmatpush1.bf16.msra.mxu0 %v4040
        %6021 = vmatprep.mubr.bf16.mxu0 %v633
        %6022 = vmatmul.mubr.bf16.gmra.mrb[0].mxu0 %v632
        %v6023 = vpop.f32.mrb[0].mxu0
        %v6024 = vadd.f32 %v5983, %v6023
        %v6025 = vpop.f32.mrb[0].mxu0
        %v6026 = vadd.f32 %v5985, %v6025
        %v6027 = vpop.f32.mrb[0].mxu0
        %v6028 = vpop.f32.mrb[0].mxu0
        %6029 = vdwg.mxu0
        %6030 = vmatprep.subr.bf16.mxu0 %v4049
        %6031 = vmatpush1.bf16.msra.mxu0 %v4048
        %6032 = vmatprep.subr.bf16.mxu0 %v4057
        %6033 = vmatpush1.bf16.msra.mxu0 %v4056
        %6034 = vmatprep.subr.bf16.mxu0 %v4065
        %6035 = vmatpush1.bf16.msra.mxu0 %v4064
        %6036 = vmatprep.subr.bf16.mxu0 %v4073
        %6037 = vmatpush1.bf16.msra.mxu0 %v4072
        %6038 = vmatprep.subr.bf16.mxu0 %v4081
        %6039 = vmatpush1.bf16.msra.mxu0 %v4080
        %6040 = vmatprep.subr.bf16.mxu0 %v4089
        %6041 = vmatpush1.bf16.msra.mxu0 %v4088
        %6042 = vmatprep.subr.bf16.mxu0 %v4097
        %6043 = vmatpush1.bf16.msra.mxu0 %v4096
        %6044 = vmatprep.subr.bf16.mxu0 %v4105
        %6045 = vmatpush1.bf16.msra.mxu0 %v4104
        %6046 = vmatprep.subr.bf16.mxu0 %v4113
        %6047 = vmatpush1.bf16.msra.mxu0 %v4112
        %6048 = vmatprep.subr.bf16.mxu0 %v4121
        %6049 = vmatpush1.bf16.msra.mxu0 %v4120
        %6050 = vmatprep.subr.bf16.mxu0 %v4129
        %6051 = vmatpush1.bf16.msra.mxu0 %v4128
        %6052 = vmatprep.subr.bf16.mxu0 %v4137
        %6053 = vmatpush1.bf16.msra.mxu0 %v4136
        %6054 = vmatprep.subr.bf16.mxu0 %v4145
        %6055 = vmatpush1.bf16.msra.mxu0 %v4144
        %6056 = vmatprep.subr.bf16.mxu0 %v4153
        %6057 = vmatpush1.bf16.msra.mxu0 %v4152
        %6058 = vmatprep.subr.bf16.mxu0 %v4161
        %6059 = vmatpush1.bf16.msra.mxu0 %v4160
        %6060 = vmatprep.subr.bf16.mxu0 %v4169
        %6061 = vmatpush1.bf16.msra.mxu0 %v4168
        %6062 = vmatprep.mubr.bf16.mxu0 %v635
        %6063 = vmatmul.mubr.bf16.gmra.mrb[0].mxu0 %v634
        %v6064 = vpop.f32.mrb[0].mxu0
        %v6065 = vadd.f32 %v6024, %v6064
        %v6066 = vpop.f32.mrb[0].mxu0
        %v6067 = vadd.f32 %v6026, %v6066
        %v6068 = vpop.f32.mrb[0].mxu0
        %v6069 = vpop.f32.mrb[0].mxu0
        %6070 = vdwg.mxu0
        %6071 = vmatprep.subr.bf16.mxu0 %v4177
        %6072 = vmatpush1.bf16.msra.mxu0 %v4176
        %6073 = vmatprep.subr.bf16.mxu0 %v4185
        %6074 = vmatpush1.bf16.msra.mxu0 %v4184
        %6075 = vmatprep.subr.bf16.mxu0 %v4193
        %6076 = vmatpush1.bf16.msra.mxu0 %v4192
        %6077 = vmatprep.subr.bf16.mxu0 %v4201
        %6078 = vmatpush1.bf16.msra.mxu0 %v4200
        %6079 = vmatprep.subr.bf16.mxu0 %v4209
        %6080 = vmatpush1.bf16.msra.mxu0 %v4208
        %6081 = vmatprep.subr.bf16.mxu0 %v4217
        %6082 = vmatpush1.bf16.msra.mxu0 %v4216
        %6083 = vmatprep.subr.bf16.mxu0 %v4225
        %6084 = vmatpush1.bf16.msra.mxu0 %v4224
        %6085 = vmatprep.subr.bf16.mxu0 %v4233
        %6086 = vmatpush1.bf16.msra.mxu0 %v4232
        %6087 = vmatprep.subr.bf16.mxu0 %v4241
        %6088 = vmatpush1.bf16.msra.mxu0 %v4240
        %6089 = vmatprep.subr.bf16.mxu0 %v4249
        %6090 = vmatpush1.bf16.msra.mxu0 %v4248
        %6091 = vmatprep.subr.bf16.mxu0 %v4257
        %6092 = vmatpush1.bf16.msra.mxu0 %v4256
        %6093 = vmatprep.subr.bf16.mxu0 %v4265
        %6094 = vmatpush1.bf16.msra.mxu0 %v4264
        %6095 = vmatprep.subr.bf16.mxu0 %v4273
        %6096 = vmatpush1.bf16.msra.mxu0 %v4272
        %6097 = vmatprep.subr.bf16.mxu0 %v4281
        %6098 = vmatpush1.bf16.msra.mxu0 %v4280
        %6099 = vmatprep.subr.bf16.mxu0 %v4289
        %6100 = vmatpush1.bf16.msra.mxu0 %v4288
        %6101 = vmatprep.subr.bf16.mxu0 %v4297
        %6102 = vmatpush1.bf16.msra.mxu0 %v4296
        %6103 = vmatprep.mubr.bf16.mxu0 %v637
        %6104 = vmatmul.mubr.bf16.gmra.mrb[0].mxu0 %v636
        %v6105 = vpop.f32.mrb[0].mxu0
        %v6106 = vadd.f32 %v6065, %v6105
        %v6107 = vpop.f32.mrb[0].mxu0
        %v6108 = vadd.f32 %v6067, %v6107
        %v6109 = vpop.f32.mrb[0].mxu0
        %v6110 = vpop.f32.mrb[0].mxu0
        %6111 = vdwg.mxu0
        %6112 = vmatprep.subr.bf16.mxu0 %v4305
        %6113 = vmatpush1.bf16.msra.mxu0 %v4304
        %6114 = vmatprep.subr.bf16.mxu0 %v4313
        %6115 = vmatpush1.bf16.msra.mxu0 %v4312
        %6116 = vmatprep.subr.bf16.mxu0 %v4321
        %6117 = vmatpush1.bf16.msra.mxu0 %v4320
        %6118 = vmatprep.subr.bf16.mxu0 %v4329
        %6119 = vmatpush1.bf16.msra.mxu0 %v4328
        %6120 = vmatprep.subr.bf16.mxu0 %v4337
        %6121 = vmatpush1.bf16.msra.mxu0 %v4336
        %6122 = vmatprep.subr.bf16.mxu0 %v4345
        %6123 = vmatpush1.bf16.msra.mxu0 %v4344
        %6124 = vmatprep.subr.bf16.mxu0 %v4353
        %6125 = vmatpush1.bf16.msra.mxu0 %v4352
        %6126 = vmatprep.subr.bf16.mxu0 %v4361
        %6127 = vmatpush1.bf16.msra.mxu0 %v4360
        %6128 = vmatprep.subr.bf16.mxu0 %v4369
        %6129 = vmatpush1.bf16.msra.mxu0 %v4368
        %6130 = vmatprep.subr.bf16.mxu0 %v4377
        %6131 = vmatpush1.bf16.msra.mxu0 %v4376
        %6132 = vmatprep.subr.bf16.mxu0 %v4385
        %6133 = vmatpush1.bf16.msra.mxu0 %v4384
        %6134 = vmatprep.subr.bf16.mxu0 %v4393
        %6135 = vmatpush1.bf16.msra.mxu0 %v4392
        %6136 = vmatprep.subr.bf16.mxu0 %v4401
        %6137 = vmatpush1.bf16.msra.mxu0 %v4400
        %6138 = vmatprep.subr.bf16.mxu0 %v4409
        %6139 = vmatpush1.bf16.msra.mxu0 %v4408
        %6140 = vmatprep.subr.bf16.mxu0 %v4417
        %6141 = vmatpush1.bf16.msra.mxu0 %v4416
        %6142 = vmatprep.subr.bf16.mxu0 %v4425
        %6143 = vmatpush1.bf16.msra.mxu0 %v4424
        %6144 = vmatprep.mubr.bf16.mxu0 %v639
        %6145 = vmatmul.mubr.bf16.gmra.mrb[0].mxu0 %v638
        %v6146 = vpop.f32.mrb[0].mxu0
        %v6147 = vadd.f32 %v6106, %v6146
        %v6148 = vpop.f32.mrb[0].mxu0
        %v6149 = vadd.f32 %v6108, %v6148
        %v6150 = vpop.f32.mrb[0].mxu0
        %v6151 = vpop.f32.mrb[0].mxu0
        %6152 = vdwg.mxu0
        %6153 = vmatprep.subr.bf16.mxu0 %v4433
        %6154 = vmatpush1.bf16.msra.mxu0 %v4432
        %6155 = vmatprep.subr.bf16.mxu0 %v4441
        %6156 = vmatpush1.bf16.msra.mxu0 %v4440
        %6157 = vmatprep.subr.bf16.mxu0 %v4449
        %6158 = vmatpush1.bf16.msra.mxu0 %v4448
        %6159 = vmatprep.subr.bf16.mxu0 %v4457
        %6160 = vmatpush1.bf16.msra.mxu0 %v4456
        %6161 = vmatprep.subr.bf16.mxu0 %v4465
        %6162 = vmatpush1.bf16.msra.mxu0 %v4464
        %6163 = vmatprep.subr.bf16.mxu0 %v4473
        %6164 = vmatpush1.bf16.msra.mxu0 %v4472
        %6165 = vmatprep.subr.bf16.mxu0 %v4481
        %6166 = vmatpush1.bf16.msra.mxu0 %v4480
        %6167 = vmatprep.subr.bf16.mxu0 %v4489
        %6168 = vmatpush1.bf16.msra.mxu0 %v4488
        %6169 = vmatprep.subr.bf16.mxu0 %v4497
        %6170 = vmatpush1.bf16.msra.mxu0 %v4496
        %6171 = vmatprep.subr.bf16.mxu0 %v4505
        %6172 = vmatpush1.bf16.msra.mxu0 %v4504
        %6173 = vmatprep.subr.bf16.mxu0 %v4513
        %6174 = vmatpush1.bf16.msra.mxu0 %v4512
        %6175 = vmatprep.subr.bf16.mxu0 %v4521
        %6176 = vmatpush1.bf16.msra.mxu0 %v4520
        %6177 = vmatprep.subr.bf16.mxu0 %v4529
        %6178 = vmatpush1.bf16.msra.mxu0 %v4528
        %6179 = vmatprep.subr.bf16.mxu0 %v4537
        %6180 = vmatpush1.bf16.msra.mxu0 %v4536
        %6181 = vmatprep.subr.bf16.mxu0 %v4545
        %6182 = vmatpush1.bf16.msra.mxu0 %v4544
        %6183 = vmatprep.subr.bf16.mxu0 %v4553
        %6184 = vmatpush1.bf16.msra.mxu0 %v4552
        %6185 = vmatprep.mubr.bf16.mxu0 %v641
        %6186 = vmatmul.mubr.bf16.gmra.mrb[0].mxu0 %v640
        %v6187 = vpop.f32.mrb[0].mxu0
        %v6188 = vadd.f32 %v6147, %v6187
        %v6189 = vpop.f32.mrb[0].mxu0
        %v6190 = vadd.f32 %v6149, %v6189
        %v6191 = vpop.f32.mrb[0].mxu0
        %v6192 = vpop.f32.mrb[0].mxu0
        %6193 = vdwg.mxu0
        %6194 = vmatprep.subr.bf16.mxu0 %v4561
        %6195 = vmatpush1.bf16.msra.mxu0 %v4560
        %6196 = vmatprep.subr.bf16.mxu0 %v4569
        %6197 = vmatpush1.bf16.msra.mxu0 %v4568
        %6198 = vmatprep.subr.bf16.mxu0 %v4577
        %6199 = vmatpush1.bf16.msra.mxu0 %v4576
        %6200 = vmatprep.subr.bf16.mxu0 %v4585
        %6201 = vmatpush1.bf16.msra.mxu0 %v4584
        %6202 = vmatprep.subr.bf16.mxu0 %v4593
        %6203 = vmatpush1.bf16.msra.mxu0 %v4592
        %6204 = vmatprep.subr.bf16.mxu0 %v4601
        %6205 = vmatpush1.bf16.msra.mxu0 %v4600
        %6206 = vmatprep.subr.bf16.mxu0 %v4609
        %6207 = vmatpush1.bf16.msra.mxu0 %v4608
        %6208 = vmatprep.subr.bf16.mxu0 %v4617
        %6209 = vmatpush1.bf16.msra.mxu0 %v4616
        %6210 = vmatprep.subr.bf16.mxu0 %v4625
        %6211 = vmatpush1.bf16.msra.mxu0 %v4624
        %6212 = vmatprep.subr.bf16.mxu0 %v4633
        %6213 = vmatpush1.bf16.msra.mxu0 %v4632
        %6214 = vmatprep.subr.bf16.mxu0 %v4641
        %6215 = vmatpush1.bf16.msra.mxu0 %v4640
        %6216 = vmatprep.subr.bf16.mxu0 %v4649
        %6217 = vmatpush1.bf16.msra.mxu0 %v4648
        %6218 = vmatprep.subr.bf16.mxu0 %v4657
        %6219 = vmatpush1.bf16.msra.mxu0 %v4656
        %6220 = vmatprep.subr.bf16.mxu0 %v4665
        %6221 = vmatpush1.bf16.msra.mxu0 %v4664
        %6222 = vmatprep.subr.bf16.mxu0 %v4673
        %6223 = vmatpush1.bf16.msra.mxu0 %v4672
        %6224 = vmatprep.subr.bf16.mxu0 %v4681
        %6225 = vmatpush1.bf16.msra.mxu0 %v4680
        %6226 = vmatprep.mubr.bf16.mxu0 %v643
        %6227 = vmatmul.mubr.bf16.gmra.mrb[0].mxu0 %v642
        %v6228 = vpop.f32.mrb[0].mxu0
        %v6229 = vadd.f32 %v6188, %v6228
        %v6230 = vpop.f32.mrb[0].mxu0
        %v6231 = vadd.f32 %v6190, %v6230
        %v6232 = vpop.f32.mrb[0].mxu0
        %v6233 = vpop.f32.mrb[0].mxu0
        %6234 = vdwg.mxu0
        %6235 = vmatprep.subr.bf16.mxu0 %v4689
        %6236 = vmatpush1.bf16.msra.mxu0 %v4688
        %6237 = vmatprep.subr.bf16.mxu0 %v4697
        %6238 = vmatpush1.bf16.msra.mxu0 %v4696
        %6239 = vmatprep.subr.bf16.mxu0 %v4705
        %6240 = vmatpush1.bf16.msra.mxu0 %v4704
        %6241 = vmatprep.subr.bf16.mxu0 %v4713
        %6242 = vmatpush1.bf16.msra.mxu0 %v4712
        %6243 = vmatprep.subr.bf16.mxu0 %v4721
        %6244 = vmatpush1.bf16.msra.mxu0 %v4720
        %6245 = vmatprep.subr.bf16.mxu0 %v4729
        %6246 = vmatpush1.bf16.msra.mxu0 %v4728
        %6247 = vmatprep.subr.bf16.mxu0 %v4737
        %6248 = vmatpush1.bf16.msra.mxu0 %v4736
        %6249 = vmatprep.subr.bf16.mxu0 %v4745
        %6250 = vmatpush1.bf16.msra.mxu0 %v4744
        %6251 = vmatprep.subr.bf16.mxu0 %v4753
        %6252 = vmatpush1.bf16.msra.mxu0 %v4752
        %6253 = vmatprep.subr.bf16.mxu0 %v4761
        %6254 = vmatpush1.bf16.msra.mxu0 %v4760
        %6255 = vmatprep.subr.bf16.mxu0 %v4769
        %6256 = vmatpush1.bf16.msra.mxu0 %v4768
        %6257 = vmatprep.subr.bf16.mxu0 %v4777
        %6258 = vmatpush1.bf16.msra.mxu0 %v4776
        %6259 = vmatprep.subr.bf16.mxu0 %v4785
        %6260 = vmatpush1.bf16.msra.mxu0 %v4784
        %6261 = vmatprep.subr.bf16.mxu0 %v4793
        %6262 = vmatpush1.bf16.msra.mxu0 %v4792
        %6263 = vmatprep.subr.bf16.mxu0 %v4801
        %6264 = vmatpush1.bf16.msra.mxu0 %v4800
        %6265 = vmatprep.subr.bf16.mxu0 %v4809
        %6266 = vmatpush1.bf16.msra.mxu0 %v4808
        %6267 = vmatprep.mubr.bf16.mxu0 %v645
        %6268 = vmatmul.mubr.bf16.gmra.mrb[0].mxu0 %v644
        %v6269 = vpop.f32.mrb[0].mxu0
        %v6270 = vadd.f32 %v6229, %v6269
        %v6271 = vpop.f32.mrb[0].mxu0
        %v6272 = vadd.f32 %v6231, %v6271
        %v6273 = vpop.f32.mrb[0].mxu0
        %v6274 = vpop.f32.mrb[0].mxu0
        %6275 = vdwg.mxu0
        %6276 = vmatprep.subr.bf16.mxu0 %v4817
        %6277 = vmatpush1.bf16.msra.mxu0 %v4816
        %6278 = vmatprep.subr.bf16.mxu0 %v4825
        %6279 = vmatpush1.bf16.msra.mxu0 %v4824
        %6280 = vmatprep.subr.bf16.mxu0 %v4833
        %6281 = vmatpush1.bf16.msra.mxu0 %v4832
        %6282 = vmatprep.subr.bf16.mxu0 %v4841
        %6283 = vmatpush1.bf16.msra.mxu0 %v4840
        %6284 = vmatprep.subr.bf16.mxu0 %v4849
        %6285 = vmatpush1.bf16.msra.mxu0 %v4848
        %6286 = vmatprep.subr.bf16.mxu0 %v4857
        %6287 = vmatpush1.bf16.msra.mxu0 %v4856
        %6288 = vmatprep.subr.bf16.mxu0 %v4865
        %6289 = vmatpush1.bf16.msra.mxu0 %v4864
        %6290 = vmatprep.subr.bf16.mxu0 %v4873
        %6291 = vmatpush1.bf16.msra.mxu0 %v4872
        %6292 = vmatprep.subr.bf16.mxu0 %v4881
        %6293 = vmatpush1.bf16.msra.mxu0 %v4880
        %6294 = vmatprep.subr.bf16.mxu0 %v4889
        %6295 = vmatpush1.bf16.msra.mxu0 %v4888
        %6296 = vmatprep.subr.bf16.mxu0 %v4897
        %6297 = vmatpush1.bf16.msra.mxu0 %v4896
        %6298 = vmatprep.subr.bf16.mxu0 %v4905
        %6299 = vmatpush1.bf16.msra.mxu0 %v4904
        %6300 = vmatprep.subr.bf16.mxu0 %v4913
        %6301 = vmatpush1.bf16.msra.mxu0 %v4912
        %6302 = vmatprep.subr.bf16.mxu0 %v4921
        %6303 = vmatpush1.bf16.msra.mxu0 %v4920
        %6304 = vmatprep.subr.bf16.mxu0 %v4929
        %6305 = vmatpush1.bf16.msra.mxu0 %v4928
        %6306 = vmatprep.subr.bf16.mxu0 %v4937
        %6307 = vmatpush1.bf16.msra.mxu0 %v4936
        %6308 = vmatprep.mubr.bf16.mxu0 %v647
        %6309 = vmatmul.mubr.bf16.gmra.mrb[0].mxu0 %v646
        %v6310 = vpop.f32.mrb[0].mxu0
        %v6311 = vadd.f32 %v6270, %v6310
        %v6312 = vpop.f32.mrb[0].mxu0
        %v6313 = vadd.f32 %v6272, %v6312
        %v6314 = vpop.f32.mrb[0].mxu0
        %v6315 = vpop.f32.mrb[0].mxu0
        %6316 = vdwg.mxu0
        %6317 = vmatprep.subr.bf16.mxu0 %v4945
        %6318 = vmatpush1.bf16.msra.mxu0 %v4944
        %6319 = vmatprep.subr.bf16.mxu0 %v4953
        %6320 = vmatpush1.bf16.msra.mxu0 %v4952
        %6321 = vmatprep.subr.bf16.mxu0 %v4961
        %6322 = vmatpush1.bf16.msra.mxu0 %v4960
        %6323 = vmatprep.subr.bf16.mxu0 %v4969
        %6324 = vmatpush1.bf16.msra.mxu0 %v4968
        %6325 = vmatprep.subr.bf16.mxu0 %v4977
        %6326 = vmatpush1.bf16.msra.mxu0 %v4976
        %6327 = vmatprep.subr.bf16.mxu0 %v4985
        %6328 = vmatpush1.bf16.msra.mxu0 %v4984
        %6329 = vmatprep.subr.bf16.mxu0 %v4993
        %6330 = vmatpush1.bf16.msra.mxu0 %v4992
        %6331 = vmatprep.subr.bf16.mxu0 %v5001
        %6332 = vmatpush1.bf16.msra.mxu0 %v5000
        %6333 = vmatprep.subr.bf16.mxu0 %v5009
        %6334 = vmatpush1.bf16.msra.mxu0 %v5008
        %6335 = vmatprep.subr.bf16.mxu0 %v5017
        %6336 = vmatpush1.bf16.msra.mxu0 %v5016
        %6337 = vmatprep.subr.bf16.mxu0 %v5025
        %6338 = vmatpush1.bf16.msra.mxu0 %v5024
        %6339 = vmatprep.subr.bf16.mxu0 %v5033
        %6340 = vmatpush1.bf16.msra.mxu0 %v5032
        %6341 = vmatprep.subr.bf16.mxu0 %v5041
        %6342 = vmatpush1.bf16.msra.mxu0 %v5040
        %6343 = vmatprep.subr.bf16.mxu0 %v5049
        %6344 = vmatpush1.bf16.msra.mxu0 %v5048
        %6345 = vmatprep.subr.bf16.mxu0 %v5057
        %6346 = vmatpush1.bf16.msra.mxu0 %v5056
        %6347 = vmatprep.subr.bf16.mxu0 %v5065
        %6348 = vmatpush1.bf16.msra.mxu0 %v5064
        %6349 = vmatprep.mubr.bf16.mxu0 %v649
        %6350 = vmatmul.mubr.bf16.gmra.mrb[0].mxu0 %v648
        %v6351 = vpop.f32.mrb[0].mxu0
        %v6352 = vadd.f32 %v6311, %v6351
        %v6353 = vpop.f32.mrb[0].mxu0
        %v6354 = vadd.f32 %v6313, %v6353
        %v6355 = vpop.f32.mrb[0].mxu0
        %v6356 = vpop.f32.mrb[0].mxu0
        %6357 = vdwg.mxu0
        %6358 = vmatprep.subr.bf16.mxu0 %v5073
        %6359 = vmatpush1.bf16.msra.mxu0 %v5072
        %6360 = vmatprep.subr.bf16.mxu0 %v5081
        %6361 = vmatpush1.bf16.msra.mxu0 %v5080
        %6362 = vmatprep.subr.bf16.mxu0 %v5089
        %6363 = vmatpush1.bf16.msra.mxu0 %v5088
        %6364 = vmatprep.subr.bf16.mxu0 %v5097
        %6365 = vmatpush1.bf16.msra.mxu0 %v5096
        %6366 = vmatprep.subr.bf16.mxu0 %v5105
        %6367 = vmatpush1.bf16.msra.mxu0 %v5104
        %6368 = vmatprep.subr.bf16.mxu0 %v5113
        %6369 = vmatpush1.bf16.msra.mxu0 %v5112
        %6370 = vmatprep.subr.bf16.mxu0 %v5121
        %6371 = vmatpush1.bf16.msra.mxu0 %v5120
        %6372 = vmatprep.subr.bf16.mxu0 %v5129
        %6373 = vmatpush1.bf16.msra.mxu0 %v5128
        %6374 = vmatprep.subr.bf16.mxu0 %v5137
        %6375 = vmatpush1.bf16.msra.mxu0 %v5136
        %6376 = vmatprep.subr.bf16.mxu0 %v5145
        %6377 = vmatpush1.bf16.msra.mxu0 %v5144
        %6378 = vmatprep.subr.bf16.mxu0 %v5153
        %6379 = vmatpush1.bf16.msra.mxu0 %v5152
        %6380 = vmatprep.subr.bf16.mxu0 %v5161
        %6381 = vmatpush1.bf16.msra.mxu0 %v5160
        %6382 = vmatprep.subr.bf16.mxu0 %v5169
        %6383 = vmatpush1.bf16.msra.mxu0 %v5168
        %6384 = vmatprep.subr.bf16.mxu0 %v5177
        %6385 = vmatpush1.bf16.msra.mxu0 %v5176
        %6386 = vmatprep.subr.bf16.mxu0 %v5185
        %6387 = vmatpush1.bf16.msra.mxu0 %v5184
        %6388 = vmatprep.subr.bf16.mxu0 %v5193
        %6389 = vmatpush1.bf16.msra.mxu0 %v5192
        %6390 = vmatprep.mubr.bf16.mxu0 %v651
        %6391 = vmatmul.mubr.bf16.gmra.mrb[0].mxu0 %v650
        %v6392 = vpop.f32.mrb[0].mxu0
        %v6393 = vadd.f32 %v6352, %v6392
        %v6394 = vpop.f32.mrb[0].mxu0
        %v6395 = vadd.f32 %v6354, %v6394
        %v6396 = vpop.f32.mrb[0].mxu0
        %v6397 = vpop.f32.mrb[0].mxu0
        %6398 = vdwg.mxu0
        %6399 = vmatprep.subr.bf16.mxu0 %v5201
        %6400 = vmatpush1.bf16.msra.mxu0 %v5200
        %6401 = vmatprep.subr.bf16.mxu0 %v5209
        %6402 = vmatpush1.bf16.msra.mxu0 %v5208
        %6403 = vmatprep.subr.bf16.mxu0 %v5217
        %6404 = vmatpush1.bf16.msra.mxu0 %v5216
        %6405 = vmatprep.subr.bf16.mxu0 %v5225
        %6406 = vmatpush1.bf16.msra.mxu0 %v5224
        %6407 = vmatprep.subr.bf16.mxu0 %v5233
        %6408 = vmatpush1.bf16.msra.mxu0 %v5232
        %6409 = vmatprep.subr.bf16.mxu0 %v5241
        %6410 = vmatpush1.bf16.msra.mxu0 %v5240
        %6411 = vmatprep.subr.bf16.mxu0 %v5249
        %6412 = vmatpush1.bf16.msra.mxu0 %v5248
        %6413 = vmatprep.subr.bf16.mxu0 %v5257
        %6414 = vmatpush1.bf16.msra.mxu0 %v5256
        %6415 = vmatprep.subr.bf16.mxu0 %v5265
        %6416 = vmatpush1.bf16.msra.mxu0 %v5264
        %6417 = vmatprep.subr.bf16.mxu0 %v5273
        %6418 = vmatpush1.bf16.msra.mxu0 %v5272
        %6419 = vmatprep.subr.bf16.mxu0 %v5281
        %6420 = vmatpush1.bf16.msra.mxu0 %v5280
        %6421 = vmatprep.subr.bf16.mxu0 %v5289
        %6422 = vmatpush1.bf16.msra.mxu0 %v5288
        %6423 = vmatprep.subr.bf16.mxu0 %v5297
        %6424 = vmatpush1.bf16.msra.mxu0 %v5296
        %6425 = vmatprep.subr.bf16.mxu0 %v5305
        %6426 = vmatpush1.bf16.msra.mxu0 %v5304
        %6427 = vmatprep.subr.bf16.mxu0 %v5313
        %6428 = vmatpush1.bf16.msra.mxu0 %v5312
        %6429 = vmatprep.subr.bf16.mxu0 %v5321
        %6430 = vmatpush1.bf16.msra.mxu0 %v5320
        %6431 = vmatprep.mubr.bf16.mxu0 %v653
        %6432 = vmatmul.mubr.bf16.gmra.mrb[0].mxu0 %v652
        %v6433 = vpop.f32.mrb[0].mxu0
        %v6434 = vadd.f32 %v6393, %v6433
        %v6435 = vpop.f32.mrb[0].mxu0
        %v6436 = vadd.f32 %v6395, %v6435
        %v6437 = vpop.f32.mrb[0].mxu0
        %v6438 = vpop.f32.mrb[0].mxu0
        %6439 = vdwg.mxu0
        %6440 = vmatprep.subr.bf16.mxu0 %v5329
        %6441 = vmatpush1.bf16.msra.mxu0 %v5328
        %6442 = vmatprep.subr.bf16.mxu0 %v5337
        %6443 = vmatpush1.bf16.msra.mxu0 %v5336
        %6444 = vmatprep.subr.bf16.mxu0 %v5345
        %6445 = vmatpush1.bf16.msra.mxu0 %v5344
        %6446 = vmatprep.subr.bf16.mxu0 %v5353
        %6447 = vmatpush1.bf16.msra.mxu0 %v5352
        %6448 = vmatprep.subr.bf16.mxu0 %v5361
        %6449 = vmatpush1.bf16.msra.mxu0 %v5360
        %6450 = vmatprep.subr.bf16.mxu0 %v5369
        %6451 = vmatpush1.bf16.msra.mxu0 %v5368
        %6452 = vmatprep.subr.bf16.mxu0 %v5377
        %6453 = vmatpush1.bf16.msra.mxu0 %v5376
        %6454 = vmatprep.subr.bf16.mxu0 %v5385
        %6455 = vmatpush1.bf16.msra.mxu0 %v5384
        %6456 = vmatprep.subr.bf16.mxu0 %v5393
        %6457 = vmatpush1.bf16.msra.mxu0 %v5392
        %6458 = vmatprep.subr.bf16.mxu0 %v5401
        %6459 = vmatpush1.bf16.msra.mxu0 %v5400
        %6460 = vmatprep.subr.bf16.mxu0 %v5409
        %6461 = vmatpush1.bf16.msra.mxu0 %v5408
        %6462 = vmatprep.subr.bf16.mxu0 %v5417
        %6463 = vmatpush1.bf16.msra.mxu0 %v5416
        %6464 = vmatprep.subr.bf16.mxu0 %v5425
        %6465 = vmatpush1.bf16.msra.mxu0 %v5424
        %6466 = vmatprep.subr.bf16.mxu0 %v5433
        %6467 = vmatpush1.bf16.msra.mxu0 %v5432
        %6468 = vmatprep.subr.bf16.mxu0 %v5441
        %6469 = vmatpush1.bf16.msra.mxu0 %v5440
        %6470 = vmatprep.subr.bf16.mxu0 %v5449
        %6471 = vmatpush1.bf16.msra.mxu0 %v5448
        %6472 = vmatprep.mubr.bf16.mxu0 %v655
        %6473 = vmatmul.mubr.bf16.gmra.mrb[0].mxu0 %v654
        %v6474 = vpop.f32.mrb[0].mxu0
        %v6475 = vadd.f32 %v6434, %v6474
        %v6476 = vpop.f32.mrb[0].mxu0
        %v6477 = vadd.f32 %v6436, %v6476
        %v6478 = vpop.f32.mrb[0].mxu0
        %v6479 = vpop.f32.mrb[0].mxu0
        %6480 = vdwg.mxu0
        %6481 = vmatprep.subr.bf16.mxu0 %v2259
        %6482 = vmatpush1.bf16.msra.mxu0 %v2258
        %6483 = vmatprep.subr.bf16.mxu0 %v2267
        %6484 = vmatpush1.bf16.msra.mxu0 %v2266
        %6485 = vmatprep.subr.bf16.mxu0 %v2275
        %6486 = vmatpush1.bf16.msra.mxu0 %v2274
        %6487 = vmatprep.subr.bf16.mxu0 %v2283
        %6488 = vmatpush1.bf16.msra.mxu0 %v2282
        %6489 = vmatprep.subr.bf16.mxu0 %v2291
        %6490 = vmatpush1.bf16.msra.mxu0 %v2290
        %6491 = vmatprep.subr.bf16.mxu0 %v2299
        %6492 = vmatpush1.bf16.msra.mxu0 %v2298
        %6493 = vmatprep.subr.bf16.mxu0 %v2307
        %6494 = vmatpush1.bf16.msra.mxu0 %v2306
        %6495 = vmatprep.subr.bf16.mxu0 %v2315
        %6496 = vmatpush1.bf16.msra.mxu0 %v2314
        %6497 = vmatprep.subr.bf16.mxu0 %v2323
        %6498 = vmatpush1.bf16.msra.mxu0 %v2322
        %6499 = vmatprep.subr.bf16.mxu0 %v2331
        %6500 = vmatpush1.bf16.msra.mxu0 %v2330
        %6501 = vmatprep.subr.bf16.mxu0 %v2339
        %6502 = vmatpush1.bf16.msra.mxu0 %v2338
        %6503 = vmatprep.subr.bf16.mxu0 %v2347
        %6504 = vmatpush1.bf16.msra.mxu0 %v2346
        %6505 = vmatprep.subr.bf16.mxu0 %v2355
        %6506 = vmatpush1.bf16.msra.mxu0 %v2354
        %6507 = vmatprep.subr.bf16.mxu0 %v2363
        %6508 = vmatpush1.bf16.msra.mxu0 %v2362
        %6509 = vmatprep.subr.bf16.mxu0 %v2371
        %6510 = vmatpush1.bf16.msra.mxu0 %v2370
        %6511 = vmatprep.subr.bf16.mxu0 %v2379
        %6512 = vmatpush1.bf16.msra.mxu0 %v2378
        %6513 = vmatprep.mubr.bf16.mxu0 %v607
        %6514 = vmatmul.mubr.bf16.gmra.mrb[0].mxu0 %v606
        %v6515 = vpop.f32.mrb[0].mxu0
        %v6516 = vadd.f32 0.0, %v6515
        %v6517 = vpop.f32.mrb[0].mxu0
        %v6518 = vadd.f32 0.0, %v6517
        %v6519 = vpop.f32.mrb[0].mxu0
        %v6520 = vpop.f32.mrb[0].mxu0
        %6521 = vdwg.mxu0
        %6522 = vmatprep.subr.bf16.mxu0 %v2387
        %6523 = vmatpush1.bf16.msra.mxu0 %v2386
        %6524 = vmatprep.subr.bf16.mxu0 %v2395
        %6525 = vmatpush1.bf16.msra.mxu0 %v2394
        %6526 = vmatprep.subr.bf16.mxu0 %v2403
        %6527 = vmatpush1.bf16.msra.mxu0 %v2402
        %6528 = vmatprep.subr.bf16.mxu0 %v2411
        %6529 = vmatpush1.bf16.msra.mxu0 %v2410
        %6530 = vmatprep.subr.bf16.mxu0 %v2419
        %6531 = vmatpush1.bf16.msra.mxu0 %v2418
        %6532 = vmatprep.subr.bf16.mxu0 %v2427
        %6533 = vmatpush1.bf16.msra.mxu0 %v2426
        %6534 = vmatprep.subr.bf16.mxu0 %v2435
        %6535 = vmatpush1.bf16.msra.mxu0 %v2434
        %6536 = vmatprep.subr.bf16.mxu0 %v2443
        %6537 = vmatpush1.bf16.msra.mxu0 %v2442
        %6538 = vmatprep.subr.bf16.mxu0 %v2451
        %6539 = vmatpush1.bf16.msra.mxu0 %v2450
        %6540 = vmatprep.subr.bf16.mxu0 %v2459
        %6541 = vmatpush1.bf16.msra.mxu0 %v2458
        %6542 = vmatprep.subr.bf16.mxu0 %v2467
        %6543 = vmatpush1.bf16.msra.mxu0 %v2466
        %6544 = vmatprep.subr.bf16.mxu0 %v2475
        %6545 = vmatpush1.bf16.msra.mxu0 %v2474
        %6546 = vmatprep.subr.bf16.mxu0 %v2483
        %6547 = vmatpush1.bf16.msra.mxu0 %v2482
        %6548 = vmatprep.subr.bf16.mxu0 %v2491
        %6549 = vmatpush1.bf16.msra.mxu0 %v2490
        %6550 = vmatprep.subr.bf16.mxu0 %v2499
        %6551 = vmatpush1.bf16.msra.mxu0 %v2498
        %6552 = vmatprep.subr.bf16.mxu0 %v2507
        %6553 = vmatpush1.bf16.msra.mxu0 %v2506
        %6554 = vmatprep.mubr.bf16.mxu0 %v609
        %6555 = vmatmul.mubr.bf16.gmra.mrb[0].mxu0 %v608
        %v6556 = vpop.f32.mrb[0].mxu0
        %v6557 = vadd.f32 %v6516, %v6556
        %v6558 = vpop.f32.mrb[0].mxu0
        %v6559 = vadd.f32 %v6518, %v6558
        %v6560 = vpop.f32.mrb[0].mxu0
        %v6561 = vpop.f32.mrb[0].mxu0
        %6562 = vdwg.mxu0
        %6563 = vmatprep.subr.bf16.mxu0 %v2515
        %6564 = vmatpush1.bf16.msra.mxu0 %v2514
        %6565 = vmatprep.subr.bf16.mxu0 %v2523
        %6566 = vmatpush1.bf16.msra.mxu0 %v2522
        %6567 = vmatprep.subr.bf16.mxu0 %v2531
        %6568 = vmatpush1.bf16.msra.mxu0 %v2530
        %6569 = vmatprep.subr.bf16.mxu0 %v2539
        %6570 = vmatpush1.bf16.msra.mxu0 %v2538
        %6571 = vmatprep.subr.bf16.mxu0 %v2547
        %6572 = vmatpush1.bf16.msra.mxu0 %v2546
        %6573 = vmatprep.subr.bf16.mxu0 %v2555
        %6574 = vmatpush1.bf16.msra.mxu0 %v2554
        %6575 = vmatprep.subr.bf16.mxu0 %v2563
        %6576 = vmatpush1.bf16.msra.mxu0 %v2562
        %6577 = vmatprep.subr.bf16.mxu0 %v2571
        %6578 = vmatpush1.bf16.msra.mxu0 %v2570
        %6579 = vmatprep.subr.bf16.mxu0 %v2579
        %6580 = vmatpush1.bf16.msra.mxu0 %v2578
        %6581 = vmatprep.subr.bf16.mxu0 %v2587
        %6582 = vmatpush1.bf16.msra.mxu0 %v2586
        %6583 = vmatprep.subr.bf16.mxu0 %v2595
        %6584 = vmatpush1.bf16.msra.mxu0 %v2594
        %6585 = vmatprep.subr.bf16.mxu0 %v2603
        %6586 = vmatpush1.bf16.msra.mxu0 %v2602
        %6587 = vmatprep.subr.bf16.mxu0 %v2611
        %6588 = vmatpush1.bf16.msra.mxu0 %v2610
        %6589 = vmatprep.subr.bf16.mxu0 %v2619
        %6590 = vmatpush1.bf16.msra.mxu0 %v2618
        %6591 = vmatprep.subr.bf16.mxu0 %v2627
        %6592 = vmatpush1.bf16.msra.mxu0 %v2626
        %6593 = vmatprep.subr.bf16.mxu0 %v2635
        %6594 = vmatpush1.bf16.msra.mxu0 %v2634
        %6595 = vmatprep.mubr.bf16.mxu0 %v611
        %6596 = vmatmul.mubr.bf16.gmra.mrb[0].mxu0 %v610
        %v6597 = vpop.f32.mrb[0].mxu0
        %v6598 = vadd.f32 %v6557, %v6597
        %v6599 = vpop.f32.mrb[0].mxu0
        %v6600 = vadd.f32 %v6559, %v6599
        %v6601 = vpop.f32.mrb[0].mxu0
        %v6602 = vpop.f32.mrb[0].mxu0
        %6603 = vdwg.mxu0
        %6604 = vmatprep.subr.bf16.mxu0 %v2643
        %6605 = vmatpush1.bf16.msra.mxu0 %v2642
        %6606 = vmatprep.subr.bf16.mxu0 %v2651
        %6607 = vmatpush1.bf16.msra.mxu0 %v2650
        %6608 = vmatprep.subr.bf16.mxu0 %v2659
        %6609 = vmatpush1.bf16.msra.mxu0 %v2658
        %6610 = vmatprep.subr.bf16.mxu0 %v2667
        %6611 = vmatpush1.bf16.msra.mxu0 %v2666
        %6612 = vmatprep.subr.bf16.mxu0 %v2675
        %6613 = vmatpush1.bf16.msra.mxu0 %v2674
        %6614 = vmatprep.subr.bf16.mxu0 %v2683
        %6615 = vmatpush1.bf16.msra.mxu0 %v2682
        %6616 = vmatprep.subr.bf16.mxu0 %v2691
        %6617 = vmatpush1.bf16.msra.mxu0 %v2690
        %6618 = vmatprep.subr.bf16.mxu0 %v2699
        %6619 = vmatpush1.bf16.msra.mxu0 %v2698
        %6620 = vmatprep.subr.bf16.mxu0 %v2707
        %6621 = vmatpush1.bf16.msra.mxu0 %v2706
        %6622 = vmatprep.subr.bf16.mxu0 %v2715
        %6623 = vmatpush1.bf16.msra.mxu0 %v2714
        %6624 = vmatprep.subr.bf16.mxu0 %v2723
        %6625 = vmatpush1.bf16.msra.mxu0 %v2722
        %6626 = vmatprep.subr.bf16.mxu0 %v2731
        %6627 = vmatpush1.bf16.msra.mxu0 %v2730
        %6628 = vmatprep.subr.bf16.mxu0 %v2739
        %6629 = vmatpush1.bf16.msra.mxu0 %v2738
        %6630 = vmatprep.subr.bf16.mxu0 %v2747
        %6631 = vmatpush1.bf16.msra.mxu0 %v2746
        %6632 = vmatprep.subr.bf16.mxu0 %v2755
        %6633 = vmatpush1.bf16.msra.mxu0 %v2754
        %6634 = vmatprep.subr.bf16.mxu0 %v2763
        %6635 = vmatpush1.bf16.msra.mxu0 %v2762
        %6636 = vmatprep.mubr.bf16.mxu0 %v613
        %6637 = vmatmul.mubr.bf16.gmra.mrb[0].mxu0 %v612
        %v6638 = vpop.f32.mrb[0].mxu0
        %v6639 = vadd.f32 %v6598, %v6638
        %v6640 = vpop.f32.mrb[0].mxu0
        %v6641 = vadd.f32 %v6600, %v6640
        %v6642 = vpop.f32.mrb[0].mxu0
        %v6643 = vpop.f32.mrb[0].mxu0
        %6644 = vdwg.mxu0
        %6645 = vmatprep.subr.bf16.mxu0 %v2771
        %6646 = vmatpush1.bf16.msra.mxu0 %v2770
        %6647 = vmatprep.subr.bf16.mxu0 %v2779
        %6648 = vmatpush1.bf16.msra.mxu0 %v2778
        %6649 = vmatprep.subr.bf16.mxu0 %v2787
        %6650 = vmatpush1.bf16.msra.mxu0 %v2786
        %6651 = vmatprep.subr.bf16.mxu0 %v2795
        %6652 = vmatpush1.bf16.msra.mxu0 %v2794
        %6653 = vmatprep.subr.bf16.mxu0 %v2803
        %6654 = vmatpush1.bf16.msra.mxu0 %v2802
        %6655 = vmatprep.subr.bf16.mxu0 %v2811
        %6656 = vmatpush1.bf16.msra.mxu0 %v2810
        %6657 = vmatprep.subr.bf16.mxu0 %v2819
        %6658 = vmatpush1.bf16.msra.mxu0 %v2818
        %6659 = vmatprep.subr.bf16.mxu0 %v2827
        %6660 = vmatpush1.bf16.msra.mxu0 %v2826
        %6661 = vmatprep.subr.bf16.mxu0 %v2835
        %6662 = vmatpush1.bf16.msra.mxu0 %v2834
        %6663 = vmatprep.subr.bf16.mxu0 %v2843
        %6664 = vmatpush1.bf16.msra.mxu0 %v2842
        %6665 = vmatprep.subr.bf16.mxu0 %v2851
        %6666 = vmatpush1.bf16.msra.mxu0 %v2850
        %6667 = vmatprep.subr.bf16.mxu0 %v2859
        %6668 = vmatpush1.bf16.msra.mxu0 %v2858
        %6669 = vmatprep.subr.bf16.mxu0 %v2867
        %6670 = vmatpush1.bf16.msra.mxu0 %v2866
        %6671 = vmatprep.subr.bf16.mxu0 %v2875
        %6672 = vmatpush1.bf16.msra.mxu0 %v2874
        %6673 = vmatprep.subr.bf16.mxu0 %v2883
        %6674 = vmatpush1.bf16.msra.mxu0 %v2882
        %6675 = vmatprep.subr.bf16.mxu0 %v2891
        %6676 = vmatpush1.bf16.msra.mxu0 %v2890
        %6677 = vmatprep.mubr.bf16.mxu0 %v615
        %6678 = vmatmul.mubr.bf16.gmra.mrb[0].mxu0 %v614
        %v6679 = vpop.f32.mrb[0].mxu0
        %v6680 = vadd.f32 %v6639, %v6679
        %v6681 = vpop.f32.mrb[0].mxu0
        %v6682 = vadd.f32 %v6641, %v6681
        %v6683 = vpop.f32.mrb[0].mxu0
        %v6684 = vpop.f32.mrb[0].mxu0
        %6685 = vdwg.mxu0
        %6686 = vmatprep.subr.bf16.mxu0 %v2899
        %6687 = vmatpush1.bf16.msra.mxu0 %v2898
        %6688 = vmatprep.subr.bf16.mxu0 %v2907
        %6689 = vmatpush1.bf16.msra.mxu0 %v2906
        %6690 = vmatprep.subr.bf16.mxu0 %v2915
        %6691 = vmatpush1.bf16.msra.mxu0 %v2914
        %6692 = vmatprep.subr.bf16.mxu0 %v2923
        %6693 = vmatpush1.bf16.msra.mxu0 %v2922
        %6694 = vmatprep.subr.bf16.mxu0 %v2931
        %6695 = vmatpush1.bf16.msra.mxu0 %v2930
        %6696 = vmatprep.subr.bf16.mxu0 %v2939
        %6697 = vmatpush1.bf16.msra.mxu0 %v2938
        %6698 = vmatprep.subr.bf16.mxu0 %v2947
        %6699 = vmatpush1.bf16.msra.mxu0 %v2946
        %6700 = vmatprep.subr.bf16.mxu0 %v2955
        %6701 = vmatpush1.bf16.msra.mxu0 %v2954
        %6702 = vmatprep.subr.bf16.mxu0 %v2963
        %6703 = vmatpush1.bf16.msra.mxu0 %v2962
        %6704 = vmatprep.subr.bf16.mxu0 %v2971
        %6705 = vmatpush1.bf16.msra.mxu0 %v2970
        %6706 = vmatprep.subr.bf16.mxu0 %v2979
        %6707 = vmatpush1.bf16.msra.mxu0 %v2978
        %6708 = vmatprep.subr.bf16.mxu0 %v2987
        %6709 = vmatpush1.bf16.msra.mxu0 %v2986
        %6710 = vmatprep.subr.bf16.mxu0 %v2995
        %6711 = vmatpush1.bf16.msra.mxu0 %v2994
        %6712 = vmatprep.subr.bf16.mxu0 %v3003
        %6713 = vmatpush1.bf16.msra.mxu0 %v3002
        %6714 = vmatprep.subr.bf16.mxu0 %v3011
        %6715 = vmatpush1.bf16.msra.mxu0 %v3010
        %6716 = vmatprep.subr.bf16.mxu0 %v3019
        %6717 = vmatpush1.bf16.msra.mxu0 %v3018
        %6718 = vmatprep.mubr.bf16.mxu0 %v617
        %6719 = vmatmul.mubr.bf16.gmra.mrb[0].mxu0 %v616
        %v6720 = vpop.f32.mrb[0].mxu0
        %v6721 = vadd.f32 %v6680, %v6720
        %v6722 = vpop.f32.mrb[0].mxu0
        %v6723 = vadd.f32 %v6682, %v6722
        %v6724 = vpop.f32.mrb[0].mxu0
        %v6725 = vpop.f32.mrb[0].mxu0
        %6726 = vdwg.mxu0
        %6727 = vmatprep.subr.bf16.mxu0 %v3027
        %6728 = vmatpush1.bf16.msra.mxu0 %v3026
        %6729 = vmatprep.subr.bf16.mxu0 %v3035
        %6730 = vmatpush1.bf16.msra.mxu0 %v3034
        %6731 = vmatprep.subr.bf16.mxu0 %v3043
        %6732 = vmatpush1.bf16.msra.mxu0 %v3042
        %6733 = vmatprep.subr.bf16.mxu0 %v3051
        %6734 = vmatpush1.bf16.msra.mxu0 %v3050
        %6735 = vmatprep.subr.bf16.mxu0 %v3059
        %6736 = vmatpush1.bf16.msra.mxu0 %v3058
        %6737 = vmatprep.subr.bf16.mxu0 %v3067
        %6738 = vmatpush1.bf16.msra.mxu0 %v3066
        %6739 = vmatprep.subr.bf16.mxu0 %v3075
        %6740 = vmatpush1.bf16.msra.mxu0 %v3074
        %6741 = vmatprep.subr.bf16.mxu0 %v3083
        %6742 = vmatpush1.bf16.msra.mxu0 %v3082
        %6743 = vmatprep.subr.bf16.mxu0 %v3091
        %6744 = vmatpush1.bf16.msra.mxu0 %v3090
        %6745 = vmatprep.subr.bf16.mxu0 %v3099
        %6746 = vmatpush1.bf16.msra.mxu0 %v3098
        %6747 = vmatprep.subr.bf16.mxu0 %v3107
        %6748 = vmatpush1.bf16.msra.mxu0 %v3106
        %6749 = vmatprep.subr.bf16.mxu0 %v3115
        %6750 = vmatpush1.bf16.msra.mxu0 %v3114
        %6751 = vmatprep.subr.bf16.mxu0 %v3123
        %6752 = vmatpush1.bf16.msra.mxu0 %v3122
        %6753 = vmatprep.subr.bf16.mxu0 %v3131
        %6754 = vmatpush1.bf16.msra.mxu0 %v3130
        %6755 = vmatprep.subr.bf16.mxu0 %v3139
        %6756 = vmatpush1.bf16.msra.mxu0 %v3138
        %6757 = vmatprep.subr.bf16.mxu0 %v3147
        %6758 = vmatpush1.bf16.msra.mxu0 %v3146
        %6759 = vmatprep.mubr.bf16.mxu0 %v619
        %6760 = vmatmul.mubr.bf16.gmra.mrb[0].mxu0 %v618
        %v6761 = vpop.f32.mrb[0].mxu0
        %v6762 = vadd.f32 %v6721, %v6761
        %v6763 = vpop.f32.mrb[0].mxu0
        %v6764 = vadd.f32 %v6723, %v6763
        %v6765 = vpop.f32.mrb[0].mxu0
        %v6766 = vpop.f32.mrb[0].mxu0
        %6767 = vdwg.mxu0
        %6768 = vmatprep.subr.bf16.mxu0 %v3155
        %6769 = vmatpush1.bf16.msra.mxu0 %v3154
        %6770 = vmatprep.subr.bf16.mxu0 %v3163
        %6771 = vmatpush1.bf16.msra.mxu0 %v3162
        %6772 = vmatprep.subr.bf16.mxu0 %v3171
        %6773 = vmatpush1.bf16.msra.mxu0 %v3170
        %6774 = vmatprep.subr.bf16.mxu0 %v3179
        %6775 = vmatpush1.bf16.msra.mxu0 %v3178
        %6776 = vmatprep.subr.bf16.mxu0 %v3187
        %6777 = vmatpush1.bf16.msra.mxu0 %v3186
        %6778 = vmatprep.subr.bf16.mxu0 %v3195
        %6779 = vmatpush1.bf16.msra.mxu0 %v3194
        %6780 = vmatprep.subr.bf16.mxu0 %v3203
        %6781 = vmatpush1.bf16.msra.mxu0 %v3202
        %6782 = vmatprep.subr.bf16.mxu0 %v3211
        %6783 = vmatpush1.bf16.msra.mxu0 %v3210
        %6784 = vmatprep.subr.bf16.mxu0 %v3219
        %6785 = vmatpush1.bf16.msra.mxu0 %v3218
        %6786 = vmatprep.subr.bf16.mxu0 %v3227
        %6787 = vmatpush1.bf16.msra.mxu0 %v3226
        %6788 = vmatprep.subr.bf16.mxu0 %v3235
        %6789 = vmatpush1.bf16.msra.mxu0 %v3234
        %6790 = vmatprep.subr.bf16.mxu0 %v3243
        %6791 = vmatpush1.bf16.msra.mxu0 %v3242
        %6792 = vmatprep.subr.bf16.mxu0 %v3251
        %6793 = vmatpush1.bf16.msra.mxu0 %v3250
        %6794 = vmatprep.subr.bf16.mxu0 %v3259
        %6795 = vmatpush1.bf16.msra.mxu0 %v3258
        %6796 = vmatprep.subr.bf16.mxu0 %v3267
        %6797 = vmatpush1.bf16.msra.mxu0 %v3266
        %6798 = vmatprep.subr.bf16.mxu0 %v3275
        %6799 = vmatpush1.bf16.msra.mxu0 %v3274
        %6800 = vmatprep.mubr.bf16.mxu0 %v621
        %6801 = vmatmul.mubr.bf16.gmra.mrb[0].mxu0 %v620
        %v6802 = vpop.f32.mrb[0].mxu0
        %v6803 = vadd.f32 %v6762, %v6802
        %v6804 = vpop.f32.mrb[0].mxu0
        %v6805 = vadd.f32 %v6764, %v6804
        %v6806 = vpop.f32.mrb[0].mxu0
        %v6807 = vpop.f32.mrb[0].mxu0
        %6808 = vdwg.mxu0
        %6809 = vmatprep.subr.bf16.mxu0 %v3283
        %6810 = vmatpush1.bf16.msra.mxu0 %v3282
        %6811 = vmatprep.subr.bf16.mxu0 %v3291
        %6812 = vmatpush1.bf16.msra.mxu0 %v3290
        %6813 = vmatprep.subr.bf16.mxu0 %v3299
        %6814 = vmatpush1.bf16.msra.mxu0 %v3298
        %6815 = vmatprep.subr.bf16.mxu0 %v3307
        %6816 = vmatpush1.bf16.msra.mxu0 %v3306
        %6817 = vmatprep.subr.bf16.mxu0 %v3315
        %6818 = vmatpush1.bf16.msra.mxu0 %v3314
        %6819 = vmatprep.subr.bf16.mxu0 %v3323
        %6820 = vmatpush1.bf16.msra.mxu0 %v3322
        %6821 = vmatprep.subr.bf16.mxu0 %v3331
        %6822 = vmatpush1.bf16.msra.mxu0 %v3330
        %6823 = vmatprep.subr.bf16.mxu0 %v3339
        %6824 = vmatpush1.bf16.msra.mxu0 %v3338
        %6825 = vmatprep.subr.bf16.mxu0 %v3347
        %6826 = vmatpush1.bf16.msra.mxu0 %v3346
        %6827 = vmatprep.subr.bf16.mxu0 %v3355
        %6828 = vmatpush1.bf16.msra.mxu0 %v3354
        %6829 = vmatprep.subr.bf16.mxu0 %v3363
        %6830 = vmatpush1.bf16.msra.mxu0 %v3362
        %6831 = vmatprep.subr.bf16.mxu0 %v3371
        %6832 = vmatpush1.bf16.msra.mxu0 %v3370
        %6833 = vmatprep.subr.bf16.mxu0 %v3379
        %6834 = vmatpush1.bf16.msra.mxu0 %v3378
        %6835 = vmatprep.subr.bf16.mxu0 %v3387
        %6836 = vmatpush1.bf16.msra.mxu0 %v3386
        %6837 = vmatprep.subr.bf16.mxu0 %v3395
        %6838 = vmatpush1.bf16.msra.mxu0 %v3394
        %6839 = vmatprep.subr.bf16.mxu0 %v3403
        %6840 = vmatpush1.bf16.msra.mxu0 %v3402
        %6841 = vmatprep.mubr.bf16.mxu0 %v623
        %6842 = vmatmul.mubr.bf16.gmra.mrb[0].mxu0 %v622
        %v6843 = vpop.f32.mrb[0].mxu0
        %v6844 = vadd.f32 %v6803, %v6843
        %v6845 = vpop.f32.mrb[0].mxu0
        %v6846 = vadd.f32 %v6805, %v6845
        %v6847 = vpop.f32.mrb[0].mxu0
        %v6848 = vpop.f32.mrb[0].mxu0
        %6849 = vdwg.mxu0
        %6850 = vmatprep.subr.bf16.mxu0 %v3411
        %6851 = vmatpush1.bf16.msra.mxu0 %v3410
        %6852 = vmatprep.subr.bf16.mxu0 %v3419
        %6853 = vmatpush1.bf16.msra.mxu0 %v3418
        %6854 = vmatprep.subr.bf16.mxu0 %v3427
        %6855 = vmatpush1.bf16.msra.mxu0 %v3426
        %6856 = vmatprep.subr.bf16.mxu0 %v3435
        %6857 = vmatpush1.bf16.msra.mxu0 %v3434
        %6858 = vmatprep.subr.bf16.mxu0 %v3443
        %6859 = vmatpush1.bf16.msra.mxu0 %v3442
        %6860 = vmatprep.subr.bf16.mxu0 %v3451
        %6861 = vmatpush1.bf16.msra.mxu0 %v3450
        %6862 = vmatprep.subr.bf16.mxu0 %v3459
        %6863 = vmatpush1.bf16.msra.mxu0 %v3458
        %6864 = vmatprep.subr.bf16.mxu0 %v3467
        %6865 = vmatpush1.bf16.msra.mxu0 %v3466
        %6866 = vmatprep.subr.bf16.mxu0 %v3475
        %6867 = vmatpush1.bf16.msra.mxu0 %v3474
        %6868 = vmatprep.subr.bf16.mxu0 %v3483
        %6869 = vmatpush1.bf16.msra.mxu0 %v3482
        %6870 = vmatprep.subr.bf16.mxu0 %v3491
        %6871 = vmatpush1.bf16.msra.mxu0 %v3490
        %6872 = vmatprep.subr.bf16.mxu0 %v3499
        %6873 = vmatpush1.bf16.msra.mxu0 %v3498
        %6874 = vmatprep.subr.bf16.mxu0 %v3507
        %6875 = vmatpush1.bf16.msra.mxu0 %v3506
        %6876 = vmatprep.subr.bf16.mxu0 %v3515
        %6877 = vmatpush1.bf16.msra.mxu0 %v3514
        %6878 = vmatprep.subr.bf16.mxu0 %v3523
        %6879 = vmatpush1.bf16.msra.mxu0 %v3522
        %6880 = vmatprep.subr.bf16.mxu0 %v3531
        %6881 = vmatpush1.bf16.msra.mxu0 %v3530
        %6882 = vmatprep.mubr.bf16.mxu0 %v625
        %6883 = vmatmul.mubr.bf16.gmra.mrb[0].mxu0 %v624
        %v6884 = vpop.f32.mrb[0].mxu0
        %v6885 = vadd.f32 %v6844, %v6884
        %v6886 = vpop.f32.mrb[0].mxu0
        %v6887 = vadd.f32 %v6846, %v6886
        %v6888 = vpop.f32.mrb[0].mxu0
        %v6889 = vpop.f32.mrb[0].mxu0
        %6890 = vdwg.mxu0
        %6891 = vmatprep.subr.bf16.mxu0 %v3539
        %6892 = vmatpush1.bf16.msra.mxu0 %v3538
        %6893 = vmatprep.subr.bf16.mxu0 %v3547
        %6894 = vmatpush1.bf16.msra.mxu0 %v3546
        %6895 = vmatprep.subr.bf16.mxu0 %v3555
        %6896 = vmatpush1.bf16.msra.mxu0 %v3554
        %6897 = vmatprep.subr.bf16.mxu0 %v3563
        %6898 = vmatpush1.bf16.msra.mxu0 %v3562
        %6899 = vmatprep.subr.bf16.mxu0 %v3571
        %6900 = vmatpush1.bf16.msra.mxu0 %v3570
        %6901 = vmatprep.subr.bf16.mxu0 %v3579
        %6902 = vmatpush1.bf16.msra.mxu0 %v3578
        %6903 = vmatprep.subr.bf16.mxu0 %v3587
        %6904 = vmatpush1.bf16.msra.mxu0 %v3586
        %6905 = vmatprep.subr.bf16.mxu0 %v3595
        %6906 = vmatpush1.bf16.msra.mxu0 %v3594
        %6907 = vmatprep.subr.bf16.mxu0 %v3603
        %6908 = vmatpush1.bf16.msra.mxu0 %v3602
        %6909 = vmatprep.subr.bf16.mxu0 %v3611
        %6910 = vmatpush1.bf16.msra.mxu0 %v3610
        %6911 = vmatprep.subr.bf16.mxu0 %v3619
        %6912 = vmatpush1.bf16.msra.mxu0 %v3618
        %6913 = vmatprep.subr.bf16.mxu0 %v3627
        %6914 = vmatpush1.bf16.msra.mxu0 %v3626
        %6915 = vmatprep.subr.bf16.mxu0 %v3635
        %6916 = vmatpush1.bf16.msra.mxu0 %v3634
        %6917 = vmatprep.subr.bf16.mxu0 %v3643
        %6918 = vmatpush1.bf16.msra.mxu0 %v3642
        %6919 = vmatprep.subr.bf16.mxu0 %v3651
        %6920 = vmatpush1.bf16.msra.mxu0 %v3650
        %6921 = vmatprep.subr.bf16.mxu0 %v3659
        %6922 = vmatpush1.bf16.msra.mxu0 %v3658
        %6923 = vmatprep.mubr.bf16.mxu0 %v627
        %6924 = vmatmul.mubr.bf16.gmra.mrb[0].mxu0 %v626
        %v6925 = vpop.f32.mrb[0].mxu0
        %v6926 = vadd.f32 %v6885, %v6925
        %v6927 = vpop.f32.mrb[0].mxu0
        %v6928 = vadd.f32 %v6887, %v6927
        %v6929 = vpop.f32.mrb[0].mxu0
        %v6930 = vpop.f32.mrb[0].mxu0
        %6931 = vdwg.mxu0
        %6932 = vmatprep.subr.bf16.mxu0 %v3667
        %6933 = vmatpush1.bf16.msra.mxu0 %v3666
        %6934 = vmatprep.subr.bf16.mxu0 %v3675
        %6935 = vmatpush1.bf16.msra.mxu0 %v3674
        %6936 = vmatprep.subr.bf16.mxu0 %v3683
        %6937 = vmatpush1.bf16.msra.mxu0 %v3682
        %6938 = vmatprep.subr.bf16.mxu0 %v3691
        %6939 = vmatpush1.bf16.msra.mxu0 %v3690
        %6940 = vmatprep.subr.bf16.mxu0 %v3699
        %6941 = vmatpush1.bf16.msra.mxu0 %v3698
        %6942 = vmatprep.subr.bf16.mxu0 %v3707
        %6943 = vmatpush1.bf16.msra.mxu0 %v3706
        %6944 = vmatprep.subr.bf16.mxu0 %v3715
        %6945 = vmatpush1.bf16.msra.mxu0 %v3714
        %6946 = vmatprep.subr.bf16.mxu0 %v3723
        %6947 = vmatpush1.bf16.msra.mxu0 %v3722
        %6948 = vmatprep.subr.bf16.mxu0 %v3731
        %6949 = vmatpush1.bf16.msra.mxu0 %v3730
        %6950 = vmatprep.subr.bf16.mxu0 %v3739
        %6951 = vmatpush1.bf16.msra.mxu0 %v3738
        %6952 = vmatprep.subr.bf16.mxu0 %v3747
        %6953 = vmatpush1.bf16.msra.mxu0 %v3746
        %6954 = vmatprep.subr.bf16.mxu0 %v3755
        %6955 = vmatpush1.bf16.msra.mxu0 %v3754
        %6956 = vmatprep.subr.bf16.mxu0 %v3763
        %6957 = vmatpush1.bf16.msra.mxu0 %v3762
        %6958 = vmatprep.subr.bf16.mxu0 %v3771
        %6959 = vmatpush1.bf16.msra.mxu0 %v3770
        %6960 = vmatprep.subr.bf16.mxu0 %v3779
        %6961 = vmatpush1.bf16.msra.mxu0 %v3778
        %6962 = vmatprep.subr.bf16.mxu0 %v3787
        %6963 = vmatpush1.bf16.msra.mxu0 %v3786
        %6964 = vmatprep.mubr.bf16.mxu0 %v629
        %6965 = vmatmul.mubr.bf16.gmra.mrb[0].mxu0 %v628
        %v6966 = vpop.f32.mrb[0].mxu0
        %v6967 = vadd.f32 %v6926, %v6966
        %v6968 = vpop.f32.mrb[0].mxu0
        %v6969 = vadd.f32 %v6928, %v6968
        %v6970 = vpop.f32.mrb[0].mxu0
        %v6971 = vpop.f32.mrb[0].mxu0
        %6972 = vdwg.mxu0
        %6973 = vmatprep.subr.bf16.mxu0 %v3795
        %6974 = vmatpush1.bf16.msra.mxu0 %v3794
        %6975 = vmatprep.subr.bf16.mxu0 %v3803
        %6976 = vmatpush1.bf16.msra.mxu0 %v3802
        %6977 = vmatprep.subr.bf16.mxu0 %v3811
        %6978 = vmatpush1.bf16.msra.mxu0 %v3810
        %6979 = vmatprep.subr.bf16.mxu0 %v3819
        %6980 = vmatpush1.bf16.msra.mxu0 %v3818
        %6981 = vmatprep.subr.bf16.mxu0 %v3827
        %6982 = vmatpush1.bf16.msra.mxu0 %v3826
        %6983 = vmatprep.subr.bf16.mxu0 %v3835
        %6984 = vmatpush1.bf16.msra.mxu0 %v3834
        %6985 = vmatprep.subr.bf16.mxu0 %v3843
        %6986 = vmatpush1.bf16.msra.mxu0 %v3842
        %6987 = vmatprep.subr.bf16.mxu0 %v3851
        %6988 = vmatpush1.bf16.msra.mxu0 %v3850
        %6989 = vmatprep.subr.bf16.mxu0 %v3859
        %6990 = vmatpush1.bf16.msra.mxu0 %v3858
        %6991 = vmatprep.subr.bf16.mxu0 %v3867
        %6992 = vmatpush1.bf16.msra.mxu0 %v3866
        %6993 = vmatprep.subr.bf16.mxu0 %v3875
        %6994 = vmatpush1.bf16.msra.mxu0 %v3874
        %6995 = vmatprep.subr.bf16.mxu0 %v3883
        %6996 = vmatpush1.bf16.msra.mxu0 %v3882
        %6997 = vmatprep.subr.bf16.mxu0 %v3891
        %6998 = vmatpush1.bf16.msra.mxu0 %v3890
        %6999 = vmatprep.subr.bf16.mxu0 %v3899
        %7000 = vmatpush1.bf16.msra.mxu0 %v3898
        %7001 = vmatprep.subr.bf16.mxu0 %v3907
        %7002 = vmatpush1.bf16.msra.mxu0 %v3906
        %7003 = vmatprep.subr.bf16.mxu0 %v3915
        %7004 = vmatpush1.bf16.msra.mxu0 %v3914
        %7005 = vmatprep.mubr.bf16.mxu0 %v631
        %7006 = vmatmul.mubr.bf16.gmra.mrb[0].mxu0 %v630
        %v7007 = vpop.f32.mrb[0].mxu0
        %v7008 = vadd.f32 %v6967, %v7007
        %v7009 = vpop.f32.mrb[0].mxu0
        %v7010 = vadd.f32 %v6969, %v7009
        %v7011 = vpop.f32.mrb[0].mxu0
        %v7012 = vpop.f32.mrb[0].mxu0
        %7013 = vdwg.mxu0
        %7014 = vmatprep.subr.bf16.mxu0 %v3923
        %7015 = vmatpush1.bf16.msra.mxu0 %v3922
        %7016 = vmatprep.subr.bf16.mxu0 %v3931
        %7017 = vmatpush1.bf16.msra.mxu0 %v3930
        %7018 = vmatprep.subr.bf16.mxu0 %v3939
        %7019 = vmatpush1.bf16.msra.mxu0 %v3938
        %7020 = vmatprep.subr.bf16.mxu0 %v3947
        %7021 = vmatpush1.bf16.msra.mxu0 %v3946
        %7022 = vmatprep.subr.bf16.mxu0 %v3955
        %7023 = vmatpush1.bf16.msra.mxu0 %v3954
        %7024 = vmatprep.subr.bf16.mxu0 %v3963
        %7025 = vmatpush1.bf16.msra.mxu0 %v3962
        %7026 = vmatprep.subr.bf16.mxu0 %v3971
        %7027 = vmatpush1.bf16.msra.mxu0 %v3970
        %7028 = vmatprep.subr.bf16.mxu0 %v3979
        %7029 = vmatpush1.bf16.msra.mxu0 %v3978
        %7030 = vmatprep.subr.bf16.mxu0 %v3987
        %7031 = vmatpush1.bf16.msra.mxu0 %v3986
        %7032 = vmatprep.subr.bf16.mxu0 %v3995
        %7033 = vmatpush1.bf16.msra.mxu0 %v3994
        %7034 = vmatprep.subr.bf16.mxu0 %v4003
        %7035 = vmatpush1.bf16.msra.mxu0 %v4002
        %7036 = vmatprep.subr.bf16.mxu0 %v4011
        %7037 = vmatpush1.bf16.msra.mxu0 %v4010
        %7038 = vmatprep.subr.bf16.mxu0 %v4019
        %7039 = vmatpush1.bf16.msra.mxu0 %v4018
        %7040 = vmatprep.subr.bf16.mxu0 %v4027
        %7041 = vmatpush1.bf16.msra.mxu0 %v4026
        %7042 = vmatprep.subr.bf16.mxu0 %v4035
        %7043 = vmatpush1.bf16.msra.mxu0 %v4034
        %7044 = vmatprep.subr.bf16.mxu0 %v4043
        %7045 = vmatpush1.bf16.msra.mxu0 %v4042
        %7046 = vmatprep.mubr.bf16.mxu0 %v633
        %7047 = vmatmul.mubr.bf16.gmra.mrb[0].mxu0 %v632
        %v7048 = vpop.f32.mrb[0].mxu0
        %v7049 = vadd.f32 %v7008, %v7048
        %v7050 = vpop.f32.mrb[0].mxu0
        %v7051 = vadd.f32 %v7010, %v7050
        %v7052 = vpop.f32.mrb[0].mxu0
        %v7053 = vpop.f32.mrb[0].mxu0
        %7054 = vdwg.mxu0
        %7055 = vmatprep.subr.bf16.mxu0 %v4051
        %7056 = vmatpush1.bf16.msra.mxu0 %v4050
        %7057 = vmatprep.subr.bf16.mxu0 %v4059
        %7058 = vmatpush1.bf16.msra.mxu0 %v4058
        %7059 = vmatprep.subr.bf16.mxu0 %v4067
        %7060 = vmatpush1.bf16.msra.mxu0 %v4066
        %7061 = vmatprep.subr.bf16.mxu0 %v4075
        %7062 = vmatpush1.bf16.msra.mxu0 %v4074
        %7063 = vmatprep.subr.bf16.mxu0 %v4083
        %7064 = vmatpush1.bf16.msra.mxu0 %v4082
        %7065 = vmatprep.subr.bf16.mxu0 %v4091
        %7066 = vmatpush1.bf16.msra.mxu0 %v4090
        %7067 = vmatprep.subr.bf16.mxu0 %v4099
        %7068 = vmatpush1.bf16.msra.mxu0 %v4098
        %7069 = vmatprep.subr.bf16.mxu0 %v4107
        %7070 = vmatpush1.bf16.msra.mxu0 %v4106
        %7071 = vmatprep.subr.bf16.mxu0 %v4115
        %7072 = vmatpush1.bf16.msra.mxu0 %v4114
        %7073 = vmatprep.subr.bf16.mxu0 %v4123
        %7074 = vmatpush1.bf16.msra.mxu0 %v4122
        %7075 = vmatprep.subr.bf16.mxu0 %v4131
        %7076 = vmatpush1.bf16.msra.mxu0 %v4130
        %7077 = vmatprep.subr.bf16.mxu0 %v4139
        %7078 = vmatpush1.bf16.msra.mxu0 %v4138
        %7079 = vmatprep.subr.bf16.mxu0 %v4147
        %7080 = vmatpush1.bf16.msra.mxu0 %v4146
        %7081 = vmatprep.subr.bf16.mxu0 %v4155
        %7082 = vmatpush1.bf16.msra.mxu0 %v4154
        %7083 = vmatprep.subr.bf16.mxu0 %v4163
        %7084 = vmatpush1.bf16.msra.mxu0 %v4162
        %7085 = vmatprep.subr.bf16.mxu0 %v4171
        %7086 = vmatpush1.bf16.msra.mxu0 %v4170
        %7087 = vmatprep.mubr.bf16.mxu0 %v635
        %7088 = vmatmul.mubr.bf16.gmra.mrb[0].mxu0 %v634
        %v7089 = vpop.f32.mrb[0].mxu0
        %v7090 = vadd.f32 %v7049, %v7089
        %v7091 = vpop.f32.mrb[0].mxu0
        %v7092 = vadd.f32 %v7051, %v7091
        %v7093 = vpop.f32.mrb[0].mxu0
        %v7094 = vpop.f32.mrb[0].mxu0
        %7095 = vdwg.mxu0
        %7096 = vmatprep.subr.bf16.mxu0 %v4179
        %7097 = vmatpush1.bf16.msra.mxu0 %v4178
        %7098 = vmatprep.subr.bf16.mxu0 %v4187
        %7099 = vmatpush1.bf16.msra.mxu0 %v4186
        %7100 = vmatprep.subr.bf16.mxu0 %v4195
        %7101 = vmatpush1.bf16.msra.mxu0 %v4194
        %7102 = vmatprep.subr.bf16.mxu0 %v4203
        %7103 = vmatpush1.bf16.msra.mxu0 %v4202
        %7104 = vmatprep.subr.bf16.mxu0 %v4211
        %7105 = vmatpush1.bf16.msra.mxu0 %v4210
        %7106 = vmatprep.subr.bf16.mxu0 %v4219
        %7107 = vmatpush1.bf16.msra.mxu0 %v4218
        %7108 = vmatprep.subr.bf16.mxu0 %v4227
        %7109 = vmatpush1.bf16.msra.mxu0 %v4226
        %7110 = vmatprep.subr.bf16.mxu0 %v4235
        %7111 = vmatpush1.bf16.msra.mxu0 %v4234
        %7112 = vmatprep.subr.bf16.mxu0 %v4243
        %7113 = vmatpush1.bf16.msra.mxu0 %v4242
        %7114 = vmatprep.subr.bf16.mxu0 %v4251
        %7115 = vmatpush1.bf16.msra.mxu0 %v4250
        %7116 = vmatprep.subr.bf16.mxu0 %v4259
        %7117 = vmatpush1.bf16.msra.mxu0 %v4258
        %7118 = vmatprep.subr.bf16.mxu0 %v4267
        %7119 = vmatpush1.bf16.msra.mxu0 %v4266
        %7120 = vmatprep.subr.bf16.mxu0 %v4275
        %7121 = vmatpush1.bf16.msra.mxu0 %v4274
        %7122 = vmatprep.subr.bf16.mxu0 %v4283
        %7123 = vmatpush1.bf16.msra.mxu0 %v4282
        %7124 = vmatprep.subr.bf16.mxu0 %v4291
        %7125 = vmatpush1.bf16.msra.mxu0 %v4290
        %7126 = vmatprep.subr.bf16.mxu0 %v4299
        %7127 = vmatpush1.bf16.msra.mxu0 %v4298
        %7128 = vmatprep.mubr.bf16.mxu0 %v637
        %7129 = vmatmul.mubr.bf16.gmra.mrb[0].mxu0 %v636
        %v7130 = vpop.f32.mrb[0].mxu0
        %v7131 = vadd.f32 %v7090, %v7130
        %v7132 = vpop.f32.mrb[0].mxu0
        %v7133 = vadd.f32 %v7092, %v7132
        %v7134 = vpop.f32.mrb[0].mxu0
        %v7135 = vpop.f32.mrb[0].mxu0
        %7136 = vdwg.mxu0
        %7137 = vmatprep.subr.bf16.mxu0 %v4307
        %7138 = vmatpush1.bf16.msra.mxu0 %v4306
        %7139 = vmatprep.subr.bf16.mxu0 %v4315
        %7140 = vmatpush1.bf16.msra.mxu0 %v4314
        %7141 = vmatprep.subr.bf16.mxu0 %v4323
        %7142 = vmatpush1.bf16.msra.mxu0 %v4322
        %7143 = vmatprep.subr.bf16.mxu0 %v4331
        %7144 = vmatpush1.bf16.msra.mxu0 %v4330
        %7145 = vmatprep.subr.bf16.mxu0 %v4339
        %7146 = vmatpush1.bf16.msra.mxu0 %v4338
        %7147 = vmatprep.subr.bf16.mxu0 %v4347
        %7148 = vmatpush1.bf16.msra.mxu0 %v4346
        %7149 = vmatprep.subr.bf16.mxu0 %v4355
        %7150 = vmatpush1.bf16.msra.mxu0 %v4354
        %7151 = vmatprep.subr.bf16.mxu0 %v4363
        %7152 = vmatpush1.bf16.msra.mxu0 %v4362
        %7153 = vmatprep.subr.bf16.mxu0 %v4371
        %7154 = vmatpush1.bf16.msra.mxu0 %v4370
        %7155 = vmatprep.subr.bf16.mxu0 %v4379
        %7156 = vmatpush1.bf16.msra.mxu0 %v4378
        %7157 = vmatprep.subr.bf16.mxu0 %v4387
        %7158 = vmatpush1.bf16.msra.mxu0 %v4386
        %7159 = vmatprep.subr.bf16.mxu0 %v4395
        %7160 = vmatpush1.bf16.msra.mxu0 %v4394
        %7161 = vmatprep.subr.bf16.mxu0 %v4403
        %7162 = vmatpush1.bf16.msra.mxu0 %v4402
        %7163 = vmatprep.subr.bf16.mxu0 %v4411
        %7164 = vmatpush1.bf16.msra.mxu0 %v4410
        %7165 = vmatprep.subr.bf16.mxu0 %v4419
        %7166 = vmatpush1.bf16.msra.mxu0 %v4418
        %7167 = vmatprep.subr.bf16.mxu0 %v4427
        %7168 = vmatpush1.bf16.msra.mxu0 %v4426
        %7169 = vmatprep.mubr.bf16.mxu0 %v639
        %7170 = vmatmul.mubr.bf16.gmra.mrb[0].mxu0 %v638
        %v7171 = vpop.f32.mrb[0].mxu0
        %v7172 = vadd.f32 %v7131, %v7171
        %v7173 = vpop.f32.mrb[0].mxu0
        %v7174 = vadd.f32 %v7133, %v7173
        %v7175 = vpop.f32.mrb[0].mxu0
        %v7176 = vpop.f32.mrb[0].mxu0
        %7177 = vdwg.mxu0
        %7178 = vmatprep.subr.bf16.mxu0 %v4435
        %7179 = vmatpush1.bf16.msra.mxu0 %v4434
        %7180 = vmatprep.subr.bf16.mxu0 %v4443
        %7181 = vmatpush1.bf16.msra.mxu0 %v4442
        %7182 = vmatprep.subr.bf16.mxu0 %v4451
        %7183 = vmatpush1.bf16.msra.mxu0 %v4450
        %7184 = vmatprep.subr.bf16.mxu0 %v4459
        %7185 = vmatpush1.bf16.msra.mxu0 %v4458
        %7186 = vmatprep.subr.bf16.mxu0 %v4467
        %7187 = vmatpush1.bf16.msra.mxu0 %v4466
        %7188 = vmatprep.subr.bf16.mxu0 %v4475
        %7189 = vmatpush1.bf16.msra.mxu0 %v4474
        %7190 = vmatprep.subr.bf16.mxu0 %v4483
        %7191 = vmatpush1.bf16.msra.mxu0 %v4482
        %7192 = vmatprep.subr.bf16.mxu0 %v4491
        %7193 = vmatpush1.bf16.msra.mxu0 %v4490
        %7194 = vmatprep.subr.bf16.mxu0 %v4499
        %7195 = vmatpush1.bf16.msra.mxu0 %v4498
        %7196 = vmatprep.subr.bf16.mxu0 %v4507
        %7197 = vmatpush1.bf16.msra.mxu0 %v4506
        %7198 = vmatprep.subr.bf16.mxu0 %v4515
        %7199 = vmatpush1.bf16.msra.mxu0 %v4514
        %7200 = vmatprep.subr.bf16.mxu0 %v4523
        %7201 = vmatpush1.bf16.msra.mxu0 %v4522
        %7202 = vmatprep.subr.bf16.mxu0 %v4531
        %7203 = vmatpush1.bf16.msra.mxu0 %v4530
        %7204 = vmatprep.subr.bf16.mxu0 %v4539
        %7205 = vmatpush1.bf16.msra.mxu0 %v4538
        %7206 = vmatprep.subr.bf16.mxu0 %v4547
        %7207 = vmatpush1.bf16.msra.mxu0 %v4546
        %7208 = vmatprep.subr.bf16.mxu0 %v4555
        %7209 = vmatpush1.bf16.msra.mxu0 %v4554
        %7210 = vmatprep.mubr.bf16.mxu0 %v641
        %7211 = vmatmul.mubr.bf16.gmra.mrb[0].mxu0 %v640
        %v7212 = vpop.f32.mrb[0].mxu0
        %v7213 = vadd.f32 %v7172, %v7212
        %v7214 = vpop.f32.mrb[0].mxu0
        %v7215 = vadd.f32 %v7174, %v7214
        %v7216 = vpop.f32.mrb[0].mxu0
        %v7217 = vpop.f32.mrb[0].mxu0
        %7218 = vdwg.mxu0
        %7219 = vmatprep.subr.bf16.mxu0 %v4563
        %7220 = vmatpush1.bf16.msra.mxu0 %v4562
        %7221 = vmatprep.subr.bf16.mxu0 %v4571
        %7222 = vmatpush1.bf16.msra.mxu0 %v4570
        %7223 = vmatprep.subr.bf16.mxu0 %v4579
        %7224 = vmatpush1.bf16.msra.mxu0 %v4578
        %7225 = vmatprep.subr.bf16.mxu0 %v4587
        %7226 = vmatpush1.bf16.msra.mxu0 %v4586
        %7227 = vmatprep.subr.bf16.mxu0 %v4595
        %7228 = vmatpush1.bf16.msra.mxu0 %v4594
        %7229 = vmatprep.subr.bf16.mxu0 %v4603
        %7230 = vmatpush1.bf16.msra.mxu0 %v4602
        %7231 = vmatprep.subr.bf16.mxu0 %v4611
        %7232 = vmatpush1.bf16.msra.mxu0 %v4610
        %7233 = vmatprep.subr.bf16.mxu0 %v4619
        %7234 = vmatpush1.bf16.msra.mxu0 %v4618
        %7235 = vmatprep.subr.bf16.mxu0 %v4627
        %7236 = vmatpush1.bf16.msra.mxu0 %v4626
        %7237 = vmatprep.subr.bf16.mxu0 %v4635
        %7238 = vmatpush1.bf16.msra.mxu0 %v4634
        %7239 = vmatprep.subr.bf16.mxu0 %v4643
        %7240 = vmatpush1.bf16.msra.mxu0 %v4642
        %7241 = vmatprep.subr.bf16.mxu0 %v4651
        %7242 = vmatpush1.bf16.msra.mxu0 %v4650
        %7243 = vmatprep.subr.bf16.mxu0 %v4659
        %7244 = vmatpush1.bf16.msra.mxu0 %v4658
        %7245 = vmatprep.subr.bf16.mxu0 %v4667
        %7246 = vmatpush1.bf16.msra.mxu0 %v4666
        %7247 = vmatprep.subr.bf16.mxu0 %v4675
        %7248 = vmatpush1.bf16.msra.mxu0 %v4674
        %7249 = vmatprep.subr.bf16.mxu0 %v4683
        %7250 = vmatpush1.bf16.msra.mxu0 %v4682
        %7251 = vmatprep.mubr.bf16.mxu0 %v643
        %7252 = vmatmul.mubr.bf16.gmra.mrb[0].mxu0 %v642
        %v7253 = vpop.f32.mrb[0].mxu0
        %v7254 = vadd.f32 %v7213, %v7253
        %v7255 = vpop.f32.mrb[0].mxu0
        %v7256 = vadd.f32 %v7215, %v7255
        %v7257 = vpop.f32.mrb[0].mxu0
        %v7258 = vpop.f32.mrb[0].mxu0
        %7259 = vdwg.mxu0
        %7260 = vmatprep.subr.bf16.mxu0 %v4691
        %7261 = vmatpush1.bf16.msra.mxu0 %v4690
        %7262 = vmatprep.subr.bf16.mxu0 %v4699
        %7263 = vmatpush1.bf16.msra.mxu0 %v4698
        %7264 = vmatprep.subr.bf16.mxu0 %v4707
        %7265 = vmatpush1.bf16.msra.mxu0 %v4706
        %7266 = vmatprep.subr.bf16.mxu0 %v4715
        %7267 = vmatpush1.bf16.msra.mxu0 %v4714
        %7268 = vmatprep.subr.bf16.mxu0 %v4723
        %7269 = vmatpush1.bf16.msra.mxu0 %v4722
        %7270 = vmatprep.subr.bf16.mxu0 %v4731
        %7271 = vmatpush1.bf16.msra.mxu0 %v4730
        %7272 = vmatprep.subr.bf16.mxu0 %v4739
        %7273 = vmatpush1.bf16.msra.mxu0 %v4738
        %7274 = vmatprep.subr.bf16.mxu0 %v4747
        %7275 = vmatpush1.bf16.msra.mxu0 %v4746
        %7276 = vmatprep.subr.bf16.mxu0 %v4755
        %7277 = vmatpush1.bf16.msra.mxu0 %v4754
        %7278 = vmatprep.subr.bf16.mxu0 %v4763
        %7279 = vmatpush1.bf16.msra.mxu0 %v4762
        %7280 = vmatprep.subr.bf16.mxu0 %v4771
        %7281 = vmatpush1.bf16.msra.mxu0 %v4770
        %7282 = vmatprep.subr.bf16.mxu0 %v4779
        %7283 = vmatpush1.bf16.msra.mxu0 %v4778
        %7284 = vmatprep.subr.bf16.mxu0 %v4787
        %7285 = vmatpush1.bf16.msra.mxu0 %v4786
        %7286 = vmatprep.subr.bf16.mxu0 %v4795
        %7287 = vmatpush1.bf16.msra.mxu0 %v4794
        %7288 = vmatprep.subr.bf16.mxu0 %v4803
        %7289 = vmatpush1.bf16.msra.mxu0 %v4802
        %7290 = vmatprep.subr.bf16.mxu0 %v4811
        %7291 = vmatpush1.bf16.msra.mxu0 %v4810
        %7292 = vmatprep.mubr.bf16.mxu0 %v645
        %7293 = vmatmul.mubr.bf16.gmra.mrb[0].mxu0 %v644
        %v7294 = vpop.f32.mrb[0].mxu0
        %v7295 = vadd.f32 %v7254, %v7294
        %v7296 = vpop.f32.mrb[0].mxu0
        %v7297 = vadd.f32 %v7256, %v7296
        %v7298 = vpop.f32.mrb[0].mxu0
        %v7299 = vpop.f32.mrb[0].mxu0
        %7300 = vdwg.mxu0
        %7301 = vmatprep.subr.bf16.mxu0 %v4819
        %7302 = vmatpush1.bf16.msra.mxu0 %v4818
        %7303 = vmatprep.subr.bf16.mxu0 %v4827
        %7304 = vmatpush1.bf16.msra.mxu0 %v4826
        %7305 = vmatprep.subr.bf16.mxu0 %v4835
        %7306 = vmatpush1.bf16.msra.mxu0 %v4834
        %7307 = vmatprep.subr.bf16.mxu0 %v4843
        %7308 = vmatpush1.bf16.msra.mxu0 %v4842
        %7309 = vmatprep.subr.bf16.mxu0 %v4851
        %7310 = vmatpush1.bf16.msra.mxu0 %v4850
        %7311 = vmatprep.subr.bf16.mxu0 %v4859
        %7312 = vmatpush1.bf16.msra.mxu0 %v4858
        %7313 = vmatprep.subr.bf16.mxu0 %v4867
        %7314 = vmatpush1.bf16.msra.mxu0 %v4866
        %7315 = vmatprep.subr.bf16.mxu0 %v4875
        %7316 = vmatpush1.bf16.msra.mxu0 %v4874
        %7317 = vmatprep.subr.bf16.mxu0 %v4883
        %7318 = vmatpush1.bf16.msra.mxu0 %v4882
        %7319 = vmatprep.subr.bf16.mxu0 %v4891
        %7320 = vmatpush1.bf16.msra.mxu0 %v4890
        %7321 = vmatprep.subr.bf16.mxu0 %v4899
        %7322 = vmatpush1.bf16.msra.mxu0 %v4898
        %7323 = vmatprep.subr.bf16.mxu0 %v4907
        %7324 = vmatpush1.bf16.msra.mxu0 %v4906
        %7325 = vmatprep.subr.bf16.mxu0 %v4915
        %7326 = vmatpush1.bf16.msra.mxu0 %v4914
        %7327 = vmatprep.subr.bf16.mxu0 %v4923
        %7328 = vmatpush1.bf16.msra.mxu0 %v4922
        %7329 = vmatprep.subr.bf16.mxu0 %v4931
        %7330 = vmatpush1.bf16.msra.mxu0 %v4930
        %7331 = vmatprep.subr.bf16.mxu0 %v4939
        %7332 = vmatpush1.bf16.msra.mxu0 %v4938
        %7333 = vmatprep.mubr.bf16.mxu0 %v647
        %7334 = vmatmul.mubr.bf16.gmra.mrb[0].mxu0 %v646
        %v7335 = vpop.f32.mrb[0].mxu0
        %v7336 = vadd.f32 %v7295, %v7335
        %v7337 = vpop.f32.mrb[0].mxu0
        %v7338 = vadd.f32 %v7297, %v7337
        %v7339 = vpop.f32.mrb[0].mxu0
        %v7340 = vpop.f32.mrb[0].mxu0
        %7341 = vdwg.mxu0
        %7342 = vmatprep.subr.bf16.mxu0 %v4947
        %7343 = vmatpush1.bf16.msra.mxu0 %v4946
        %7344 = vmatprep.subr.bf16.mxu0 %v4955
        %7345 = vmatpush1.bf16.msra.mxu0 %v4954
        %7346 = vmatprep.subr.bf16.mxu0 %v4963
        %7347 = vmatpush1.bf16.msra.mxu0 %v4962
        %7348 = vmatprep.subr.bf16.mxu0 %v4971
        %7349 = vmatpush1.bf16.msra.mxu0 %v4970
        %7350 = vmatprep.subr.bf16.mxu0 %v4979
        %7351 = vmatpush1.bf16.msra.mxu0 %v4978
        %7352 = vmatprep.subr.bf16.mxu0 %v4987
        %7353 = vmatpush1.bf16.msra.mxu0 %v4986
        %7354 = vmatprep.subr.bf16.mxu0 %v4995
        %7355 = vmatpush1.bf16.msra.mxu0 %v4994
        %7356 = vmatprep.subr.bf16.mxu0 %v5003
        %7357 = vmatpush1.bf16.msra.mxu0 %v5002
        %7358 = vmatprep.subr.bf16.mxu0 %v5011
        %7359 = vmatpush1.bf16.msra.mxu0 %v5010
        %7360 = vmatprep.subr.bf16.mxu0 %v5019
        %7361 = vmatpush1.bf16.msra.mxu0 %v5018
        %7362 = vmatprep.subr.bf16.mxu0 %v5027
        %7363 = vmatpush1.bf16.msra.mxu0 %v5026
        %7364 = vmatprep.subr.bf16.mxu0 %v5035
        %7365 = vmatpush1.bf16.msra.mxu0 %v5034
        %7366 = vmatprep.subr.bf16.mxu0 %v5043
        %7367 = vmatpush1.bf16.msra.mxu0 %v5042
        %7368 = vmatprep.subr.bf16.mxu0 %v5051
        %7369 = vmatpush1.bf16.msra.mxu0 %v5050
        %7370 = vmatprep.subr.bf16.mxu0 %v5059
        %7371 = vmatpush1.bf16.msra.mxu0 %v5058
        %7372 = vmatprep.subr.bf16.mxu0 %v5067
        %7373 = vmatpush1.bf16.msra.mxu0 %v5066
        %7374 = vmatprep.mubr.bf16.mxu0 %v649
        %7375 = vmatmul.mubr.bf16.gmra.mrb[0].mxu0 %v648
        %v7376 = vpop.f32.mrb[0].mxu0
        %v7377 = vadd.f32 %v7336, %v7376
        %v7378 = vpop.f32.mrb[0].mxu0
        %v7379 = vadd.f32 %v7338, %v7378
        %v7380 = vpop.f32.mrb[0].mxu0
        %v7381 = vpop.f32.mrb[0].mxu0
        %7382 = vdwg.mxu0
        %7383 = vmatprep.subr.bf16.mxu0 %v5075
        %7384 = vmatpush1.bf16.msra.mxu0 %v5074
        %7385 = vmatprep.subr.bf16.mxu0 %v5083
        %7386 = vmatpush1.bf16.msra.mxu0 %v5082
        %7387 = vmatprep.subr.bf16.mxu0 %v5091
        %7388 = vmatpush1.bf16.msra.mxu0 %v5090
        %7389 = vmatprep.subr.bf16.mxu0 %v5099
        %7390 = vmatpush1.bf16.msra.mxu0 %v5098
        %7391 = vmatprep.subr.bf16.mxu0 %v5107
        %7392 = vmatpush1.bf16.msra.mxu0 %v5106
        %7393 = vmatprep.subr.bf16.mxu0 %v5115
        %7394 = vmatpush1.bf16.msra.mxu0 %v5114
        %7395 = vmatprep.subr.bf16.mxu0 %v5123
        %7396 = vmatpush1.bf16.msra.mxu0 %v5122
        %7397 = vmatprep.subr.bf16.mxu0 %v5131
        %7398 = vmatpush1.bf16.msra.mxu0 %v5130
        %7399 = vmatprep.subr.bf16.mxu0 %v5139
        %7400 = vmatpush1.bf16.msra.mxu0 %v5138
        %7401 = vmatprep.subr.bf16.mxu0 %v5147
        %7402 = vmatpush1.bf16.msra.mxu0 %v5146
        %7403 = vmatprep.subr.bf16.mxu0 %v5155
        %7404 = vmatpush1.bf16.msra.mxu0 %v5154
        %7405 = vmatprep.subr.bf16.mxu0 %v5163
        %7406 = vmatpush1.bf16.msra.mxu0 %v5162
        %7407 = vmatprep.subr.bf16.mxu0 %v5171
        %7408 = vmatpush1.bf16.msra.mxu0 %v5170
        %7409 = vmatprep.subr.bf16.mxu0 %v5179
        %7410 = vmatpush1.bf16.msra.mxu0 %v5178
        %7411 = vmatprep.subr.bf16.mxu0 %v5187
        %7412 = vmatpush1.bf16.msra.mxu0 %v5186
        %7413 = vmatprep.subr.bf16.mxu0 %v5195
        %7414 = vmatpush1.bf16.msra.mxu0 %v5194
        %7415 = vmatprep.mubr.bf16.mxu0 %v651
        %7416 = vmatmul.mubr.bf16.gmra.mrb[0].mxu0 %v650
        %v7417 = vpop.f32.mrb[0].mxu0
        %v7418 = vadd.f32 %v7377, %v7417
        %v7419 = vpop.f32.mrb[0].mxu0
        %v7420 = vadd.f32 %v7379, %v7419
        %v7421 = vpop.f32.mrb[0].mxu0
        %v7422 = vpop.f32.mrb[0].mxu0
        %7423 = vdwg.mxu0
        %7424 = vmatprep.subr.bf16.mxu0 %v5203
        %7425 = vmatpush1.bf16.msra.mxu0 %v5202
        %7426 = vmatprep.subr.bf16.mxu0 %v5211
        %7427 = vmatpush1.bf16.msra.mxu0 %v5210
        %7428 = vmatprep.subr.bf16.mxu0 %v5219
        %7429 = vmatpush1.bf16.msra.mxu0 %v5218
        %7430 = vmatprep.subr.bf16.mxu0 %v5227
        %7431 = vmatpush1.bf16.msra.mxu0 %v5226
        %7432 = vmatprep.subr.bf16.mxu0 %v5235
        %7433 = vmatpush1.bf16.msra.mxu0 %v5234
        %7434 = vmatprep.subr.bf16.mxu0 %v5243
        %7435 = vmatpush1.bf16.msra.mxu0 %v5242
        %7436 = vmatprep.subr.bf16.mxu0 %v5251
        %7437 = vmatpush1.bf16.msra.mxu0 %v5250
        %7438 = vmatprep.subr.bf16.mxu0 %v5259
        %7439 = vmatpush1.bf16.msra.mxu0 %v5258
        %7440 = vmatprep.subr.bf16.mxu0 %v5267
        %7441 = vmatpush1.bf16.msra.mxu0 %v5266
        %7442 = vmatprep.subr.bf16.mxu0 %v5275
        %7443 = vmatpush1.bf16.msra.mxu0 %v5274
        %7444 = vmatprep.subr.bf16.mxu0 %v5283
        %7445 = vmatpush1.bf16.msra.mxu0 %v5282
        %7446 = vmatprep.subr.bf16.mxu0 %v5291
        %7447 = vmatpush1.bf16.msra.mxu0 %v5290
        %7448 = vmatprep.subr.bf16.mxu0 %v5299
        %7449 = vmatpush1.bf16.msra.mxu0 %v5298
        %7450 = vmatprep.subr.bf16.mxu0 %v5307
        %7451 = vmatpush1.bf16.msra.mxu0 %v5306
        %7452 = vmatprep.subr.bf16.mxu0 %v5315
        %7453 = vmatpush1.bf16.msra.mxu0 %v5314
        %7454 = vmatprep.subr.bf16.mxu0 %v5323
        %7455 = vmatpush1.bf16.msra.mxu0 %v5322
        %7456 = vmatprep.mubr.bf16.mxu0 %v653
        %7457 = vmatmul.mubr.bf16.gmra.mrb[0].mxu0 %v652
        %v7458 = vpop.f32.mrb[0].mxu0
        %v7459 = vadd.f32 %v7418, %v7458
        %v7460 = vpop.f32.mrb[0].mxu0
        %v7461 = vadd.f32 %v7420, %v7460
        %v7462 = vpop.f32.mrb[0].mxu0
        %v7463 = vpop.f32.mrb[0].mxu0
        %7464 = vdwg.mxu0
        %7465 = vmatprep.subr.bf16.mxu0 %v5331
        %7466 = vmatpush1.bf16.msra.mxu0 %v5330
        %7467 = vmatprep.subr.bf16.mxu0 %v5339
        %7468 = vmatpush1.bf16.msra.mxu0 %v5338
        %7469 = vmatprep.subr.bf16.mxu0 %v5347
        %7470 = vmatpush1.bf16.msra.mxu0 %v5346
        %7471 = vmatprep.subr.bf16.mxu0 %v5355
        %7472 = vmatpush1.bf16.msra.mxu0 %v5354
        %7473 = vmatprep.subr.bf16.mxu0 %v5363
        %7474 = vmatpush1.bf16.msra.mxu0 %v5362
        %7475 = vmatprep.subr.bf16.mxu0 %v5371
        %7476 = vmatpush1.bf16.msra.mxu0 %v5370
        %7477 = vmatprep.subr.bf16.mxu0 %v5379
        %7478 = vmatpush1.bf16.msra.mxu0 %v5378
        %7479 = vmatprep.subr.bf16.mxu0 %v5387
        %7480 = vmatpush1.bf16.msra.mxu0 %v5386
        %7481 = vmatprep.subr.bf16.mxu0 %v5395
        %7482 = vmatpush1.bf16.msra.mxu0 %v5394
        %7483 = vmatprep.subr.bf16.mxu0 %v5403
        %7484 = vmatpush1.bf16.msra.mxu0 %v5402
        %7485 = vmatprep.subr.bf16.mxu0 %v5411
        %7486 = vmatpush1.bf16.msra.mxu0 %v5410
        %7487 = vmatprep.subr.bf16.mxu0 %v5419
        %7488 = vmatpush1.bf16.msra.mxu0 %v5418
        %7489 = vmatprep.subr.bf16.mxu0 %v5427
        %7490 = vmatpush1.bf16.msra.mxu0 %v5426
        %7491 = vmatprep.subr.bf16.mxu0 %v5435
        %7492 = vmatpush1.bf16.msra.mxu0 %v5434
        %7493 = vmatprep.subr.bf16.mxu0 %v5443
        %7494 = vmatpush1.bf16.msra.mxu0 %v5442
        %7495 = vmatprep.subr.bf16.mxu0 %v5451
        %7496 = vmatpush1.bf16.msra.mxu0 %v5450
        %7497 = vmatprep.mubr.bf16.mxu0 %v655
        %7498 = vmatmul.mubr.bf16.gmra.mrb[0].mxu0 %v654
        %v7499 = vpop.f32.mrb[0].mxu0
        %v7500 = vadd.f32 %v7459, %v7499
        %v7501 = vpop.f32.mrb[0].mxu0
        %v7502 = vadd.f32 %v7461, %v7501
        %v7503 = vpop.f32.mrb[0].mxu0
        %v7504 = vpop.f32.mrb[0].mxu0
        %7505 = vdwg.mxu0
        %7506 = vmatprep.subr.bf16.mxu0 %v2261
        %7507 = vmatpush1.bf16.msra.mxu0 %v2260
        %7508 = vmatprep.subr.bf16.mxu0 %v2269
        %7509 = vmatpush1.bf16.msra.mxu0 %v2268
        %7510 = vmatprep.subr.bf16.mxu0 %v2277
        %7511 = vmatpush1.bf16.msra.mxu0 %v2276
        %7512 = vmatprep.subr.bf16.mxu0 %v2285
        %7513 = vmatpush1.bf16.msra.mxu0 %v2284
        %7514 = vmatprep.subr.bf16.mxu0 %v2293
        %7515 = vmatpush1.bf16.msra.mxu0 %v2292
        %7516 = vmatprep.subr.bf16.mxu0 %v2301
        %7517 = vmatpush1.bf16.msra.mxu0 %v2300
        %7518 = vmatprep.subr.bf16.mxu0 %v2309
        %7519 = vmatpush1.bf16.msra.mxu0 %v2308
        %7520 = vmatprep.subr.bf16.mxu0 %v2317
        %7521 = vmatpush1.bf16.msra.mxu0 %v2316
        %7522 = vmatprep.subr.bf16.mxu0 %v2325
        %7523 = vmatpush1.bf16.msra.mxu0 %v2324
        %7524 = vmatprep.subr.bf16.mxu0 %v2333
        %7525 = vmatpush1.bf16.msra.mxu0 %v2332
        %7526 = vmatprep.subr.bf16.mxu0 %v2341
        %7527 = vmatpush1.bf16.msra.mxu0 %v2340
        %7528 = vmatprep.subr.bf16.mxu0 %v2349
        %7529 = vmatpush1.bf16.msra.mxu0 %v2348
        %7530 = vmatprep.subr.bf16.mxu0 %v2357
        %7531 = vmatpush1.bf16.msra.mxu0 %v2356
        %7532 = vmatprep.subr.bf16.mxu0 %v2365
        %7533 = vmatpush1.bf16.msra.mxu0 %v2364
        %7534 = vmatprep.subr.bf16.mxu0 %v2373
        %7535 = vmatpush1.bf16.msra.mxu0 %v2372
        %7536 = vmatprep.subr.bf16.mxu0 %v2381
        %7537 = vmatpush1.bf16.msra.mxu0 %v2380
        %7538 = vmatprep.mubr.bf16.mxu0 %v607
        %7539 = vmatmul.mubr.bf16.gmra.mrb[0].mxu0 %v606
        %v7540 = vpop.f32.mrb[0].mxu0
        %v7541 = vadd.f32 0.0, %v7540
        %v7542 = vpop.f32.mrb[0].mxu0
        %v7543 = vadd.f32 0.0, %v7542
        %v7544 = vpop.f32.mrb[0].mxu0
        %v7545 = vpop.f32.mrb[0].mxu0
        %7546 = vdwg.mxu0
        %7547 = vmatprep.subr.bf16.mxu0 %v2389
        %7548 = vmatpush1.bf16.msra.mxu0 %v2388
        %7549 = vmatprep.subr.bf16.mxu0 %v2397
        %7550 = vmatpush1.bf16.msra.mxu0 %v2396
        %7551 = vmatprep.subr.bf16.mxu0 %v2405
        %7552 = vmatpush1.bf16.msra.mxu0 %v2404
        %7553 = vmatprep.subr.bf16.mxu0 %v2413
        %7554 = vmatpush1.bf16.msra.mxu0 %v2412
        %7555 = vmatprep.subr.bf16.mxu0 %v2421
        %7556 = vmatpush1.bf16.msra.mxu0 %v2420
        %7557 = vmatprep.subr.bf16.mxu0 %v2429
        %7558 = vmatpush1.bf16.msra.mxu0 %v2428
        %7559 = vmatprep.subr.bf16.mxu0 %v2437
        %7560 = vmatpush1.bf16.msra.mxu0 %v2436
        %7561 = vmatprep.subr.bf16.mxu0 %v2445
        %7562 = vmatpush1.bf16.msra.mxu0 %v2444
        %7563 = vmatprep.subr.bf16.mxu0 %v2453
        %7564 = vmatpush1.bf16.msra.mxu0 %v2452
        %7565 = vmatprep.subr.bf16.mxu0 %v2461
        %7566 = vmatpush1.bf16.msra.mxu0 %v2460
        %7567 = vmatprep.subr.bf16.mxu0 %v2469
        %7568 = vmatpush1.bf16.msra.mxu0 %v2468
        %7569 = vmatprep.subr.bf16.mxu0 %v2477
        %7570 = vmatpush1.bf16.msra.mxu0 %v2476
        %7571 = vmatprep.subr.bf16.mxu0 %v2485
        %7572 = vmatpush1.bf16.msra.mxu0 %v2484
        %7573 = vmatprep.subr.bf16.mxu0 %v2493
        %7574 = vmatpush1.bf16.msra.mxu0 %v2492
        %7575 = vmatprep.subr.bf16.mxu0 %v2501
        %7576 = vmatpush1.bf16.msra.mxu0 %v2500
        %7577 = vmatprep.subr.bf16.mxu0 %v2509
        %7578 = vmatpush1.bf16.msra.mxu0 %v2508
        %7579 = vmatprep.mubr.bf16.mxu0 %v609
        %7580 = vmatmul.mubr.bf16.gmra.mrb[0].mxu0 %v608
        %v7581 = vpop.f32.mrb[0].mxu0
        %v7582 = vadd.f32 %v7541, %v7581
        %v7583 = vpop.f32.mrb[0].mxu0
        %v7584 = vadd.f32 %v7543, %v7583
        %v7585 = vpop.f32.mrb[0].mxu0
        %v7586 = vpop.f32.mrb[0].mxu0
        %7587 = vdwg.mxu0
        %7588 = vmatprep.subr.bf16.mxu0 %v2517
        %7589 = vmatpush1.bf16.msra.mxu0 %v2516
        %7590 = vmatprep.subr.bf16.mxu0 %v2525
        %7591 = vmatpush1.bf16.msra.mxu0 %v2524
        %7592 = vmatprep.subr.bf16.mxu0 %v2533
        %7593 = vmatpush1.bf16.msra.mxu0 %v2532
        %7594 = vmatprep.subr.bf16.mxu0 %v2541
        %7595 = vmatpush1.bf16.msra.mxu0 %v2540
        %7596 = vmatprep.subr.bf16.mxu0 %v2549
        %7597 = vmatpush1.bf16.msra.mxu0 %v2548
        %7598 = vmatprep.subr.bf16.mxu0 %v2557
        %7599 = vmatpush1.bf16.msra.mxu0 %v2556
        %7600 = vmatprep.subr.bf16.mxu0 %v2565
        %7601 = vmatpush1.bf16.msra.mxu0 %v2564
        %7602 = vmatprep.subr.bf16.mxu0 %v2573
        %7603 = vmatpush1.bf16.msra.mxu0 %v2572
        %7604 = vmatprep.subr.bf16.mxu0 %v2581
        %7605 = vmatpush1.bf16.msra.mxu0 %v2580
        %7606 = vmatprep.subr.bf16.mxu0 %v2589
        %7607 = vmatpush1.bf16.msra.mxu0 %v2588
        %7608 = vmatprep.subr.bf16.mxu0 %v2597
        %7609 = vmatpush1.bf16.msra.mxu0 %v2596
        %7610 = vmatprep.subr.bf16.mxu0 %v2605
        %7611 = vmatpush1.bf16.msra.mxu0 %v2604
        %7612 = vmatprep.subr.bf16.mxu0 %v2613
        %7613 = vmatpush1.bf16.msra.mxu0 %v2612
        %7614 = vmatprep.subr.bf16.mxu0 %v2621
        %7615 = vmatpush1.bf16.msra.mxu0 %v2620
        %7616 = vmatprep.subr.bf16.mxu0 %v2629
        %7617 = vmatpush1.bf16.msra.mxu0 %v2628
        %7618 = vmatprep.subr.bf16.mxu0 %v2637
        %7619 = vmatpush1.bf16.msra.mxu0 %v2636
        %7620 = vmatprep.mubr.bf16.mxu0 %v611
        %7621 = vmatmul.mubr.bf16.gmra.mrb[0].mxu0 %v610
        %v7622 = vpop.f32.mrb[0].mxu0
        %v7623 = vadd.f32 %v7582, %v7622
        %v7624 = vpop.f32.mrb[0].mxu0
        %v7625 = vadd.f32 %v7584, %v7624
        %v7626 = vpop.f32.mrb[0].mxu0
        %v7627 = vpop.f32.mrb[0].mxu0
        %7628 = vdwg.mxu0
        %7629 = vmatprep.subr.bf16.mxu0 %v2645
        %7630 = vmatpush1.bf16.msra.mxu0 %v2644
        %7631 = vmatprep.subr.bf16.mxu0 %v2653
        %7632 = vmatpush1.bf16.msra.mxu0 %v2652
        %7633 = vmatprep.subr.bf16.mxu0 %v2661
        %7634 = vmatpush1.bf16.msra.mxu0 %v2660
        %7635 = vmatprep.subr.bf16.mxu0 %v2669
        %7636 = vmatpush1.bf16.msra.mxu0 %v2668
        %7637 = vmatprep.subr.bf16.mxu0 %v2677
        %7638 = vmatpush1.bf16.msra.mxu0 %v2676
        %7639 = vmatprep.subr.bf16.mxu0 %v2685
        %7640 = vmatpush1.bf16.msra.mxu0 %v2684
        %7641 = vmatprep.subr.bf16.mxu0 %v2693
        %7642 = vmatpush1.bf16.msra.mxu0 %v2692
        %7643 = vmatprep.subr.bf16.mxu0 %v2701
        %7644 = vmatpush1.bf16.msra.mxu0 %v2700
        %7645 = vmatprep.subr.bf16.mxu0 %v2709
        %7646 = vmatpush1.bf16.msra.mxu0 %v2708
        %7647 = vmatprep.subr.bf16.mxu0 %v2717
        %7648 = vmatpush1.bf16.msra.mxu0 %v2716
        %7649 = vmatprep.subr.bf16.mxu0 %v2725
        %7650 = vmatpush1.bf16.msra.mxu0 %v2724
        %7651 = vmatprep.subr.bf16.mxu0 %v2733
        %7652 = vmatpush1.bf16.msra.mxu0 %v2732
        %7653 = vmatprep.subr.bf16.mxu0 %v2741
        %7654 = vmatpush1.bf16.msra.mxu0 %v2740
        %7655 = vmatprep.subr.bf16.mxu0 %v2749
        %7656 = vmatpush1.bf16.msra.mxu0 %v2748
        %7657 = vmatprep.subr.bf16.mxu0 %v2757
        %7658 = vmatpush1.bf16.msra.mxu0 %v2756
        %7659 = vmatprep.subr.bf16.mxu0 %v2765
        %7660 = vmatpush1.bf16.msra.mxu0 %v2764
        %7661 = vmatprep.mubr.bf16.mxu0 %v613
        %7662 = vmatmul.mubr.bf16.gmra.mrb[0].mxu0 %v612
        %v7663 = vpop.f32.mrb[0].mxu0
        %v7664 = vadd.f32 %v7623, %v7663
        %v7665 = vpop.f32.mrb[0].mxu0
        %v7666 = vadd.f32 %v7625, %v7665
        %v7667 = vpop.f32.mrb[0].mxu0
        %v7668 = vpop.f32.mrb[0].mxu0
        %7669 = vdwg.mxu0
        %7670 = vmatprep.subr.bf16.mxu0 %v2773
        %7671 = vmatpush1.bf16.msra.mxu0 %v2772
        %7672 = vmatprep.subr.bf16.mxu0 %v2781
        %7673 = vmatpush1.bf16.msra.mxu0 %v2780
        %7674 = vmatprep.subr.bf16.mxu0 %v2789
        %7675 = vmatpush1.bf16.msra.mxu0 %v2788
        %7676 = vmatprep.subr.bf16.mxu0 %v2797
        %7677 = vmatpush1.bf16.msra.mxu0 %v2796
        %7678 = vmatprep.subr.bf16.mxu0 %v2805
        %7679 = vmatpush1.bf16.msra.mxu0 %v2804
        %7680 = vmatprep.subr.bf16.mxu0 %v2813
        %7681 = vmatpush1.bf16.msra.mxu0 %v2812
        %7682 = vmatprep.subr.bf16.mxu0 %v2821
        %7683 = vmatpush1.bf16.msra.mxu0 %v2820
        %7684 = vmatprep.subr.bf16.mxu0 %v2829
        %7685 = vmatpush1.bf16.msra.mxu0 %v2828
        %7686 = vmatprep.subr.bf16.mxu0 %v2837
        %7687 = vmatpush1.bf16.msra.mxu0 %v2836
        %7688 = vmatprep.subr.bf16.mxu0 %v2845
        %7689 = vmatpush1.bf16.msra.mxu0 %v2844
        %7690 = vmatprep.subr.bf16.mxu0 %v2853
        %7691 = vmatpush1.bf16.msra.mxu0 %v2852
        %7692 = vmatprep.subr.bf16.mxu0 %v2861
        %7693 = vmatpush1.bf16.msra.mxu0 %v2860
        %7694 = vmatprep.subr.bf16.mxu0 %v2869
        %7695 = vmatpush1.bf16.msra.mxu0 %v2868
        %7696 = vmatprep.subr.bf16.mxu0 %v2877
        %7697 = vmatpush1.bf16.msra.mxu0 %v2876
        %7698 = vmatprep.subr.bf16.mxu0 %v2885
        %7699 = vmatpush1.bf16.msra.mxu0 %v2884
        %7700 = vmatprep.subr.bf16.mxu0 %v2893
        %7701 = vmatpush1.bf16.msra.mxu0 %v2892
        %7702 = vmatprep.mubr.bf16.mxu0 %v615
        %7703 = vmatmul.mubr.bf16.gmra.mrb[0].mxu0 %v614
        %v7704 = vpop.f32.mrb[0].mxu0
        %v7705 = vadd.f32 %v7664, %v7704
        %v7706 = vpop.f32.mrb[0].mxu0
        %v7707 = vadd.f32 %v7666, %v7706
        %v7708 = vpop.f32.mrb[0].mxu0
        %v7709 = vpop.f32.mrb[0].mxu0
        %7710 = vdwg.mxu0
        %7711 = vmatprep.subr.bf16.mxu0 %v2901
        %7712 = vmatpush1.bf16.msra.mxu0 %v2900
        %7713 = vmatprep.subr.bf16.mxu0 %v2909
        %7714 = vmatpush1.bf16.msra.mxu0 %v2908
        %7715 = vmatprep.subr.bf16.mxu0 %v2917
        %7716 = vmatpush1.bf16.msra.mxu0 %v2916
        %7717 = vmatprep.subr.bf16.mxu0 %v2925
        %7718 = vmatpush1.bf16.msra.mxu0 %v2924
        %7719 = vmatprep.subr.bf16.mxu0 %v2933
        %7720 = vmatpush1.bf16.msra.mxu0 %v2932
        %7721 = vmatprep.subr.bf16.mxu0 %v2941
        %7722 = vmatpush1.bf16.msra.mxu0 %v2940
        %7723 = vmatprep.subr.bf16.mxu0 %v2949
        %7724 = vmatpush1.bf16.msra.mxu0 %v2948
        %7725 = vmatprep.subr.bf16.mxu0 %v2957
        %7726 = vmatpush1.bf16.msra.mxu0 %v2956
        %7727 = vmatprep.subr.bf16.mxu0 %v2965
        %7728 = vmatpush1.bf16.msra.mxu0 %v2964
        %7729 = vmatprep.subr.bf16.mxu0 %v2973
        %7730 = vmatpush1.bf16.msra.mxu0 %v2972
        %7731 = vmatprep.subr.bf16.mxu0 %v2981
        %7732 = vmatpush1.bf16.msra.mxu0 %v2980
        %7733 = vmatprep.subr.bf16.mxu0 %v2989
        %7734 = vmatpush1.bf16.msra.mxu0 %v2988
        %7735 = vmatprep.subr.bf16.mxu0 %v2997
        %7736 = vmatpush1.bf16.msra.mxu0 %v2996
        %7737 = vmatprep.subr.bf16.mxu0 %v3005
        %7738 = vmatpush1.bf16.msra.mxu0 %v3004
        %7739 = vmatprep.subr.bf16.mxu0 %v3013
        %7740 = vmatpush1.bf16.msra.mxu0 %v3012
        %7741 = vmatprep.subr.bf16.mxu0 %v3021
        %7742 = vmatpush1.bf16.msra.mxu0 %v3020
        %7743 = vmatprep.mubr.bf16.mxu0 %v617
        %7744 = vmatmul.mubr.bf16.gmra.mrb[0].mxu0 %v616
        %v7745 = vpop.f32.mrb[0].mxu0
        %v7746 = vadd.f32 %v7705, %v7745
        %v7747 = vpop.f32.mrb[0].mxu0
        %v7748 = vadd.f32 %v7707, %v7747
        %v7749 = vpop.f32.mrb[0].mxu0
        %v7750 = vpop.f32.mrb[0].mxu0
        %7751 = vdwg.mxu0
        %7752 = vmatprep.subr.bf16.mxu0 %v3029
        %7753 = vmatpush1.bf16.msra.mxu0 %v3028
        %7754 = vmatprep.subr.bf16.mxu0 %v3037
        %7755 = vmatpush1.bf16.msra.mxu0 %v3036
        %7756 = vmatprep.subr.bf16.mxu0 %v3045
        %7757 = vmatpush1.bf16.msra.mxu0 %v3044
        %7758 = vmatprep.subr.bf16.mxu0 %v3053
        %7759 = vmatpush1.bf16.msra.mxu0 %v3052
        %7760 = vmatprep.subr.bf16.mxu0 %v3061
        %7761 = vmatpush1.bf16.msra.mxu0 %v3060
        %7762 = vmatprep.subr.bf16.mxu0 %v3069
        %7763 = vmatpush1.bf16.msra.mxu0 %v3068
        %7764 = vmatprep.subr.bf16.mxu0 %v3077
        %7765 = vmatpush1.bf16.msra.mxu0 %v3076
        %7766 = vmatprep.subr.bf16.mxu0 %v3085
        %7767 = vmatpush1.bf16.msra.mxu0 %v3084
        %7768 = vmatprep.subr.bf16.mxu0 %v3093
        %7769 = vmatpush1.bf16.msra.mxu0 %v3092
        %7770 = vmatprep.subr.bf16.mxu0 %v3101
        %7771 = vmatpush1.bf16.msra.mxu0 %v3100
        %7772 = vmatprep.subr.bf16.mxu0 %v3109
        %7773 = vmatpush1.bf16.msra.mxu0 %v3108
        %7774 = vmatprep.subr.bf16.mxu0 %v3117
        %7775 = vmatpush1.bf16.msra.mxu0 %v3116
        %7776 = vmatprep.subr.bf16.mxu0 %v3125
        %7777 = vmatpush1.bf16.msra.mxu0 %v3124
        %7778 = vmatprep.subr.bf16.mxu0 %v3133
        %7779 = vmatpush1.bf16.msra.mxu0 %v3132
        %7780 = vmatprep.subr.bf16.mxu0 %v3141
        %7781 = vmatpush1.bf16.msra.mxu0 %v3140
        %7782 = vmatprep.subr.bf16.mxu0 %v3149
        %7783 = vmatpush1.bf16.msra.mxu0 %v3148
        %7784 = vmatprep.mubr.bf16.mxu0 %v619
        %7785 = vmatmul.mubr.bf16.gmra.mrb[0].mxu0 %v618
        %v7786 = vpop.f32.mrb[0].mxu0
        %v7787 = vadd.f32 %v7746, %v7786
        %v7788 = vpop.f32.mrb[0].mxu0
        %v7789 = vadd.f32 %v7748, %v7788
        %v7790 = vpop.f32.mrb[0].mxu0
        %v7791 = vpop.f32.mrb[0].mxu0
        %7792 = vdwg.mxu0
        %7793 = vmatprep.subr.bf16.mxu0 %v3157
        %7794 = vmatpush1.bf16.msra.mxu0 %v3156
        %7795 = vmatprep.subr.bf16.mxu0 %v3165
        %7796 = vmatpush1.bf16.msra.mxu0 %v3164
        %7797 = vmatprep.subr.bf16.mxu0 %v3173
        %7798 = vmatpush1.bf16.msra.mxu0 %v3172
        %7799 = vmatprep.subr.bf16.mxu0 %v3181
        %7800 = vmatpush1.bf16.msra.mxu0 %v3180
        %7801 = vmatprep.subr.bf16.mxu0 %v3189
        %7802 = vmatpush1.bf16.msra.mxu0 %v3188
        %7803 = vmatprep.subr.bf16.mxu0 %v3197
        %7804 = vmatpush1.bf16.msra.mxu0 %v3196
        %7805 = vmatprep.subr.bf16.mxu0 %v3205
        %7806 = vmatpush1.bf16.msra.mxu0 %v3204
        %7807 = vmatprep.subr.bf16.mxu0 %v3213
        %7808 = vmatpush1.bf16.msra.mxu0 %v3212
        %7809 = vmatprep.subr.bf16.mxu0 %v3221
        %7810 = vmatpush1.bf16.msra.mxu0 %v3220
        %7811 = vmatprep.subr.bf16.mxu0 %v3229
        %7812 = vmatpush1.bf16.msra.mxu0 %v3228
        %7813 = vmatprep.subr.bf16.mxu0 %v3237
        %7814 = vmatpush1.bf16.msra.mxu0 %v3236
        %7815 = vmatprep.subr.bf16.mxu0 %v3245
        %7816 = vmatpush1.bf16.msra.mxu0 %v3244
        %7817 = vmatprep.subr.bf16.mxu0 %v3253
        %7818 = vmatpush1.bf16.msra.mxu0 %v3252
        %7819 = vmatprep.subr.bf16.mxu0 %v3261
        %7820 = vmatpush1.bf16.msra.mxu0 %v3260
        %7821 = vmatprep.subr.bf16.mxu0 %v3269
        %7822 = vmatpush1.bf16.msra.mxu0 %v3268
        %7823 = vmatprep.subr.bf16.mxu0 %v3277
        %7824 = vmatpush1.bf16.msra.mxu0 %v3276
        %7825 = vmatprep.mubr.bf16.mxu0 %v621
        %7826 = vmatmul.mubr.bf16.gmra.mrb[0].mxu0 %v620
        %v7827 = vpop.f32.mrb[0].mxu0
        %v7828 = vadd.f32 %v7787, %v7827
        %v7829 = vpop.f32.mrb[0].mxu0
        %v7830 = vadd.f32 %v7789, %v7829
        %v7831 = vpop.f32.mrb[0].mxu0
        %v7832 = vpop.f32.mrb[0].mxu0
        %7833 = vdwg.mxu0
        %7834 = vmatprep.subr.bf16.mxu0 %v3285
        %7835 = vmatpush1.bf16.msra.mxu0 %v3284
        %7836 = vmatprep.subr.bf16.mxu0 %v3293
        %7837 = vmatpush1.bf16.msra.mxu0 %v3292
        %7838 = vmatprep.subr.bf16.mxu0 %v3301
        %7839 = vmatpush1.bf16.msra.mxu0 %v3300
        %7840 = vmatprep.subr.bf16.mxu0 %v3309
        %7841 = vmatpush1.bf16.msra.mxu0 %v3308
        %7842 = vmatprep.subr.bf16.mxu0 %v3317
        %7843 = vmatpush1.bf16.msra.mxu0 %v3316
        %7844 = vmatprep.subr.bf16.mxu0 %v3325
        %7845 = vmatpush1.bf16.msra.mxu0 %v3324
        %7846 = vmatprep.subr.bf16.mxu0 %v3333
        %7847 = vmatpush1.bf16.msra.mxu0 %v3332
        %7848 = vmatprep.subr.bf16.mxu0 %v3341
        %7849 = vmatpush1.bf16.msra.mxu0 %v3340
        %7850 = vmatprep.subr.bf16.mxu0 %v3349
        %7851 = vmatpush1.bf16.msra.mxu0 %v3348
        %7852 = vmatprep.subr.bf16.mxu0 %v3357
        %7853 = vmatpush1.bf16.msra.mxu0 %v3356
        %7854 = vmatprep.subr.bf16.mxu0 %v3365
        %7855 = vmatpush1.bf16.msra.mxu0 %v3364
        %7856 = vmatprep.subr.bf16.mxu0 %v3373
        %7857 = vmatpush1.bf16.msra.mxu0 %v3372
        %7858 = vmatprep.subr.bf16.mxu0 %v3381
        %7859 = vmatpush1.bf16.msra.mxu0 %v3380
        %7860 = vmatprep.subr.bf16.mxu0 %v3389
        %7861 = vmatpush1.bf16.msra.mxu0 %v3388
        %7862 = vmatprep.subr.bf16.mxu0 %v3397
        %7863 = vmatpush1.bf16.msra.mxu0 %v3396
        %7864 = vmatprep.subr.bf16.mxu0 %v3405
        %7865 = vmatpush1.bf16.msra.mxu0 %v3404
        %7866 = vmatprep.mubr.bf16.mxu0 %v623
        %7867 = vmatmul.mubr.bf16.gmra.mrb[0].mxu0 %v622
        %v7868 = vpop.f32.mrb[0].mxu0
        %v7869 = vadd.f32 %v7828, %v7868
        %v7870 = vpop.f32.mrb[0].mxu0
        %v7871 = vadd.f32 %v7830, %v7870
        %v7872 = vpop.f32.mrb[0].mxu0
        %v7873 = vpop.f32.mrb[0].mxu0
        %7874 = vdwg.mxu0
        %7875 = vmatprep.subr.bf16.mxu0 %v3413
        %7876 = vmatpush1.bf16.msra.mxu0 %v3412
        %7877 = vmatprep.subr.bf16.mxu0 %v3421
        %7878 = vmatpush1.bf16.msra.mxu0 %v3420
        %7879 = vmatprep.subr.bf16.mxu0 %v3429
        %7880 = vmatpush1.bf16.msra.mxu0 %v3428
        %7881 = vmatprep.subr.bf16.mxu0 %v3437
        %7882 = vmatpush1.bf16.msra.mxu0 %v3436
        %7883 = vmatprep.subr.bf16.mxu0 %v3445
        %7884 = vmatpush1.bf16.msra.mxu0 %v3444
        %7885 = vmatprep.subr.bf16.mxu0 %v3453
        %7886 = vmatpush1.bf16.msra.mxu0 %v3452
        %7887 = vmatprep.subr.bf16.mxu0 %v3461
        %7888 = vmatpush1.bf16.msra.mxu0 %v3460
        %7889 = vmatprep.subr.bf16.mxu0 %v3469
        %7890 = vmatpush1.bf16.msra.mxu0 %v3468
        %7891 = vmatprep.subr.bf16.mxu0 %v3477
        %7892 = vmatpush1.bf16.msra.mxu0 %v3476
        %7893 = vmatprep.subr.bf16.mxu0 %v3485
        %7894 = vmatpush1.bf16.msra.mxu0 %v3484
        %7895 = vmatprep.subr.bf16.mxu0 %v3493
        %7896 = vmatpush1.bf16.msra.mxu0 %v3492
        %7897 = vmatprep.subr.bf16.mxu0 %v3501
        %7898 = vmatpush1.bf16.msra.mxu0 %v3500
        %7899 = vmatprep.subr.bf16.mxu0 %v3509
        %7900 = vmatpush1.bf16.msra.mxu0 %v3508
        %7901 = vmatprep.subr.bf16.mxu0 %v3517
        %7902 = vmatpush1.bf16.msra.mxu0 %v3516
        %7903 = vmatprep.subr.bf16.mxu0 %v3525
        %7904 = vmatpush1.bf16.msra.mxu0 %v3524
        %7905 = vmatprep.subr.bf16.mxu0 %v3533
        %7906 = vmatpush1.bf16.msra.mxu0 %v3532
        %7907 = vmatprep.mubr.bf16.mxu0 %v625
        %7908 = vmatmul.mubr.bf16.gmra.mrb[0].mxu0 %v624
        %v7909 = vpop.f32.mrb[0].mxu0
        %v7910 = vadd.f32 %v7869, %v7909
        %v7911 = vpop.f32.mrb[0].mxu0
        %v7912 = vadd.f32 %v7871, %v7911
        %v7913 = vpop.f32.mrb[0].mxu0
        %v7914 = vpop.f32.mrb[0].mxu0
        %7915 = vdwg.mxu0
        %7916 = vmatprep.subr.bf16.mxu0 %v3541
        %7917 = vmatpush1.bf16.msra.mxu0 %v3540
        %7918 = vmatprep.subr.bf16.mxu0 %v3549
        %7919 = vmatpush1.bf16.msra.mxu0 %v3548
        %7920 = vmatprep.subr.bf16.mxu0 %v3557
        %7921 = vmatpush1.bf16.msra.mxu0 %v3556
        %7922 = vmatprep.subr.bf16.mxu0 %v3565
        %7923 = vmatpush1.bf16.msra.mxu0 %v3564
        %7924 = vmatprep.subr.bf16.mxu0 %v3573
        %7925 = vmatpush1.bf16.msra.mxu0 %v3572
        %7926 = vmatprep.subr.bf16.mxu0 %v3581
        %7927 = vmatpush1.bf16.msra.mxu0 %v3580
        %7928 = vmatprep.subr.bf16.mxu0 %v3589
        %7929 = vmatpush1.bf16.msra.mxu0 %v3588
        %7930 = vmatprep.subr.bf16.mxu0 %v3597
        %7931 = vmatpush1.bf16.msra.mxu0 %v3596
        %7932 = vmatprep.subr.bf16.mxu0 %v3605
        %7933 = vmatpush1.bf16.msra.mxu0 %v3604
        %7934 = vmatprep.subr.bf16.mxu0 %v3613
        %7935 = vmatpush1.bf16.msra.mxu0 %v3612
        %7936 = vmatprep.subr.bf16.mxu0 %v3621
        %7937 = vmatpush1.bf16.msra.mxu0 %v3620
        %7938 = vmatprep.subr.bf16.mxu0 %v3629
        %7939 = vmatpush1.bf16.msra.mxu0 %v3628
        %7940 = vmatprep.subr.bf16.mxu0 %v3637
        %7941 = vmatpush1.bf16.msra.mxu0 %v3636
        %7942 = vmatprep.subr.bf16.mxu0 %v3645
        %7943 = vmatpush1.bf16.msra.mxu0 %v3644
        %7944 = vmatprep.subr.bf16.mxu0 %v3653
        %7945 = vmatpush1.bf16.msra.mxu0 %v3652
        %7946 = vmatprep.subr.bf16.mxu0 %v3661
        %7947 = vmatpush1.bf16.msra.mxu0 %v3660
        %7948 = vmatprep.mubr.bf16.mxu0 %v627
        %7949 = vmatmul.mubr.bf16.gmra.mrb[0].mxu0 %v626
        %v7950 = vpop.f32.mrb[0].mxu0
        %v7951 = vadd.f32 %v7910, %v7950
        %v7952 = vpop.f32.mrb[0].mxu0
        %v7953 = vadd.f32 %v7912, %v7952
        %v7954 = vpop.f32.mrb[0].mxu0
        %v7955 = vpop.f32.mrb[0].mxu0
        %7956 = vdwg.mxu0
        %7957 = vmatprep.subr.bf16.mxu0 %v3669
        %7958 = vmatpush1.bf16.msra.mxu0 %v3668
        %7959 = vmatprep.subr.bf16.mxu0 %v3677
        %7960 = vmatpush1.bf16.msra.mxu0 %v3676
        %7961 = vmatprep.subr.bf16.mxu0 %v3685
        %7962 = vmatpush1.bf16.msra.mxu0 %v3684
        %7963 = vmatprep.subr.bf16.mxu0 %v3693
        %7964 = vmatpush1.bf16.msra.mxu0 %v3692
        %7965 = vmatprep.subr.bf16.mxu0 %v3701
        %7966 = vmatpush1.bf16.msra.mxu0 %v3700
        %7967 = vmatprep.subr.bf16.mxu0 %v3709
        %7968 = vmatpush1.bf16.msra.mxu0 %v3708
        %7969 = vmatprep.subr.bf16.mxu0 %v3717
        %7970 = vmatpush1.bf16.msra.mxu0 %v3716
        %7971 = vmatprep.subr.bf16.mxu0 %v3725
        %7972 = vmatpush1.bf16.msra.mxu0 %v3724
        %7973 = vmatprep.subr.bf16.mxu0 %v3733
        %7974 = vmatpush1.bf16.msra.mxu0 %v3732
        %7975 = vmatprep.subr.bf16.mxu0 %v3741
        %7976 = vmatpush1.bf16.msra.mxu0 %v3740
        %7977 = vmatprep.subr.bf16.mxu0 %v3749
        %7978 = vmatpush1.bf16.msra.mxu0 %v3748
        %7979 = vmatprep.subr.bf16.mxu0 %v3757
        %7980 = vmatpush1.bf16.msra.mxu0 %v3756
        %7981 = vmatprep.subr.bf16.mxu0 %v3765
        %7982 = vmatpush1.bf16.msra.mxu0 %v3764
        %7983 = vmatprep.subr.bf16.mxu0 %v3773
        %7984 = vmatpush1.bf16.msra.mxu0 %v3772
        %7985 = vmatprep.subr.bf16.mxu0 %v3781
        %7986 = vmatpush1.bf16.msra.mxu0 %v3780
        %7987 = vmatprep.subr.bf16.mxu0 %v3789
        %7988 = vmatpush1.bf16.msra.mxu0 %v3788
        %7989 = vmatprep.mubr.bf16.mxu0 %v629
        %7990 = vmatmul.mubr.bf16.gmra.mrb[0].mxu0 %v628
        %v7991 = vpop.f32.mrb[0].mxu0
        %v7992 = vadd.f32 %v7951, %v7991
        %v7993 = vpop.f32.mrb[0].mxu0
        %v7994 = vadd.f32 %v7953, %v7993
        %v7995 = vpop.f32.mrb[0].mxu0
        %v7996 = vpop.f32.mrb[0].mxu0
        %7997 = vdwg.mxu0
        %7998 = vmatprep.subr.bf16.mxu0 %v3797
        %7999 = vmatpush1.bf16.msra.mxu0 %v3796
        %8000 = vmatprep.subr.bf16.mxu0 %v3805
        %8001 = vmatpush1.bf16.msra.mxu0 %v3804
        %8002 = vmatprep.subr.bf16.mxu0 %v3813
        %8003 = vmatpush1.bf16.msra.mxu0 %v3812
        %8004 = vmatprep.subr.bf16.mxu0 %v3821
        %8005 = vmatpush1.bf16.msra.mxu0 %v3820
        %8006 = vmatprep.subr.bf16.mxu0 %v3829
        %8007 = vmatpush1.bf16.msra.mxu0 %v3828
        %8008 = vmatprep.subr.bf16.mxu0 %v3837
        %8009 = vmatpush1.bf16.msra.mxu0 %v3836
        %8010 = vmatprep.subr.bf16.mxu0 %v3845
        %8011 = vmatpush1.bf16.msra.mxu0 %v3844
        %8012 = vmatprep.subr.bf16.mxu0 %v3853
        %8013 = vmatpush1.bf16.msra.mxu0 %v3852
        %8014 = vmatprep.subr.bf16.mxu0 %v3861
        %8015 = vmatpush1.bf16.msra.mxu0 %v3860
        %8016 = vmatprep.subr.bf16.mxu0 %v3869
        %8017 = vmatpush1.bf16.msra.mxu0 %v3868
        %8018 = vmatprep.subr.bf16.mxu0 %v3877
        %8019 = vmatpush1.bf16.msra.mxu0 %v3876
        %8020 = vmatprep.subr.bf16.mxu0 %v3885
        %8021 = vmatpush1.bf16.msra.mxu0 %v3884
        %8022 = vmatprep.subr.bf16.mxu0 %v3893
        %8023 = vmatpush1.bf16.msra.mxu0 %v3892
        %8024 = vmatprep.subr.bf16.mxu0 %v3901
        %8025 = vmatpush1.bf16.msra.mxu0 %v3900
        %8026 = vmatprep.subr.bf16.mxu0 %v3909
        %8027 = vmatpush1.bf16.msra.mxu0 %v3908
        %8028 = vmatprep.subr.bf16.mxu0 %v3917
        %8029 = vmatpush1.bf16.msra.mxu0 %v3916
        %8030 = vmatprep.mubr.bf16.mxu0 %v631
        %8031 = vmatmul.mubr.bf16.gmra.mrb[0].mxu0 %v630
        %v8032 = vpop.f32.mrb[0].mxu0
        %v8033 = vadd.f32 %v7992, %v8032
        %v8034 = vpop.f32.mrb[0].mxu0
        %v8035 = vadd.f32 %v7994, %v8034
        %v8036 = vpop.f32.mrb[0].mxu0
        %v8037 = vpop.f32.mrb[0].mxu0
        %8038 = vdwg.mxu0
        %8039 = vmatprep.subr.bf16.mxu0 %v3925
        %8040 = vmatpush1.bf16.msra.mxu0 %v3924
        %8041 = vmatprep.subr.bf16.mxu0 %v3933
        %8042 = vmatpush1.bf16.msra.mxu0 %v3932
        %8043 = vmatprep.subr.bf16.mxu0 %v3941
        %8044 = vmatpush1.bf16.msra.mxu0 %v3940
        %8045 = vmatprep.subr.bf16.mxu0 %v3949
        %8046 = vmatpush1.bf16.msra.mxu0 %v3948
        %8047 = vmatprep.subr.bf16.mxu0 %v3957
        %8048 = vmatpush1.bf16.msra.mxu0 %v3956
        %8049 = vmatprep.subr.bf16.mxu0 %v3965
        %8050 = vmatpush1.bf16.msra.mxu0 %v3964
        %8051 = vmatprep.subr.bf16.mxu0 %v3973
        %8052 = vmatpush1.bf16.msra.mxu0 %v3972
        %8053 = vmatprep.subr.bf16.mxu0 %v3981
        %8054 = vmatpush1.bf16.msra.mxu0 %v3980
        %8055 = vmatprep.subr.bf16.mxu0 %v3989
        %8056 = vmatpush1.bf16.msra.mxu0 %v3988
        %8057 = vmatprep.subr.bf16.mxu0 %v3997
        %8058 = vmatpush1.bf16.msra.mxu0 %v3996
        %8059 = vmatprep.subr.bf16.mxu0 %v4005
        %8060 = vmatpush1.bf16.msra.mxu0 %v4004
        %8061 = vmatprep.subr.bf16.mxu0 %v4013
        %8062 = vmatpush1.bf16.msra.mxu0 %v4012
        %8063 = vmatprep.subr.bf16.mxu0 %v4021
        %8064 = vmatpush1.bf16.msra.mxu0 %v4020
        %8065 = vmatprep.subr.bf16.mxu0 %v4029
        %8066 = vmatpush1.bf16.msra.mxu0 %v4028
        %8067 = vmatprep.subr.bf16.mxu0 %v4037
        %8068 = vmatpush1.bf16.msra.mxu0 %v4036
        %8069 = vmatprep.subr.bf16.mxu0 %v4045
        %8070 = vmatpush1.bf16.msra.mxu0 %v4044
        %8071 = vmatprep.mubr.bf16.mxu0 %v633
        %8072 = vmatmul.mubr.bf16.gmra.mrb[0].mxu0 %v632
        %v8073 = vpop.f32.mrb[0].mxu0
        %v8074 = vadd.f32 %v8033, %v8073
        %v8075 = vpop.f32.mrb[0].mxu0
        %v8076 = vadd.f32 %v8035, %v8075
        %v8077 = vpop.f32.mrb[0].mxu0
        %v8078 = vpop.f32.mrb[0].mxu0
        %8079 = vdwg.mxu0
        %8080 = vmatprep.subr.bf16.mxu0 %v4053
        %8081 = vmatpush1.bf16.msra.mxu0 %v4052
        %8082 = vmatprep.subr.bf16.mxu0 %v4061
        %8083 = vmatpush1.bf16.msra.mxu0 %v4060
        %8084 = vmatprep.subr.bf16.mxu0 %v4069
        %8085 = vmatpush1.bf16.msra.mxu0 %v4068
        %8086 = vmatprep.subr.bf16.mxu0 %v4077
        %8087 = vmatpush1.bf16.msra.mxu0 %v4076
        %8088 = vmatprep.subr.bf16.mxu0 %v4085
        %8089 = vmatpush1.bf16.msra.mxu0 %v4084
        %8090 = vmatprep.subr.bf16.mxu0 %v4093
        %8091 = vmatpush1.bf16.msra.mxu0 %v4092
        %8092 = vmatprep.subr.bf16.mxu0 %v4101
        %8093 = vmatpush1.bf16.msra.mxu0 %v4100
        %8094 = vmatprep.subr.bf16.mxu0 %v4109
        %8095 = vmatpush1.bf16.msra.mxu0 %v4108
        %8096 = vmatprep.subr.bf16.mxu0 %v4117
        %8097 = vmatpush1.bf16.msra.mxu0 %v4116
        %8098 = vmatprep.subr.bf16.mxu0 %v4125
        %8099 = vmatpush1.bf16.msra.mxu0 %v4124
        %8100 = vmatprep.subr.bf16.mxu0 %v4133
        %8101 = vmatpush1.bf16.msra.mxu0 %v4132
        %8102 = vmatprep.subr.bf16.mxu0 %v4141
        %8103 = vmatpush1.bf16.msra.mxu0 %v4140
        %8104 = vmatprep.subr.bf16.mxu0 %v4149
        %8105 = vmatpush1.bf16.msra.mxu0 %v4148
        %8106 = vmatprep.subr.bf16.mxu0 %v4157
        %8107 = vmatpush1.bf16.msra.mxu0 %v4156
        %8108 = vmatprep.subr.bf16.mxu0 %v4165
        %8109 = vmatpush1.bf16.msra.mxu0 %v4164
        %8110 = vmatprep.subr.bf16.mxu0 %v4173
        %8111 = vmatpush1.bf16.msra.mxu0 %v4172
        %8112 = vmatprep.mubr.bf16.mxu0 %v635
        %8113 = vmatmul.mubr.bf16.gmra.mrb[0].mxu0 %v634
        %v8114 = vpop.f32.mrb[0].mxu0
        %v8115 = vadd.f32 %v8074, %v8114
        %v8116 = vpop.f32.mrb[0].mxu0
        %v8117 = vadd.f32 %v8076, %v8116
        %v8118 = vpop.f32.mrb[0].mxu0
        %v8119 = vpop.f32.mrb[0].mxu0
        %8120 = vdwg.mxu0
        %8121 = vmatprep.subr.bf16.mxu0 %v4181
        %8122 = vmatpush1.bf16.msra.mxu0 %v4180
        %8123 = vmatprep.subr.bf16.mxu0 %v4189
        %8124 = vmatpush1.bf16.msra.mxu0 %v4188
        %8125 = vmatprep.subr.bf16.mxu0 %v4197
        %8126 = vmatpush1.bf16.msra.mxu0 %v4196
        %8127 = vmatprep.subr.bf16.mxu0 %v4205
        %8128 = vmatpush1.bf16.msra.mxu0 %v4204
        %8129 = vmatprep.subr.bf16.mxu0 %v4213
        %8130 = vmatpush1.bf16.msra.mxu0 %v4212
        %8131 = vmatprep.subr.bf16.mxu0 %v4221
        %8132 = vmatpush1.bf16.msra.mxu0 %v4220
        %8133 = vmatprep.subr.bf16.mxu0 %v4229
        %8134 = vmatpush1.bf16.msra.mxu0 %v4228
        %8135 = vmatprep.subr.bf16.mxu0 %v4237
        %8136 = vmatpush1.bf16.msra.mxu0 %v4236
        %8137 = vmatprep.subr.bf16.mxu0 %v4245
        %8138 = vmatpush1.bf16.msra.mxu0 %v4244
        %8139 = vmatprep.subr.bf16.mxu0 %v4253
        %8140 = vmatpush1.bf16.msra.mxu0 %v4252
        %8141 = vmatprep.subr.bf16.mxu0 %v4261
        %8142 = vmatpush1.bf16.msra.mxu0 %v4260
        %8143 = vmatprep.subr.bf16.mxu0 %v4269
        %8144 = vmatpush1.bf16.msra.mxu0 %v4268
        %8145 = vmatprep.subr.bf16.mxu0 %v4277
        %8146 = vmatpush1.bf16.msra.mxu0 %v4276
        %8147 = vmatprep.subr.bf16.mxu0 %v4285
        %8148 = vmatpush1.bf16.msra.mxu0 %v4284
        %8149 = vmatprep.subr.bf16.mxu0 %v4293
        %8150 = vmatpush1.bf16.msra.mxu0 %v4292
        %8151 = vmatprep.subr.bf16.mxu0 %v4301
        %8152 = vmatpush1.bf16.msra.mxu0 %v4300
        %8153 = vmatprep.mubr.bf16.mxu0 %v637
        %8154 = vmatmul.mubr.bf16.gmra.mrb[0].mxu0 %v636
        %v8155 = vpop.f32.mrb[0].mxu0
        %v8156 = vadd.f32 %v8115, %v8155
        %v8157 = vpop.f32.mrb[0].mxu0
        %v8158 = vadd.f32 %v8117, %v8157
        %v8159 = vpop.f32.mrb[0].mxu0
        %v8160 = vpop.f32.mrb[0].mxu0
        %8161 = vdwg.mxu0
        %8162 = vmatprep.subr.bf16.mxu0 %v4309
        %8163 = vmatpush1.bf16.msra.mxu0 %v4308
        %8164 = vmatprep.subr.bf16.mxu0 %v4317
        %8165 = vmatpush1.bf16.msra.mxu0 %v4316
        %8166 = vmatprep.subr.bf16.mxu0 %v4325
        %8167 = vmatpush1.bf16.msra.mxu0 %v4324
        %8168 = vmatprep.subr.bf16.mxu0 %v4333
        %8169 = vmatpush1.bf16.msra.mxu0 %v4332
        %8170 = vmatprep.subr.bf16.mxu0 %v4341
        %8171 = vmatpush1.bf16.msra.mxu0 %v4340
        %8172 = vmatprep.subr.bf16.mxu0 %v4349
        %8173 = vmatpush1.bf16.msra.mxu0 %v4348
        %8174 = vmatprep.subr.bf16.mxu0 %v4357
        %8175 = vmatpush1.bf16.msra.mxu0 %v4356
        %8176 = vmatprep.subr.bf16.mxu0 %v4365
        %8177 = vmatpush1.bf16.msra.mxu0 %v4364
        %8178 = vmatprep.subr.bf16.mxu0 %v4373
        %8179 = vmatpush1.bf16.msra.mxu0 %v4372
        %8180 = vmatprep.subr.bf16.mxu0 %v4381
        %8181 = vmatpush1.bf16.msra.mxu0 %v4380
        %8182 = vmatprep.subr.bf16.mxu0 %v4389
        %8183 = vmatpush1.bf16.msra.mxu0 %v4388
        %8184 = vmatprep.subr.bf16.mxu0 %v4397
        %8185 = vmatpush1.bf16.msra.mxu0 %v4396
        %8186 = vmatprep.subr.bf16.mxu0 %v4405
        %8187 = vmatpush1.bf16.msra.mxu0 %v4404
        %8188 = vmatprep.subr.bf16.mxu0 %v4413
        %8189 = vmatpush1.bf16.msra.mxu0 %v4412
        %8190 = vmatprep.subr.bf16.mxu0 %v4421
        %8191 = vmatpush1.bf16.msra.mxu0 %v4420
        %8192 = vmatprep.subr.bf16.mxu0 %v4429
        %8193 = vmatpush1.bf16.msra.mxu0 %v4428
        %8194 = vmatprep.mubr.bf16.mxu0 %v639
        %8195 = vmatmul.mubr.bf16.gmra.mrb[0].mxu0 %v638
        %v8196 = vpop.f32.mrb[0].mxu0
        %v8197 = vadd.f32 %v8156, %v8196
        %v8198 = vpop.f32.mrb[0].mxu0
        %v8199 = vadd.f32 %v8158, %v8198
        %v8200 = vpop.f32.mrb[0].mxu0
        %v8201 = vpop.f32.mrb[0].mxu0
        %8202 = vdwg.mxu0
        %8203 = vmatprep.subr.bf16.mxu0 %v4437
        %8204 = vmatpush1.bf16.msra.mxu0 %v4436
        %8205 = vmatprep.subr.bf16.mxu0 %v4445
        %8206 = vmatpush1.bf16.msra.mxu0 %v4444
        %8207 = vmatprep.subr.bf16.mxu0 %v4453
        %8208 = vmatpush1.bf16.msra.mxu0 %v4452
        %8209 = vmatprep.subr.bf16.mxu0 %v4461
        %8210 = vmatpush1.bf16.msra.mxu0 %v4460
        %8211 = vmatprep.subr.bf16.mxu0 %v4469
        %8212 = vmatpush1.bf16.msra.mxu0 %v4468
        %8213 = vmatprep.subr.bf16.mxu0 %v4477
        %8214 = vmatpush1.bf16.msra.mxu0 %v4476
        %8215 = vmatprep.subr.bf16.mxu0 %v4485
        %8216 = vmatpush1.bf16.msra.mxu0 %v4484
        %8217 = vmatprep.subr.bf16.mxu0 %v4493
        %8218 = vmatpush1.bf16.msra.mxu0 %v4492
        %8219 = vmatprep.subr.bf16.mxu0 %v4501
        %8220 = vmatpush1.bf16.msra.mxu0 %v4500
        %8221 = vmatprep.subr.bf16.mxu0 %v4509
        %8222 = vmatpush1.bf16.msra.mxu0 %v4508
        %8223 = vmatprep.subr.bf16.mxu0 %v4517
        %8224 = vmatpush1.bf16.msra.mxu0 %v4516
        %8225 = vmatprep.subr.bf16.mxu0 %v4525
        %8226 = vmatpush1.bf16.msra.mxu0 %v4524
        %8227 = vmatprep.subr.bf16.mxu0 %v4533
        %8228 = vmatpush1.bf16.msra.mxu0 %v4532
        %8229 = vmatprep.subr.bf16.mxu0 %v4541
        %8230 = vmatpush1.bf16.msra.mxu0 %v4540
        %8231 = vmatprep.subr.bf16.mxu0 %v4549
        %8232 = vmatpush1.bf16.msra.mxu0 %v4548
        %8233 = vmatprep.subr.bf16.mxu0 %v4557
        %8234 = vmatpush1.bf16.msra.mxu0 %v4556
        %8235 = vmatprep.mubr.bf16.mxu0 %v641
        %8236 = vmatmul.mubr.bf16.gmra.mrb[0].mxu0 %v640
        %v8237 = vpop.f32.mrb[0].mxu0
        %v8238 = vadd.f32 %v8197, %v8237
        %v8239 = vpop.f32.mrb[0].mxu0
        %v8240 = vadd.f32 %v8199, %v8239
        %v8241 = vpop.f32.mrb[0].mxu0
        %v8242 = vpop.f32.mrb[0].mxu0
        %8243 = vdwg.mxu0
        %8244 = vmatprep.subr.bf16.mxu0 %v4565
        %8245 = vmatpush1.bf16.msra.mxu0 %v4564
        %8246 = vmatprep.subr.bf16.mxu0 %v4573
        %8247 = vmatpush1.bf16.msra.mxu0 %v4572
        %8248 = vmatprep.subr.bf16.mxu0 %v4581
        %8249 = vmatpush1.bf16.msra.mxu0 %v4580
        %8250 = vmatprep.subr.bf16.mxu0 %v4589
        %8251 = vmatpush1.bf16.msra.mxu0 %v4588
        %8252 = vmatprep.subr.bf16.mxu0 %v4597
        %8253 = vmatpush1.bf16.msra.mxu0 %v4596
        %8254 = vmatprep.subr.bf16.mxu0 %v4605
        %8255 = vmatpush1.bf16.msra.mxu0 %v4604
        %8256 = vmatprep.subr.bf16.mxu0 %v4613
        %8257 = vmatpush1.bf16.msra.mxu0 %v4612
        %8258 = vmatprep.subr.bf16.mxu0 %v4621
        %8259 = vmatpush1.bf16.msra.mxu0 %v4620
        %8260 = vmatprep.subr.bf16.mxu0 %v4629
        %8261 = vmatpush1.bf16.msra.mxu0 %v4628
        %8262 = vmatprep.subr.bf16.mxu0 %v4637
        %8263 = vmatpush1.bf16.msra.mxu0 %v4636
        %8264 = vmatprep.subr.bf16.mxu0 %v4645
        %8265 = vmatpush1.bf16.msra.mxu0 %v4644
        %8266 = vmatprep.subr.bf16.mxu0 %v4653
        %8267 = vmatpush1.bf16.msra.mxu0 %v4652
        %8268 = vmatprep.subr.bf16.mxu0 %v4661
        %8269 = vmatpush1.bf16.msra.mxu0 %v4660
        %8270 = vmatprep.subr.bf16.mxu0 %v4669
        %8271 = vmatpush1.bf16.msra.mxu0 %v4668
        %8272 = vmatprep.subr.bf16.mxu0 %v4677
        %8273 = vmatpush1.bf16.msra.mxu0 %v4676
        %8274 = vmatprep.subr.bf16.mxu0 %v4685
        %8275 = vmatpush1.bf16.msra.mxu0 %v4684
        %8276 = vmatprep.mubr.bf16.mxu0 %v643
        %8277 = vmatmul.mubr.bf16.gmra.mrb[0].mxu0 %v642
        %v8278 = vpop.f32.mrb[0].mxu0
        %v8279 = vadd.f32 %v8238, %v8278
        %v8280 = vpop.f32.mrb[0].mxu0
        %v8281 = vadd.f32 %v8240, %v8280
        %v8282 = vpop.f32.mrb[0].mxu0
        %v8283 = vpop.f32.mrb[0].mxu0
        %8284 = vdwg.mxu0
        %8285 = vmatprep.subr.bf16.mxu0 %v4693
        %8286 = vmatpush1.bf16.msra.mxu0 %v4692
        %8287 = vmatprep.subr.bf16.mxu0 %v4701
        %8288 = vmatpush1.bf16.msra.mxu0 %v4700
        %8289 = vmatprep.subr.bf16.mxu0 %v4709
        %8290 = vmatpush1.bf16.msra.mxu0 %v4708
        %8291 = vmatprep.subr.bf16.mxu0 %v4717
        %8292 = vmatpush1.bf16.msra.mxu0 %v4716
        %8293 = vmatprep.subr.bf16.mxu0 %v4725
        %8294 = vmatpush1.bf16.msra.mxu0 %v4724
        %8295 = vmatprep.subr.bf16.mxu0 %v4733
        %8296 = vmatpush1.bf16.msra.mxu0 %v4732
        %8297 = vmatprep.subr.bf16.mxu0 %v4741
        %8298 = vmatpush1.bf16.msra.mxu0 %v4740
        %8299 = vmatprep.subr.bf16.mxu0 %v4749
        %8300 = vmatpush1.bf16.msra.mxu0 %v4748
        %8301 = vmatprep.subr.bf16.mxu0 %v4757
        %8302 = vmatpush1.bf16.msra.mxu0 %v4756
        %8303 = vmatprep.subr.bf16.mxu0 %v4765
        %8304 = vmatpush1.bf16.msra.mxu0 %v4764
        %8305 = vmatprep.subr.bf16.mxu0 %v4773
        %8306 = vmatpush1.bf16.msra.mxu0 %v4772
        %8307 = vmatprep.subr.bf16.mxu0 %v4781
        %8308 = vmatpush1.bf16.msra.mxu0 %v4780
        %8309 = vmatprep.subr.bf16.mxu0 %v4789
        %8310 = vmatpush1.bf16.msra.mxu0 %v4788
        %8311 = vmatprep.subr.bf16.mxu0 %v4797
        %8312 = vmatpush1.bf16.msra.mxu0 %v4796
        %8313 = vmatprep.subr.bf16.mxu0 %v4805
        %8314 = vmatpush1.bf16.msra.mxu0 %v4804
        %8315 = vmatprep.subr.bf16.mxu0 %v4813
        %8316 = vmatpush1.bf16.msra.mxu0 %v4812
        %8317 = vmatprep.mubr.bf16.mxu0 %v645
        %8318 = vmatmul.mubr.bf16.gmra.mrb[0].mxu0 %v644
        %v8319 = vpop.f32.mrb[0].mxu0
        %v8320 = vadd.f32 %v8279, %v8319
        %v8321 = vpop.f32.mrb[0].mxu0
        %v8322 = vadd.f32 %v8281, %v8321
        %v8323 = vpop.f32.mrb[0].mxu0
        %v8324 = vpop.f32.mrb[0].mxu0
        %8325 = vdwg.mxu0
        %8326 = vmatprep.subr.bf16.mxu0 %v4821
        %8327 = vmatpush1.bf16.msra.mxu0 %v4820
        %8328 = vmatprep.subr.bf16.mxu0 %v4829
        %8329 = vmatpush1.bf16.msra.mxu0 %v4828
        %8330 = vmatprep.subr.bf16.mxu0 %v4837
        %8331 = vmatpush1.bf16.msra.mxu0 %v4836
        %8332 = vmatprep.subr.bf16.mxu0 %v4845
        %8333 = vmatpush1.bf16.msra.mxu0 %v4844
        %8334 = vmatprep.subr.bf16.mxu0 %v4853
        %8335 = vmatpush1.bf16.msra.mxu0 %v4852
        %8336 = vmatprep.subr.bf16.mxu0 %v4861
        %8337 = vmatpush1.bf16.msra.mxu0 %v4860
        %8338 = vmatprep.subr.bf16.mxu0 %v4869
        %8339 = vmatpush1.bf16.msra.mxu0 %v4868
        %8340 = vmatprep.subr.bf16.mxu0 %v4877
        %8341 = vmatpush1.bf16.msra.mxu0 %v4876
        %8342 = vmatprep.subr.bf16.mxu0 %v4885
        %8343 = vmatpush1.bf16.msra.mxu0 %v4884
        %8344 = vmatprep.subr.bf16.mxu0 %v4893
        %8345 = vmatpush1.bf16.msra.mxu0 %v4892
        %8346 = vmatprep.subr.bf16.mxu0 %v4901
        %8347 = vmatpush1.bf16.msra.mxu0 %v4900
        %8348 = vmatprep.subr.bf16.mxu0 %v4909
        %8349 = vmatpush1.bf16.msra.mxu0 %v4908
        %8350 = vmatprep.subr.bf16.mxu0 %v4917
        %8351 = vmatpush1.bf16.msra.mxu0 %v4916
        %8352 = vmatprep.subr.bf16.mxu0 %v4925
        %8353 = vmatpush1.bf16.msra.mxu0 %v4924
        %8354 = vmatprep.subr.bf16.mxu0 %v4933
        %8355 = vmatpush1.bf16.msra.mxu0 %v4932
        %8356 = vmatprep.subr.bf16.mxu0 %v4941
        %8357 = vmatpush1.bf16.msra.mxu0 %v4940
        %8358 = vmatprep.mubr.bf16.mxu0 %v647
        %8359 = vmatmul.mubr.bf16.gmra.mrb[0].mxu0 %v646
        %v8360 = vpop.f32.mrb[0].mxu0
        %v8361 = vadd.f32 %v8320, %v8360
        %v8362 = vpop.f32.mrb[0].mxu0
        %v8363 = vadd.f32 %v8322, %v8362
        %v8364 = vpop.f32.mrb[0].mxu0
        %v8365 = vpop.f32.mrb[0].mxu0
        %8366 = vdwg.mxu0
        %8367 = vmatprep.subr.bf16.mxu0 %v4949
        %8368 = vmatpush1.bf16.msra.mxu0 %v4948
        %8369 = vmatprep.subr.bf16.mxu0 %v4957
        %8370 = vmatpush1.bf16.msra.mxu0 %v4956
        %8371 = vmatprep.subr.bf16.mxu0 %v4965
        %8372 = vmatpush1.bf16.msra.mxu0 %v4964
        %8373 = vmatprep.subr.bf16.mxu0 %v4973
        %8374 = vmatpush1.bf16.msra.mxu0 %v4972
        %8375 = vmatprep.subr.bf16.mxu0 %v4981
        %8376 = vmatpush1.bf16.msra.mxu0 %v4980
        %8377 = vmatprep.subr.bf16.mxu0 %v4989
        %8378 = vmatpush1.bf16.msra.mxu0 %v4988
        %8379 = vmatprep.subr.bf16.mxu0 %v4997
        %8380 = vmatpush1.bf16.msra.mxu0 %v4996
        %8381 = vmatprep.subr.bf16.mxu0 %v5005
        %8382 = vmatpush1.bf16.msra.mxu0 %v5004
        %8383 = vmatprep.subr.bf16.mxu0 %v5013
        %8384 = vmatpush1.bf16.msra.mxu0 %v5012
        %8385 = vmatprep.subr.bf16.mxu0 %v5021
        %8386 = vmatpush1.bf16.msra.mxu0 %v5020
        %8387 = vmatprep.subr.bf16.mxu0 %v5029
        %8388 = vmatpush1.bf16.msra.mxu0 %v5028
        %8389 = vmatprep.subr.bf16.mxu0 %v5037
        %8390 = vmatpush1.bf16.msra.mxu0 %v5036
        %8391 = vmatprep.subr.bf16.mxu0 %v5045
        %8392 = vmatpush1.bf16.msra.mxu0 %v5044
        %8393 = vmatprep.subr.bf16.mxu0 %v5053
        %8394 = vmatpush1.bf16.msra.mxu0 %v5052
        %8395 = vmatprep.subr.bf16.mxu0 %v5061
        %8396 = vmatpush1.bf16.msra.mxu0 %v5060
        %8397 = vmatprep.subr.bf16.mxu0 %v5069
        %8398 = vmatpush1.bf16.msra.mxu0 %v5068
        %8399 = vmatprep.mubr.bf16.mxu0 %v649
        %8400 = vmatmul.mubr.bf16.gmra.mrb[0].mxu0 %v648
        %v8401 = vpop.f32.mrb[0].mxu0
        %v8402 = vadd.f32 %v8361, %v8401
        %v8403 = vpop.f32.mrb[0].mxu0
        %v8404 = vadd.f32 %v8363, %v8403
        %v8405 = vpop.f32.mrb[0].mxu0
        %v8406 = vpop.f32.mrb[0].mxu0
        %8407 = vdwg.mxu0
        %8408 = vmatprep.subr.bf16.mxu0 %v5077
        %8409 = vmatpush1.bf16.msra.mxu0 %v5076
        %8410 = vmatprep.subr.bf16.mxu0 %v5085
        %8411 = vmatpush1.bf16.msra.mxu0 %v5084
        %8412 = vmatprep.subr.bf16.mxu0 %v5093
        %8413 = vmatpush1.bf16.msra.mxu0 %v5092
        %8414 = vmatprep.subr.bf16.mxu0 %v5101
        %8415 = vmatpush1.bf16.msra.mxu0 %v5100
        %8416 = vmatprep.subr.bf16.mxu0 %v5109
        %8417 = vmatpush1.bf16.msra.mxu0 %v5108
        %8418 = vmatprep.subr.bf16.mxu0 %v5117
        %8419 = vmatpush1.bf16.msra.mxu0 %v5116
        %8420 = vmatprep.subr.bf16.mxu0 %v5125
        %8421 = vmatpush1.bf16.msra.mxu0 %v5124
        %8422 = vmatprep.subr.bf16.mxu0 %v5133
        %8423 = vmatpush1.bf16.msra.mxu0 %v5132
        %8424 = vmatprep.subr.bf16.mxu0 %v5141
        %8425 = vmatpush1.bf16.msra.mxu0 %v5140
        %8426 = vmatprep.subr.bf16.mxu0 %v5149
        %8427 = vmatpush1.bf16.msra.mxu0 %v5148
        %8428 = vmatprep.subr.bf16.mxu0 %v5157
        %8429 = vmatpush1.bf16.msra.mxu0 %v5156
        %8430 = vmatprep.subr.bf16.mxu0 %v5165
        %8431 = vmatpush1.bf16.msra.mxu0 %v5164
        %8432 = vmatprep.subr.bf16.mxu0 %v5173
        %8433 = vmatpush1.bf16.msra.mxu0 %v5172
        %8434 = vmatprep.subr.bf16.mxu0 %v5181
        %8435 = vmatpush1.bf16.msra.mxu0 %v5180
        %8436 = vmatprep.subr.bf16.mxu0 %v5189
        %8437 = vmatpush1.bf16.msra.mxu0 %v5188
        %8438 = vmatprep.subr.bf16.mxu0 %v5197
        %8439 = vmatpush1.bf16.msra.mxu0 %v5196
        %8440 = vmatprep.mubr.bf16.mxu0 %v651
        %8441 = vmatmul.mubr.bf16.gmra.mrb[0].mxu0 %v650
        %v8442 = vpop.f32.mrb[0].mxu0
        %v8443 = vadd.f32 %v8402, %v8442
        %v8444 = vpop.f32.mrb[0].mxu0
        %v8445 = vadd.f32 %v8404, %v8444
        %v8446 = vpop.f32.mrb[0].mxu0
        %v8447 = vpop.f32.mrb[0].mxu0
        %8448 = vdwg.mxu0
        %8449 = vmatprep.subr.bf16.mxu0 %v5205
        %8450 = vmatpush1.bf16.msra.mxu0 %v5204
        %8451 = vmatprep.subr.bf16.mxu0 %v5213
        %8452 = vmatpush1.bf16.msra.mxu0 %v5212
        %8453 = vmatprep.subr.bf16.mxu0 %v5221
        %8454 = vmatpush1.bf16.msra.mxu0 %v5220
        %8455 = vmatprep.subr.bf16.mxu0 %v5229
        %8456 = vmatpush1.bf16.msra.mxu0 %v5228
        %8457 = vmatprep.subr.bf16.mxu0 %v5237
        %8458 = vmatpush1.bf16.msra.mxu0 %v5236
        %8459 = vmatprep.subr.bf16.mxu0 %v5245
        %8460 = vmatpush1.bf16.msra.mxu0 %v5244
        %8461 = vmatprep.subr.bf16.mxu0 %v5253
        %8462 = vmatpush1.bf16.msra.mxu0 %v5252
        %8463 = vmatprep.subr.bf16.mxu0 %v5261
        %8464 = vmatpush1.bf16.msra.mxu0 %v5260
        %8465 = vmatprep.subr.bf16.mxu0 %v5269
        %8466 = vmatpush1.bf16.msra.mxu0 %v5268
        %8467 = vmatprep.subr.bf16.mxu0 %v5277
        %8468 = vmatpush1.bf16.msra.mxu0 %v5276
        %8469 = vmatprep.subr.bf16.mxu0 %v5285
        %8470 = vmatpush1.bf16.msra.mxu0 %v5284
        %8471 = vmatprep.subr.bf16.mxu0 %v5293
        %8472 = vmatpush1.bf16.msra.mxu0 %v5292
        %8473 = vmatprep.subr.bf16.mxu0 %v5301
        %8474 = vmatpush1.bf16.msra.mxu0 %v5300
        %8475 = vmatprep.subr.bf16.mxu0 %v5309
        %8476 = vmatpush1.bf16.msra.mxu0 %v5308
        %8477 = vmatprep.subr.bf16.mxu0 %v5317
        %8478 = vmatpush1.bf16.msra.mxu0 %v5316
        %8479 = vmatprep.subr.bf16.mxu0 %v5325
        %8480 = vmatpush1.bf16.msra.mxu0 %v5324
        %8481 = vmatprep.mubr.bf16.mxu0 %v653
        %8482 = vmatmul.mubr.bf16.gmra.mrb[0].mxu0 %v652
        %v8483 = vpop.f32.mrb[0].mxu0
        %v8484 = vadd.f32 %v8443, %v8483
        %v8485 = vpop.f32.mrb[0].mxu0
        %v8486 = vadd.f32 %v8445, %v8485
        %v8487 = vpop.f32.mrb[0].mxu0
        %v8488 = vpop.f32.mrb[0].mxu0
        %8489 = vdwg.mxu0
        %8490 = vmatprep.subr.bf16.mxu0 %v5333
        %8491 = vmatpush1.bf16.msra.mxu0 %v5332
        %8492 = vmatprep.subr.bf16.mxu0 %v5341
        %8493 = vmatpush1.bf16.msra.mxu0 %v5340
        %8494 = vmatprep.subr.bf16.mxu0 %v5349
        %8495 = vmatpush1.bf16.msra.mxu0 %v5348
        %8496 = vmatprep.subr.bf16.mxu0 %v5357
        %8497 = vmatpush1.bf16.msra.mxu0 %v5356
        %8498 = vmatprep.subr.bf16.mxu0 %v5365
        %8499 = vmatpush1.bf16.msra.mxu0 %v5364
        %8500 = vmatprep.subr.bf16.mxu0 %v5373
        %8501 = vmatpush1.bf16.msra.mxu0 %v5372
        %8502 = vmatprep.subr.bf16.mxu0 %v5381
        %8503 = vmatpush1.bf16.msra.mxu0 %v5380
        %8504 = vmatprep.subr.bf16.mxu0 %v5389
        %8505 = vmatpush1.bf16.msra.mxu0 %v5388
        %8506 = vmatprep.subr.bf16.mxu0 %v5397
        %8507 = vmatpush1.bf16.msra.mxu0 %v5396
        %8508 = vmatprep.subr.bf16.mxu0 %v5405
        %8509 = vmatpush1.bf16.msra.mxu0 %v5404
        %8510 = vmatprep.subr.bf16.mxu0 %v5413
        %8511 = vmatpush1.bf16.msra.mxu0 %v5412
        %8512 = vmatprep.subr.bf16.mxu0 %v5421
        %8513 = vmatpush1.bf16.msra.mxu0 %v5420
        %8514 = vmatprep.subr.bf16.mxu0 %v5429
        %8515 = vmatpush1.bf16.msra.mxu0 %v5428
        %8516 = vmatprep.subr.bf16.mxu0 %v5437
        %8517 = vmatpush1.bf16.msra.mxu0 %v5436
        %8518 = vmatprep.subr.bf16.mxu0 %v5445
        %8519 = vmatpush1.bf16.msra.mxu0 %v5444
        %8520 = vmatprep.subr.bf16.mxu0 %v5453
        %8521 = vmatpush1.bf16.msra.mxu0 %v5452
        %8522 = vmatprep.mubr.bf16.mxu0 %v655
        %8523 = vmatmul.mubr.bf16.gmra.mrb[0].mxu0 %v654
        %v8524 = vpop.f32.mrb[0].mxu0
        %v8525 = vadd.f32 %v8484, %v8524
        %v8526 = vpop.f32.mrb[0].mxu0
        %v8527 = vadd.f32 %v8486, %v8526
        %v8528 = vpop.f32.mrb[0].mxu0
        %v8529 = vpop.f32.mrb[0].mxu0
        %8530 = vdwg.mxu0
        %8531 = vmatprep.subr.bf16.mxu0 %v2263
        %8532 = vmatpush1.bf16.msra.mxu0 %v2262
        %8533 = vmatprep.subr.bf16.mxu0 %v2271
        %8534 = vmatpush1.bf16.msra.mxu0 %v2270
        %8535 = vmatprep.subr.bf16.mxu0 %v2279
        %8536 = vmatpush1.bf16.msra.mxu0 %v2278
        %8537 = vmatprep.subr.bf16.mxu0 %v2287
        %8538 = vmatpush1.bf16.msra.mxu0 %v2286
        %8539 = vmatprep.subr.bf16.mxu0 %v2295
        %8540 = vmatpush1.bf16.msra.mxu0 %v2294
        %8541 = vmatprep.subr.bf16.mxu0 %v2303
        %8542 = vmatpush1.bf16.msra.mxu0 %v2302
        %8543 = vmatprep.subr.bf16.mxu0 %v2311
        %8544 = vmatpush1.bf16.msra.mxu0 %v2310
        %8545 = vmatprep.subr.bf16.mxu0 %v2319
        %8546 = vmatpush1.bf16.msra.mxu0 %v2318
        %8547 = vmatprep.subr.bf16.mxu0 %v2327
        %8548 = vmatpush1.bf16.msra.mxu0 %v2326
        %8549 = vmatprep.subr.bf16.mxu0 %v2335
        %8550 = vmatpush1.bf16.msra.mxu0 %v2334
        %8551 = vmatprep.subr.bf16.mxu0 %v2343
        %8552 = vmatpush1.bf16.msra.mxu0 %v2342
        %8553 = vmatprep.subr.bf16.mxu0 %v2351
        %8554 = vmatpush1.bf16.msra.mxu0 %v2350
        %8555 = vmatprep.subr.bf16.mxu0 %v2359
        %8556 = vmatpush1.bf16.msra.mxu0 %v2358
        %8557 = vmatprep.subr.bf16.mxu0 %v2367
        %8558 = vmatpush1.bf16.msra.mxu0 %v2366
        %8559 = vmatprep.subr.bf16.mxu0 %v2375
        %8560 = vmatpush1.bf16.msra.mxu0 %v2374
        %8561 = vmatprep.subr.bf16.mxu0 %v2383
        %8562 = vmatpush1.bf16.msra.mxu0 %v2382
        %8563 = vmatprep.mubr.bf16.mxu0 %v607
        %8564 = vmatmul.mubr.bf16.gmra.mrb[0].mxu0 %v606
        %v8565 = vpop.f32.mrb[0].mxu0
        %v8566 = vadd.f32 0.0, %v8565
        %v8567 = vpop.f32.mrb[0].mxu0
        %v8568 = vadd.f32 0.0, %v8567
        %v8569 = vpop.f32.mrb[0].mxu0
        %v8570 = vpop.f32.mrb[0].mxu0
        %8571 = vdwg.mxu0
        %8572 = vmatprep.subr.bf16.mxu0 %v2391
        %8573 = vmatpush1.bf16.msra.mxu0 %v2390
        %8574 = vmatprep.subr.bf16.mxu0 %v2399
        %8575 = vmatpush1.bf16.msra.mxu0 %v2398
        %8576 = vmatprep.subr.bf16.mxu0 %v2407
        %8577 = vmatpush1.bf16.msra.mxu0 %v2406
        %8578 = vmatprep.subr.bf16.mxu0 %v2415
        %8579 = vmatpush1.bf16.msra.mxu0 %v2414
        %8580 = vmatprep.subr.bf16.mxu0 %v2423
        %8581 = vmatpush1.bf16.msra.mxu0 %v2422
        %8582 = vmatprep.subr.bf16.mxu0 %v2431
        %8583 = vmatpush1.bf16.msra.mxu0 %v2430
        %8584 = vmatprep.subr.bf16.mxu0 %v2439
        %8585 = vmatpush1.bf16.msra.mxu0 %v2438
        %8586 = vmatprep.subr.bf16.mxu0 %v2447
        %8587 = vmatpush1.bf16.msra.mxu0 %v2446
        %8588 = vmatprep.subr.bf16.mxu0 %v2455
        %8589 = vmatpush1.bf16.msra.mxu0 %v2454
        %8590 = vmatprep.subr.bf16.mxu0 %v2463
        %8591 = vmatpush1.bf16.msra.mxu0 %v2462
        %8592 = vmatprep.subr.bf16.mxu0 %v2471
        %8593 = vmatpush1.bf16.msra.mxu0 %v2470
        %8594 = vmatprep.subr.bf16.mxu0 %v2479
        %8595 = vmatpush1.bf16.msra.mxu0 %v2478
        %8596 = vmatprep.subr.bf16.mxu0 %v2487
        %8597 = vmatpush1.bf16.msra.mxu0 %v2486
        %8598 = vmatprep.subr.bf16.mxu0 %v2495
        %8599 = vmatpush1.bf16.msra.mxu0 %v2494
        %8600 = vmatprep.subr.bf16.mxu0 %v2503
        %8601 = vmatpush1.bf16.msra.mxu0 %v2502
        %8602 = vmatprep.subr.bf16.mxu0 %v2511
        %8603 = vmatpush1.bf16.msra.mxu0 %v2510
        %8604 = vmatprep.mubr.bf16.mxu0 %v609
        %8605 = vmatmul.mubr.bf16.gmra.mrb[0].mxu0 %v608
        %v8606 = vpop.f32.mrb[0].mxu0
        %v8607 = vadd.f32 %v8566, %v8606
        %v8608 = vpop.f32.mrb[0].mxu0
        %v8609 = vadd.f32 %v8568, %v8608
        %v8610 = vpop.f32.mrb[0].mxu0
        %v8611 = vpop.f32.mrb[0].mxu0
        %8612 = vdwg.mxu0
        %8613 = vmatprep.subr.bf16.mxu0 %v2519
        %8614 = vmatpush1.bf16.msra.mxu0 %v2518
        %8615 = vmatprep.subr.bf16.mxu0 %v2527
        %8616 = vmatpush1.bf16.msra.mxu0 %v2526
        %8617 = vmatprep.subr.bf16.mxu0 %v2535
        %8618 = vmatpush1.bf16.msra.mxu0 %v2534
        %8619 = vmatprep.subr.bf16.mxu0 %v2543
        %8620 = vmatpush1.bf16.msra.mxu0 %v2542
        %8621 = vmatprep.subr.bf16.mxu0 %v2551
        %8622 = vmatpush1.bf16.msra.mxu0 %v2550
        %8623 = vmatprep.subr.bf16.mxu0 %v2559
        %8624 = vmatpush1.bf16.msra.mxu0 %v2558
        %8625 = vmatprep.subr.bf16.mxu0 %v2567
        %8626 = vmatpush1.bf16.msra.mxu0 %v2566
        %8627 = vmatprep.subr.bf16.mxu0 %v2575
        %8628 = vmatpush1.bf16.msra.mxu0 %v2574
        %8629 = vmatprep.subr.bf16.mxu0 %v2583
        %8630 = vmatpush1.bf16.msra.mxu0 %v2582
        %8631 = vmatprep.subr.bf16.mxu0 %v2591
        %8632 = vmatpush1.bf16.msra.mxu0 %v2590
        %8633 = vmatprep.subr.bf16.mxu0 %v2599
        %8634 = vmatpush1.bf16.msra.mxu0 %v2598
        %8635 = vmatprep.subr.bf16.mxu0 %v2607
        %8636 = vmatpush1.bf16.msra.mxu0 %v2606
        %8637 = vmatprep.subr.bf16.mxu0 %v2615
        %8638 = vmatpush1.bf16.msra.mxu0 %v2614
        %8639 = vmatprep.subr.bf16.mxu0 %v2623
        %8640 = vmatpush1.bf16.msra.mxu0 %v2622
        %8641 = vmatprep.subr.bf16.mxu0 %v2631
        %8642 = vmatpush1.bf16.msra.mxu0 %v2630
        %8643 = vmatprep.subr.bf16.mxu0 %v2639
        %8644 = vmatpush1.bf16.msra.mxu0 %v2638
        %8645 = vmatprep.mubr.bf16.mxu0 %v611
        %8646 = vmatmul.mubr.bf16.gmra.mrb[0].mxu0 %v610
        %v8647 = vpop.f32.mrb[0].mxu0
        %v8648 = vadd.f32 %v8607, %v8647
        %v8649 = vpop.f32.mrb[0].mxu0
        %v8650 = vadd.f32 %v8609, %v8649
        %v8651 = vpop.f32.mrb[0].mxu0
        %v8652 = vpop.f32.mrb[0].mxu0
        %8653 = vdwg.mxu0
        %8654 = vmatprep.subr.bf16.mxu0 %v2647
        %8655 = vmatpush1.bf16.msra.mxu0 %v2646
        %8656 = vmatprep.subr.bf16.mxu0 %v2655
        %8657 = vmatpush1.bf16.msra.mxu0 %v2654
        %8658 = vmatprep.subr.bf16.mxu0 %v2663
        %8659 = vmatpush1.bf16.msra.mxu0 %v2662
        %8660 = vmatprep.subr.bf16.mxu0 %v2671
        %8661 = vmatpush1.bf16.msra.mxu0 %v2670
        %8662 = vmatprep.subr.bf16.mxu0 %v2679
        %8663 = vmatpush1.bf16.msra.mxu0 %v2678
        %8664 = vmatprep.subr.bf16.mxu0 %v2687
        %8665 = vmatpush1.bf16.msra.mxu0 %v2686
        %8666 = vmatprep.subr.bf16.mxu0 %v2695
        %8667 = vmatpush1.bf16.msra.mxu0 %v2694
        %8668 = vmatprep.subr.bf16.mxu0 %v2703
        %8669 = vmatpush1.bf16.msra.mxu0 %v2702
        %8670 = vmatprep.subr.bf16.mxu0 %v2711
        %8671 = vmatpush1.bf16.msra.mxu0 %v2710
        %8672 = vmatprep.subr.bf16.mxu0 %v2719
        %8673 = vmatpush1.bf16.msra.mxu0 %v2718
        %8674 = vmatprep.subr.bf16.mxu0 %v2727
        %8675 = vmatpush1.bf16.msra.mxu0 %v2726
        %8676 = vmatprep.subr.bf16.mxu0 %v2735
        %8677 = vmatpush1.bf16.msra.mxu0 %v2734
        %8678 = vmatprep.subr.bf16.mxu0 %v2743
        %8679 = vmatpush1.bf16.msra.mxu0 %v2742
        %8680 = vmatprep.subr.bf16.mxu0 %v2751
        %8681 = vmatpush1.bf16.msra.mxu0 %v2750
        %8682 = vmatprep.subr.bf16.mxu0 %v2759
        %8683 = vmatpush1.bf16.msra.mxu0 %v2758
        %8684 = vmatprep.subr.bf16.mxu0 %v2767
        %8685 = vmatpush1.bf16.msra.mxu0 %v2766
        %8686 = vmatprep.mubr.bf16.mxu0 %v613
        %8687 = vmatmul.mubr.bf16.gmra.mrb[0].mxu0 %v612
        %v8688 = vpop.f32.mrb[0].mxu0
        %v8689 = vadd.f32 %v8648, %v8688
        %v8690 = vpop.f32.mrb[0].mxu0
        %v8691 = vadd.f32 %v8650, %v8690
        %v8692 = vpop.f32.mrb[0].mxu0
        %v8693 = vpop.f32.mrb[0].mxu0
        %8694 = vdwg.mxu0
        %8695 = vmatprep.subr.bf16.mxu0 %v2775
        %8696 = vmatpush1.bf16.msra.mxu0 %v2774
        %8697 = vmatprep.subr.bf16.mxu0 %v2783
        %8698 = vmatpush1.bf16.msra.mxu0 %v2782
        %8699 = vmatprep.subr.bf16.mxu0 %v2791
        %8700 = vmatpush1.bf16.msra.mxu0 %v2790
        %8701 = vmatprep.subr.bf16.mxu0 %v2799
        %8702 = vmatpush1.bf16.msra.mxu0 %v2798
        %8703 = vmatprep.subr.bf16.mxu0 %v2807
        %8704 = vmatpush1.bf16.msra.mxu0 %v2806
        %8705 = vmatprep.subr.bf16.mxu0 %v2815
        %8706 = vmatpush1.bf16.msra.mxu0 %v2814
        %8707 = vmatprep.subr.bf16.mxu0 %v2823
        %8708 = vmatpush1.bf16.msra.mxu0 %v2822
        %8709 = vmatprep.subr.bf16.mxu0 %v2831
        %8710 = vmatpush1.bf16.msra.mxu0 %v2830
        %8711 = vmatprep.subr.bf16.mxu0 %v2839
        %8712 = vmatpush1.bf16.msra.mxu0 %v2838
        %8713 = vmatprep.subr.bf16.mxu0 %v2847
        %8714 = vmatpush1.bf16.msra.mxu0 %v2846
        %8715 = vmatprep.subr.bf16.mxu0 %v2855
        %8716 = vmatpush1.bf16.msra.mxu0 %v2854
        %8717 = vmatprep.subr.bf16.mxu0 %v2863
        %8718 = vmatpush1.bf16.msra.mxu0 %v2862
        %8719 = vmatprep.subr.bf16.mxu0 %v2871
        %8720 = vmatpush1.bf16.msra.mxu0 %v2870
        %8721 = vmatprep.subr.bf16.mxu0 %v2879
        %8722 = vmatpush1.bf16.msra.mxu0 %v2878
        %8723 = vmatprep.subr.bf16.mxu0 %v2887
        %8724 = vmatpush1.bf16.msra.mxu0 %v2886
        %8725 = vmatprep.subr.bf16.mxu0 %v2895
        %8726 = vmatpush1.bf16.msra.mxu0 %v2894
        %8727 = vmatprep.mubr.bf16.mxu0 %v615
        %8728 = vmatmul.mubr.bf16.gmra.mrb[0].mxu0 %v614
        %v8729 = vpop.f32.mrb[0].mxu0
        %v8730 = vadd.f32 %v8689, %v8729
        %v8731 = vpop.f32.mrb[0].mxu0
        %v8732 = vadd.f32 %v8691, %v8731
        %v8733 = vpop.f32.mrb[0].mxu0
        %v8734 = vpop.f32.mrb[0].mxu0
        %8735 = vdwg.mxu0
        %8736 = vmatprep.subr.bf16.mxu0 %v2903
        %8737 = vmatpush1.bf16.msra.mxu0 %v2902
        %8738 = vmatprep.subr.bf16.mxu0 %v2911
        %8739 = vmatpush1.bf16.msra.mxu0 %v2910
        %8740 = vmatprep.subr.bf16.mxu0 %v2919
        %8741 = vmatpush1.bf16.msra.mxu0 %v2918
        %8742 = vmatprep.subr.bf16.mxu0 %v2927
        %8743 = vmatpush1.bf16.msra.mxu0 %v2926
        %8744 = vmatprep.subr.bf16.mxu0 %v2935
        %8745 = vmatpush1.bf16.msra.mxu0 %v2934
        %8746 = vmatprep.subr.bf16.mxu0 %v2943
        %8747 = vmatpush1.bf16.msra.mxu0 %v2942
        %8748 = vmatprep.subr.bf16.mxu0 %v2951
        %8749 = vmatpush1.bf16.msra.mxu0 %v2950
        %8750 = vmatprep.subr.bf16.mxu0 %v2959
        %8751 = vmatpush1.bf16.msra.mxu0 %v2958
        %8752 = vmatprep.subr.bf16.mxu0 %v2967
        %8753 = vmatpush1.bf16.msra.mxu0 %v2966
        %8754 = vmatprep.subr.bf16.mxu0 %v2975
        %8755 = vmatpush1.bf16.msra.mxu0 %v2974
        %8756 = vmatprep.subr.bf16.mxu0 %v2983
        %8757 = vmatpush1.bf16.msra.mxu0 %v2982
        %8758 = vmatprep.subr.bf16.mxu0 %v2991
        %8759 = vmatpush1.bf16.msra.mxu0 %v2990
        %8760 = vmatprep.subr.bf16.mxu0 %v2999
        %8761 = vmatpush1.bf16.msra.mxu0 %v2998
        %8762 = vmatprep.subr.bf16.mxu0 %v3007
        %8763 = vmatpush1.bf16.msra.mxu0 %v3006
        %8764 = vmatprep.subr.bf16.mxu0 %v3015
        %8765 = vmatpush1.bf16.msra.mxu0 %v3014
        %8766 = vmatprep.subr.bf16.mxu0 %v3023
        %8767 = vmatpush1.bf16.msra.mxu0 %v3022
        %8768 = vmatprep.mubr.bf16.mxu0 %v617
        %8769 = vmatmul.mubr.bf16.gmra.mrb[0].mxu0 %v616
        %v8770 = vpop.f32.mrb[0].mxu0
        %v8771 = vadd.f32 %v8730, %v8770
        %v8772 = vpop.f32.mrb[0].mxu0
        %v8773 = vadd.f32 %v8732, %v8772
        %v8774 = vpop.f32.mrb[0].mxu0
        %v8775 = vpop.f32.mrb[0].mxu0
        %8776 = vdwg.mxu0
        %8777 = vmatprep.subr.bf16.mxu0 %v3031
        %8778 = vmatpush1.bf16.msra.mxu0 %v3030
        %8779 = vmatprep.subr.bf16.mxu0 %v3039
        %8780 = vmatpush1.bf16.msra.mxu0 %v3038
        %8781 = vmatprep.subr.bf16.mxu0 %v3047
        %8782 = vmatpush1.bf16.msra.mxu0 %v3046
        %8783 = vmatprep.subr.bf16.mxu0 %v3055
        %8784 = vmatpush1.bf16.msra.mxu0 %v3054
        %8785 = vmatprep.subr.bf16.mxu0 %v3063
        %8786 = vmatpush1.bf16.msra.mxu0 %v3062
        %8787 = vmatprep.subr.bf16.mxu0 %v3071
        %8788 = vmatpush1.bf16.msra.mxu0 %v3070
        %8789 = vmatprep.subr.bf16.mxu0 %v3079
        %8790 = vmatpush1.bf16.msra.mxu0 %v3078
        %8791 = vmatprep.subr.bf16.mxu0 %v3087
        %8792 = vmatpush1.bf16.msra.mxu0 %v3086
        %8793 = vmatprep.subr.bf16.mxu0 %v3095
        %8794 = vmatpush1.bf16.msra.mxu0 %v3094
        %8795 = vmatprep.subr.bf16.mxu0 %v3103
        %8796 = vmatpush1.bf16.msra.mxu0 %v3102
        %8797 = vmatprep.subr.bf16.mxu0 %v3111
        %8798 = vmatpush1.bf16.msra.mxu0 %v3110
        %8799 = vmatprep.subr.bf16.mxu0 %v3119
        %8800 = vmatpush1.bf16.msra.mxu0 %v3118
        %8801 = vmatprep.subr.bf16.mxu0 %v3127
        %8802 = vmatpush1.bf16.msra.mxu0 %v3126
        %8803 = vmatprep.subr.bf16.mxu0 %v3135
        %8804 = vmatpush1.bf16.msra.mxu0 %v3134
        %8805 = vmatprep.subr.bf16.mxu0 %v3143
        %8806 = vmatpush1.bf16.msra.mxu0 %v3142
        %8807 = vmatprep.subr.bf16.mxu0 %v3151
        %8808 = vmatpush1.bf16.msra.mxu0 %v3150
        %8809 = vmatprep.mubr.bf16.mxu0 %v619
        %8810 = vmatmul.mubr.bf16.gmra.mrb[0].mxu0 %v618
        %v8811 = vpop.f32.mrb[0].mxu0
        %v8812 = vadd.f32 %v8771, %v8811
        %v8813 = vpop.f32.mrb[0].mxu0
        %v8814 = vadd.f32 %v8773, %v8813
        %v8815 = vpop.f32.mrb[0].mxu0
        %v8816 = vpop.f32.mrb[0].mxu0
        %8817 = vdwg.mxu0
        %8818 = vmatprep.subr.bf16.mxu0 %v3159
        %8819 = vmatpush1.bf16.msra.mxu0 %v3158
        %8820 = vmatprep.subr.bf16.mxu0 %v3167
        %8821 = vmatpush1.bf16.msra.mxu0 %v3166
        %8822 = vmatprep.subr.bf16.mxu0 %v3175
        %8823 = vmatpush1.bf16.msra.mxu0 %v3174
        %8824 = vmatprep.subr.bf16.mxu0 %v3183
        %8825 = vmatpush1.bf16.msra.mxu0 %v3182
        %8826 = vmatprep.subr.bf16.mxu0 %v3191
        %8827 = vmatpush1.bf16.msra.mxu0 %v3190
        %8828 = vmatprep.subr.bf16.mxu0 %v3199
        %8829 = vmatpush1.bf16.msra.mxu0 %v3198
        %8830 = vmatprep.subr.bf16.mxu0 %v3207
        %8831 = vmatpush1.bf16.msra.mxu0 %v3206
        %8832 = vmatprep.subr.bf16.mxu0 %v3215
        %8833 = vmatpush1.bf16.msra.mxu0 %v3214
        %8834 = vmatprep.subr.bf16.mxu0 %v3223
        %8835 = vmatpush1.bf16.msra.mxu0 %v3222
        %8836 = vmatprep.subr.bf16.mxu0 %v3231
        %8837 = vmatpush1.bf16.msra.mxu0 %v3230
        %8838 = vmatprep.subr.bf16.mxu0 %v3239
        %8839 = vmatpush1.bf16.msra.mxu0 %v3238
        %8840 = vmatprep.subr.bf16.mxu0 %v3247
        %8841 = vmatpush1.bf16.msra.mxu0 %v3246
        %8842 = vmatprep.subr.bf16.mxu0 %v3255
        %8843 = vmatpush1.bf16.msra.mxu0 %v3254
        %8844 = vmatprep.subr.bf16.mxu0 %v3263
        %8845 = vmatpush1.bf16.msra.mxu0 %v3262
        %8846 = vmatprep.subr.bf16.mxu0 %v3271
        %8847 = vmatpush1.bf16.msra.mxu0 %v3270
        %8848 = vmatprep.subr.bf16.mxu0 %v3279
        %8849 = vmatpush1.bf16.msra.mxu0 %v3278
        %8850 = vmatprep.mubr.bf16.mxu0 %v621
        %8851 = vmatmul.mubr.bf16.gmra.mrb[0].mxu0 %v620
        %v8852 = vpop.f32.mrb[0].mxu0
        %v8853 = vadd.f32 %v8812, %v8852
        %v8854 = vpop.f32.mrb[0].mxu0
        %v8855 = vadd.f32 %v8814, %v8854
        %v8856 = vpop.f32.mrb[0].mxu0
        %v8857 = vpop.f32.mrb[0].mxu0
        %8858 = vdwg.mxu0
        %8859 = vmatprep.subr.bf16.mxu0 %v3287
        %8860 = vmatpush1.bf16.msra.mxu0 %v3286
        %8861 = vmatprep.subr.bf16.mxu0 %v3295
        %8862 = vmatpush1.bf16.msra.mxu0 %v3294
        %8863 = vmatprep.subr.bf16.mxu0 %v3303
        %8864 = vmatpush1.bf16.msra.mxu0 %v3302
        %8865 = vmatprep.subr.bf16.mxu0 %v3311
        %8866 = vmatpush1.bf16.msra.mxu0 %v3310
        %8867 = vmatprep.subr.bf16.mxu0 %v3319
        %8868 = vmatpush1.bf16.msra.mxu0 %v3318
        %8869 = vmatprep.subr.bf16.mxu0 %v3327
        %8870 = vmatpush1.bf16.msra.mxu0 %v3326
        %8871 = vmatprep.subr.bf16.mxu0 %v3335
        %8872 = vmatpush1.bf16.msra.mxu0 %v3334
        %8873 = vmatprep.subr.bf16.mxu0 %v3343
        %8874 = vmatpush1.bf16.msra.mxu0 %v3342
        %8875 = vmatprep.subr.bf16.mxu0 %v3351
        %8876 = vmatpush1.bf16.msra.mxu0 %v3350
        %8877 = vmatprep.subr.bf16.mxu0 %v3359
        %8878 = vmatpush1.bf16.msra.mxu0 %v3358
        %8879 = vmatprep.subr.bf16.mxu0 %v3367
        %8880 = vmatpush1.bf16.msra.mxu0 %v3366
        %8881 = vmatprep.subr.bf16.mxu0 %v3375
        %8882 = vmatpush1.bf16.msra.mxu0 %v3374
        %8883 = vmatprep.subr.bf16.mxu0 %v3383
        %8884 = vmatpush1.bf16.msra.mxu0 %v3382
        %8885 = vmatprep.subr.bf16.mxu0 %v3391
        %8886 = vmatpush1.bf16.msra.mxu0 %v3390
        %8887 = vmatprep.subr.bf16.mxu0 %v3399
        %8888 = vmatpush1.bf16.msra.mxu0 %v3398
        %8889 = vmatprep.subr.bf16.mxu0 %v3407
        %8890 = vmatpush1.bf16.msra.mxu0 %v3406
        %8891 = vmatprep.mubr.bf16.mxu0 %v623
        %8892 = vmatmul.mubr.bf16.gmra.mrb[0].mxu0 %v622
        %v8893 = vpop.f32.mrb[0].mxu0
        %v8894 = vadd.f32 %v8853, %v8893
        %v8895 = vpop.f32.mrb[0].mxu0
        %v8896 = vadd.f32 %v8855, %v8895
        %v8897 = vpop.f32.mrb[0].mxu0
        %v8898 = vpop.f32.mrb[0].mxu0
        %8899 = vdwg.mxu0
        %8900 = vmatprep.subr.bf16.mxu0 %v3415
        %8901 = vmatpush1.bf16.msra.mxu0 %v3414
        %8902 = vmatprep.subr.bf16.mxu0 %v3423
        %8903 = vmatpush1.bf16.msra.mxu0 %v3422
        %8904 = vmatprep.subr.bf16.mxu0 %v3431
        %8905 = vmatpush1.bf16.msra.mxu0 %v3430
        %8906 = vmatprep.subr.bf16.mxu0 %v3439
        %8907 = vmatpush1.bf16.msra.mxu0 %v3438
        %8908 = vmatprep.subr.bf16.mxu0 %v3447
        %8909 = vmatpush1.bf16.msra.mxu0 %v3446
        %8910 = vmatprep.subr.bf16.mxu0 %v3455
        %8911 = vmatpush1.bf16.msra.mxu0 %v3454
        %8912 = vmatprep.subr.bf16.mxu0 %v3463
        %8913 = vmatpush1.bf16.msra.mxu0 %v3462
        %8914 = vmatprep.subr.bf16.mxu0 %v3471
        %8915 = vmatpush1.bf16.msra.mxu0 %v3470
        %8916 = vmatprep.subr.bf16.mxu0 %v3479
        %8917 = vmatpush1.bf16.msra.mxu0 %v3478
        %8918 = vmatprep.subr.bf16.mxu0 %v3487
        %8919 = vmatpush1.bf16.msra.mxu0 %v3486
        %8920 = vmatprep.subr.bf16.mxu0 %v3495
        %8921 = vmatpush1.bf16.msra.mxu0 %v3494
        %8922 = vmatprep.subr.bf16.mxu0 %v3503
        %8923 = vmatpush1.bf16.msra.mxu0 %v3502
        %8924 = vmatprep.subr.bf16.mxu0 %v3511
        %8925 = vmatpush1.bf16.msra.mxu0 %v3510
        %8926 = vmatprep.subr.bf16.mxu0 %v3519
        %8927 = vmatpush1.bf16.msra.mxu0 %v3518
        %8928 = vmatprep.subr.bf16.mxu0 %v3527
        %8929 = vmatpush1.bf16.msra.mxu0 %v3526
        %8930 = vmatprep.subr.bf16.mxu0 %v3535
        %8931 = vmatpush1.bf16.msra.mxu0 %v3534
        %8932 = vmatprep.mubr.bf16.mxu0 %v625
        %8933 = vmatmul.mubr.bf16.gmra.mrb[0].mxu0 %v624
        %v8934 = vpop.f32.mrb[0].mxu0
        %v8935 = vadd.f32 %v8894, %v8934
        %v8936 = vpop.f32.mrb[0].mxu0
        %v8937 = vadd.f32 %v8896, %v8936
        %v8938 = vpop.f32.mrb[0].mxu0
        %v8939 = vpop.f32.mrb[0].mxu0
        %8940 = vdwg.mxu0
        %8941 = vmatprep.subr.bf16.mxu0 %v3543
        %8942 = vmatpush1.bf16.msra.mxu0 %v3542
        %8943 = vmatprep.subr.bf16.mxu0 %v3551
        %8944 = vmatpush1.bf16.msra.mxu0 %v3550
        %8945 = vmatprep.subr.bf16.mxu0 %v3559
        %8946 = vmatpush1.bf16.msra.mxu0 %v3558
        %8947 = vmatprep.subr.bf16.mxu0 %v3567
        %8948 = vmatpush1.bf16.msra.mxu0 %v3566
        %8949 = vmatprep.subr.bf16.mxu0 %v3575
        %8950 = vmatpush1.bf16.msra.mxu0 %v3574
        %8951 = vmatprep.subr.bf16.mxu0 %v3583
        %8952 = vmatpush1.bf16.msra.mxu0 %v3582
        %8953 = vmatprep.subr.bf16.mxu0 %v3591
        %8954 = vmatpush1.bf16.msra.mxu0 %v3590
        %8955 = vmatprep.subr.bf16.mxu0 %v3599
        %8956 = vmatpush1.bf16.msra.mxu0 %v3598
        %8957 = vmatprep.subr.bf16.mxu0 %v3607
        %8958 = vmatpush1.bf16.msra.mxu0 %v3606
        %8959 = vmatprep.subr.bf16.mxu0 %v3615
        %8960 = vmatpush1.bf16.msra.mxu0 %v3614
        %8961 = vmatprep.subr.bf16.mxu0 %v3623
        %8962 = vmatpush1.bf16.msra.mxu0 %v3622
        %8963 = vmatprep.subr.bf16.mxu0 %v3631
        %8964 = vmatpush1.bf16.msra.mxu0 %v3630
        %8965 = vmatprep.subr.bf16.mxu0 %v3639
        %8966 = vmatpush1.bf16.msra.mxu0 %v3638
        %8967 = vmatprep.subr.bf16.mxu0 %v3647
        %8968 = vmatpush1.bf16.msra.mxu0 %v3646
        %8969 = vmatprep.subr.bf16.mxu0 %v3655
        %8970 = vmatpush1.bf16.msra.mxu0 %v3654
        %8971 = vmatprep.subr.bf16.mxu0 %v3663
        %8972 = vmatpush1.bf16.msra.mxu0 %v3662
        %8973 = vmatprep.mubr.bf16.mxu0 %v627
        %8974 = vmatmul.mubr.bf16.gmra.mrb[0].mxu0 %v626
        %v8975 = vpop.f32.mrb[0].mxu0
        %v8976 = vadd.f32 %v8935, %v8975
        %v8977 = vpop.f32.mrb[0].mxu0
        %v8978 = vadd.f32 %v8937, %v8977
        %v8979 = vpop.f32.mrb[0].mxu0
        %v8980 = vpop.f32.mrb[0].mxu0
        %8981 = vdwg.mxu0
        %8982 = vmatprep.subr.bf16.mxu0 %v3671
        %8983 = vmatpush1.bf16.msra.mxu0 %v3670
        %8984 = vmatprep.subr.bf16.mxu0 %v3679
        %8985 = vmatpush1.bf16.msra.mxu0 %v3678
        %8986 = vmatprep.subr.bf16.mxu0 %v3687
        %8987 = vmatpush1.bf16.msra.mxu0 %v3686
        %8988 = vmatprep.subr.bf16.mxu0 %v3695
        %8989 = vmatpush1.bf16.msra.mxu0 %v3694
        %8990 = vmatprep.subr.bf16.mxu0 %v3703
        %8991 = vmatpush1.bf16.msra.mxu0 %v3702
        %8992 = vmatprep.subr.bf16.mxu0 %v3711
        %8993 = vmatpush1.bf16.msra.mxu0 %v3710
        %8994 = vmatprep.subr.bf16.mxu0 %v3719
        %8995 = vmatpush1.bf16.msra.mxu0 %v3718
        %8996 = vmatprep.subr.bf16.mxu0 %v3727
        %8997 = vmatpush1.bf16.msra.mxu0 %v3726
        %8998 = vmatprep.subr.bf16.mxu0 %v3735
        %8999 = vmatpush1.bf16.msra.mxu0 %v3734
        %9000 = vmatprep.subr.bf16.mxu0 %v3743
        %9001 = vmatpush1.bf16.msra.mxu0 %v3742
        %9002 = vmatprep.subr.bf16.mxu0 %v3751
        %9003 = vmatpush1.bf16.msra.mxu0 %v3750
        %9004 = vmatprep.subr.bf16.mxu0 %v3759
        %9005 = vmatpush1.bf16.msra.mxu0 %v3758
        %9006 = vmatprep.subr.bf16.mxu0 %v3767
        %9007 = vmatpush1.bf16.msra.mxu0 %v3766
        %9008 = vmatprep.subr.bf16.mxu0 %v3775
        %9009 = vmatpush1.bf16.msra.mxu0 %v3774
        %9010 = vmatprep.subr.bf16.mxu0 %v3783
        %9011 = vmatpush1.bf16.msra.mxu0 %v3782
        %9012 = vmatprep.subr.bf16.mxu0 %v3791
        %9013 = vmatpush1.bf16.msra.mxu0 %v3790
        %9014 = vmatprep.mubr.bf16.mxu0 %v629
        %9015 = vmatmul.mubr.bf16.gmra.mrb[0].mxu0 %v628
        %v9016 = vpop.f32.mrb[0].mxu0
        %v9017 = vadd.f32 %v8976, %v9016
        %v9018 = vpop.f32.mrb[0].mxu0
        %v9019 = vadd.f32 %v8978, %v9018
        %v9020 = vpop.f32.mrb[0].mxu0
        %v9021 = vpop.f32.mrb[0].mxu0
        %9022 = vdwg.mxu0
        %9023 = vmatprep.subr.bf16.mxu0 %v3799
        %9024 = vmatpush1.bf16.msra.mxu0 %v3798
        %9025 = vmatprep.subr.bf16.mxu0 %v3807
        %9026 = vmatpush1.bf16.msra.mxu0 %v3806
        %9027 = vmatprep.subr.bf16.mxu0 %v3815
        %9028 = vmatpush1.bf16.msra.mxu0 %v3814
        %9029 = vmatprep.subr.bf16.mxu0 %v3823
        %9030 = vmatpush1.bf16.msra.mxu0 %v3822
        %9031 = vmatprep.subr.bf16.mxu0 %v3831
        %9032 = vmatpush1.bf16.msra.mxu0 %v3830
        %9033 = vmatprep.subr.bf16.mxu0 %v3839
        %9034 = vmatpush1.bf16.msra.mxu0 %v3838
        %9035 = vmatprep.subr.bf16.mxu0 %v3847
        %9036 = vmatpush1.bf16.msra.mxu0 %v3846
        %9037 = vmatprep.subr.bf16.mxu0 %v3855
        %9038 = vmatpush1.bf16.msra.mxu0 %v3854
        %9039 = vmatprep.subr.bf16.mxu0 %v3863
        %9040 = vmatpush1.bf16.msra.mxu0 %v3862
        %9041 = vmatprep.subr.bf16.mxu0 %v3871
        %9042 = vmatpush1.bf16.msra.mxu0 %v3870
        %9043 = vmatprep.subr.bf16.mxu0 %v3879
        %9044 = vmatpush1.bf16.msra.mxu0 %v3878
        %9045 = vmatprep.subr.bf16.mxu0 %v3887
        %9046 = vmatpush1.bf16.msra.mxu0 %v3886
        %9047 = vmatprep.subr.bf16.mxu0 %v3895
        %9048 = vmatpush1.bf16.msra.mxu0 %v3894
        %9049 = vmatprep.subr.bf16.mxu0 %v3903
        %9050 = vmatpush1.bf16.msra.mxu0 %v3902
        %9051 = vmatprep.subr.bf16.mxu0 %v3911
        %9052 = vmatpush1.bf16.msra.mxu0 %v3910
        %9053 = vmatprep.subr.bf16.mxu0 %v3919
        %9054 = vmatpush1.bf16.msra.mxu0 %v3918
        %9055 = vmatprep.mubr.bf16.mxu0 %v631
        %9056 = vmatmul.mubr.bf16.gmra.mrb[0].mxu0 %v630
        %v9057 = vpop.f32.mrb[0].mxu0
        %v9058 = vadd.f32 %v9017, %v9057
        %v9059 = vpop.f32.mrb[0].mxu0
        %v9060 = vadd.f32 %v9019, %v9059
        %v9061 = vpop.f32.mrb[0].mxu0
        %v9062 = vpop.f32.mrb[0].mxu0
        %9063 = vdwg.mxu0
        %9064 = vmatprep.subr.bf16.mxu0 %v3927
        %9065 = vmatpush1.bf16.msra.mxu0 %v3926
        %9066 = vmatprep.subr.bf16.mxu0 %v3935
        %9067 = vmatpush1.bf16.msra.mxu0 %v3934
        %9068 = vmatprep.subr.bf16.mxu0 %v3943
        %9069 = vmatpush1.bf16.msra.mxu0 %v3942
        %9070 = vmatprep.subr.bf16.mxu0 %v3951
        %9071 = vmatpush1.bf16.msra.mxu0 %v3950
        %9072 = vmatprep.subr.bf16.mxu0 %v3959
        %9073 = vmatpush1.bf16.msra.mxu0 %v3958
        %9074 = vmatprep.subr.bf16.mxu0 %v3967
        %9075 = vmatpush1.bf16.msra.mxu0 %v3966
        %9076 = vmatprep.subr.bf16.mxu0 %v3975
        %9077 = vmatpush1.bf16.msra.mxu0 %v3974
        %9078 = vmatprep.subr.bf16.mxu0 %v3983
        %9079 = vmatpush1.bf16.msra.mxu0 %v3982
        %9080 = vmatprep.subr.bf16.mxu0 %v3991
        %9081 = vmatpush1.bf16.msra.mxu0 %v3990
        %9082 = vmatprep.subr.bf16.mxu0 %v3999
        %9083 = vmatpush1.bf16.msra.mxu0 %v3998
        %9084 = vmatprep.subr.bf16.mxu0 %v4007
        %9085 = vmatpush1.bf16.msra.mxu0 %v4006
        %9086 = vmatprep.subr.bf16.mxu0 %v4015
        %9087 = vmatpush1.bf16.msra.mxu0 %v4014
        %9088 = vmatprep.subr.bf16.mxu0 %v4023
        %9089 = vmatpush1.bf16.msra.mxu0 %v4022
        %9090 = vmatprep.subr.bf16.mxu0 %v4031
        %9091 = vmatpush1.bf16.msra.mxu0 %v4030
        %9092 = vmatprep.subr.bf16.mxu0 %v4039
        %9093 = vmatpush1.bf16.msra.mxu0 %v4038
        %9094 = vmatprep.subr.bf16.mxu0 %v4047
        %9095 = vmatpush1.bf16.msra.mxu0 %v4046
        %9096 = vmatprep.mubr.bf16.mxu0 %v633
        %9097 = vmatmul.mubr.bf16.gmra.mrb[0].mxu0 %v632
        %v9098 = vpop.f32.mrb[0].mxu0
        %v9099 = vadd.f32 %v9058, %v9098
        %v9100 = vpop.f32.mrb[0].mxu0
        %v9101 = vadd.f32 %v9060, %v9100
        %v9102 = vpop.f32.mrb[0].mxu0
        %v9103 = vpop.f32.mrb[0].mxu0
        %9104 = vdwg.mxu0
        %9105 = vmatprep.subr.bf16.mxu0 %v4055
        %9106 = vmatpush1.bf16.msra.mxu0 %v4054
        %9107 = vmatprep.subr.bf16.mxu0 %v4063
        %9108 = vmatpush1.bf16.msra.mxu0 %v4062
        %9109 = vmatprep.subr.bf16.mxu0 %v4071
        %9110 = vmatpush1.bf16.msra.mxu0 %v4070
        %9111 = vmatprep.subr.bf16.mxu0 %v4079
        %9112 = vmatpush1.bf16.msra.mxu0 %v4078
        %9113 = vmatprep.subr.bf16.mxu0 %v4087
        %9114 = vmatpush1.bf16.msra.mxu0 %v4086
        %9115 = vmatprep.subr.bf16.mxu0 %v4095
        %9116 = vmatpush1.bf16.msra.mxu0 %v4094
        %9117 = vmatprep.subr.bf16.mxu0 %v4103
        %9118 = vmatpush1.bf16.msra.mxu0 %v4102
        %9119 = vmatprep.subr.bf16.mxu0 %v4111
        %9120 = vmatpush1.bf16.msra.mxu0 %v4110
        %9121 = vmatprep.subr.bf16.mxu0 %v4119
        %9122 = vmatpush1.bf16.msra.mxu0 %v4118
        %9123 = vmatprep.subr.bf16.mxu0 %v4127
        %9124 = vmatpush1.bf16.msra.mxu0 %v4126
        %9125 = vmatprep.subr.bf16.mxu0 %v4135
        %9126 = vmatpush1.bf16.msra.mxu0 %v4134
        %9127 = vmatprep.subr.bf16.mxu0 %v4143
        %9128 = vmatpush1.bf16.msra.mxu0 %v4142
        %9129 = vmatprep.subr.bf16.mxu0 %v4151
        %9130 = vmatpush1.bf16.msra.mxu0 %v4150
        %9131 = vmatprep.subr.bf16.mxu0 %v4159
        %9132 = vmatpush1.bf16.msra.mxu0 %v4158
        %9133 = vmatprep.subr.bf16.mxu0 %v4167
        %9134 = vmatpush1.bf16.msra.mxu0 %v4166
        %9135 = vmatprep.subr.bf16.mxu0 %v4175
        %9136 = vmatpush1.bf16.msra.mxu0 %v4174
        %9137 = vmatprep.mubr.bf16.mxu0 %v635
        %9138 = vmatmul.mubr.bf16.gmra.mrb[0].mxu0 %v634
        %v9139 = vpop.f32.mrb[0].mxu0
        %v9140 = vadd.f32 %v9099, %v9139
        %v9141 = vpop.f32.mrb[0].mxu0
        %v9142 = vadd.f32 %v9101, %v9141
        %v9143 = vpop.f32.mrb[0].mxu0
        %v9144 = vpop.f32.mrb[0].mxu0
        %9145 = vdwg.mxu0
        %9146 = vmatprep.subr.bf16.mxu0 %v4183
        %9147 = vmatpush1.bf16.msra.mxu0 %v4182
        %9148 = vmatprep.subr.bf16.mxu0 %v4191
        %9149 = vmatpush1.bf16.msra.mxu0 %v4190
        %9150 = vmatprep.subr.bf16.mxu0 %v4199
        %9151 = vmatpush1.bf16.msra.mxu0 %v4198
        %9152 = vmatprep.subr.bf16.mxu0 %v4207
        %9153 = vmatpush1.bf16.msra.mxu0 %v4206
        %9154 = vmatprep.subr.bf16.mxu0 %v4215
        %9155 = vmatpush1.bf16.msra.mxu0 %v4214
        %9156 = vmatprep.subr.bf16.mxu0 %v4223
        %9157 = vmatpush1.bf16.msra.mxu0 %v4222
        %9158 = vmatprep.subr.bf16.mxu0 %v4231
        %9159 = vmatpush1.bf16.msra.mxu0 %v4230
        %9160 = vmatprep.subr.bf16.mxu0 %v4239
        %9161 = vmatpush1.bf16.msra.mxu0 %v4238
        %9162 = vmatprep.subr.bf16.mxu0 %v4247
        %9163 = vmatpush1.bf16.msra.mxu0 %v4246
        %9164 = vmatprep.subr.bf16.mxu0 %v4255
        %9165 = vmatpush1.bf16.msra.mxu0 %v4254
        %9166 = vmatprep.subr.bf16.mxu0 %v4263
        %9167 = vmatpush1.bf16.msra.mxu0 %v4262
        %9168 = vmatprep.subr.bf16.mxu0 %v4271
        %9169 = vmatpush1.bf16.msra.mxu0 %v4270
        %9170 = vmatprep.subr.bf16.mxu0 %v4279
        %9171 = vmatpush1.bf16.msra.mxu0 %v4278
        %9172 = vmatprep.subr.bf16.mxu0 %v4287
        %9173 = vmatpush1.bf16.msra.mxu0 %v4286
        %9174 = vmatprep.subr.bf16.mxu0 %v4295
        %9175 = vmatpush1.bf16.msra.mxu0 %v4294
        %9176 = vmatprep.subr.bf16.mxu0 %v4303
        %9177 = vmatpush1.bf16.msra.mxu0 %v4302
        %9178 = vmatprep.mubr.bf16.mxu0 %v637
        %9179 = vmatmul.mubr.bf16.gmra.mrb[0].mxu0 %v636
        %v9180 = vpop.f32.mrb[0].mxu0
        %v9181 = vadd.f32 %v9140, %v9180
        %v9182 = vpop.f32.mrb[0].mxu0
        %v9183 = vadd.f32 %v9142, %v9182
        %v9184 = vpop.f32.mrb[0].mxu0
        %v9185 = vpop.f32.mrb[0].mxu0
        %9186 = vdwg.mxu0
        %9187 = vmatprep.subr.bf16.mxu0 %v4311
        %9188 = vmatpush1.bf16.msra.mxu0 %v4310
        %9189 = vmatprep.subr.bf16.mxu0 %v4319
        %9190 = vmatpush1.bf16.msra.mxu0 %v4318
        %9191 = vmatprep.subr.bf16.mxu0 %v4327
        %9192 = vmatpush1.bf16.msra.mxu0 %v4326
        %9193 = vmatprep.subr.bf16.mxu0 %v4335
        %9194 = vmatpush1.bf16.msra.mxu0 %v4334
        %9195 = vmatprep.subr.bf16.mxu0 %v4343
        %9196 = vmatpush1.bf16.msra.mxu0 %v4342
        %9197 = vmatprep.subr.bf16.mxu0 %v4351
        %9198 = vmatpush1.bf16.msra.mxu0 %v4350
        %9199 = vmatprep.subr.bf16.mxu0 %v4359
        %9200 = vmatpush1.bf16.msra.mxu0 %v4358
        %9201 = vmatprep.subr.bf16.mxu0 %v4367
        %9202 = vmatpush1.bf16.msra.mxu0 %v4366
        %9203 = vmatprep.subr.bf16.mxu0 %v4375
        %9204 = vmatpush1.bf16.msra.mxu0 %v4374
        %9205 = vmatprep.subr.bf16.mxu0 %v4383
        %9206 = vmatpush1.bf16.msra.mxu0 %v4382
        %9207 = vmatprep.subr.bf16.mxu0 %v4391
        %9208 = vmatpush1.bf16.msra.mxu0 %v4390
        %9209 = vmatprep.subr.bf16.mxu0 %v4399
        %9210 = vmatpush1.bf16.msra.mxu0 %v4398
        %9211 = vmatprep.subr.bf16.mxu0 %v4407
        %9212 = vmatpush1.bf16.msra.mxu0 %v4406
        %9213 = vmatprep.subr.bf16.mxu0 %v4415
        %9214 = vmatpush1.bf16.msra.mxu0 %v4414
        %9215 = vmatprep.subr.bf16.mxu0 %v4423
        %9216 = vmatpush1.bf16.msra.mxu0 %v4422
        %9217 = vmatprep.subr.bf16.mxu0 %v4431
        %9218 = vmatpush1.bf16.msra.mxu0 %v4430
        %9219 = vmatprep.mubr.bf16.mxu0 %v639
        %9220 = vmatmul.mubr.bf16.gmra.mrb[0].mxu0 %v638
        %v9221 = vpop.f32.mrb[0].mxu0
        %v9222 = vadd.f32 %v9181, %v9221
        %v9223 = vpop.f32.mrb[0].mxu0
        %v9224 = vadd.f32 %v9183, %v9223
        %v9225 = vpop.f32.mrb[0].mxu0
        %v9226 = vpop.f32.mrb[0].mxu0
        %9227 = vdwg.mxu0
        %9228 = vmatprep.subr.bf16.mxu0 %v4439
        %9229 = vmatpush1.bf16.msra.mxu0 %v4438
        %9230 = vmatprep.subr.bf16.mxu0 %v4447
        %9231 = vmatpush1.bf16.msra.mxu0 %v4446
        %9232 = vmatprep.subr.bf16.mxu0 %v4455
        %9233 = vmatpush1.bf16.msra.mxu0 %v4454
        %9234 = vmatprep.subr.bf16.mxu0 %v4463
        %9235 = vmatpush1.bf16.msra.mxu0 %v4462
        %9236 = vmatprep.subr.bf16.mxu0 %v4471
        %9237 = vmatpush1.bf16.msra.mxu0 %v4470
        %9238 = vmatprep.subr.bf16.mxu0 %v4479
        %9239 = vmatpush1.bf16.msra.mxu0 %v4478
        %9240 = vmatprep.subr.bf16.mxu0 %v4487
        %9241 = vmatpush1.bf16.msra.mxu0 %v4486
        %9242 = vmatprep.subr.bf16.mxu0 %v4495
        %9243 = vmatpush1.bf16.msra.mxu0 %v4494
        %9244 = vmatprep.subr.bf16.mxu0 %v4503
        %9245 = vmatpush1.bf16.msra.mxu0 %v4502
        %9246 = vmatprep.subr.bf16.mxu0 %v4511
        %9247 = vmatpush1.bf16.msra.mxu0 %v4510
        %9248 = vmatprep.subr.bf16.mxu0 %v4519
        %9249 = vmatpush1.bf16.msra.mxu0 %v4518
        %9250 = vmatprep.subr.bf16.mxu0 %v4527
        %9251 = vmatpush1.bf16.msra.mxu0 %v4526
        %9252 = vmatprep.subr.bf16.mxu0 %v4535
        %9253 = vmatpush1.bf16.msra.mxu0 %v4534
        %9254 = vmatprep.subr.bf16.mxu0 %v4543
        %9255 = vmatpush1.bf16.msra.mxu0 %v4542
        %9256 = vmatprep.subr.bf16.mxu0 %v4551
        %9257 = vmatpush1.bf16.msra.mxu0 %v4550
        %9258 = vmatprep.subr.bf16.mxu0 %v4559
        %9259 = vmatpush1.bf16.msra.mxu0 %v4558
        %9260 = vmatprep.mubr.bf16.mxu0 %v641
        %9261 = vmatmul.mubr.bf16.gmra.mrb[0].mxu0 %v640
        %v9262 = vpop.f32.mrb[0].mxu0
        %v9263 = vadd.f32 %v9222, %v9262
        %v9264 = vpop.f32.mrb[0].mxu0
        %v9265 = vadd.f32 %v9224, %v9264
        %v9266 = vpop.f32.mrb[0].mxu0
        %v9267 = vpop.f32.mrb[0].mxu0
        %9268 = vdwg.mxu0
        %9269 = vmatprep.subr.bf16.mxu0 %v4567
        %9270 = vmatpush1.bf16.msra.mxu0 %v4566
        %9271 = vmatprep.subr.bf16.mxu0 %v4575
        %9272 = vmatpush1.bf16.msra.mxu0 %v4574
        %9273 = vmatprep.subr.bf16.mxu0 %v4583
        %9274 = vmatpush1.bf16.msra.mxu0 %v4582
        %9275 = vmatprep.subr.bf16.mxu0 %v4591
        %9276 = vmatpush1.bf16.msra.mxu0 %v4590
        %9277 = vmatprep.subr.bf16.mxu0 %v4599
        %9278 = vmatpush1.bf16.msra.mxu0 %v4598
        %9279 = vmatprep.subr.bf16.mxu0 %v4607
        %9280 = vmatpush1.bf16.msra.mxu0 %v4606
        %9281 = vmatprep.subr.bf16.mxu0 %v4615
        %9282 = vmatpush1.bf16.msra.mxu0 %v4614
        %9283 = vmatprep.subr.bf16.mxu0 %v4623
        %9284 = vmatpush1.bf16.msra.mxu0 %v4622
        %9285 = vmatprep.subr.bf16.mxu0 %v4631
        %9286 = vmatpush1.bf16.msra.mxu0 %v4630
        %9287 = vmatprep.subr.bf16.mxu0 %v4639
        %9288 = vmatpush1.bf16.msra.mxu0 %v4638
        %9289 = vmatprep.subr.bf16.mxu0 %v4647
        %9290 = vmatpush1.bf16.msra.mxu0 %v4646
        %9291 = vmatprep.subr.bf16.mxu0 %v4655
        %9292 = vmatpush1.bf16.msra.mxu0 %v4654
        %9293 = vmatprep.subr.bf16.mxu0 %v4663
        %9294 = vmatpush1.bf16.msra.mxu0 %v4662
        %9295 = vmatprep.subr.bf16.mxu0 %v4671
        %9296 = vmatpush1.bf16.msra.mxu0 %v4670
        %9297 = vmatprep.subr.bf16.mxu0 %v4679
        %9298 = vmatpush1.bf16.msra.mxu0 %v4678
        %9299 = vmatprep.subr.bf16.mxu0 %v4687
        %9300 = vmatpush1.bf16.msra.mxu0 %v4686
        %9301 = vmatprep.mubr.bf16.mxu0 %v643
        %9302 = vmatmul.mubr.bf16.gmra.mrb[0].mxu0 %v642
        %v9303 = vpop.f32.mrb[0].mxu0
        %v9304 = vadd.f32 %v9263, %v9303
        %v9305 = vpop.f32.mrb[0].mxu0
        %v9306 = vadd.f32 %v9265, %v9305
        %v9307 = vpop.f32.mrb[0].mxu0
        %v9308 = vpop.f32.mrb[0].mxu0
        %9309 = vdwg.mxu0
        %9310 = vmatprep.subr.bf16.mxu0 %v4695
        %9311 = vmatpush1.bf16.msra.mxu0 %v4694
        %9312 = vmatprep.subr.bf16.mxu0 %v4703
        %9313 = vmatpush1.bf16.msra.mxu0 %v4702
        %9314 = vmatprep.subr.bf16.mxu0 %v4711
        %9315 = vmatpush1.bf16.msra.mxu0 %v4710
        %9316 = vmatprep.subr.bf16.mxu0 %v4719
        %9317 = vmatpush1.bf16.msra.mxu0 %v4718
        %9318 = vmatprep.subr.bf16.mxu0 %v4727
        %9319 = vmatpush1.bf16.msra.mxu0 %v4726
        %9320 = vmatprep.subr.bf16.mxu0 %v4735
        %9321 = vmatpush1.bf16.msra.mxu0 %v4734
        %9322 = vmatprep.subr.bf16.mxu0 %v4743
        %9323 = vmatpush1.bf16.msra.mxu0 %v4742
        %9324 = vmatprep.subr.bf16.mxu0 %v4751
        %9325 = vmatpush1.bf16.msra.mxu0 %v4750
        %9326 = vmatprep.subr.bf16.mxu0 %v4759
        %9327 = vmatpush1.bf16.msra.mxu0 %v4758
        %9328 = vmatprep.subr.bf16.mxu0 %v4767
        %9329 = vmatpush1.bf16.msra.mxu0 %v4766
        %9330 = vmatprep.subr.bf16.mxu0 %v4775
        %9331 = vmatpush1.bf16.msra.mxu0 %v4774
        %9332 = vmatprep.subr.bf16.mxu0 %v4783
        %9333 = vmatpush1.bf16.msra.mxu0 %v4782
        %9334 = vmatprep.subr.bf16.mxu0 %v4791
        %9335 = vmatpush1.bf16.msra.mxu0 %v4790
        %9336 = vmatprep.subr.bf16.mxu0 %v4799
        %9337 = vmatpush1.bf16.msra.mxu0 %v4798
        %9338 = vmatprep.subr.bf16.mxu0 %v4807
        %9339 = vmatpush1.bf16.msra.mxu0 %v4806
        %9340 = vmatprep.subr.bf16.mxu0 %v4815
        %9341 = vmatpush1.bf16.msra.mxu0 %v4814
        %9342 = vmatprep.mubr.bf16.mxu0 %v645
        %9343 = vmatmul.mubr.bf16.gmra.mrb[0].mxu0 %v644
        %v9344 = vpop.f32.mrb[0].mxu0
        %v9345 = vadd.f32 %v9304, %v9344
        %v9346 = vpop.f32.mrb[0].mxu0
        %v9347 = vadd.f32 %v9306, %v9346
        %v9348 = vpop.f32.mrb[0].mxu0
        %v9349 = vpop.f32.mrb[0].mxu0
        %9350 = vdwg.mxu0
        %9351 = vmatprep.subr.bf16.mxu0 %v4823
        %9352 = vmatpush1.bf16.msra.mxu0 %v4822
        %9353 = vmatprep.subr.bf16.mxu0 %v4831
        %9354 = vmatpush1.bf16.msra.mxu0 %v4830
        %9355 = vmatprep.subr.bf16.mxu0 %v4839
        %9356 = vmatpush1.bf16.msra.mxu0 %v4838
        %9357 = vmatprep.subr.bf16.mxu0 %v4847
        %9358 = vmatpush1.bf16.msra.mxu0 %v4846
        %9359 = vmatprep.subr.bf16.mxu0 %v4855
        %9360 = vmatpush1.bf16.msra.mxu0 %v4854
        %9361 = vmatprep.subr.bf16.mxu0 %v4863
        %9362 = vmatpush1.bf16.msra.mxu0 %v4862
        %9363 = vmatprep.subr.bf16.mxu0 %v4871
        %9364 = vmatpush1.bf16.msra.mxu0 %v4870
        %9365 = vmatprep.subr.bf16.mxu0 %v4879
        %9366 = vmatpush1.bf16.msra.mxu0 %v4878
        %9367 = vmatprep.subr.bf16.mxu0 %v4887
        %9368 = vmatpush1.bf16.msra.mxu0 %v4886
        %9369 = vmatprep.subr.bf16.mxu0 %v4895
        %9370 = vmatpush1.bf16.msra.mxu0 %v4894
        %9371 = vmatprep.subr.bf16.mxu0 %v4903
        %9372 = vmatpush1.bf16.msra.mxu0 %v4902
        %9373 = vmatprep.subr.bf16.mxu0 %v4911
        %9374 = vmatpush1.bf16.msra.mxu0 %v4910
        %9375 = vmatprep.subr.bf16.mxu0 %v4919
        %9376 = vmatpush1.bf16.msra.mxu0 %v4918
        %9377 = vmatprep.subr.bf16.mxu0 %v4927
        %9378 = vmatpush1.bf16.msra.mxu0 %v4926
        %9379 = vmatprep.subr.bf16.mxu0 %v4935
        %9380 = vmatpush1.bf16.msra.mxu0 %v4934
        %9381 = vmatprep.subr.bf16.mxu0 %v4943
        %9382 = vmatpush1.bf16.msra.mxu0 %v4942
        %9383 = vmatprep.mubr.bf16.mxu0 %v647
        %9384 = vmatmul.mubr.bf16.gmra.mrb[0].mxu0 %v646
        %v9385 = vpop.f32.mrb[0].mxu0
        %v9386 = vadd.f32 %v9345, %v9385
        %v9387 = vpop.f32.mrb[0].mxu0
        %v9388 = vadd.f32 %v9347, %v9387
        %v9389 = vpop.f32.mrb[0].mxu0
        %v9390 = vpop.f32.mrb[0].mxu0
        %9391 = vdwg.mxu0
        %9392 = vmatprep.subr.bf16.mxu0 %v4951
        %9393 = vmatpush1.bf16.msra.mxu0 %v4950
        %9394 = vmatprep.subr.bf16.mxu0 %v4959
        %9395 = vmatpush1.bf16.msra.mxu0 %v4958
        %9396 = vmatprep.subr.bf16.mxu0 %v4967
        %9397 = vmatpush1.bf16.msra.mxu0 %v4966
        %9398 = vmatprep.subr.bf16.mxu0 %v4975
        %9399 = vmatpush1.bf16.msra.mxu0 %v4974
        %9400 = vmatprep.subr.bf16.mxu0 %v4983
        %9401 = vmatpush1.bf16.msra.mxu0 %v4982
        %9402 = vmatprep.subr.bf16.mxu0 %v4991
        %9403 = vmatpush1.bf16.msra.mxu0 %v4990
        %9404 = vmatprep.subr.bf16.mxu0 %v4999
        %9405 = vmatpush1.bf16.msra.mxu0 %v4998
        %9406 = vmatprep.subr.bf16.mxu0 %v5007
        %9407 = vmatpush1.bf16.msra.mxu0 %v5006
        %9408 = vmatprep.subr.bf16.mxu0 %v5015
        %9409 = vmatpush1.bf16.msra.mxu0 %v5014
        %9410 = vmatprep.subr.bf16.mxu0 %v5023
        %9411 = vmatpush1.bf16.msra.mxu0 %v5022
        %9412 = vmatprep.subr.bf16.mxu0 %v5031
        %9413 = vmatpush1.bf16.msra.mxu0 %v5030
        %9414 = vmatprep.subr.bf16.mxu0 %v5039
        %9415 = vmatpush1.bf16.msra.mxu0 %v5038
        %9416 = vmatprep.subr.bf16.mxu0 %v5047
        %9417 = vmatpush1.bf16.msra.mxu0 %v5046
        %9418 = vmatprep.subr.bf16.mxu0 %v5055
        %9419 = vmatpush1.bf16.msra.mxu0 %v5054
        %9420 = vmatprep.subr.bf16.mxu0 %v5063
        %9421 = vmatpush1.bf16.msra.mxu0 %v5062
        %9422 = vmatprep.subr.bf16.mxu0 %v5071
        %9423 = vmatpush1.bf16.msra.mxu0 %v5070
        %9424 = vmatprep.mubr.bf16.mxu0 %v649
        %9425 = vmatmul.mubr.bf16.gmra.mrb[0].mxu0 %v648
        %v9426 = vpop.f32.mrb[0].mxu0
        %v9427 = vadd.f32 %v9386, %v9426
        %v9428 = vpop.f32.mrb[0].mxu0
        %v9429 = vadd.f32 %v9388, %v9428
        %v9430 = vpop.f32.mrb[0].mxu0
        %v9431 = vpop.f32.mrb[0].mxu0
        %9432 = vdwg.mxu0
        %9433 = vmatprep.subr.bf16.mxu0 %v5079
        %9434 = vmatpush1.bf16.msra.mxu0 %v5078
        %9435 = vmatprep.subr.bf16.mxu0 %v5087
        %9436 = vmatpush1.bf16.msra.mxu0 %v5086
        %9437 = vmatprep.subr.bf16.mxu0 %v5095
        %9438 = vmatpush1.bf16.msra.mxu0 %v5094
        %9439 = vmatprep.subr.bf16.mxu0 %v5103
        %9440 = vmatpush1.bf16.msra.mxu0 %v5102
        %9441 = vmatprep.subr.bf16.mxu0 %v5111
        %9442 = vmatpush1.bf16.msra.mxu0 %v5110
        %9443 = vmatprep.subr.bf16.mxu0 %v5119
        %9444 = vmatpush1.bf16.msra.mxu0 %v5118
        %9445 = vmatprep.subr.bf16.mxu0 %v5127
        %9446 = vmatpush1.bf16.msra.mxu0 %v5126
        %9447 = vmatprep.subr.bf16.mxu0 %v5135
        %9448 = vmatpush1.bf16.msra.mxu0 %v5134
        %9449 = vmatprep.subr.bf16.mxu0 %v5143
        %9450 = vmatpush1.bf16.msra.mxu0 %v5142
        %9451 = vmatprep.subr.bf16.mxu0 %v5151
        %9452 = vmatpush1.bf16.msra.mxu0 %v5150
        %9453 = vmatprep.subr.bf16.mxu0 %v5159
        %9454 = vmatpush1.bf16.msra.mxu0 %v5158
        %9455 = vmatprep.subr.bf16.mxu0 %v5167
        %9456 = vmatpush1.bf16.msra.mxu0 %v5166
        %9457 = vmatprep.subr.bf16.mxu0 %v5175
        %9458 = vmatpush1.bf16.msra.mxu0 %v5174
        %9459 = vmatprep.subr.bf16.mxu0 %v5183
        %9460 = vmatpush1.bf16.msra.mxu0 %v5182
        %9461 = vmatprep.subr.bf16.mxu0 %v5191
        %9462 = vmatpush1.bf16.msra.mxu0 %v5190
        %9463 = vmatprep.subr.bf16.mxu0 %v5199
        %9464 = vmatpush1.bf16.msra.mxu0 %v5198
        %9465 = vmatprep.mubr.bf16.mxu0 %v651
        %9466 = vmatmul.mubr.bf16.gmra.mrb[0].mxu0 %v650
        %v9467 = vpop.f32.mrb[0].mxu0
        %v9468 = vadd.f32 %v9427, %v9467
        %v9469 = vpop.f32.mrb[0].mxu0
        %v9470 = vadd.f32 %v9429, %v9469
        %v9471 = vpop.f32.mrb[0].mxu0
        %v9472 = vpop.f32.mrb[0].mxu0
        %9473 = vdwg.mxu0
        %9474 = vmatprep.subr.bf16.mxu0 %v5207
        %9475 = vmatpush1.bf16.msra.mxu0 %v5206
        %9476 = vmatprep.subr.bf16.mxu0 %v5215
        %9477 = vmatpush1.bf16.msra.mxu0 %v5214
        %9478 = vmatprep.subr.bf16.mxu0 %v5223
        %9479 = vmatpush1.bf16.msra.mxu0 %v5222
        %9480 = vmatprep.subr.bf16.mxu0 %v5231
        %9481 = vmatpush1.bf16.msra.mxu0 %v5230
        %9482 = vmatprep.subr.bf16.mxu0 %v5239
        %9483 = vmatpush1.bf16.msra.mxu0 %v5238
        %9484 = vmatprep.subr.bf16.mxu0 %v5247
        %9485 = vmatpush1.bf16.msra.mxu0 %v5246
        %9486 = vmatprep.subr.bf16.mxu0 %v5255
        %9487 = vmatpush1.bf16.msra.mxu0 %v5254
        %9488 = vmatprep.subr.bf16.mxu0 %v5263
        %9489 = vmatpush1.bf16.msra.mxu0 %v5262
        %9490 = vmatprep.subr.bf16.mxu0 %v5271
        %9491 = vmatpush1.bf16.msra.mxu0 %v5270
        %9492 = vmatprep.subr.bf16.mxu0 %v5279
        %9493 = vmatpush1.bf16.msra.mxu0 %v5278
        %9494 = vmatprep.subr.bf16.mxu0 %v5287
        %9495 = vmatpush1.bf16.msra.mxu0 %v5286
        %9496 = vmatprep.subr.bf16.mxu0 %v5295
        %9497 = vmatpush1.bf16.msra.mxu0 %v5294
        %9498 = vmatprep.subr.bf16.mxu0 %v5303
        %9499 = vmatpush1.bf16.msra.mxu0 %v5302
        %9500 = vmatprep.subr.bf16.mxu0 %v5311
        %9501 = vmatpush1.bf16.msra.mxu0 %v5310
        %9502 = vmatprep.subr.bf16.mxu0 %v5319
        %9503 = vmatpush1.bf16.msra.mxu0 %v5318
        %9504 = vmatprep.subr.bf16.mxu0 %v5327
        %9505 = vmatpush1.bf16.msra.mxu0 %v5326
        %9506 = vmatprep.mubr.bf16.mxu0 %v653
        %9507 = vmatmul.mubr.bf16.gmra.mrb[0].mxu0 %v652
        %v9508 = vpop.f32.mrb[0].mxu0
        %v9509 = vadd.f32 %v9468, %v9508
        %v9510 = vpop.f32.mrb[0].mxu0
        %v9511 = vadd.f32 %v9470, %v9510
        %v9512 = vpop.f32.mrb[0].mxu0
        %v9513 = vpop.f32.mrb[0].mxu0
        %9514 = vdwg.mxu0
        %9515 = vmatprep.subr.bf16.mxu0 %v5335
        %9516 = vmatpush1.bf16.msra.mxu0 %v5334
        %9517 = vmatprep.subr.bf16.mxu0 %v5343
        %9518 = vmatpush1.bf16.msra.mxu0 %v5342
        %9519 = vmatprep.subr.bf16.mxu0 %v5351
        %9520 = vmatpush1.bf16.msra.mxu0 %v5350
        %9521 = vmatprep.subr.bf16.mxu0 %v5359
        %9522 = vmatpush1.bf16.msra.mxu0 %v5358
        %9523 = vmatprep.subr.bf16.mxu0 %v5367
        %9524 = vmatpush1.bf16.msra.mxu0 %v5366
        %9525 = vmatprep.subr.bf16.mxu0 %v5375
        %9526 = vmatpush1.bf16.msra.mxu0 %v5374
        %9527 = vmatprep.subr.bf16.mxu0 %v5383
        %9528 = vmatpush1.bf16.msra.mxu0 %v5382
        %9529 = vmatprep.subr.bf16.mxu0 %v5391
        %9530 = vmatpush1.bf16.msra.mxu0 %v5390
        %9531 = vmatprep.subr.bf16.mxu0 %v5399
        %9532 = vmatpush1.bf16.msra.mxu0 %v5398
        %9533 = vmatprep.subr.bf16.mxu0 %v5407
        %9534 = vmatpush1.bf16.msra.mxu0 %v5406
        %9535 = vmatprep.subr.bf16.mxu0 %v5415
        %9536 = vmatpush1.bf16.msra.mxu0 %v5414
        %9537 = vmatprep.subr.bf16.mxu0 %v5423
        %9538 = vmatpush1.bf16.msra.mxu0 %v5422
        %9539 = vmatprep.subr.bf16.mxu0 %v5431
        %9540 = vmatpush1.bf16.msra.mxu0 %v5430
        %9541 = vmatprep.subr.bf16.mxu0 %v5439
        %9542 = vmatpush1.bf16.msra.mxu0 %v5438
        %9543 = vmatprep.subr.bf16.mxu0 %v5447
        %9544 = vmatpush1.bf16.msra.mxu0 %v5446
        %9545 = vmatprep.subr.bf16.mxu0 %v5455
        %9546 = vmatpush1.bf16.msra.mxu0 %v5454
        %9547 = vmatprep.mubr.bf16.mxu0 %v655
        %9548 = vmatmul.mubr.bf16.gmra.mrb[0].mxu0 %v654
        %v9549 = vpop.f32.mrb[0].mxu0
        %v9550 = vadd.f32 %v9509, %v9549
        %v9551 = vpop.f32.mrb[0].mxu0
        %v9552 = vadd.f32 %v9511, %v9551
        %v9553 = vpop.f32.mrb[0].mxu0
        %v9554 = vpop.f32.mrb[0].mxu0
        %9555 = vdwg.mxu0
        %v9564 = vcombine.low %v6475, %v6477
        %v9565 = vcombine.low %v7500, %v7502
        %v9567 = vunpack.c.l.s4 1983009808
        %v9568 = vunpack.c.0.s8 %v9567
        %v9569 = vlaneseq
        %v9570 = vshrl.u32 %v9569, 7
        %v9571 = vsub.s32 %v9568, %v9570
        %v9572 = vrot.slane %v9564, %v9571
        %v9574 = vunpack.c.l.s4 1983009808
        %v9575 = vunpack.c.0.s8 %v9574
        %v9576 = vlaneseq
        %v9577 = vshrl.u32 %v9576, 7
        %v9578 = vsub.s32 %v9575, %v9577
        %v9579 = vrot.slane %v9565, %v9578
        %v9580 = vcombine.low %v9572, %v9579
        %v9581 = vcombine.low %v8525, %v8527
        %v9582 = vcombine.low %v9550, %v9552
        %v9584 = vunpack.c.l.s4 1983009808
        %v9585 = vunpack.c.0.s8 %v9584
        %v9586 = vlaneseq
        %v9587 = vshrl.u32 %v9586, 7
        %v9588 = vsub.s32 %v9585, %v9587
        %v9589 = vrot.slane %v9581, %v9588
        %v9591 = vunpack.c.l.s4 1983009808
        %v9592 = vunpack.c.0.s8 %v9591
        %v9593 = vlaneseq
        %v9594 = vshrl.u32 %v9593, 7
        %v9595 = vsub.s32 %v9592, %v9594
        %v9596 = vrot.slane %v9582, %v9595
        %v9597 = vcombine.low %v9589, %v9596
        %v9600 = vadd.f32 %v316, %v9580
        %v9601 = vadd.f32 %v317, %v9597
        %9602 = vst [vmem:[#allocation10] sm:$0xff] %v9600
        %9603 = vst [vmem:[#allocation10 + $0x8] sm:$0xff] %v9601
        %p9604 = scmp.eq.s32.totalorder %s28, 9
        // Predicated region
        $region57: #{tpu_custom_call.1} parent=35 // pred_check
          %p9605 = pneg %p9604
        $region58: #{tpu_custom_call.1} parent=35 // pred_check_branch
          %9607 = sbr.rel (%p9605) target = $region60
        $region59: #{tpu_custom_call.1} parent=35 // pred_region
          %v9608 = vld [vmem:[#allocation10] sm:$0xff]
          %v9609 = vld [vmem:[#allocation10 + $0x8] sm:$0xff]
          %v9610 = vld [vmem:[#allocation7] sm:$0xff]
          %v9612 = vlaneseq
          %v9613 = vshrl.u32 %v9612, 7
          %v9614 = vsub.s32 0, %v9613
          %v9615 = vrot.slane %v9610, %v9614
          %v9616 = vlaneseq
          %v9617 = vshrl.u32 %v9616, 7
          %v9618 = vsub.s32 1, %v9617
          %v9619 = vrot.slane %v9610, %v9618
          %v9620 = vlaneseq
          %v9621 = vshrl.u32 %v9620, 7
          %v9622 = vsub.s32 2, %v9621
          %v9623 = vrot.slane %v9610, %v9622
          %v9624 = vlaneseq
          %v9625 = vshrl.u32 %v9624, 7
          %v9626 = vsub.s32 3, %v9625
          %v9627 = vrot.slane %v9610, %v9626
          %v9628 = vlaneseq
          %v9629 = vshrl.u32 %v9628, 7
          %v9630 = vsub.s32 4, %v9629
          %v9631 = vrot.slane %v9610, %v9630
          %v9632 = vlaneseq
          %v9633 = vshrl.u32 %v9632, 7
          %v9634 = vsub.s32 5, %v9633
          %v9635 = vrot.slane %v9610, %v9634
          %v9636 = vlaneseq
          %v9637 = vshrl.u32 %v9636, 7
          %v9638 = vsub.s32 6, %v9637
          %v9639 = vrot.slane %v9610, %v9638
          %v9640 = vlaneseq
          %v9641 = vshrl.u32 %v9640, 7
          %v9642 = vsub.s32 7, %v9641
          %v9643 = vrot.slane %v9610, %v9642
          %v9644 = vcombine.low %v9615, %v9619
          %v9645 = vcombine.low %v9623, %v9627
          %v9647 = vunpack.c.l.s4 1983009808
          %v9648 = vunpack.c.0.s8 %v9647
          %v9649 = vlaneseq
          %v9650 = vshrl.u32 %v9649, 7
          %v9651 = vsub.s32 %v9648, %v9650
          %v9652 = vrot.slane %v9644, %v9651
          %v9654 = vunpack.c.l.s4 1983009808
          %v9655 = vunpack.c.0.s8 %v9654
          %v9656 = vlaneseq
          %v9657 = vshrl.u32 %v9656, 7
          %v9658 = vsub.s32 %v9655, %v9657
          %v9659 = vrot.slane %v9645, %v9658
          %v9660 = vcombine.low %v9652, %v9659
          %v9661 = vcombine.low %v9631, %v9635
          %v9662 = vcombine.low %v9639, %v9643
          %v9664 = vunpack.c.l.s4 1983009808
          %v9665 = vunpack.c.0.s8 %v9664
          %v9666 = vlaneseq
          %v9667 = vshrl.u32 %v9666, 7
          %v9668 = vsub.s32 %v9665, %v9667
          %v9669 = vrot.slane %v9661, %v9668
          %v9671 = vunpack.c.l.s4 1983009808
          %v9672 = vunpack.c.0.s8 %v9671
          %v9673 = vlaneseq
          %v9674 = vshrl.u32 %v9673, 7
          %v9675 = vsub.s32 %v9672, %v9674
          %v9676 = vrot.slane %v9662, %v9675
          %v9677 = vcombine.low %v9669, %v9676
          %v9680 = vmul.f32 %v9608, %v9660
          %v9681 = vmul.f32 %v9609, %v9677
          %v9682 = vld [vmem:[#allocation8] sm:$0xff]
          %v9684 = vlaneseq
          %v9685 = vshrl.u32 %v9684, 7
          %v9686 = vsub.s32 0, %v9685
          %v9687 = vrot.slane %v9682, %v9686
          %v9688 = vlaneseq
          %v9689 = vshrl.u32 %v9688, 7
          %v9690 = vsub.s32 1, %v9689
          %v9691 = vrot.slane %v9682, %v9690
          %v9692 = vlaneseq
          %v9693 = vshrl.u32 %v9692, 7
          %v9694 = vsub.s32 2, %v9693
          %v9695 = vrot.slane %v9682, %v9694
          %v9696 = vlaneseq
          %v9697 = vshrl.u32 %v9696, 7
          %v9698 = vsub.s32 3, %v9697
          %v9699 = vrot.slane %v9682, %v9698
          %v9700 = vlaneseq
          %v9701 = vshrl.u32 %v9700, 7
          %v9702 = vsub.s32 4, %v9701
          %v9703 = vrot.slane %v9682, %v9702
          %v9704 = vlaneseq
          %v9705 = vshrl.u32 %v9704, 7
          %v9706 = vsub.s32 5, %v9705
          %v9707 = vrot.slane %v9682, %v9706
          %v9708 = vlaneseq
          %v9709 = vshrl.u32 %v9708, 7
          %v9710 = vsub.s32 6, %v9709
          %v9711 = vrot.slane %v9682, %v9710
          %v9712 = vlaneseq
          %v9713 = vshrl.u32 %v9712, 7
          %v9714 = vsub.s32 7, %v9713
          %v9715 = vrot.slane %v9682, %v9714
          %v9716 = vcombine.low %v9687, %v9691
          %v9717 = vcombine.low %v9695, %v9699
          %v9719 = vunpack.c.l.s4 1983009808
          %v9720 = vunpack.c.0.s8 %v9719
          %v9721 = vlaneseq
          %v9722 = vshrl.u32 %v9721, 7
          %v9723 = vsub.s32 %v9720, %v9722
          %v9724 = vrot.slane %v9716, %v9723
          %v9726 = vunpack.c.l.s4 1983009808
          %v9727 = vunpack.c.0.s8 %v9726
          %v9728 = vlaneseq
          %v9729 = vshrl.u32 %v9728, 7
          %v9730 = vsub.s32 %v9727, %v9729
          %v9731 = vrot.slane %v9717, %v9730
          %v9732 = vcombine.low %v9724, %v9731
          %v9733 = vcombine.low %v9703, %v9707
          %v9734 = vcombine.low %v9711, %v9715
          %v9736 = vunpack.c.l.s4 1983009808
          %v9737 = vunpack.c.0.s8 %v9736
          %v9738 = vlaneseq
          %v9739 = vshrl.u32 %v9738, 7
          %v9740 = vsub.s32 %v9737, %v9739
          %v9741 = vrot.slane %v9733, %v9740
          %v9743 = vunpack.c.l.s4 1983009808
          %v9744 = vunpack.c.0.s8 %v9743
          %v9745 = vlaneseq
          %v9746 = vshrl.u32 %v9745, 7
          %v9747 = vsub.s32 %v9744, %v9746
          %v9748 = vrot.slane %v9734, %v9747
          %v9749 = vcombine.low %v9741, %v9748
          %v9752 = vadd.f32 %v9680, %v9732
          %v9753 = vadd.f32 %v9681, %v9749
          %v9754 = vmax.f32 %v9752, 0.0
          %v9755 = vmax.f32 %v9753, 0.0
          %9756 = vst [vmem:[#allocation10] sm:$0xff] %v9754
          %9757 = vst [vmem:[#allocation10 + $0x8] sm:$0xff] %v9755
        $region60: #{tpu_custom_call.1} parent=35 // pred_fallthru
          _
        // Predicated region
        $region61: #{tpu_custom_call.1} parent=35 // pred_check
          %p9758 = pneg %p159
        $region62: #{tpu_custom_call.1} parent=35 // pred_check_branch
          %9760 = sbr.rel (%p9758) target = $region64
        $region63: #{tpu_custom_call.1} parent=35 // pred_region
          %s9761 = smul.u32 8, %s27
          %s9763 = ssub.s32 256, 256
          %9764 = vsyncadd [#allocation4], %s9763
          %s9765 = smul.addr %s9761, 32
          %s9766 = scalar_lea.hbm %s4, %s9765
          %s9768 = sshll.u32 [#allocation10], 4
          %s9769 = int_to_ptr.vmem [resolvable:$true] %s9768
          %9771 = dma.vmem_to_hbm [thread:$0]  %s9769, 256, %s9766, [#allocation4]
        $region64: #{tpu_custom_call.1} parent=35 // pred_fallthru
          _
        // Predicated region
        $region65: #{tpu_custom_call.1} parent=35 // pred_check
          %p9772 = pneg %p159
        $region66: #{tpu_custom_call.1} parent=35 // pred_check_branch
          %9774 = sbr.rel (%p9772) target = $region68
        $region67: #{tpu_custom_call.1} parent=35 // pred_region
          %9775 = dma.done [#allocation4], 256
        $region68: #{tpu_custom_call.1} parent=35 // pred_fallthru
          _
      $region36: #{tpu_custom_call.1} parent=5 // pred_fallthru
        _
      %p9776 = scmp.le.s32.totalorder 2, %s18
      // Predicated region
      $region69: #{tpu_custom_call.1} parent=5 // pred_check
        %p9777 = pneg %p9776
      $region70: #{tpu_custom_call.1} parent=5 // pred_check_branch
        %9779 = sbr.rel (%p9777) target = $region72
      $region71: #{tpu_custom_call.1} parent=5 // pred_region
        %s9780 = ssub.s32 %s18, 2
      $region72: #{tpu_custom_call.1} parent=5 // pred_fallthru
        _
    $region6: #{tpu_custom_call.1} parent=1 // loop_footer
      %s22 = sadd.s32 1, %s18
    $region7: #{tpu_custom_call.1} parent=1 // loop_footer_branch
      %17 = sbr.rel target = $region3
    $region8: #{tpu_custom_call.1} parent=1 // loop_exit
      _
    %9781 = vsyncpa [#allocation3], 1
    %s9782 = scalar_lea.sflag [#allocation3], 1
    %9783 = vsyncpa %s9782, 1
    %9784 = vsyncpa [#allocation6], 1
    %s9785 = scalar_lea.sflag [#allocation6], 1
    %9786 = vsyncpa %s9785, 1
    %9787 = vsyncpa [#allocation9], 1
    %9788 = vsyncpa [#allocation4], 1
    %s9789 = scalar_lea.sflag [#allocation4], 1
    %9790 = vsyncpa %s9789, 1

</llo_original>
